<compile_context>
chip_gen: v7x
topology: tpu7x:2x2x1
jax: 0.10.0
libtpu: 0.0.40
codegen_flags: <defaults>
</compile_context>

<pallas_src>
import math

import jax
import jax.numpy as jnp
from jax.experimental import pallas as pl
from jax.experimental.pallas import tpu as pltpu


def _round_up(n, m):
    return ((n + m - 1) // m) * m


# ----------------------------------------------------------------------------
# Fused autoencoder kernel (one batch tile per grid step).
#   LSTM weights per layer (lane-padded, gate order [i | f | o | g]):
#     wih (in_pad, 4*hid_pad)  bf16 (f32 for enc1, where in_dim == 1)
#     whh (hid_pad, 4*hid_pad) bf16
#     b   (1, 4*hid_pad)       f32   (= b_ih + b_hh)
# ----------------------------------------------------------------------------
def fused_autoencoder_kernel(
    x_ref,                                   # (seq, Bt, 1) f32, time-major
    e1_wih, e1_whh, e1_b,
    e2_wih, e2_whh, e2_b,
    d1_wih, d1_whh, d1_b,
    d2_wih, d2_whh, d2_b,
    lin_w, lin_b,
    out_ref,                                 # (seq, Bt, 1) f32
):
    seq, bt, _ = x_ref.shape
    Hp = e1_whh.shape[0]                     # lane-padded 2*embedding_dim
    Ep = e2_whh.shape[0]                     # lane-padded embedding_dim

    def sigmoid(v):
        # exp and the (approx) reciprocal both issue on the EUP slot -> keeps the
        # gate nonlinearity off the VALU critical path.
        return pl.reciprocal(1.0 + jnp.exp(-v), approx=True)

    def run_lstm(pre_rows, whh_ref, hidp):
        """Serial LSTM recurrence, statically unrolled.

        pre_rows : list (len seq) of (bt, 4*hidp) f32 precomputed x@Wih + b terms,
                   or a single (bt, 4*hidp) array reused every step (dec1).
        whh_ref  : (hidp, 4*hidp) bf16 recurrent weights.
        Returns the list of per-step hidden states (bt, hidp) f32, kept in vregs.
        """
        whh = whh_ref[...]                                   # bf16, loaded once
        h = jnp.zeros((bt, hidp), jnp.float32)
        c = jnp.zeros((bt, hidp), jnp.float32)
        hs = []
        for t in range(seq):
            pre = pre_rows[t] if isinstance(pre_rows, list) else pre_rows
            g = pre + jnp.dot(h.astype(jnp.bfloat16), whh,
                              preferred_element_type=jnp.float32)  # (bt, 4*hidp)
            # Gate layout [i | f | o | g]; each slab is a full 128-lane vreg.
            ifo = sigmoid(g[:, 0:3 * hidp])                  # one EUP slab
            i_g = ifo[:, 0:hidp]
            f_g = ifo[:, hidp:2 * hidp]
            o_g = ifo[:, 2 * hidp:3 * hidp]
            u_g = jnp.tanh(g[:, 3 * hidp:4 * hidp])
            c = f_g * c + i_g * u_g
            h = o_g * jnp.tanh(c)
            hs.append(h)
        return hs

    # ---- Encoder LSTM 1: LSTM(n_features=1 -> 2E). K=1 input term is an
    #      outer-product broadcast multiply on the VPU (no MXU), hoisted per step.
    pre1_rows = [x_ref[t] * e1_wih[...] + e1_b[...] for t in range(seq)]  # (bt,4Hp)
    hs1 = run_lstm(pre1_rows, e1_whh, Hp)

    # ---- Encoder LSTM 2: LSTM(2E -> E). One M=seq*bt matmul for the input half.
    h1_all = jnp.concatenate(hs1, axis=0).astype(jnp.bfloat16)           # (seq*bt, Hp)
    pre2 = jnp.dot(h1_all, e2_wih[...],
                   preferred_element_type=jnp.float32) + e2_b[...]       # (seq*bt, 4Ep)
    pre2_rows = [pre2[t * bt:(t + 1) * bt, :] for t in range(seq)]
    z = run_lstm(pre2_rows, e2_whh, Ep)[-1]                              # (bt, Ep) latent

    # ---- Decoder LSTM 1: LSTM(E -> E). Decoder input is z repeated seq times
    #      (flip of identical rows is a no-op) -> constant input contribution.
    pre_d1 = jnp.dot(z.astype(jnp.bfloat16), d1_wih[...],
                     preferred_element_type=jnp.float32) + d1_b[...]     # (bt, 4Ep)
    hs_d1 = run_lstm(pre_d1, d1_whh, Ep)

    # ---- Decoder LSTM 2: LSTM(E -> 2E).
    d1_all = jnp.concatenate(hs_d1, axis=0).astype(jnp.bfloat16)         # (seq*bt, Ep)
    pre_d2 = jnp.dot(d1_all, d2_wih[...],
                     preferred_element_type=jnp.float32) + d2_b[...]     # (seq*bt, 4Hp)
    pre_d2_rows = [pre_d2[t * bt:(t + 1) * bt, :] for t in range(seq)]
    hs_d2 = run_lstm(pre_d2_rows, d2_whh, Hp)

    # ---- Linear(2E -> 1) fused as a row-wise lane reduction; single store.
    d2_all = jnp.concatenate(hs_d2, axis=0)                              # (seq*bt, Hp) f32
    y = jnp.sum(d2_all * lin_w[...], axis=-1, keepdims=True) + lin_b[...]  # (seq*bt, 1)
    out_ref[...] = y.reshape(seq, bt, 1)


def autoencoder_forward(x, enc1, enc2, dec1, dec2, lin_w, lin_b, *, batch_tile=8):
    """x: (B, seq, 1) f32. Returns (B, seq, 1) f32. Each sample follows the
    original single-sample module semantics exactly."""
    B, seq, nf = x.shape
    assert nf == 1
    bt = batch_tile if (B % batch_tile == 0) else B
    num_tiles = B // bt

    # Time-major layout so every per-step batch-tile slice is sublane-aligned.
    x_tb = jnp.transpose(x, (1, 0, 2)).astype(jnp.float32)               # (seq, B, 1)

    def full_spec(arr):
        n = arr.ndim
        return pl.BlockSpec(arr.shape, lambda i, _n=n: (0,) * _n)

    weights = (*enc1, *enc2, *dec1, *dec2, lin_w, lin_b)
    tile_spec = pl.BlockSpec((seq, bt, 1), lambda i: (0, i, 0))

    out_tb = pl.pallas_call(
        fused_autoencoder_kernel,
        out_shape=jax.ShapeDtypeStruct((seq, B, 1), jnp.float32),
        grid=(num_tiles,),
        in_specs=[tile_spec] + [full_spec(w) for w in weights],
        out_specs=tile_spec,
        compiler_params=pltpu.CompilerParams(
            # Batch tiles are independent -> shard across TensorCores on v7x.
            dimension_semantics=("parallel",)),
    )(x_tb, *weights)
    return jnp.transpose(out_tb, (1, 0, 2))                              # (B, seq, 1)


# ----------------------------------------------------------------------------
# Parameter init (shapes/distributions match the PyTorch module __init__).
# Gates reordered from PyTorch's [i, f, g, o] to [i, f, o, g] and each gate
# zero-padded to `hid_pad` lanes; pad rows/cols are exactly zero so pad lanes
# of h/c stay identically zero through the recurrence.
# ----------------------------------------------------------------------------
def init_lstm_params(key, in_dim, hidden, in_pad, hid_pad, wih_dtype):
    k = 1.0 / math.sqrt(hidden)
    kw, kr, kbi, kbh = jax.random.split(key, 4)
    wih_g = jax.random.uniform(kw, (4, in_dim, hidden), jnp.float32, -k, k)
    whh_g = jax.random.uniform(kr, (4, hidden, hidden), jnp.float32, -k, k)
    b_g = (jax.random.uniform(kbi, (4, 1, hidden), jnp.float32, -k, k)
           + jax.random.uniform(kbh, (4, 1, hidden), jnp.float32, -k, k))  # b_ih + b_hh

    def assemble(gates, rows, row_pad, dtype):
        out = jnp.zeros((row_pad, 4 * hid_pad), jnp.float32)
        for slot in range(4):                       # slots already in [i,f,o,g] order
            col = slot * hid_pad
            out = out.at[:rows, col:col + hidden].set(gates[slot])
        return out.astype(dtype)

    wih = assemble(wih_g, in_dim, in_pad, wih_dtype)      # bf16 MXU operand (f32 for enc1)
    whh = assemble(whh_g, hidden, hid_pad, jnp.bfloat16)  # bf16 MXU operand
    b = assemble(b_g, 1, 1, jnp.float32)                  # stays f32 (VPU add)
    return wih, whh, b


class RecurrentAutoencoderPallas:
    """Pallas port of RecurrentAutoencoder (enc_dec_ad=True path).

    Accepts (seq, n_features) like the original module, or a batched
    (B, seq, n_features) where each sample is processed independently."""

    def __init__(self, seq_len, n_features, embedding_dim=64, *, key, batch_tile=8):
        assert n_features == 1, "hidden_n.reshape((n_features, E)) requires n_features == 1"
        self.seq_len = seq_len
        self.n_features = n_features
        self.batch_tile = batch_tile
        E = embedding_dim
        H = 2 * embedding_dim
        Ep = _round_up(E, 128)       # lane-pad each gate to a full vreg
        Hp = _round_up(H, 128)

        keys = jax.random.split(key, 5)
        # Encoder: LSTM(n_features -> 2E), LSTM(2E -> E)
        self.enc1 = init_lstm_params(keys[0], n_features, H, n_features, Hp, jnp.float32)
        self.enc2 = init_lstm_params(keys[1], H, E, Hp, Ep, jnp.bfloat16)
        # Decoder: LSTM(E -> E), LSTM(E -> 2E), Linear(2E -> n_features)
        self.dec1 = init_lstm_params(keys[2], E, E, Ep, Ep, jnp.bfloat16)
        self.dec2 = init_lstm_params(keys[3], E, H, Ep, Hp, jnp.bfloat16)
        kl = 1.0 / math.sqrt(H)
        kw, kb = jax.random.split(keys[4])
        lw = jax.random.uniform(kw, (1, H), jnp.float32, -kl, kl)
        self.lin_w = jnp.zeros((1, Hp), jnp.float32).at[:, :H].set(lw)   # zero-padded lanes
        self.lin_b = jax.random.uniform(kb, (1, 1), jnp.float32, -kl, kl)

    def __call__(self, x):
        single = (x.ndim == 2)
        if single:
            x = x[None]
        x = x.reshape(x.shape[0], self.seq_len, self.n_features).astype(jnp.float32)
        y = autoencoder_forward(x, self.enc1, self.enc2, self.dec1, self.dec2,
                                self.lin_w, self.lin_b, batch_tile=self.batch_tile)
        return y[0] if single else y


if __name__ == "__main__":
    seq_len, n_features, embedding_dim = 8, 1, 32
    batch = 16                                   # 2 batch tiles of 8 -> grid=(2,), "parallel"
    key = jax.random.PRNGKey(0)
    kx, kp = jax.random.split(key)

    x = jax.random.normal(kx, (batch, seq_len, n_features), jnp.float32)
    model = RecurrentAutoencoderPallas(seq_len, n_features, embedding_dim, key=kp)

    y = jax.block_until_ready(model(x))
    assert y.shape == (batch, seq_len, n_features), y.shape
    assert bool(jnp.all(jnp.isfinite(y)))
    print("KERNEL_OK")
</pallas_src>

<mosaic_0001>
module attributes {stable_mosaic.version = 11 : i64} {
  func.func @fused_autoencoder_kernel(%arg0: i32, %arg1: memref<8x8x1xf32, #tpu.memory_space<vmem>>, %arg2: memref<1x512xf32, #tpu.memory_space<vmem>>, %arg3: memref<128x512xbf16, #tpu.memory_space<vmem>>, %arg4: memref<1x512xf32, #tpu.memory_space<vmem>>, %arg5: memref<128x512xbf16, #tpu.memory_space<vmem>>, %arg6: memref<128x512xbf16, #tpu.memory_space<vmem>>, %arg7: memref<1x512xf32, #tpu.memory_space<vmem>>, %arg8: memref<128x512xbf16, #tpu.memory_space<vmem>>, %arg9: memref<128x512xbf16, #tpu.memory_space<vmem>>, %arg10: memref<1x512xf32, #tpu.memory_space<vmem>>, %arg11: memref<128x512xbf16, #tpu.memory_space<vmem>>, %arg12: memref<128x512xbf16, #tpu.memory_space<vmem>>, %arg13: memref<1x512xf32, #tpu.memory_space<vmem>>, %arg14: memref<1x128xf32, #tpu.memory_space<vmem>>, %arg15: memref<1x1xf32, #tpu.memory_space<vmem>>, %arg16: memref<8x8x1xf32, #tpu.memory_space<vmem>>) attributes {dimension_semantics = [#tpu.dimension_semantics<parallel>], iteration_bounds = array<i64: 2>, scalar_prefetch = 0 : i64, scratch_operands = 0 : i64, tpu.core_type = #tpu.core_type<tc>, window_params = [{transform_indices = @transform_0, window_bounds = array<i64: 8, 8, 1>}, {pipeline_mode = #tpu.pipeline_mode<synchronous>, transform_indices = @transform_1, window_bounds = array<i64: 1, 512>}, {pipeline_mode = #tpu.pipeline_mode<synchronous>, transform_indices = @transform_2, window_bounds = array<i64: 128, 512>}, {pipeline_mode = #tpu.pipeline_mode<synchronous>, transform_indices = @transform_3, window_bounds = array<i64: 1, 512>}, {pipeline_mode = #tpu.pipeline_mode<synchronous>, transform_indices = @transform_4, window_bounds = array<i64: 128, 512>}, {pipeline_mode = #tpu.pipeline_mode<synchronous>, transform_indices = @transform_5, window_bounds = array<i64: 128, 512>}, {pipeline_mode = #tpu.pipeline_mode<synchronous>, transform_indices = @transform_6, window_bounds = array<i64: 1, 512>}, {pipeline_mode = #tpu.pipeline_mode<synchronous>, transform_indices = @transform_7, window_bounds = array<i64: 128, 512>}, {pipeline_mode = #tpu.pipeline_mode<synchronous>, transform_indices = @transform_8, window_bounds = array<i64: 128, 512>}, {pipeline_mode = #tpu.pipeline_mode<synchronous>, transform_indices = @transform_9, window_bounds = array<i64: 1, 512>}, {pipeline_mode = #tpu.pipeline_mode<synchronous>, transform_indices = @transform_10, window_bounds = array<i64: 128, 512>}, {pipeline_mode = #tpu.pipeline_mode<synchronous>, transform_indices = @transform_11, window_bounds = array<i64: 128, 512>}, {pipeline_mode = #tpu.pipeline_mode<synchronous>, transform_indices = @transform_12, window_bounds = array<i64: 1, 512>}, {pipeline_mode = #tpu.pipeline_mode<synchronous>, transform_indices = @transform_13, window_bounds = array<i64: 1, 128>}, {pipeline_mode = #tpu.pipeline_mode<synchronous>, transform_indices = @transform_14, window_bounds = array<i64: 1, 1>}, {transform_indices = @transform_15, window_bounds = array<i64: 8, 8, 1>}]} {
    %c0 = arith.constant 0 : index
    %c0_0 = arith.constant 0 : index
    %c0_1 = arith.constant 0 : index
    %0 = vector.load %arg1[%c0, %c0_0, %c0_1] : memref<8x8x1xf32, #tpu.memory_space<vmem>>, vector<1x8x1xf32>
    %1 = vector.shape_cast %0 : vector<1x8x1xf32> to vector<8x1xf32>
    %c0_2 = arith.constant 0 : index
    %c0_3 = arith.constant 0 : index
    %2 = vector.load %arg2[%c0_2, %c0_3] : memref<1x512xf32, #tpu.memory_space<vmem>>, vector<1x512xf32>
    %3 = vector.broadcast %1 : vector<8x1xf32> to vector<8x512xf32>
    %4 = vector.broadcast %2 : vector<1x512xf32> to vector<8x512xf32>
    %5 = arith.mulf %3, %4 : vector<8x512xf32>
    %c0_4 = arith.constant 0 : index
    %c0_5 = arith.constant 0 : index
    %6 = vector.load %arg4[%c0_4, %c0_5] : memref<1x512xf32, #tpu.memory_space<vmem>>, vector<1x512xf32>
    %7 = vector.broadcast %6 : vector<1x512xf32> to vector<8x512xf32>
    %8 = arith.addf %5, %7 : vector<8x512xf32>
    %c1 = arith.constant 1 : index
    %c0_6 = arith.constant 0 : index
    %c0_7 = arith.constant 0 : index
    %9 = vector.load %arg1[%c1, %c0_6, %c0_7] : memref<8x8x1xf32, #tpu.memory_space<vmem>>, vector<1x8x1xf32>
    %10 = vector.shape_cast %9 : vector<1x8x1xf32> to vector<8x1xf32>
    %c0_8 = arith.constant 0 : index
    %c0_9 = arith.constant 0 : index
    %11 = vector.load %arg2[%c0_8, %c0_9] : memref<1x512xf32, #tpu.memory_space<vmem>>, vector<1x512xf32>
    %12 = vector.broadcast %10 : vector<8x1xf32> to vector<8x512xf32>
    %13 = vector.broadcast %11 : vector<1x512xf32> to vector<8x512xf32>
    %14 = arith.mulf %12, %13 : vector<8x512xf32>
    %c0_10 = arith.constant 0 : index
    %c0_11 = arith.constant 0 : index
    %15 = vector.load %arg4[%c0_10, %c0_11] : memref<1x512xf32, #tpu.memory_space<vmem>>, vector<1x512xf32>
    %16 = vector.broadcast %15 : vector<1x512xf32> to vector<8x512xf32>
    %17 = arith.addf %14, %16 : vector<8x512xf32>
    %c2 = arith.constant 2 : index
    %c0_12 = arith.constant 0 : index
    %c0_13 = arith.constant 0 : index
    %18 = vector.load %arg1[%c2, %c0_12, %c0_13] : memref<8x8x1xf32, #tpu.memory_space<vmem>>, vector<1x8x1xf32>
    %19 = vector.shape_cast %18 : vector<1x8x1xf32> to vector<8x1xf32>
    %c0_14 = arith.constant 0 : index
    %c0_15 = arith.constant 0 : index
    %20 = vector.load %arg2[%c0_14, %c0_15] : memref<1x512xf32, #tpu.memory_space<vmem>>, vector<1x512xf32>
    %21 = vector.broadcast %19 : vector<8x1xf32> to vector<8x512xf32>
    %22 = vector.broadcast %20 : vector<1x512xf32> to vector<8x512xf32>
    %23 = arith.mulf %21, %22 : vector<8x512xf32>
    %c0_16 = arith.constant 0 : index
    %c0_17 = arith.constant 0 : index
    %24 = vector.load %arg4[%c0_16, %c0_17] : memref<1x512xf32, #tpu.memory_space<vmem>>, vector<1x512xf32>
    %25 = vector.broadcast %24 : vector<1x512xf32> to vector<8x512xf32>
    %26 = arith.addf %23, %25 : vector<8x512xf32>
    %c3 = arith.constant 3 : index
    %c0_18 = arith.constant 0 : index
    %c0_19 = arith.constant 0 : index
    %27 = vector.load %arg1[%c3, %c0_18, %c0_19] : memref<8x8x1xf32, #tpu.memory_space<vmem>>, vector<1x8x1xf32>
    %28 = vector.shape_cast %27 : vector<1x8x1xf32> to vector<8x1xf32>
    %c0_20 = arith.constant 0 : index
    %c0_21 = arith.constant 0 : index
    %29 = vector.load %arg2[%c0_20, %c0_21] : memref<1x512xf32, #tpu.memory_space<vmem>>, vector<1x512xf32>
    %30 = vector.broadcast %28 : vector<8x1xf32> to vector<8x512xf32>
    %31 = vector.broadcast %29 : vector<1x512xf32> to vector<8x512xf32>
    %32 = arith.mulf %30, %31 : vector<8x512xf32>
    %c0_22 = arith.constant 0 : index
    %c0_23 = arith.constant 0 : index
    %33 = vector.load %arg4[%c0_22, %c0_23] : memref<1x512xf32, #tpu.memory_space<vmem>>, vector<1x512xf32>
    %34 = vector.broadcast %33 : vector<1x512xf32> to vector<8x512xf32>
    %35 = arith.addf %32, %34 : vector<8x512xf32>
    %c4 = arith.constant 4 : index
    %c0_24 = arith.constant 0 : index
    %c0_25 = arith.constant 0 : index
    %36 = vector.load %arg1[%c4, %c0_24, %c0_25] : memref<8x8x1xf32, #tpu.memory_space<vmem>>, vector<1x8x1xf32>
    %37 = vector.shape_cast %36 : vector<1x8x1xf32> to vector<8x1xf32>
    %c0_26 = arith.constant 0 : index
    %c0_27 = arith.constant 0 : index
    %38 = vector.load %arg2[%c0_26, %c0_27] : memref<1x512xf32, #tpu.memory_space<vmem>>, vector<1x512xf32>
    %39 = vector.broadcast %37 : vector<8x1xf32> to vector<8x512xf32>
    %40 = vector.broadcast %38 : vector<1x512xf32> to vector<8x512xf32>
    %41 = arith.mulf %39, %40 : vector<8x512xf32>
    %c0_28 = arith.constant 0 : index
    %c0_29 = arith.constant 0 : index
    %42 = vector.load %arg4[%c0_28, %c0_29] : memref<1x512xf32, #tpu.memory_space<vmem>>, vector<1x512xf32>
    %43 = vector.broadcast %42 : vector<1x512xf32> to vector<8x512xf32>
    %44 = arith.addf %41, %43 : vector<8x512xf32>
    %c5 = arith.constant 5 : index
    %c0_30 = arith.constant 0 : index
    %c0_31 = arith.constant 0 : index
    %45 = vector.load %arg1[%c5, %c0_30, %c0_31] : memref<8x8x1xf32, #tpu.memory_space<vmem>>, vector<1x8x1xf32>
    %46 = vector.shape_cast %45 : vector<1x8x1xf32> to vector<8x1xf32>
    %c0_32 = arith.constant 0 : index
    %c0_33 = arith.constant 0 : index
    %47 = vector.load %arg2[%c0_32, %c0_33] : memref<1x512xf32, #tpu.memory_space<vmem>>, vector<1x512xf32>
    %48 = vector.broadcast %46 : vector<8x1xf32> to vector<8x512xf32>
    %49 = vector.broadcast %47 : vector<1x512xf32> to vector<8x512xf32>
    %50 = arith.mulf %48, %49 : vector<8x512xf32>
    %c0_34 = arith.constant 0 : index
    %c0_35 = arith.constant 0 : index
    %51 = vector.load %arg4[%c0_34, %c0_35] : memref<1x512xf32, #tpu.memory_space<vmem>>, vector<1x512xf32>
    %52 = vector.broadcast %51 : vector<1x512xf32> to vector<8x512xf32>
    %53 = arith.addf %50, %52 : vector<8x512xf32>
    %c6 = arith.constant 6 : index
    %c0_36 = arith.constant 0 : index
    %c0_37 = arith.constant 0 : index
    %54 = vector.load %arg1[%c6, %c0_36, %c0_37] : memref<8x8x1xf32, #tpu.memory_space<vmem>>, vector<1x8x1xf32>
    %55 = vector.shape_cast %54 : vector<1x8x1xf32> to vector<8x1xf32>
    %c0_38 = arith.constant 0 : index
    %c0_39 = arith.constant 0 : index
    %56 = vector.load %arg2[%c0_38, %c0_39] : memref<1x512xf32, #tpu.memory_space<vmem>>, vector<1x512xf32>
    %57 = vector.broadcast %55 : vector<8x1xf32> to vector<8x512xf32>
    %58 = vector.broadcast %56 : vector<1x512xf32> to vector<8x512xf32>
    %59 = arith.mulf %57, %58 : vector<8x512xf32>
    %c0_40 = arith.constant 0 : index
    %c0_41 = arith.constant 0 : index
    %60 = vector.load %arg4[%c0_40, %c0_41] : memref<1x512xf32, #tpu.memory_space<vmem>>, vector<1x512xf32>
    %61 = vector.broadcast %60 : vector<1x512xf32> to vector<8x512xf32>
    %62 = arith.addf %59, %61 : vector<8x512xf32>
    %c7 = arith.constant 7 : index
    %c0_42 = arith.constant 0 : index
    %c0_43 = arith.constant 0 : index
    %63 = vector.load %arg1[%c7, %c0_42, %c0_43] : memref<8x8x1xf32, #tpu.memory_space<vmem>>, vector<1x8x1xf32>
    %64 = vector.shape_cast %63 : vector<1x8x1xf32> to vector<8x1xf32>
    %c0_44 = arith.constant 0 : index
    %c0_45 = arith.constant 0 : index
    %65 = vector.load %arg2[%c0_44, %c0_45] : memref<1x512xf32, #tpu.memory_space<vmem>>, vector<1x512xf32>
    %66 = vector.broadcast %64 : vector<8x1xf32> to vector<8x512xf32>
    %67 = vector.broadcast %65 : vector<1x512xf32> to vector<8x512xf32>
    %68 = arith.mulf %66, %67 : vector<8x512xf32>
    %c0_46 = arith.constant 0 : index
    %c0_47 = arith.constant 0 : index
    %69 = vector.load %arg4[%c0_46, %c0_47] : memref<1x512xf32, #tpu.memory_space<vmem>>, vector<1x512xf32>
    %70 = vector.broadcast %69 : vector<1x512xf32> to vector<8x512xf32>
    %71 = arith.addf %68, %70 : vector<8x512xf32>
    %c0_48 = arith.constant 0 : index
    %c0_49 = arith.constant 0 : index
    %72 = vector.load %arg3[%c0_48, %c0_49] : memref<128x512xbf16, #tpu.memory_space<vmem>>, vector<128x512xbf16>
    %cst = arith.constant 0.000000e+00 : f32
    %73 = vector.broadcast %cst : f32 to vector<8x128xf32>
    %cst_50 = arith.constant 0.000000e+00 : f32
    %74 = vector.broadcast %cst_50 : f32 to vector<8x128xf32>
    %75 = arith.truncf %73 : vector<8x128xf32> to vector<8x128xbf16>
    %cst_51 = arith.constant dense<0.000000e+00> : vector<8x512xf32>
    %76 = tpu.matmul %75, %72, %cst_51 {dimension_numbers = #tpu.dot_dimension_numbers<[1], [0], [0], [1], [0, 0, 1, 1], [], []>} : vector<8x128xbf16>, vector<128x512xbf16>, vector<8x512xf32> -> vector<8x512xf32>
    %77 = arith.addf %8, %76 : vector<8x512xf32>
    %78 = vector.extract_strided_slice %77 {offsets = [0, 0], sizes = [8, 384], strides = [1, 1]} : vector<8x512xf32> to vector<8x384xf32>
    %cst_52 = arith.constant 0.000000e+00 : f32
    %79 = vector.broadcast %cst_52 : f32 to vector<8x384xf32>
    %80 = arith.subf %79, %78 : vector<8x384xf32>
    %81 = math.exp %80 : vector<8x384xf32>
    %cst_53 = arith.constant 1.000000e+00 : f32
    %82 = vector.broadcast %cst_53 : f32 to vector<8x384xf32>
    %83 = arith.addf %82, %81 : vector<8x384xf32>
    %84 = tpu.reciprocal %83 {approx = true} : vector<8x384xf32> -> vector<8x384xf32>
    %85 = vector.extract_strided_slice %84 {offsets = [0, 0], sizes = [8, 128], strides = [1, 1]} : vector<8x384xf32> to vector<8x128xf32>
    %86 = vector.extract_strided_slice %84 {offsets = [0, 128], sizes = [8, 128], strides = [1, 1]} : vector<8x384xf32> to vector<8x128xf32>
    %87 = vector.extract_strided_slice %84 {offsets = [0, 256], sizes = [8, 128], strides = [1, 1]} : vector<8x384xf32> to vector<8x128xf32>
    %88 = vector.extract_strided_slice %77 {offsets = [0, 384], sizes = [8, 128], strides = [1, 1]} : vector<8x512xf32> to vector<8x128xf32>
    %89 = math.tanh %88 : vector<8x128xf32>
    %90 = arith.mulf %86, %74 : vector<8x128xf32>
    %91 = arith.mulf %85, %89 : vector<8x128xf32>
    %92 = arith.addf %90, %91 : vector<8x128xf32>
    %93 = math.tanh %92 : vector<8x128xf32>
    %94 = arith.mulf %87, %93 : vector<8x128xf32>
    %95 = arith.truncf %94 : vector<8x128xf32> to vector<8x128xbf16>
    %cst_54 = arith.constant dense<0.000000e+00> : vector<8x512xf32>
    %96 = tpu.matmul %95, %72, %cst_54 {dimension_numbers = #tpu.dot_dimension_numbers<[1], [0], [0], [1], [0, 0, 1, 1], [], []>} : vector<8x128xbf16>, vector<128x512xbf16>, vector<8x512xf32> -> vector<8x512xf32>
    %97 = arith.addf %17, %96 : vector<8x512xf32>
    %98 = vector.extract_strided_slice %97 {offsets = [0, 0], sizes = [8, 384], strides = [1, 1]} : vector<8x512xf32> to vector<8x384xf32>
    %cst_55 = arith.constant 0.000000e+00 : f32
    %99 = vector.broadcast %cst_55 : f32 to vector<8x384xf32>
    %100 = arith.subf %99, %98 : vector<8x384xf32>
    %101 = math.exp %100 : vector<8x384xf32>
    %cst_56 = arith.constant 1.000000e+00 : f32
    %102 = vector.broadcast %cst_56 : f32 to vector<8x384xf32>
    %103 = arith.addf %102, %101 : vector<8x384xf32>
    %104 = tpu.reciprocal %103 {approx = true} : vector<8x384xf32> -> vector<8x384xf32>
    %105 = vector.extract_strided_slice %104 {offsets = [0, 0], sizes = [8, 128], strides = [1, 1]} : vector<8x384xf32> to vector<8x128xf32>
    %106 = vector.extract_strided_slice %104 {offsets = [0, 128], sizes = [8, 128], strides = [1, 1]} : vector<8x384xf32> to vector<8x128xf32>
    %107 = vector.extract_strided_slice %104 {offsets = [0, 256], sizes = [8, 128], strides = [1, 1]} : vector<8x384xf32> to vector<8x128xf32>
    %108 = vector.extract_strided_slice %97 {offsets = [0, 384], sizes = [8, 128], strides = [1, 1]} : vector<8x512xf32> to vector<8x128xf32>
    %109 = math.tanh %108 : vector<8x128xf32>
    %110 = arith.mulf %106, %92 : vector<8x128xf32>
    %111 = arith.mulf %105, %109 : vector<8x128xf32>
    %112 = arith.addf %110, %111 : vector<8x128xf32>
    %113 = math.tanh %112 : vector<8x128xf32>
    %114 = arith.mulf %107, %113 : vector<8x128xf32>
    %115 = arith.truncf %114 : vector<8x128xf32> to vector<8x128xbf16>
    %cst_57 = arith.constant dense<0.000000e+00> : vector<8x512xf32>
    %116 = tpu.matmul %115, %72, %cst_57 {dimension_numbers = #tpu.dot_dimension_numbers<[1], [0], [0], [1], [0, 0, 1, 1], [], []>} : vector<8x128xbf16>, vector<128x512xbf16>, vector<8x512xf32> -> vector<8x512xf32>
    %117 = arith.addf %26, %116 : vector<8x512xf32>
    %118 = vector.extract_strided_slice %117 {offsets = [0, 0], sizes = [8, 384], strides = [1, 1]} : vector<8x512xf32> to vector<8x384xf32>
    %cst_58 = arith.constant 0.000000e+00 : f32
    %119 = vector.broadcast %cst_58 : f32 to vector<8x384xf32>
    %120 = arith.subf %119, %118 : vector<8x384xf32>
    %121 = math.exp %120 : vector<8x384xf32>
    %cst_59 = arith.constant 1.000000e+00 : f32
    %122 = vector.broadcast %cst_59 : f32 to vector<8x384xf32>
    %123 = arith.addf %122, %121 : vector<8x384xf32>
    %124 = tpu.reciprocal %123 {approx = true} : vector<8x384xf32> -> vector<8x384xf32>
    %125 = vector.extract_strided_slice %124 {offsets = [0, 0], sizes = [8, 128], strides = [1, 1]} : vector<8x384xf32> to vector<8x128xf32>
    %126 = vector.extract_strided_slice %124 {offsets = [0, 128], sizes = [8, 128], strides = [1, 1]} : vector<8x384xf32> to vector<8x128xf32>
    %127 = vector.extract_strided_slice %124 {offsets = [0, 256], sizes = [8, 128], strides = [1, 1]} : vector<8x384xf32> to vector<8x128xf32>
    %128 = vector.extract_strided_slice %117 {offsets = [0, 384], sizes = [8, 128], strides = [1, 1]} : vector<8x512xf32> to vector<8x128xf32>
    %129 = math.tanh %128 : vector<8x128xf32>
    %130 = arith.mulf %126, %112 : vector<8x128xf32>
    %131 = arith.mulf %125, %129 : vector<8x128xf32>
    %132 = arith.addf %130, %131 : vector<8x128xf32>
    %133 = math.tanh %132 : vector<8x128xf32>
    %134 = arith.mulf %127, %133 : vector<8x128xf32>
    %135 = arith.truncf %134 : vector<8x128xf32> to vector<8x128xbf16>
    %cst_60 = arith.constant dense<0.000000e+00> : vector<8x512xf32>
    %136 = tpu.matmul %135, %72, %cst_60 {dimension_numbers = #tpu.dot_dimension_numbers<[1], [0], [0], [1], [0, 0, 1, 1], [], []>} : vector<8x128xbf16>, vector<128x512xbf16>, vector<8x512xf32> -> vector<8x512xf32>
    %137 = arith.addf %35, %136 : vector<8x512xf32>
    %138 = vector.extract_strided_slice %137 {offsets = [0, 0], sizes = [8, 384], strides = [1, 1]} : vector<8x512xf32> to vector<8x384xf32>
    %cst_61 = arith.constant 0.000000e+00 : f32
    %139 = vector.broadcast %cst_61 : f32 to vector<8x384xf32>
    %140 = arith.subf %139, %138 : vector<8x384xf32>
    %141 = math.exp %140 : vector<8x384xf32>
    %cst_62 = arith.constant 1.000000e+00 : f32
    %142 = vector.broadcast %cst_62 : f32 to vector<8x384xf32>
    %143 = arith.addf %142, %141 : vector<8x384xf32>
    %144 = tpu.reciprocal %143 {approx = true} : vector<8x384xf32> -> vector<8x384xf32>
    %145 = vector.extract_strided_slice %144 {offsets = [0, 0], sizes = [8, 128], strides = [1, 1]} : vector<8x384xf32> to vector<8x128xf32>
    %146 = vector.extract_strided_slice %144 {offsets = [0, 128], sizes = [8, 128], strides = [1, 1]} : vector<8x384xf32> to vector<8x128xf32>
    %147 = vector.extract_strided_slice %144 {offsets = [0, 256], sizes = [8, 128], strides = [1, 1]} : vector<8x384xf32> to vector<8x128xf32>
    %148 = vector.extract_strided_slice %137 {offsets = [0, 384], sizes = [8, 128], strides = [1, 1]} : vector<8x512xf32> to vector<8x128xf32>
    %149 = math.tanh %148 : vector<8x128xf32>
    %150 = arith.mulf %146, %132 : vector<8x128xf32>
    %151 = arith.mulf %145, %149 : vector<8x128xf32>
    %152 = arith.addf %150, %151 : vector<8x128xf32>
    %153 = math.tanh %152 : vector<8x128xf32>
    %154 = arith.mulf %147, %153 : vector<8x128xf32>
    %155 = arith.truncf %154 : vector<8x128xf32> to vector<8x128xbf16>
    %cst_63 = arith.constant dense<0.000000e+00> : vector<8x512xf32>
    %156 = tpu.matmul %155, %72, %cst_63 {dimension_numbers = #tpu.dot_dimension_numbers<[1], [0], [0], [1], [0, 0, 1, 1], [], []>} : vector<8x128xbf16>, vector<128x512xbf16>, vector<8x512xf32> -> vector<8x512xf32>
    %157 = arith.addf %44, %156 : vector<8x512xf32>
    %158 = vector.extract_strided_slice %157 {offsets = [0, 0], sizes = [8, 384], strides = [1, 1]} : vector<8x512xf32> to vector<8x384xf32>
    %cst_64 = arith.constant 0.000000e+00 : f32
    %159 = vector.broadcast %cst_64 : f32 to vector<8x384xf32>
    %160 = arith.subf %159, %158 : vector<8x384xf32>
    %161 = math.exp %160 : vector<8x384xf32>
    %cst_65 = arith.constant 1.000000e+00 : f32
    %162 = vector.broadcast %cst_65 : f32 to vector<8x384xf32>
    %163 = arith.addf %162, %161 : vector<8x384xf32>
    %164 = tpu.reciprocal %163 {approx = true} : vector<8x384xf32> -> vector<8x384xf32>
    %165 = vector.extract_strided_slice %164 {offsets = [0, 0], sizes = [8, 128], strides = [1, 1]} : vector<8x384xf32> to vector<8x128xf32>
    %166 = vector.extract_strided_slice %164 {offsets = [0, 128], sizes = [8, 128], strides = [1, 1]} : vector<8x384xf32> to vector<8x128xf32>
    %167 = vector.extract_strided_slice %164 {offsets = [0, 256], sizes = [8, 128], strides = [1, 1]} : vector<8x384xf32> to vector<8x128xf32>
    %168 = vector.extract_strided_slice %157 {offsets = [0, 384], sizes = [8, 128], strides = [1, 1]} : vector<8x512xf32> to vector<8x128xf32>
    %169 = math.tanh %168 : vector<8x128xf32>
    %170 = arith.mulf %166, %152 : vector<8x128xf32>
    %171 = arith.mulf %165, %169 : vector<8x128xf32>
    %172 = arith.addf %170, %171 : vector<8x128xf32>
    %173 = math.tanh %172 : vector<8x128xf32>
    %174 = arith.mulf %167, %173 : vector<8x128xf32>
    %175 = arith.truncf %174 : vector<8x128xf32> to vector<8x128xbf16>
    %cst_66 = arith.constant dense<0.000000e+00> : vector<8x512xf32>
    %176 = tpu.matmul %175, %72, %cst_66 {dimension_numbers = #tpu.dot_dimension_numbers<[1], [0], [0], [1], [0, 0, 1, 1], [], []>} : vector<8x128xbf16>, vector<128x512xbf16>, vector<8x512xf32> -> vector<8x512xf32>
    %177 = arith.addf %53, %176 : vector<8x512xf32>
    %178 = vector.extract_strided_slice %177 {offsets = [0, 0], sizes = [8, 384], strides = [1, 1]} : vector<8x512xf32> to vector<8x384xf32>
    %cst_67 = arith.constant 0.000000e+00 : f32
    %179 = vector.broadcast %cst_67 : f32 to vector<8x384xf32>
    %180 = arith.subf %179, %178 : vector<8x384xf32>
    %181 = math.exp %180 : vector<8x384xf32>
    %cst_68 = arith.constant 1.000000e+00 : f32
    %182 = vector.broadcast %cst_68 : f32 to vector<8x384xf32>
    %183 = arith.addf %182, %181 : vector<8x384xf32>
    %184 = tpu.reciprocal %183 {approx = true} : vector<8x384xf32> -> vector<8x384xf32>
    %185 = vector.extract_strided_slice %184 {offsets = [0, 0], sizes = [8, 128], strides = [1, 1]} : vector<8x384xf32> to vector<8x128xf32>
    %186 = vector.extract_strided_slice %184 {offsets = [0, 128], sizes = [8, 128], strides = [1, 1]} : vector<8x384xf32> to vector<8x128xf32>
    %187 = vector.extract_strided_slice %184 {offsets = [0, 256], sizes = [8, 128], strides = [1, 1]} : vector<8x384xf32> to vector<8x128xf32>
    %188 = vector.extract_strided_slice %177 {offsets = [0, 384], sizes = [8, 128], strides = [1, 1]} : vector<8x512xf32> to vector<8x128xf32>
    %189 = math.tanh %188 : vector<8x128xf32>
    %190 = arith.mulf %186, %172 : vector<8x128xf32>
    %191 = arith.mulf %185, %189 : vector<8x128xf32>
    %192 = arith.addf %190, %191 : vector<8x128xf32>
    %193 = math.tanh %192 : vector<8x128xf32>
    %194 = arith.mulf %187, %193 : vector<8x128xf32>
    %195 = arith.truncf %194 : vector<8x128xf32> to vector<8x128xbf16>
    %cst_69 = arith.constant dense<0.000000e+00> : vector<8x512xf32>
    %196 = tpu.matmul %195, %72, %cst_69 {dimension_numbers = #tpu.dot_dimension_numbers<[1], [0], [0], [1], [0, 0, 1, 1], [], []>} : vector<8x128xbf16>, vector<128x512xbf16>, vector<8x512xf32> -> vector<8x512xf32>
    %197 = arith.addf %62, %196 : vector<8x512xf32>
    %198 = vector.extract_strided_slice %197 {offsets = [0, 0], sizes = [8, 384], strides = [1, 1]} : vector<8x512xf32> to vector<8x384xf32>
    %cst_70 = arith.constant 0.000000e+00 : f32
    %199 = vector.broadcast %cst_70 : f32 to vector<8x384xf32>
    %200 = arith.subf %199, %198 : vector<8x384xf32>
    %201 = math.exp %200 : vector<8x384xf32>
    %cst_71 = arith.constant 1.000000e+00 : f32
    %202 = vector.broadcast %cst_71 : f32 to vector<8x384xf32>
    %203 = arith.addf %202, %201 : vector<8x384xf32>
    %204 = tpu.reciprocal %203 {approx = true} : vector<8x384xf32> -> vector<8x384xf32>
    %205 = vector.extract_strided_slice %204 {offsets = [0, 0], sizes = [8, 128], strides = [1, 1]} : vector<8x384xf32> to vector<8x128xf32>
    %206 = vector.extract_strided_slice %204 {offsets = [0, 128], sizes = [8, 128], strides = [1, 1]} : vector<8x384xf32> to vector<8x128xf32>
    %207 = vector.extract_strided_slice %204 {offsets = [0, 256], sizes = [8, 128], strides = [1, 1]} : vector<8x384xf32> to vector<8x128xf32>
    %208 = vector.extract_strided_slice %197 {offsets = [0, 384], sizes = [8, 128], strides = [1, 1]} : vector<8x512xf32> to vector<8x128xf32>
    %209 = math.tanh %208 : vector<8x128xf32>
    %210 = arith.mulf %206, %192 : vector<8x128xf32>
    %211 = arith.mulf %205, %209 : vector<8x128xf32>
    %212 = arith.addf %210, %211 : vector<8x128xf32>
    %213 = math.tanh %212 : vector<8x128xf32>
    %214 = arith.mulf %207, %213 : vector<8x128xf32>
    %215 = arith.truncf %214 : vector<8x128xf32> to vector<8x128xbf16>
    %cst_72 = arith.constant dense<0.000000e+00> : vector<8x512xf32>
    %216 = tpu.matmul %215, %72, %cst_72 {dimension_numbers = #tpu.dot_dimension_numbers<[1], [0], [0], [1], [0, 0, 1, 1], [], []>} : vector<8x128xbf16>, vector<128x512xbf16>, vector<8x512xf32> -> vector<8x512xf32>
    %217 = arith.addf %71, %216 : vector<8x512xf32>
    %218 = vector.extract_strided_slice %217 {offsets = [0, 0], sizes = [8, 384], strides = [1, 1]} : vector<8x512xf32> to vector<8x384xf32>
    %cst_73 = arith.constant 0.000000e+00 : f32
    %219 = vector.broadcast %cst_73 : f32 to vector<8x384xf32>
    %220 = arith.subf %219, %218 : vector<8x384xf32>
    %221 = math.exp %220 : vector<8x384xf32>
    %cst_74 = arith.constant 1.000000e+00 : f32
    %222 = vector.broadcast %cst_74 : f32 to vector<8x384xf32>
    %223 = arith.addf %222, %221 : vector<8x384xf32>
    %224 = tpu.reciprocal %223 {approx = true} : vector<8x384xf32> -> vector<8x384xf32>
    %225 = vector.extract_strided_slice %224 {offsets = [0, 0], sizes = [8, 128], strides = [1, 1]} : vector<8x384xf32> to vector<8x128xf32>
    %226 = vector.extract_strided_slice %224 {offsets = [0, 128], sizes = [8, 128], strides = [1, 1]} : vector<8x384xf32> to vector<8x128xf32>
    %227 = vector.extract_strided_slice %224 {offsets = [0, 256], sizes = [8, 128], strides = [1, 1]} : vector<8x384xf32> to vector<8x128xf32>
    %228 = vector.extract_strided_slice %217 {offsets = [0, 384], sizes = [8, 128], strides = [1, 1]} : vector<8x512xf32> to vector<8x128xf32>
    %229 = math.tanh %228 : vector<8x128xf32>
    %230 = arith.mulf %226, %212 : vector<8x128xf32>
    %231 = arith.mulf %225, %229 : vector<8x128xf32>
    %232 = arith.addf %230, %231 : vector<8x128xf32>
    %233 = math.tanh %232 : vector<8x128xf32>
    %234 = arith.mulf %227, %233 : vector<8x128xf32>
    %235 = tpu.concatenate %94, %114, %134, %154, %174, %194, %214, %234 in 0 : vector<8x128xf32>, vector<8x128xf32>, vector<8x128xf32>, vector<8x128xf32>, vector<8x128xf32>, vector<8x128xf32>, vector<8x128xf32>, vector<8x128xf32> -> vector<64x128xf32>
    %236 = arith.truncf %235 : vector<64x128xf32> to vector<64x128xbf16>
    %c0_75 = arith.constant 0 : index
    %c0_76 = arith.constant 0 : index
    %237 = vector.load %arg5[%c0_75, %c0_76] : memref<128x512xbf16, #tpu.memory_space<vmem>>, vector<128x512xbf16>
    %cst_77 = arith.constant dense<0.000000e+00> : vector<64x512xf32>
    %238 = tpu.matmul %236, %237, %cst_77 {dimension_numbers = #tpu.dot_dimension_numbers<[1], [0], [0], [1], [0, 0, 1, 1], [], []>} : vector<64x128xbf16>, vector<128x512xbf16>, vector<64x512xf32> -> vector<64x512xf32>
    %c0_78 = arith.constant 0 : index
    %c0_79 = arith.constant 0 : index
    %239 = vector.load %arg7[%c0_78, %c0_79] : memref<1x512xf32, #tpu.memory_space<vmem>>, vector<1x512xf32>
    %240 = vector.broadcast %239 : vector<1x512xf32> to vector<64x512xf32>
    %241 = arith.addf %238, %240 : vector<64x512xf32>
    %242 = vector.extract_strided_slice %241 {offsets = [0, 0], sizes = [8, 512], strides = [1, 1]} : vector<64x512xf32> to vector<8x512xf32>
    %243 = vector.extract_strided_slice %241 {offsets = [8, 0], sizes = [8, 512], strides = [1, 1]} : vector<64x512xf32> to vector<8x512xf32>
    %244 = vector.extract_strided_slice %241 {offsets = [16, 0], sizes = [8, 512], strides = [1, 1]} : vector<64x512xf32> to vector<8x512xf32>
    %245 = vector.extract_strided_slice %241 {offsets = [24, 0], sizes = [8, 512], strides = [1, 1]} : vector<64x512xf32> to vector<8x512xf32>
    %246 = vector.extract_strided_slice %241 {offsets = [32, 0], sizes = [8, 512], strides = [1, 1]} : vector<64x512xf32> to vector<8x512xf32>
    %247 = vector.extract_strided_slice %241 {offsets = [40, 0], sizes = [8, 512], strides = [1, 1]} : vector<64x512xf32> to vector<8x512xf32>
    %248 = vector.extract_strided_slice %241 {offsets = [48, 0], sizes = [8, 512], strides = [1, 1]} : vector<64x512xf32> to vector<8x512xf32>
    %249 = vector.extract_strided_slice %241 {offsets = [56, 0], sizes = [8, 512], strides = [1, 1]} : vector<64x512xf32> to vector<8x512xf32>
    %c0_80 = arith.constant 0 : index
    %c0_81 = arith.constant 0 : index
    %250 = vector.load %arg6[%c0_80, %c0_81] : memref<128x512xbf16, #tpu.memory_space<vmem>>, vector<128x512xbf16>
    %cst_82 = arith.constant 0.000000e+00 : f32
    %251 = vector.broadcast %cst_82 : f32 to vector<8x128xf32>
    %cst_83 = arith.constant 0.000000e+00 : f32
    %252 = vector.broadcast %cst_83 : f32 to vector<8x128xf32>
    %253 = arith.truncf %251 : vector<8x128xf32> to vector<8x128xbf16>
    %cst_84 = arith.constant dense<0.000000e+00> : vector<8x512xf32>
    %254 = tpu.matmul %253, %250, %cst_84 {dimension_numbers = #tpu.dot_dimension_numbers<[1], [0], [0], [1], [0, 0, 1, 1], [], []>} : vector<8x128xbf16>, vector<128x512xbf16>, vector<8x512xf32> -> vector<8x512xf32>
    %255 = arith.addf %242, %254 : vector<8x512xf32>
    %256 = vector.extract_strided_slice %255 {offsets = [0, 0], sizes = [8, 384], strides = [1, 1]} : vector<8x512xf32> to vector<8x384xf32>
    %cst_85 = arith.constant 0.000000e+00 : f32
    %257 = vector.broadcast %cst_85 : f32 to vector<8x384xf32>
    %258 = arith.subf %257, %256 : vector<8x384xf32>
    %259 = math.exp %258 : vector<8x384xf32>
    %cst_86 = arith.constant 1.000000e+00 : f32
    %260 = vector.broadcast %cst_86 : f32 to vector<8x384xf32>
    %261 = arith.addf %260, %259 : vector<8x384xf32>
    %262 = tpu.reciprocal %261 {approx = true} : vector<8x384xf32> -> vector<8x384xf32>
    %263 = vector.extract_strided_slice %262 {offsets = [0, 0], sizes = [8, 128], strides = [1, 1]} : vector<8x384xf32> to vector<8x128xf32>
    %264 = vector.extract_strided_slice %262 {offsets = [0, 128], sizes = [8, 128], strides = [1, 1]} : vector<8x384xf32> to vector<8x128xf32>
    %265 = vector.extract_strided_slice %262 {offsets = [0, 256], sizes = [8, 128], strides = [1, 1]} : vector<8x384xf32> to vector<8x128xf32>
    %266 = vector.extract_strided_slice %255 {offsets = [0, 384], sizes = [8, 128], strides = [1, 1]} : vector<8x512xf32> to vector<8x128xf32>
    %267 = math.tanh %266 : vector<8x128xf32>
    %268 = arith.mulf %264, %252 : vector<8x128xf32>
    %269 = arith.mulf %263, %267 : vector<8x128xf32>
    %270 = arith.addf %268, %269 : vector<8x128xf32>
    %271 = math.tanh %270 : vector<8x128xf32>
    %272 = arith.mulf %265, %271 : vector<8x128xf32>
    %273 = arith.truncf %272 : vector<8x128xf32> to vector<8x128xbf16>
    %cst_87 = arith.constant dense<0.000000e+00> : vector<8x512xf32>
    %274 = tpu.matmul %273, %250, %cst_87 {dimension_numbers = #tpu.dot_dimension_numbers<[1], [0], [0], [1], [0, 0, 1, 1], [], []>} : vector<8x128xbf16>, vector<128x512xbf16>, vector<8x512xf32> -> vector<8x512xf32>
    %275 = arith.addf %243, %274 : vector<8x512xf32>
    %276 = vector.extract_strided_slice %275 {offsets = [0, 0], sizes = [8, 384], strides = [1, 1]} : vector<8x512xf32> to vector<8x384xf32>
    %cst_88 = arith.constant 0.000000e+00 : f32
    %277 = vector.broadcast %cst_88 : f32 to vector<8x384xf32>
    %278 = arith.subf %277, %276 : vector<8x384xf32>
    %279 = math.exp %278 : vector<8x384xf32>
    %cst_89 = arith.constant 1.000000e+00 : f32
    %280 = vector.broadcast %cst_89 : f32 to vector<8x384xf32>
    %281 = arith.addf %280, %279 : vector<8x384xf32>
    %282 = tpu.reciprocal %281 {approx = true} : vector<8x384xf32> -> vector<8x384xf32>
    %283 = vector.extract_strided_slice %282 {offsets = [0, 0], sizes = [8, 128], strides = [1, 1]} : vector<8x384xf32> to vector<8x128xf32>
    %284 = vector.extract_strided_slice %282 {offsets = [0, 128], sizes = [8, 128], strides = [1, 1]} : vector<8x384xf32> to vector<8x128xf32>
    %285 = vector.extract_strided_slice %282 {offsets = [0, 256], sizes = [8, 128], strides = [1, 1]} : vector<8x384xf32> to vector<8x128xf32>
    %286 = vector.extract_strided_slice %275 {offsets = [0, 384], sizes = [8, 128], strides = [1, 1]} : vector<8x512xf32> to vector<8x128xf32>
    %287 = math.tanh %286 : vector<8x128xf32>
    %288 = arith.mulf %284, %270 : vector<8x128xf32>
    %289 = arith.mulf %283, %287 : vector<8x128xf32>
    %290 = arith.addf %288, %289 : vector<8x128xf32>
    %291 = math.tanh %290 : vector<8x128xf32>
    %292 = arith.mulf %285, %291 : vector<8x128xf32>
    %293 = arith.truncf %292 : vector<8x128xf32> to vector<8x128xbf16>
    %cst_90 = arith.constant dense<0.000000e+00> : vector<8x512xf32>
    %294 = tpu.matmul %293, %250, %cst_90 {dimension_numbers = #tpu.dot_dimension_numbers<[1], [0], [0], [1], [0, 0, 1, 1], [], []>} : vector<8x128xbf16>, vector<128x512xbf16>, vector<8x512xf32> -> vector<8x512xf32>
    %295 = arith.addf %244, %294 : vector<8x512xf32>
    %296 = vector.extract_strided_slice %295 {offsets = [0, 0], sizes = [8, 384], strides = [1, 1]} : vector<8x512xf32> to vector<8x384xf32>
    %cst_91 = arith.constant 0.000000e+00 : f32
    %297 = vector.broadcast %cst_91 : f32 to vector<8x384xf32>
    %298 = arith.subf %297, %296 : vector<8x384xf32>
    %299 = math.exp %298 : vector<8x384xf32>
    %cst_92 = arith.constant 1.000000e+00 : f32
    %300 = vector.broadcast %cst_92 : f32 to vector<8x384xf32>
    %301 = arith.addf %300, %299 : vector<8x384xf32>
    %302 = tpu.reciprocal %301 {approx = true} : vector<8x384xf32> -> vector<8x384xf32>
    %303 = vector.extract_strided_slice %302 {offsets = [0, 0], sizes = [8, 128], strides = [1, 1]} : vector<8x384xf32> to vector<8x128xf32>
    %304 = vector.extract_strided_slice %302 {offsets = [0, 128], sizes = [8, 128], strides = [1, 1]} : vector<8x384xf32> to vector<8x128xf32>
    %305 = vector.extract_strided_slice %302 {offsets = [0, 256], sizes = [8, 128], strides = [1, 1]} : vector<8x384xf32> to vector<8x128xf32>
    %306 = vector.extract_strided_slice %295 {offsets = [0, 384], sizes = [8, 128], strides = [1, 1]} : vector<8x512xf32> to vector<8x128xf32>
    %307 = math.tanh %306 : vector<8x128xf32>
    %308 = arith.mulf %304, %290 : vector<8x128xf32>
    %309 = arith.mulf %303, %307 : vector<8x128xf32>
    %310 = arith.addf %308, %309 : vector<8x128xf32>
    %311 = math.tanh %310 : vector<8x128xf32>
    %312 = arith.mulf %305, %311 : vector<8x128xf32>
    %313 = arith.truncf %312 : vector<8x128xf32> to vector<8x128xbf16>
    %cst_93 = arith.constant dense<0.000000e+00> : vector<8x512xf32>
    %314 = tpu.matmul %313, %250, %cst_93 {dimension_numbers = #tpu.dot_dimension_numbers<[1], [0], [0], [1], [0, 0, 1, 1], [], []>} : vector<8x128xbf16>, vector<128x512xbf16>, vector<8x512xf32> -> vector<8x512xf32>
    %315 = arith.addf %245, %314 : vector<8x512xf32>
    %316 = vector.extract_strided_slice %315 {offsets = [0, 0], sizes = [8, 384], strides = [1, 1]} : vector<8x512xf32> to vector<8x384xf32>
    %cst_94 = arith.constant 0.000000e+00 : f32
    %317 = vector.broadcast %cst_94 : f32 to vector<8x384xf32>
    %318 = arith.subf %317, %316 : vector<8x384xf32>
    %319 = math.exp %318 : vector<8x384xf32>
    %cst_95 = arith.constant 1.000000e+00 : f32
    %320 = vector.broadcast %cst_95 : f32 to vector<8x384xf32>
    %321 = arith.addf %320, %319 : vector<8x384xf32>
    %322 = tpu.reciprocal %321 {approx = true} : vector<8x384xf32> -> vector<8x384xf32>
    %323 = vector.extract_strided_slice %322 {offsets = [0, 0], sizes = [8, 128], strides = [1, 1]} : vector<8x384xf32> to vector<8x128xf32>
    %324 = vector.extract_strided_slice %322 {offsets = [0, 128], sizes = [8, 128], strides = [1, 1]} : vector<8x384xf32> to vector<8x128xf32>
    %325 = vector.extract_strided_slice %322 {offsets = [0, 256], sizes = [8, 128], strides = [1, 1]} : vector<8x384xf32> to vector<8x128xf32>
    %326 = vector.extract_strided_slice %315 {offsets = [0, 384], sizes = [8, 128], strides = [1, 1]} : vector<8x512xf32> to vector<8x128xf32>
    %327 = math.tanh %326 : vector<8x128xf32>
    %328 = arith.mulf %324, %310 : vector<8x128xf32>
    %329 = arith.mulf %323, %327 : vector<8x128xf32>
    %330 = arith.addf %328, %329 : vector<8x128xf32>
    %331 = math.tanh %330 : vector<8x128xf32>
    %332 = arith.mulf %325, %331 : vector<8x128xf32>
    %333 = arith.truncf %332 : vector<8x128xf32> to vector<8x128xbf16>
    %cst_96 = arith.constant dense<0.000000e+00> : vector<8x512xf32>
    %334 = tpu.matmul %333, %250, %cst_96 {dimension_numbers = #tpu.dot_dimension_numbers<[1], [0], [0], [1], [0, 0, 1, 1], [], []>} : vector<8x128xbf16>, vector<128x512xbf16>, vector<8x512xf32> -> vector<8x512xf32>
    %335 = arith.addf %246, %334 : vector<8x512xf32>
    %336 = vector.extract_strided_slice %335 {offsets = [0, 0], sizes = [8, 384], strides = [1, 1]} : vector<8x512xf32> to vector<8x384xf32>
    %cst_97 = arith.constant 0.000000e+00 : f32
    %337 = vector.broadcast %cst_97 : f32 to vector<8x384xf32>
    %338 = arith.subf %337, %336 : vector<8x384xf32>
    %339 = math.exp %338 : vector<8x384xf32>
    %cst_98 = arith.constant 1.000000e+00 : f32
    %340 = vector.broadcast %cst_98 : f32 to vector<8x384xf32>
    %341 = arith.addf %340, %339 : vector<8x384xf32>
    %342 = tpu.reciprocal %341 {approx = true} : vector<8x384xf32> -> vector<8x384xf32>
    %343 = vector.extract_strided_slice %342 {offsets = [0, 0], sizes = [8, 128], strides = [1, 1]} : vector<8x384xf32> to vector<8x128xf32>
    %344 = vector.extract_strided_slice %342 {offsets = [0, 128], sizes = [8, 128], strides = [1, 1]} : vector<8x384xf32> to vector<8x128xf32>
    %345 = vector.extract_strided_slice %342 {offsets = [0, 256], sizes = [8, 128], strides = [1, 1]} : vector<8x384xf32> to vector<8x128xf32>
    %346 = vector.extract_strided_slice %335 {offsets = [0, 384], sizes = [8, 128], strides = [1, 1]} : vector<8x512xf32> to vector<8x128xf32>
    %347 = math.tanh %346 : vector<8x128xf32>
    %348 = arith.mulf %344, %330 : vector<8x128xf32>
    %349 = arith.mulf %343, %347 : vector<8x128xf32>
    %350 = arith.addf %348, %349 : vector<8x128xf32>
    %351 = math.tanh %350 : vector<8x128xf32>
    %352 = arith.mulf %345, %351 : vector<8x128xf32>
    %353 = arith.truncf %352 : vector<8x128xf32> to vector<8x128xbf16>
    %cst_99 = arith.constant dense<0.000000e+00> : vector<8x512xf32>
    %354 = tpu.matmul %353, %250, %cst_99 {dimension_numbers = #tpu.dot_dimension_numbers<[1], [0], [0], [1], [0, 0, 1, 1], [], []>} : vector<8x128xbf16>, vector<128x512xbf16>, vector<8x512xf32> -> vector<8x512xf32>
    %355 = arith.addf %247, %354 : vector<8x512xf32>
    %356 = vector.extract_strided_slice %355 {offsets = [0, 0], sizes = [8, 384], strides = [1, 1]} : vector<8x512xf32> to vector<8x384xf32>
    %cst_100 = arith.constant 0.000000e+00 : f32
    %357 = vector.broadcast %cst_100 : f32 to vector<8x384xf32>
    %358 = arith.subf %357, %356 : vector<8x384xf32>
    %359 = math.exp %358 : vector<8x384xf32>
    %cst_101 = arith.constant 1.000000e+00 : f32
    %360 = vector.broadcast %cst_101 : f32 to vector<8x384xf32>
    %361 = arith.addf %360, %359 : vector<8x384xf32>
    %362 = tpu.reciprocal %361 {approx = true} : vector<8x384xf32> -> vector<8x384xf32>
    %363 = vector.extract_strided_slice %362 {offsets = [0, 0], sizes = [8, 128], strides = [1, 1]} : vector<8x384xf32> to vector<8x128xf32>
    %364 = vector.extract_strided_slice %362 {offsets = [0, 128], sizes = [8, 128], strides = [1, 1]} : vector<8x384xf32> to vector<8x128xf32>
    %365 = vector.extract_strided_slice %362 {offsets = [0, 256], sizes = [8, 128], strides = [1, 1]} : vector<8x384xf32> to vector<8x128xf32>
    %366 = vector.extract_strided_slice %355 {offsets = [0, 384], sizes = [8, 128], strides = [1, 1]} : vector<8x512xf32> to vector<8x128xf32>
    %367 = math.tanh %366 : vector<8x128xf32>
    %368 = arith.mulf %364, %350 : vector<8x128xf32>
    %369 = arith.mulf %363, %367 : vector<8x128xf32>
    %370 = arith.addf %368, %369 : vector<8x128xf32>
    %371 = math.tanh %370 : vector<8x128xf32>
    %372 = arith.mulf %365, %371 : vector<8x128xf32>
    %373 = arith.truncf %372 : vector<8x128xf32> to vector<8x128xbf16>
    %cst_102 = arith.constant dense<0.000000e+00> : vector<8x512xf32>
    %374 = tpu.matmul %373, %250, %cst_102 {dimension_numbers = #tpu.dot_dimension_numbers<[1], [0], [0], [1], [0, 0, 1, 1], [], []>} : vector<8x128xbf16>, vector<128x512xbf16>, vector<8x512xf32> -> vector<8x512xf32>
    %375 = arith.addf %248, %374 : vector<8x512xf32>
    %376 = vector.extract_strided_slice %375 {offsets = [0, 0], sizes = [8, 384], strides = [1, 1]} : vector<8x512xf32> to vector<8x384xf32>
    %cst_103 = arith.constant 0.000000e+00 : f32
    %377 = vector.broadcast %cst_103 : f32 to vector<8x384xf32>
    %378 = arith.subf %377, %376 : vector<8x384xf32>
    %379 = math.exp %378 : vector<8x384xf32>
    %cst_104 = arith.constant 1.000000e+00 : f32
    %380 = vector.broadcast %cst_104 : f32 to vector<8x384xf32>
    %381 = arith.addf %380, %379 : vector<8x384xf32>
    %382 = tpu.reciprocal %381 {approx = true} : vector<8x384xf32> -> vector<8x384xf32>
    %383 = vector.extract_strided_slice %382 {offsets = [0, 0], sizes = [8, 128], strides = [1, 1]} : vector<8x384xf32> to vector<8x128xf32>
    %384 = vector.extract_strided_slice %382 {offsets = [0, 128], sizes = [8, 128], strides = [1, 1]} : vector<8x384xf32> to vector<8x128xf32>
    %385 = vector.extract_strided_slice %382 {offsets = [0, 256], sizes = [8, 128], strides = [1, 1]} : vector<8x384xf32> to vector<8x128xf32>
    %386 = vector.extract_strided_slice %375 {offsets = [0, 384], sizes = [8, 128], strides = [1, 1]} : vector<8x512xf32> to vector<8x128xf32>
    %387 = math.tanh %386 : vector<8x128xf32>
    %388 = arith.mulf %384, %370 : vector<8x128xf32>
    %389 = arith.mulf %383, %387 : vector<8x128xf32>
    %390 = arith.addf %388, %389 : vector<8x128xf32>
    %391 = math.tanh %390 : vector<8x128xf32>
    %392 = arith.mulf %385, %391 : vector<8x128xf32>
    %393 = arith.truncf %392 : vector<8x128xf32> to vector<8x128xbf16>
    %cst_105 = arith.constant dense<0.000000e+00> : vector<8x512xf32>
    %394 = tpu.matmul %393, %250, %cst_105 {dimension_numbers = #tpu.dot_dimension_numbers<[1], [0], [0], [1], [0, 0, 1, 1], [], []>} : vector<8x128xbf16>, vector<128x512xbf16>, vector<8x512xf32> -> vector<8x512xf32>
    %395 = arith.addf %249, %394 : vector<8x512xf32>
    %396 = vector.extract_strided_slice %395 {offsets = [0, 0], sizes = [8, 384], strides = [1, 1]} : vector<8x512xf32> to vector<8x384xf32>
    %cst_106 = arith.constant 0.000000e+00 : f32
    %397 = vector.broadcast %cst_106 : f32 to vector<8x384xf32>
    %398 = arith.subf %397, %396 : vector<8x384xf32>
    %399 = math.exp %398 : vector<8x384xf32>
    %cst_107 = arith.constant 1.000000e+00 : f32
    %400 = vector.broadcast %cst_107 : f32 to vector<8x384xf32>
    %401 = arith.addf %400, %399 : vector<8x384xf32>
    %402 = tpu.reciprocal %401 {approx = true} : vector<8x384xf32> -> vector<8x384xf32>
    %403 = vector.extract_strided_slice %402 {offsets = [0, 0], sizes = [8, 128], strides = [1, 1]} : vector<8x384xf32> to vector<8x128xf32>
    %404 = vector.extract_strided_slice %402 {offsets = [0, 128], sizes = [8, 128], strides = [1, 1]} : vector<8x384xf32> to vector<8x128xf32>
    %405 = vector.extract_strided_slice %402 {offsets = [0, 256], sizes = [8, 128], strides = [1, 1]} : vector<8x384xf32> to vector<8x128xf32>
    %406 = vector.extract_strided_slice %395 {offsets = [0, 384], sizes = [8, 128], strides = [1, 1]} : vector<8x512xf32> to vector<8x128xf32>
    %407 = math.tanh %406 : vector<8x128xf32>
    %408 = arith.mulf %404, %390 : vector<8x128xf32>
    %409 = arith.mulf %403, %407 : vector<8x128xf32>
    %410 = arith.addf %408, %409 : vector<8x128xf32>
    %411 = math.tanh %410 : vector<8x128xf32>
    %412 = arith.mulf %405, %411 : vector<8x128xf32>
    %413 = arith.truncf %412 : vector<8x128xf32> to vector<8x128xbf16>
    %c0_108 = arith.constant 0 : index
    %c0_109 = arith.constant 0 : index
    %414 = vector.load %arg8[%c0_108, %c0_109] : memref<128x512xbf16, #tpu.memory_space<vmem>>, vector<128x512xbf16>
    %cst_110 = arith.constant dense<0.000000e+00> : vector<8x512xf32>
    %415 = tpu.matmul %413, %414, %cst_110 {dimension_numbers = #tpu.dot_dimension_numbers<[1], [0], [0], [1], [0, 0, 1, 1], [], []>} : vector<8x128xbf16>, vector<128x512xbf16>, vector<8x512xf32> -> vector<8x512xf32>
    %c0_111 = arith.constant 0 : index
    %c0_112 = arith.constant 0 : index
    %416 = vector.load %arg10[%c0_111, %c0_112] : memref<1x512xf32, #tpu.memory_space<vmem>>, vector<1x512xf32>
    %417 = vector.broadcast %416 : vector<1x512xf32> to vector<8x512xf32>
    %418 = arith.addf %415, %417 : vector<8x512xf32>
    %c0_113 = arith.constant 0 : index
    %c0_114 = arith.constant 0 : index
    %419 = vector.load %arg9[%c0_113, %c0_114] : memref<128x512xbf16, #tpu.memory_space<vmem>>, vector<128x512xbf16>
    %cst_115 = arith.constant 0.000000e+00 : f32
    %420 = vector.broadcast %cst_115 : f32 to vector<8x128xf32>
    %cst_116 = arith.constant 0.000000e+00 : f32
    %421 = vector.broadcast %cst_116 : f32 to vector<8x128xf32>
    %422 = arith.truncf %420 : vector<8x128xf32> to vector<8x128xbf16>
    %cst_117 = arith.constant dense<0.000000e+00> : vector<8x512xf32>
    %423 = tpu.matmul %422, %419, %cst_117 {dimension_numbers = #tpu.dot_dimension_numbers<[1], [0], [0], [1], [0, 0, 1, 1], [], []>} : vector<8x128xbf16>, vector<128x512xbf16>, vector<8x512xf32> -> vector<8x512xf32>
    %424 = arith.addf %418, %423 : vector<8x512xf32>
    %425 = vector.extract_strided_slice %424 {offsets = [0, 0], sizes = [8, 384], strides = [1, 1]} : vector<8x512xf32> to vector<8x384xf32>
    %cst_118 = arith.constant 0.000000e+00 : f32
    %426 = vector.broadcast %cst_118 : f32 to vector<8x384xf32>
    %427 = arith.subf %426, %425 : vector<8x384xf32>
    %428 = math.exp %427 : vector<8x384xf32>
    %cst_119 = arith.constant 1.000000e+00 : f32
    %429 = vector.broadcast %cst_119 : f32 to vector<8x384xf32>
    %430 = arith.addf %429, %428 : vector<8x384xf32>
    %431 = tpu.reciprocal %430 {approx = true} : vector<8x384xf32> -> vector<8x384xf32>
    %432 = vector.extract_strided_slice %431 {offsets = [0, 0], sizes = [8, 128], strides = [1, 1]} : vector<8x384xf32> to vector<8x128xf32>
    %433 = vector.extract_strided_slice %431 {offsets = [0, 128], sizes = [8, 128], strides = [1, 1]} : vector<8x384xf32> to vector<8x128xf32>
    %434 = vector.extract_strided_slice %431 {offsets = [0, 256], sizes = [8, 128], strides = [1, 1]} : vector<8x384xf32> to vector<8x128xf32>
    %435 = vector.extract_strided_slice %424 {offsets = [0, 384], sizes = [8, 128], strides = [1, 1]} : vector<8x512xf32> to vector<8x128xf32>
    %436 = math.tanh %435 : vector<8x128xf32>
    %437 = arith.mulf %433, %421 : vector<8x128xf32>
    %438 = arith.mulf %432, %436 : vector<8x128xf32>
    %439 = arith.addf %437, %438 : vector<8x128xf32>
    %440 = math.tanh %439 : vector<8x128xf32>
    %441 = arith.mulf %434, %440 : vector<8x128xf32>
    %442 = arith.truncf %441 : vector<8x128xf32> to vector<8x128xbf16>
    %cst_120 = arith.constant dense<0.000000e+00> : vector<8x512xf32>
    %443 = tpu.matmul %442, %419, %cst_120 {dimension_numbers = #tpu.dot_dimension_numbers<[1], [0], [0], [1], [0, 0, 1, 1], [], []>} : vector<8x128xbf16>, vector<128x512xbf16>, vector<8x512xf32> -> vector<8x512xf32>
    %444 = arith.addf %418, %443 : vector<8x512xf32>
    %445 = vector.extract_strided_slice %444 {offsets = [0, 0], sizes = [8, 384], strides = [1, 1]} : vector<8x512xf32> to vector<8x384xf32>
    %cst_121 = arith.constant 0.000000e+00 : f32
    %446 = vector.broadcast %cst_121 : f32 to vector<8x384xf32>
    %447 = arith.subf %446, %445 : vector<8x384xf32>
    %448 = math.exp %447 : vector<8x384xf32>
    %cst_122 = arith.constant 1.000000e+00 : f32
    %449 = vector.broadcast %cst_122 : f32 to vector<8x384xf32>
    %450 = arith.addf %449, %448 : vector<8x384xf32>
    %451 = tpu.reciprocal %450 {approx = true} : vector<8x384xf32> -> vector<8x384xf32>
    %452 = vector.extract_strided_slice %451 {offsets = [0, 0], sizes = [8, 128], strides = [1, 1]} : vector<8x384xf32> to vector<8x128xf32>
    %453 = vector.extract_strided_slice %451 {offsets = [0, 128], sizes = [8, 128], strides = [1, 1]} : vector<8x384xf32> to vector<8x128xf32>
    %454 = vector.extract_strided_slice %451 {offsets = [0, 256], sizes = [8, 128], strides = [1, 1]} : vector<8x384xf32> to vector<8x128xf32>
    %455 = vector.extract_strided_slice %444 {offsets = [0, 384], sizes = [8, 128], strides = [1, 1]} : vector<8x512xf32> to vector<8x128xf32>
    %456 = math.tanh %455 : vector<8x128xf32>
    %457 = arith.mulf %453, %439 : vector<8x128xf32>
    %458 = arith.mulf %452, %456 : vector<8x128xf32>
    %459 = arith.addf %457, %458 : vector<8x128xf32>
    %460 = math.tanh %459 : vector<8x128xf32>
    %461 = arith.mulf %454, %460 : vector<8x128xf32>
    %462 = arith.truncf %461 : vector<8x128xf32> to vector<8x128xbf16>
    %cst_123 = arith.constant dense<0.000000e+00> : vector<8x512xf32>
    %463 = tpu.matmul %462, %419, %cst_123 {dimension_numbers = #tpu.dot_dimension_numbers<[1], [0], [0], [1], [0, 0, 1, 1], [], []>} : vector<8x128xbf16>, vector<128x512xbf16>, vector<8x512xf32> -> vector<8x512xf32>
    %464 = arith.addf %418, %463 : vector<8x512xf32>
    %465 = vector.extract_strided_slice %464 {offsets = [0, 0], sizes = [8, 384], strides = [1, 1]} : vector<8x512xf32> to vector<8x384xf32>
    %cst_124 = arith.constant 0.000000e+00 : f32
    %466 = vector.broadcast %cst_124 : f32 to vector<8x384xf32>
    %467 = arith.subf %466, %465 : vector<8x384xf32>
    %468 = math.exp %467 : vector<8x384xf32>
    %cst_125 = arith.constant 1.000000e+00 : f32
    %469 = vector.broadcast %cst_125 : f32 to vector<8x384xf32>
    %470 = arith.addf %469, %468 : vector<8x384xf32>
    %471 = tpu.reciprocal %470 {approx = true} : vector<8x384xf32> -> vector<8x384xf32>
    %472 = vector.extract_strided_slice %471 {offsets = [0, 0], sizes = [8, 128], strides = [1, 1]} : vector<8x384xf32> to vector<8x128xf32>
    %473 = vector.extract_strided_slice %471 {offsets = [0, 128], sizes = [8, 128], strides = [1, 1]} : vector<8x384xf32> to vector<8x128xf32>
    %474 = vector.extract_strided_slice %471 {offsets = [0, 256], sizes = [8, 128], strides = [1, 1]} : vector<8x384xf32> to vector<8x128xf32>
    %475 = vector.extract_strided_slice %464 {offsets = [0, 384], sizes = [8, 128], strides = [1, 1]} : vector<8x512xf32> to vector<8x128xf32>
    %476 = math.tanh %475 : vector<8x128xf32>
    %477 = arith.mulf %473, %459 : vector<8x128xf32>
    %478 = arith.mulf %472, %476 : vector<8x128xf32>
    %479 = arith.addf %477, %478 : vector<8x128xf32>
    %480 = math.tanh %479 : vector<8x128xf32>
    %481 = arith.mulf %474, %480 : vector<8x128xf32>
    %482 = arith.truncf %481 : vector<8x128xf32> to vector<8x128xbf16>
    %cst_126 = arith.constant dense<0.000000e+00> : vector<8x512xf32>
    %483 = tpu.matmul %482, %419, %cst_126 {dimension_numbers = #tpu.dot_dimension_numbers<[1], [0], [0], [1], [0, 0, 1, 1], [], []>} : vector<8x128xbf16>, vector<128x512xbf16>, vector<8x512xf32> -> vector<8x512xf32>
    %484 = arith.addf %418, %483 : vector<8x512xf32>
    %485 = vector.extract_strided_slice %484 {offsets = [0, 0], sizes = [8, 384], strides = [1, 1]} : vector<8x512xf32> to vector<8x384xf32>
    %cst_127 = arith.constant 0.000000e+00 : f32
    %486 = vector.broadcast %cst_127 : f32 to vector<8x384xf32>
    %487 = arith.subf %486, %485 : vector<8x384xf32>
    %488 = math.exp %487 : vector<8x384xf32>
    %cst_128 = arith.constant 1.000000e+00 : f32
    %489 = vector.broadcast %cst_128 : f32 to vector<8x384xf32>
    %490 = arith.addf %489, %488 : vector<8x384xf32>
    %491 = tpu.reciprocal %490 {approx = true} : vector<8x384xf32> -> vector<8x384xf32>
    %492 = vector.extract_strided_slice %491 {offsets = [0, 0], sizes = [8, 128], strides = [1, 1]} : vector<8x384xf32> to vector<8x128xf32>
    %493 = vector.extract_strided_slice %491 {offsets = [0, 128], sizes = [8, 128], strides = [1, 1]} : vector<8x384xf32> to vector<8x128xf32>
    %494 = vector.extract_strided_slice %491 {offsets = [0, 256], sizes = [8, 128], strides = [1, 1]} : vector<8x384xf32> to vector<8x128xf32>
    %495 = vector.extract_strided_slice %484 {offsets = [0, 384], sizes = [8, 128], strides = [1, 1]} : vector<8x512xf32> to vector<8x128xf32>
    %496 = math.tanh %495 : vector<8x128xf32>
    %497 = arith.mulf %493, %479 : vector<8x128xf32>
    %498 = arith.mulf %492, %496 : vector<8x128xf32>
    %499 = arith.addf %497, %498 : vector<8x128xf32>
    %500 = math.tanh %499 : vector<8x128xf32>
    %501 = arith.mulf %494, %500 : vector<8x128xf32>
    %502 = arith.truncf %501 : vector<8x128xf32> to vector<8x128xbf16>
    %cst_129 = arith.constant dense<0.000000e+00> : vector<8x512xf32>
    %503 = tpu.matmul %502, %419, %cst_129 {dimension_numbers = #tpu.dot_dimension_numbers<[1], [0], [0], [1], [0, 0, 1, 1], [], []>} : vector<8x128xbf16>, vector<128x512xbf16>, vector<8x512xf32> -> vector<8x512xf32>
    %504 = arith.addf %418, %503 : vector<8x512xf32>
    %505 = vector.extract_strided_slice %504 {offsets = [0, 0], sizes = [8, 384], strides = [1, 1]} : vector<8x512xf32> to vector<8x384xf32>
    %cst_130 = arith.constant 0.000000e+00 : f32
    %506 = vector.broadcast %cst_130 : f32 to vector<8x384xf32>
    %507 = arith.subf %506, %505 : vector<8x384xf32>
    %508 = math.exp %507 : vector<8x384xf32>
    %cst_131 = arith.constant 1.000000e+00 : f32
    %509 = vector.broadcast %cst_131 : f32 to vector<8x384xf32>
    %510 = arith.addf %509, %508 : vector<8x384xf32>
    %511 = tpu.reciprocal %510 {approx = true} : vector<8x384xf32> -> vector<8x384xf32>
    %512 = vector.extract_strided_slice %511 {offsets = [0, 0], sizes = [8, 128], strides = [1, 1]} : vector<8x384xf32> to vector<8x128xf32>
    %513 = vector.extract_strided_slice %511 {offsets = [0, 128], sizes = [8, 128], strides = [1, 1]} : vector<8x384xf32> to vector<8x128xf32>
    %514 = vector.extract_strided_slice %511 {offsets = [0, 256], sizes = [8, 128], strides = [1, 1]} : vector<8x384xf32> to vector<8x128xf32>
    %515 = vector.extract_strided_slice %504 {offsets = [0, 384], sizes = [8, 128], strides = [1, 1]} : vector<8x512xf32> to vector<8x128xf32>
    %516 = math.tanh %515 : vector<8x128xf32>
    %517 = arith.mulf %513, %499 : vector<8x128xf32>
    %518 = arith.mulf %512, %516 : vector<8x128xf32>
    %519 = arith.addf %517, %518 : vector<8x128xf32>
    %520 = math.tanh %519 : vector<8x128xf32>
    %521 = arith.mulf %514, %520 : vector<8x128xf32>
    %522 = arith.truncf %521 : vector<8x128xf32> to vector<8x128xbf16>
    %cst_132 = arith.constant dense<0.000000e+00> : vector<8x512xf32>
    %523 = tpu.matmul %522, %419, %cst_132 {dimension_numbers = #tpu.dot_dimension_numbers<[1], [0], [0], [1], [0, 0, 1, 1], [], []>} : vector<8x128xbf16>, vector<128x512xbf16>, vector<8x512xf32> -> vector<8x512xf32>
    %524 = arith.addf %418, %523 : vector<8x512xf32>
    %525 = vector.extract_strided_slice %524 {offsets = [0, 0], sizes = [8, 384], strides = [1, 1]} : vector<8x512xf32> to vector<8x384xf32>
    %cst_133 = arith.constant 0.000000e+00 : f32
    %526 = vector.broadcast %cst_133 : f32 to vector<8x384xf32>
    %527 = arith.subf %526, %525 : vector<8x384xf32>
    %528 = math.exp %527 : vector<8x384xf32>
    %cst_134 = arith.constant 1.000000e+00 : f32
    %529 = vector.broadcast %cst_134 : f32 to vector<8x384xf32>
    %530 = arith.addf %529, %528 : vector<8x384xf32>
    %531 = tpu.reciprocal %530 {approx = true} : vector<8x384xf32> -> vector<8x384xf32>
    %532 = vector.extract_strided_slice %531 {offsets = [0, 0], sizes = [8, 128], strides = [1, 1]} : vector<8x384xf32> to vector<8x128xf32>
    %533 = vector.extract_strided_slice %531 {offsets = [0, 128], sizes = [8, 128], strides = [1, 1]} : vector<8x384xf32> to vector<8x128xf32>
    %534 = vector.extract_strided_slice %531 {offsets = [0, 256], sizes = [8, 128], strides = [1, 1]} : vector<8x384xf32> to vector<8x128xf32>
    %535 = vector.extract_strided_slice %524 {offsets = [0, 384], sizes = [8, 128], strides = [1, 1]} : vector<8x512xf32> to vector<8x128xf32>
    %536 = math.tanh %535 : vector<8x128xf32>
    %537 = arith.mulf %533, %519 : vector<8x128xf32>
    %538 = arith.mulf %532, %536 : vector<8x128xf32>
    %539 = arith.addf %537, %538 : vector<8x128xf32>
    %540 = math.tanh %539 : vector<8x128xf32>
    %541 = arith.mulf %534, %540 : vector<8x128xf32>
    %542 = arith.truncf %541 : vector<8x128xf32> to vector<8x128xbf16>
    %cst_135 = arith.constant dense<0.000000e+00> : vector<8x512xf32>
    %543 = tpu.matmul %542, %419, %cst_135 {dimension_numbers = #tpu.dot_dimension_numbers<[1], [0], [0], [1], [0, 0, 1, 1], [], []>} : vector<8x128xbf16>, vector<128x512xbf16>, vector<8x512xf32> -> vector<8x512xf32>
    %544 = arith.addf %418, %543 : vector<8x512xf32>
    %545 = vector.extract_strided_slice %544 {offsets = [0, 0], sizes = [8, 384], strides = [1, 1]} : vector<8x512xf32> to vector<8x384xf32>
    %cst_136 = arith.constant 0.000000e+00 : f32
    %546 = vector.broadcast %cst_136 : f32 to vector<8x384xf32>
    %547 = arith.subf %546, %545 : vector<8x384xf32>
    %548 = math.exp %547 : vector<8x384xf32>
    %cst_137 = arith.constant 1.000000e+00 : f32
    %549 = vector.broadcast %cst_137 : f32 to vector<8x384xf32>
    %550 = arith.addf %549, %548 : vector<8x384xf32>
    %551 = tpu.reciprocal %550 {approx = true} : vector<8x384xf32> -> vector<8x384xf32>
    %552 = vector.extract_strided_slice %551 {offsets = [0, 0], sizes = [8, 128], strides = [1, 1]} : vector<8x384xf32> to vector<8x128xf32>
    %553 = vector.extract_strided_slice %551 {offsets = [0, 128], sizes = [8, 128], strides = [1, 1]} : vector<8x384xf32> to vector<8x128xf32>
    %554 = vector.extract_strided_slice %551 {offsets = [0, 256], sizes = [8, 128], strides = [1, 1]} : vector<8x384xf32> to vector<8x128xf32>
    %555 = vector.extract_strided_slice %544 {offsets = [0, 384], sizes = [8, 128], strides = [1, 1]} : vector<8x512xf32> to vector<8x128xf32>
    %556 = math.tanh %555 : vector<8x128xf32>
    %557 = arith.mulf %553, %539 : vector<8x128xf32>
    %558 = arith.mulf %552, %556 : vector<8x128xf32>
    %559 = arith.addf %557, %558 : vector<8x128xf32>
    %560 = math.tanh %559 : vector<8x128xf32>
    %561 = arith.mulf %554, %560 : vector<8x128xf32>
    %562 = arith.truncf %561 : vector<8x128xf32> to vector<8x128xbf16>
    %cst_138 = arith.constant dense<0.000000e+00> : vector<8x512xf32>
    %563 = tpu.matmul %562, %419, %cst_138 {dimension_numbers = #tpu.dot_dimension_numbers<[1], [0], [0], [1], [0, 0, 1, 1], [], []>} : vector<8x128xbf16>, vector<128x512xbf16>, vector<8x512xf32> -> vector<8x512xf32>
    %564 = arith.addf %418, %563 : vector<8x512xf32>
    %565 = vector.extract_strided_slice %564 {offsets = [0, 0], sizes = [8, 384], strides = [1, 1]} : vector<8x512xf32> to vector<8x384xf32>
    %cst_139 = arith.constant 0.000000e+00 : f32
    %566 = vector.broadcast %cst_139 : f32 to vector<8x384xf32>
    %567 = arith.subf %566, %565 : vector<8x384xf32>
    %568 = math.exp %567 : vector<8x384xf32>
    %cst_140 = arith.constant 1.000000e+00 : f32
    %569 = vector.broadcast %cst_140 : f32 to vector<8x384xf32>
    %570 = arith.addf %569, %568 : vector<8x384xf32>
    %571 = tpu.reciprocal %570 {approx = true} : vector<8x384xf32> -> vector<8x384xf32>
    %572 = vector.extract_strided_slice %571 {offsets = [0, 0], sizes = [8, 128], strides = [1, 1]} : vector<8x384xf32> to vector<8x128xf32>
    %573 = vector.extract_strided_slice %571 {offsets = [0, 128], sizes = [8, 128], strides = [1, 1]} : vector<8x384xf32> to vector<8x128xf32>
    %574 = vector.extract_strided_slice %571 {offsets = [0, 256], sizes = [8, 128], strides = [1, 1]} : vector<8x384xf32> to vector<8x128xf32>
    %575 = vector.extract_strided_slice %564 {offsets = [0, 384], sizes = [8, 128], strides = [1, 1]} : vector<8x512xf32> to vector<8x128xf32>
    %576 = math.tanh %575 : vector<8x128xf32>
    %577 = arith.mulf %573, %559 : vector<8x128xf32>
    %578 = arith.mulf %572, %576 : vector<8x128xf32>
    %579 = arith.addf %577, %578 : vector<8x128xf32>
    %580 = math.tanh %579 : vector<8x128xf32>
    %581 = arith.mulf %574, %580 : vector<8x128xf32>
    %582 = tpu.concatenate %441, %461, %481, %501, %521, %541, %561, %581 in 0 : vector<8x128xf32>, vector<8x128xf32>, vector<8x128xf32>, vector<8x128xf32>, vector<8x128xf32>, vector<8x128xf32>, vector<8x128xf32>, vector<8x128xf32> -> vector<64x128xf32>
    %583 = arith.truncf %582 : vector<64x128xf32> to vector<64x128xbf16>
    %c0_141 = arith.constant 0 : index
    %c0_142 = arith.constant 0 : index
    %584 = vector.load %arg11[%c0_141, %c0_142] : memref<128x512xbf16, #tpu.memory_space<vmem>>, vector<128x512xbf16>
    %cst_143 = arith.constant dense<0.000000e+00> : vector<64x512xf32>
    %585 = tpu.matmul %583, %584, %cst_143 {dimension_numbers = #tpu.dot_dimension_numbers<[1], [0], [0], [1], [0, 0, 1, 1], [], []>} : vector<64x128xbf16>, vector<128x512xbf16>, vector<64x512xf32> -> vector<64x512xf32>
    %c0_144 = arith.constant 0 : index
    %c0_145 = arith.constant 0 : index
    %586 = vector.load %arg13[%c0_144, %c0_145] : memref<1x512xf32, #tpu.memory_space<vmem>>, vector<1x512xf32>
    %587 = vector.broadcast %586 : vector<1x512xf32> to vector<64x512xf32>
    %588 = arith.addf %585, %587 : vector<64x512xf32>
    %589 = vector.extract_strided_slice %588 {offsets = [0, 0], sizes = [8, 512], strides = [1, 1]} : vector<64x512xf32> to vector<8x512xf32>
    %590 = vector.extract_strided_slice %588 {offsets = [8, 0], sizes = [8, 512], strides = [1, 1]} : vector<64x512xf32> to vector<8x512xf32>
    %591 = vector.extract_strided_slice %588 {offsets = [16, 0], sizes = [8, 512], strides = [1, 1]} : vector<64x512xf32> to vector<8x512xf32>
    %592 = vector.extract_strided_slice %588 {offsets = [24, 0], sizes = [8, 512], strides = [1, 1]} : vector<64x512xf32> to vector<8x512xf32>
    %593 = vector.extract_strided_slice %588 {offsets = [32, 0], sizes = [8, 512], strides = [1, 1]} : vector<64x512xf32> to vector<8x512xf32>
    %594 = vector.extract_strided_slice %588 {offsets = [40, 0], sizes = [8, 512], strides = [1, 1]} : vector<64x512xf32> to vector<8x512xf32>
    %595 = vector.extract_strided_slice %588 {offsets = [48, 0], sizes = [8, 512], strides = [1, 1]} : vector<64x512xf32> to vector<8x512xf32>
    %596 = vector.extract_strided_slice %588 {offsets = [56, 0], sizes = [8, 512], strides = [1, 1]} : vector<64x512xf32> to vector<8x512xf32>
    %c0_146 = arith.constant 0 : index
    %c0_147 = arith.constant 0 : index
    %597 = vector.load %arg12[%c0_146, %c0_147] : memref<128x512xbf16, #tpu.memory_space<vmem>>, vector<128x512xbf16>
    %cst_148 = arith.constant 0.000000e+00 : f32
    %598 = vector.broadcast %cst_148 : f32 to vector<8x128xf32>
    %cst_149 = arith.constant 0.000000e+00 : f32
    %599 = vector.broadcast %cst_149 : f32 to vector<8x128xf32>
    %600 = arith.truncf %598 : vector<8x128xf32> to vector<8x128xbf16>
    %cst_150 = arith.constant dense<0.000000e+00> : vector<8x512xf32>
    %601 = tpu.matmul %600, %597, %cst_150 {dimension_numbers = #tpu.dot_dimension_numbers<[1], [0], [0], [1], [0, 0, 1, 1], [], []>} : vector<8x128xbf16>, vector<128x512xbf16>, vector<8x512xf32> -> vector<8x512xf32>
    %602 = arith.addf %589, %601 : vector<8x512xf32>
    %603 = vector.extract_strided_slice %602 {offsets = [0, 0], sizes = [8, 384], strides = [1, 1]} : vector<8x512xf32> to vector<8x384xf32>
    %cst_151 = arith.constant 0.000000e+00 : f32
    %604 = vector.broadcast %cst_151 : f32 to vector<8x384xf32>
    %605 = arith.subf %604, %603 : vector<8x384xf32>
    %606 = math.exp %605 : vector<8x384xf32>
    %cst_152 = arith.constant 1.000000e+00 : f32
    %607 = vector.broadcast %cst_152 : f32 to vector<8x384xf32>
    %608 = arith.addf %607, %606 : vector<8x384xf32>
    %609 = tpu.reciprocal %608 {approx = true} : vector<8x384xf32> -> vector<8x384xf32>
    %610 = vector.extract_strided_slice %609 {offsets = [0, 0], sizes = [8, 128], strides = [1, 1]} : vector<8x384xf32> to vector<8x128xf32>
    %611 = vector.extract_strided_slice %609 {offsets = [0, 128], sizes = [8, 128], strides = [1, 1]} : vector<8x384xf32> to vector<8x128xf32>
    %612 = vector.extract_strided_slice %609 {offsets = [0, 256], sizes = [8, 128], strides = [1, 1]} : vector<8x384xf32> to vector<8x128xf32>
    %613 = vector.extract_strided_slice %602 {offsets = [0, 384], sizes = [8, 128], strides = [1, 1]} : vector<8x512xf32> to vector<8x128xf32>
    %614 = math.tanh %613 : vector<8x128xf32>
    %615 = arith.mulf %611, %599 : vector<8x128xf32>
    %616 = arith.mulf %610, %614 : vector<8x128xf32>
    %617 = arith.addf %615, %616 : vector<8x128xf32>
    %618 = math.tanh %617 : vector<8x128xf32>
    %619 = arith.mulf %612, %618 : vector<8x128xf32>
    %620 = arith.truncf %619 : vector<8x128xf32> to vector<8x128xbf16>
    %cst_153 = arith.constant dense<0.000000e+00> : vector<8x512xf32>
    %621 = tpu.matmul %620, %597, %cst_153 {dimension_numbers = #tpu.dot_dimension_numbers<[1], [0], [0], [1], [0, 0, 1, 1], [], []>} : vector<8x128xbf16>, vector<128x512xbf16>, vector<8x512xf32> -> vector<8x512xf32>
    %622 = arith.addf %590, %621 : vector<8x512xf32>
    %623 = vector.extract_strided_slice %622 {offsets = [0, 0], sizes = [8, 384], strides = [1, 1]} : vector<8x512xf32> to vector<8x384xf32>
    %cst_154 = arith.constant 0.000000e+00 : f32
    %624 = vector.broadcast %cst_154 : f32 to vector<8x384xf32>
    %625 = arith.subf %624, %623 : vector<8x384xf32>
    %626 = math.exp %625 : vector<8x384xf32>
    %cst_155 = arith.constant 1.000000e+00 : f32
    %627 = vector.broadcast %cst_155 : f32 to vector<8x384xf32>
    %628 = arith.addf %627, %626 : vector<8x384xf32>
    %629 = tpu.reciprocal %628 {approx = true} : vector<8x384xf32> -> vector<8x384xf32>
    %630 = vector.extract_strided_slice %629 {offsets = [0, 0], sizes = [8, 128], strides = [1, 1]} : vector<8x384xf32> to vector<8x128xf32>
    %631 = vector.extract_strided_slice %629 {offsets = [0, 128], sizes = [8, 128], strides = [1, 1]} : vector<8x384xf32> to vector<8x128xf32>
    %632 = vector.extract_strided_slice %629 {offsets = [0, 256], sizes = [8, 128], strides = [1, 1]} : vector<8x384xf32> to vector<8x128xf32>
    %633 = vector.extract_strided_slice %622 {offsets = [0, 384], sizes = [8, 128], strides = [1, 1]} : vector<8x512xf32> to vector<8x128xf32>
    %634 = math.tanh %633 : vector<8x128xf32>
    %635 = arith.mulf %631, %617 : vector<8x128xf32>
    %636 = arith.mulf %630, %634 : vector<8x128xf32>
    %637 = arith.addf %635, %636 : vector<8x128xf32>
    %638 = math.tanh %637 : vector<8x128xf32>
    %639 = arith.mulf %632, %638 : vector<8x128xf32>
    %640 = arith.truncf %639 : vector<8x128xf32> to vector<8x128xbf16>
    %cst_156 = arith.constant dense<0.000000e+00> : vector<8x512xf32>
    %641 = tpu.matmul %640, %597, %cst_156 {dimension_numbers = #tpu.dot_dimension_numbers<[1], [0], [0], [1], [0, 0, 1, 1], [], []>} : vector<8x128xbf16>, vector<128x512xbf16>, vector<8x512xf32> -> vector<8x512xf32>
    %642 = arith.addf %591, %641 : vector<8x512xf32>
    %643 = vector.extract_strided_slice %642 {offsets = [0, 0], sizes = [8, 384], strides = [1, 1]} : vector<8x512xf32> to vector<8x384xf32>
    %cst_157 = arith.constant 0.000000e+00 : f32
    %644 = vector.broadcast %cst_157 : f32 to vector<8x384xf32>
    %645 = arith.subf %644, %643 : vector<8x384xf32>
    %646 = math.exp %645 : vector<8x384xf32>
    %cst_158 = arith.constant 1.000000e+00 : f32
    %647 = vector.broadcast %cst_158 : f32 to vector<8x384xf32>
    %648 = arith.addf %647, %646 : vector<8x384xf32>
    %649 = tpu.reciprocal %648 {approx = true} : vector<8x384xf32> -> vector<8x384xf32>
    %650 = vector.extract_strided_slice %649 {offsets = [0, 0], sizes = [8, 128], strides = [1, 1]} : vector<8x384xf32> to vector<8x128xf32>
    %651 = vector.extract_strided_slice %649 {offsets = [0, 128], sizes = [8, 128], strides = [1, 1]} : vector<8x384xf32> to vector<8x128xf32>
    %652 = vector.extract_strided_slice %649 {offsets = [0, 256], sizes = [8, 128], strides = [1, 1]} : vector<8x384xf32> to vector<8x128xf32>
    %653 = vector.extract_strided_slice %642 {offsets = [0, 384], sizes = [8, 128], strides = [1, 1]} : vector<8x512xf32> to vector<8x128xf32>
    %654 = math.tanh %653 : vector<8x128xf32>
    %655 = arith.mulf %651, %637 : vector<8x128xf32>
    %656 = arith.mulf %650, %654 : vector<8x128xf32>
    %657 = arith.addf %655, %656 : vector<8x128xf32>
    %658 = math.tanh %657 : vector<8x128xf32>
    %659 = arith.mulf %652, %658 : vector<8x128xf32>
    %660 = arith.truncf %659 : vector<8x128xf32> to vector<8x128xbf16>
    %cst_159 = arith.constant dense<0.000000e+00> : vector<8x512xf32>
    %661 = tpu.matmul %660, %597, %cst_159 {dimension_numbers = #tpu.dot_dimension_numbers<[1], [0], [0], [1], [0, 0, 1, 1], [], []>} : vector<8x128xbf16>, vector<128x512xbf16>, vector<8x512xf32> -> vector<8x512xf32>
    %662 = arith.addf %592, %661 : vector<8x512xf32>
    %663 = vector.extract_strided_slice %662 {offsets = [0, 0], sizes = [8, 384], strides = [1, 1]} : vector<8x512xf32> to vector<8x384xf32>
    %cst_160 = arith.constant 0.000000e+00 : f32
    %664 = vector.broadcast %cst_160 : f32 to vector<8x384xf32>
    %665 = arith.subf %664, %663 : vector<8x384xf32>
    %666 = math.exp %665 : vector<8x384xf32>
    %cst_161 = arith.constant 1.000000e+00 : f32
    %667 = vector.broadcast %cst_161 : f32 to vector<8x384xf32>
    %668 = arith.addf %667, %666 : vector<8x384xf32>
    %669 = tpu.reciprocal %668 {approx = true} : vector<8x384xf32> -> vector<8x384xf32>
    %670 = vector.extract_strided_slice %669 {offsets = [0, 0], sizes = [8, 128], strides = [1, 1]} : vector<8x384xf32> to vector<8x128xf32>
    %671 = vector.extract_strided_slice %669 {offsets = [0, 128], sizes = [8, 128], strides = [1, 1]} : vector<8x384xf32> to vector<8x128xf32>
    %672 = vector.extract_strided_slice %669 {offsets = [0, 256], sizes = [8, 128], strides = [1, 1]} : vector<8x384xf32> to vector<8x128xf32>
    %673 = vector.extract_strided_slice %662 {offsets = [0, 384], sizes = [8, 128], strides = [1, 1]} : vector<8x512xf32> to vector<8x128xf32>
    %674 = math.tanh %673 : vector<8x128xf32>
    %675 = arith.mulf %671, %657 : vector<8x128xf32>
    %676 = arith.mulf %670, %674 : vector<8x128xf32>
    %677 = arith.addf %675, %676 : vector<8x128xf32>
    %678 = math.tanh %677 : vector<8x128xf32>
    %679 = arith.mulf %672, %678 : vector<8x128xf32>
    %680 = arith.truncf %679 : vector<8x128xf32> to vector<8x128xbf16>
    %cst_162 = arith.constant dense<0.000000e+00> : vector<8x512xf32>
    %681 = tpu.matmul %680, %597, %cst_162 {dimension_numbers = #tpu.dot_dimension_numbers<[1], [0], [0], [1], [0, 0, 1, 1], [], []>} : vector<8x128xbf16>, vector<128x512xbf16>, vector<8x512xf32> -> vector<8x512xf32>
    %682 = arith.addf %593, %681 : vector<8x512xf32>
    %683 = vector.extract_strided_slice %682 {offsets = [0, 0], sizes = [8, 384], strides = [1, 1]} : vector<8x512xf32> to vector<8x384xf32>
    %cst_163 = arith.constant 0.000000e+00 : f32
    %684 = vector.broadcast %cst_163 : f32 to vector<8x384xf32>
    %685 = arith.subf %684, %683 : vector<8x384xf32>
    %686 = math.exp %685 : vector<8x384xf32>
    %cst_164 = arith.constant 1.000000e+00 : f32
    %687 = vector.broadcast %cst_164 : f32 to vector<8x384xf32>
    %688 = arith.addf %687, %686 : vector<8x384xf32>
    %689 = tpu.reciprocal %688 {approx = true} : vector<8x384xf32> -> vector<8x384xf32>
    %690 = vector.extract_strided_slice %689 {offsets = [0, 0], sizes = [8, 128], strides = [1, 1]} : vector<8x384xf32> to vector<8x128xf32>
    %691 = vector.extract_strided_slice %689 {offsets = [0, 128], sizes = [8, 128], strides = [1, 1]} : vector<8x384xf32> to vector<8x128xf32>
    %692 = vector.extract_strided_slice %689 {offsets = [0, 256], sizes = [8, 128], strides = [1, 1]} : vector<8x384xf32> to vector<8x128xf32>
    %693 = vector.extract_strided_slice %682 {offsets = [0, 384], sizes = [8, 128], strides = [1, 1]} : vector<8x512xf32> to vector<8x128xf32>
    %694 = math.tanh %693 : vector<8x128xf32>
    %695 = arith.mulf %691, %677 : vector<8x128xf32>
    %696 = arith.mulf %690, %694 : vector<8x128xf32>
    %697 = arith.addf %695, %696 : vector<8x128xf32>
    %698 = math.tanh %697 : vector<8x128xf32>
    %699 = arith.mulf %692, %698 : vector<8x128xf32>
    %700 = arith.truncf %699 : vector<8x128xf32> to vector<8x128xbf16>
    %cst_165 = arith.constant dense<0.000000e+00> : vector<8x512xf32>
    %701 = tpu.matmul %700, %597, %cst_165 {dimension_numbers = #tpu.dot_dimension_numbers<[1], [0], [0], [1], [0, 0, 1, 1], [], []>} : vector<8x128xbf16>, vector<128x512xbf16>, vector<8x512xf32> -> vector<8x512xf32>
    %702 = arith.addf %594, %701 : vector<8x512xf32>
    %703 = vector.extract_strided_slice %702 {offsets = [0, 0], sizes = [8, 384], strides = [1, 1]} : vector<8x512xf32> to vector<8x384xf32>
    %cst_166 = arith.constant 0.000000e+00 : f32
    %704 = vector.broadcast %cst_166 : f32 to vector<8x384xf32>
    %705 = arith.subf %704, %703 : vector<8x384xf32>
    %706 = math.exp %705 : vector<8x384xf32>
    %cst_167 = arith.constant 1.000000e+00 : f32
    %707 = vector.broadcast %cst_167 : f32 to vector<8x384xf32>
    %708 = arith.addf %707, %706 : vector<8x384xf32>
    %709 = tpu.reciprocal %708 {approx = true} : vector<8x384xf32> -> vector<8x384xf32>
    %710 = vector.extract_strided_slice %709 {offsets = [0, 0], sizes = [8, 128], strides = [1, 1]} : vector<8x384xf32> to vector<8x128xf32>
    %711 = vector.extract_strided_slice %709 {offsets = [0, 128], sizes = [8, 128], strides = [1, 1]} : vector<8x384xf32> to vector<8x128xf32>
    %712 = vector.extract_strided_slice %709 {offsets = [0, 256], sizes = [8, 128], strides = [1, 1]} : vector<8x384xf32> to vector<8x128xf32>
    %713 = vector.extract_strided_slice %702 {offsets = [0, 384], sizes = [8, 128], strides = [1, 1]} : vector<8x512xf32> to vector<8x128xf32>
    %714 = math.tanh %713 : vector<8x128xf32>
    %715 = arith.mulf %711, %697 : vector<8x128xf32>
    %716 = arith.mulf %710, %714 : vector<8x128xf32>
    %717 = arith.addf %715, %716 : vector<8x128xf32>
    %718 = math.tanh %717 : vector<8x128xf32>
    %719 = arith.mulf %712, %718 : vector<8x128xf32>
    %720 = arith.truncf %719 : vector<8x128xf32> to vector<8x128xbf16>
    %cst_168 = arith.constant dense<0.000000e+00> : vector<8x512xf32>
    %721 = tpu.matmul %720, %597, %cst_168 {dimension_numbers = #tpu.dot_dimension_numbers<[1], [0], [0], [1], [0, 0, 1, 1], [], []>} : vector<8x128xbf16>, vector<128x512xbf16>, vector<8x512xf32> -> vector<8x512xf32>
    %722 = arith.addf %595, %721 : vector<8x512xf32>
    %723 = vector.extract_strided_slice %722 {offsets = [0, 0], sizes = [8, 384], strides = [1, 1]} : vector<8x512xf32> to vector<8x384xf32>
    %cst_169 = arith.constant 0.000000e+00 : f32
    %724 = vector.broadcast %cst_169 : f32 to vector<8x384xf32>
    %725 = arith.subf %724, %723 : vector<8x384xf32>
    %726 = math.exp %725 : vector<8x384xf32>
    %cst_170 = arith.constant 1.000000e+00 : f32
    %727 = vector.broadcast %cst_170 : f32 to vector<8x384xf32>
    %728 = arith.addf %727, %726 : vector<8x384xf32>
    %729 = tpu.reciprocal %728 {approx = true} : vector<8x384xf32> -> vector<8x384xf32>
    %730 = vector.extract_strided_slice %729 {offsets = [0, 0], sizes = [8, 128], strides = [1, 1]} : vector<8x384xf32> to vector<8x128xf32>
    %731 = vector.extract_strided_slice %729 {offsets = [0, 128], sizes = [8, 128], strides = [1, 1]} : vector<8x384xf32> to vector<8x128xf32>
    %732 = vector.extract_strided_slice %729 {offsets = [0, 256], sizes = [8, 128], strides = [1, 1]} : vector<8x384xf32> to vector<8x128xf32>
    %733 = vector.extract_strided_slice %722 {offsets = [0, 384], sizes = [8, 128], strides = [1, 1]} : vector<8x512xf32> to vector<8x128xf32>
    %734 = math.tanh %733 : vector<8x128xf32>
    %735 = arith.mulf %731, %717 : vector<8x128xf32>
    %736 = arith.mulf %730, %734 : vector<8x128xf32>
    %737 = arith.addf %735, %736 : vector<8x128xf32>
    %738 = math.tanh %737 : vector<8x128xf32>
    %739 = arith.mulf %732, %738 : vector<8x128xf32>
    %740 = arith.truncf %739 : vector<8x128xf32> to vector<8x128xbf16>
    %cst_171 = arith.constant dense<0.000000e+00> : vector<8x512xf32>
    %741 = tpu.matmul %740, %597, %cst_171 {dimension_numbers = #tpu.dot_dimension_numbers<[1], [0], [0], [1], [0, 0, 1, 1], [], []>} : vector<8x128xbf16>, vector<128x512xbf16>, vector<8x512xf32> -> vector<8x512xf32>
    %742 = arith.addf %596, %741 : vector<8x512xf32>
    %743 = vector.extract_strided_slice %742 {offsets = [0, 0], sizes = [8, 384], strides = [1, 1]} : vector<8x512xf32> to vector<8x384xf32>
    %cst_172 = arith.constant 0.000000e+00 : f32
    %744 = vector.broadcast %cst_172 : f32 to vector<8x384xf32>
    %745 = arith.subf %744, %743 : vector<8x384xf32>
    %746 = math.exp %745 : vector<8x384xf32>
    %cst_173 = arith.constant 1.000000e+00 : f32
    %747 = vector.broadcast %cst_173 : f32 to vector<8x384xf32>
    %748 = arith.addf %747, %746 : vector<8x384xf32>
    %749 = tpu.reciprocal %748 {approx = true} : vector<8x384xf32> -> vector<8x384xf32>
    %750 = vector.extract_strided_slice %749 {offsets = [0, 0], sizes = [8, 128], strides = [1, 1]} : vector<8x384xf32> to vector<8x128xf32>
    %751 = vector.extract_strided_slice %749 {offsets = [0, 128], sizes = [8, 128], strides = [1, 1]} : vector<8x384xf32> to vector<8x128xf32>
    %752 = vector.extract_strided_slice %749 {offsets = [0, 256], sizes = [8, 128], strides = [1, 1]} : vector<8x384xf32> to vector<8x128xf32>
    %753 = vector.extract_strided_slice %742 {offsets = [0, 384], sizes = [8, 128], strides = [1, 1]} : vector<8x512xf32> to vector<8x128xf32>
    %754 = math.tanh %753 : vector<8x128xf32>
    %755 = arith.mulf %751, %737 : vector<8x128xf32>
    %756 = arith.mulf %750, %754 : vector<8x128xf32>
    %757 = arith.addf %755, %756 : vector<8x128xf32>
    %758 = math.tanh %757 : vector<8x128xf32>
    %759 = arith.mulf %752, %758 : vector<8x128xf32>
    %760 = tpu.concatenate %619, %639, %659, %679, %699, %719, %739, %759 in 0 : vector<8x128xf32>, vector<8x128xf32>, vector<8x128xf32>, vector<8x128xf32>, vector<8x128xf32>, vector<8x128xf32>, vector<8x128xf32>, vector<8x128xf32> -> vector<64x128xf32>
    %c0_174 = arith.constant 0 : index
    %c0_175 = arith.constant 0 : index
    %761 = vector.load %arg14[%c0_174, %c0_175] : memref<1x128xf32, #tpu.memory_space<vmem>>, vector<1x128xf32>
    %762 = vector.broadcast %761 : vector<1x128xf32> to vector<64x128xf32>
    %763 = arith.mulf %760, %762 : vector<64x128xf32>
    %cst_176 = arith.constant dense<0.000000e+00> : vector<64xf32>
    %764 = vector.multi_reduction <add>, %763, %cst_176 [1] : vector<64x128xf32> to vector<64xf32>
    %765 = vector.shape_cast %764 : vector<64xf32> to vector<64x1xf32>
    %c0_177 = arith.constant 0 : index
    %c0_178 = arith.constant 0 : index
    %766 = vector.load %arg15[%c0_177, %c0_178] : memref<1x1xf32, #tpu.memory_space<vmem>>, vector<1x1xf32>
    %767 = vector.broadcast %766 : vector<1x1xf32> to vector<64x1xf32>
    %768 = arith.addf %765, %767 : vector<64x1xf32>
    %769 = vector.shape_cast %768 : vector<64x1xf32> to vector<8x8x1xf32>
    %c0_179 = arith.constant 0 : index
    %c0_180 = arith.constant 0 : index
    %c0_181 = arith.constant 0 : index
    %770 = vector.load %arg16[%c0_179, %c0_180, %c0_181] : memref<8x8x1xf32, #tpu.memory_space<vmem>>, vector<8x8x1xf32>
    tpu.vector_store %arg16[%c0_179, %c0_180, %c0_181], %769 {strides = array<i32>} : memref<8x8x1xf32, #tpu.memory_space<vmem>>, vector<8x8x1xf32>,
    return
  }
  func.func @transform_0(%arg0: i32) -> (i32, i32, i32) {
    %c0_i32 = arith.constant 0 : i32
    %c0_i32_0 = arith.constant 0 : i32
    %c0_i32_1 = arith.constant 0 : i32
    return %c0_i32, %arg0, %c0_i32_0 : i32, i32, i32
  }
  func.func @transform_1(%arg0: i32) -> (i32, i32) {
    %c0_i32 = arith.constant 0 : i32
    %c0_i32_0 = arith.constant 0 : i32
    %c0_i32_1 = arith.constant 0 : i32
    return %c0_i32, %c0_i32_0 : i32, i32
  }
  func.func @transform_2(%arg0: i32) -> (i32, i32) {
    %c0_i32 = arith.constant 0 : i32
    %c0_i32_0 = arith.constant 0 : i32
    %c0_i32_1 = arith.constant 0 : i32
    return %c0_i32, %c0_i32_0 : i32, i32
  }
  func.func @transform_3(%arg0: i32) -> (i32, i32) {
    %c0_i32 = arith.constant 0 : i32
    %c0_i32_0 = arith.constant 0 : i32
    %c0_i32_1 = arith.constant 0 : i32
    return %c0_i32, %c0_i32_0 : i32, i32
  }
  func.func @transform_4(%arg0: i32) -> (i32, i32) {
    %c0_i32 = arith.constant 0 : i32
    %c0_i32_0 = arith.constant 0 : i32
    %c0_i32_1 = arith.constant 0 : i32
    return %c0_i32, %c0_i32_0 : i32, i32
  }
  func.func @transform_5(%arg0: i32) -> (i32, i32) {
    %c0_i32 = arith.constant 0 : i32
    %c0_i32_0 = arith.constant 0 : i32
    %c0_i32_1 = arith.constant 0 : i32
    return %c0_i32, %c0_i32_0 : i32, i32
  }
  func.func @transform_6(%arg0: i32) -> (i32, i32) {
    %c0_i32 = arith.constant 0 : i32
    %c0_i32_0 = arith.constant 0 : i32
    %c0_i32_1 = arith.constant 0 : i32
    return %c0_i32, %c0_i32_0 : i32, i32
  }
  func.func @transform_7(%arg0: i32) -> (i32, i32) {
    %c0_i32 = arith.constant 0 : i32
    %c0_i32_0 = arith.constant 0 : i32
    %c0_i32_1 = arith.constant 0 : i32
    return %c0_i32, %c0_i32_0 : i32, i32
  }
  func.func @transform_8(%arg0: i32) -> (i32, i32) {
    %c0_i32 = arith.constant 0 : i32
    %c0_i32_0 = arith.constant 0 : i32
    %c0_i32_1 = arith.constant 0 : i32
    return %c0_i32, %c0_i32_0 : i32, i32
  }
  func.func @transform_9(%arg0: i32) -> (i32, i32) {
    %c0_i32 = arith.constant 0 : i32
    %c0_i32_0 = arith.constant 0 : i32
    %c0_i32_1 = arith.constant 0 : i32
    return %c0_i32, %c0_i32_0 : i32, i32
  }
  func.func @transform_10(%arg0: i32) -> (i32, i32) {
    %c0_i32 = arith.constant 0 : i32
    %c0_i32_0 = arith.constant 0 : i32
    %c0_i32_1 = arith.constant 0 : i32
    return %c0_i32, %c0_i32_0 : i32, i32
  }
  func.func @transform_11(%arg0: i32) -> (i32, i32) {
    %c0_i32 = arith.constant 0 : i32
    %c0_i32_0 = arith.constant 0 : i32
    %c0_i32_1 = arith.constant 0 : i32
    return %c0_i32, %c0_i32_0 : i32, i32
  }
  func.func @transform_12(%arg0: i32) -> (i32, i32) {
    %c0_i32 = arith.constant 0 : i32
    %c0_i32_0 = arith.constant 0 : i32
    %c0_i32_1 = arith.constant 0 : i32
    return %c0_i32, %c0_i32_0 : i32, i32
  }
  func.func @transform_13(%arg0: i32) -> (i32, i32) {
    %c0_i32 = arith.constant 0 : i32
    %c0_i32_0 = arith.constant 0 : i32
    %c0_i32_1 = arith.constant 0 : i32
    return %c0_i32, %c0_i32_0 : i32, i32
  }
  func.func @transform_14(%arg0: i32) -> (i32, i32) {
    %c0_i32 = arith.constant 0 : i32
    %c0_i32_0 = arith.constant 0 : i32
    %c0_i32_1 = arith.constant 0 : i32
    return %c0_i32, %c0_i32_0 : i32, i32
  }
  func.func @transform_15(%arg0: i32) -> (i32, i32, i32) {
    %c0_i32 = arith.constant 0 : i32
    %c0_i32_0 = arith.constant 0 : i32
    %c0_i32_1 = arith.constant 0 : i32
    return %c0_i32, %arg0, %c0_i32_0 : i32, i32, i32
  }
}

</mosaic_0001>

<llo_original>
// kernel: tpu_custom_call.1
$region0: #{tpu_custom_call.1}
  #allocation0 [shape = 'u32[]', space=smem, size = 0x4, offset = 0x4, fixed_abs, tag = 'smem constant byte address 0x4 - core index']
  #allocation1 [shape = 'u32[144,128]{1,0:T(1,128)}', space=vmem, size = 0x12000, scoped, tag = 'internal scratch']
  #allocation2 [shape = 'f32[1,1]{1,0:T(1,128)S(1)}', space=vmem, size = 0x200, scoped, tag = 'scoped memory for tpu_custom_call.1']
  %s0 = inlined_call_operand.vmem [shape: f32[8,16,1], index: 0, kind: input, shape index: {}]
  %s1 = inlined_call_operand.vmem [shape: f32[1,512], index: 1, kind: input, shape index: {}]
  %s2 = inlined_call_operand.hbm [shape: bf16[128,512], index: 2, kind: input, shape index: {}]
  %s3 = inlined_call_operand.vmem [shape: f32[1,512], index: 3, kind: input, shape index: {}]
  %s4 = inlined_call_operand.hbm [shape: bf16[128,512], index: 4, kind: input, shape index: {}]
  %s5 = inlined_call_operand.hbm [shape: bf16[128,512], index: 5, kind: input, shape index: {}]
  %s6 = inlined_call_operand.vmem [shape: f32[1,512], index: 6, kind: input, shape index: {}]
  %s7 = inlined_call_operand.hbm [shape: bf16[128,512], index: 7, kind: input, shape index: {}]
  %s8 = inlined_call_operand.hbm [shape: bf16[128,512], index: 8, kind: input, shape index: {}]
  %s9 = inlined_call_operand.vmem [shape: f32[1,512], index: 9, kind: input, shape index: {}]
  %s10 = inlined_call_operand.hbm [shape: bf16[128,512], index: 10, kind: input, shape index: {}]
  %s11 = inlined_call_operand.hbm [shape: bf16[128,512], index: 11, kind: input, shape index: {}]
  %s12 = inlined_call_operand.vmem [shape: f32[1,512], index: 12, kind: input, shape index: {}]
  %s13 = inlined_call_operand.vmem [shape: f32[1,128], index: 13, kind: input, shape index: {}]
  %s14 = inlined_call_operand.<no memory space> [shape: f32[1,1], index: 14, kind: input, shape index: {}]
  %s15 = inlined_call_operand.vmem [shape: f32[8,16,1], index: 15, kind: output, shape index: {}]
  %s16 = sld [smem:[#allocation0]]
  $region193: #{tpu_custom_call.1} parent=0
    _
  %s18 = ssub.s32 1, %s16
  %s19 = scalar_select 0, %s18, %s16
  %v20 = vstv %s14
  %21 = vst [vmem:[#allocation2] sm:$0x1] %v20
  $region1: #{tpu_custom_call.1} parent=0
    #allocation3 [shape = 'u8[65536]{0}', space=vmem, size = 0x10000, scoped, tag = 'input window, operand 0']
    #allocation4 [shape = 'u8[131072]{0}', space=vmem, size = 0x20000, scoped, tag = 'input window, operand 2, single buffered']
    #allocation5 [shape = 's32[2]{0}', space=sflag, size = 0x8, scoped, tag = 'scoped memory for tpu_custom_call.1']
    #allocation6 [shape = 'u8[131072]{0}', space=vmem, size = 0x20000, scoped, tag = 'input window, operand 4, single buffered']
    #allocation7 [shape = 's32[1]{0}', space=sflag, size = 0x4, scoped, tag = 'scoped memory for tpu_custom_call.1']
    #allocation8 [shape = 'u8[131072]{0}', space=vmem, size = 0x20000, scoped, tag = 'input window, operand 5, single buffered']
    #allocation9 [shape = 'u8[131072]{0}', space=vmem, size = 0x20000, scoped, tag = 'input window, operand 7, single buffered']
    #allocation10 [shape = 's32[1]{0}', space=sflag, size = 0x4, scoped, tag = 'scoped memory for tpu_custom_call.1']
    #allocation11 [shape = 'u8[131072]{0}', space=vmem, size = 0x20000, scoped, tag = 'input window, operand 8, single buffered']
    #allocation12 [shape = 'u8[131072]{0}', space=vmem, size = 0x20000, scoped, tag = 'input window, operand 10, single buffered']
    #allocation13 [shape = 's32[1]{0}', space=sflag, size = 0x4, scoped, tag = 'scoped memory for tpu_custom_call.1']
    #allocation14 [shape = 'u8[131072]{0}', space=vmem, size = 0x20000, scoped, tag = 'input window, operand 11, single buffered']
    #allocation15 [shape = 'u8[65536]{0}', space=vmem, size = 0x10000, scoped, tag = 'output window, operand 0']
    %22 = vsyncpa [#allocation5], 0
    %23 = vsyncpa [#allocation7], 0
    %24 = vsyncpa [#allocation10], 0
    %25 = vsyncpa [#allocation13], 0
    loop: start=0, step=1, limit=4
    $region2: #{tpu_custom_call.1} parent=1 // loop_pre_header
      _
    $region3: #{tpu_custom_call.1} parent=1 // loop_header
      %s27 = sphi 0, %s31
      %p28 = scmp.ge.s32.totalorder %s27, 4
      %s37 = sphi 0, %s39
      %s40 = sphi 0, %s37
      %s41 = sphi 0, %s40
      %s57 = sphi 0, %s41
      %s61 = sphi 0, %s61
      %s63 = sphi 0, %s61
      %s64 = sphi 0, %s63
      %s78 = sphi 0, %s64
      %s82 = sphi 0, %s82
      %s84 = sphi 0, %s82
      %s85 = sphi 0, %s84
      %s99 = sphi 0, %s85
      %s103 = sphi 0, %s103
      %s105 = sphi 0, %s103
      %s106 = sphi 0, %s105
      %s120 = sphi 0, %s106
      %s124 = sphi 0, %s124
      %s126 = sphi 0, %s124
      %s127 = sphi 0, %s126
      %s141 = sphi 0, %s127
      %s145 = sphi 0, %s145
      %s147 = sphi 0, %s145
      %s148 = sphi 0, %s147
      %s162 = sphi 0, %s148
      %s166 = sphi 0, %s166
      %s168 = sphi 0, %s166
      %s169 = sphi 0, %s168
      %s183 = sphi 0, %s169
      %s187 = sphi 0, %s187
      %s189 = sphi 0, %s187
      %s190 = sphi 0, %s189
      %s204 = sphi 0, %s190
      %s208 = sphi 0, %s208
      %s210 = sphi 0, %s208
      %s211 = sphi 0, %s210
      %s225 = sphi 0, %s211
      %s229 = sphi 0, %s229
      %s231 = sphi 0, %s229
      %s232 = sphi 0, %s231
      %s246 = sphi 0, %s232
      %s250 = sphi 0, %s250
      %s252 = sphi 0, %s250
      %s253 = sphi 0, %s252
      %s267 = sphi 0, %s253
      %s271 = sphi 0, %s271
      %s273 = sphi 0, %s271
      %s274 = sphi 0, %s273
      %s288 = sphi 0, %s274
      %s292 = sphi 0, %s292
      %s294 = sphi 0, %s292
      %s295 = sphi 0, %s294
      %s309 = sphi 0, %s295
      %s313 = sphi 0, %s313
      %s315 = sphi 0, %s313
      %s316 = sphi 0, %s315
      %s330 = sphi 0, %s316
      %s334 = sphi 0, %s334
      %s336 = sphi 0, %s334
      %s337 = sphi 0, %s336
      %s351 = sphi 0, %s337
      %s357 = sphi 0, %s359
      %s360 = sphi 0, %s357
      %s361 = sphi 0, %s360
      %s377 = sphi 0, %s361
    $region4: #{tpu_custom_call.1} parent=1 // loop_header_branch
      %30 = sbr.rel (%p28) target = $region8
    $region5: #{tpu_custom_call.1} parent=1 // loop_body
      %s32 = ssub.s32 %s27, 1
      %s33 = ssub.s32 %s27, 2
      %s34 = sadd.s32 %s27, 1
      %s35 = ssub.s32 %s27, %s34
      %p36 = scmp.eq.s32.totalorder %s35, 0
      %s38 = sadd.s32 %s37, 1
      %s39 = scalar_select %p36, %s37, %s38
      %p42 = pneg %p36
      %p43 = scmp.eq.s32.totalorder %s27, 1
      %p44 = por %p42, %p43
      %p45 = scmp.ne.s32.totalorder %s37, %s40
      %p46 = scmp.eq.s32.totalorder %s27, 0
      %p47 = por %p45, %p46
      %p48 = scmp.ne.s32.totalorder %s37, %s40
      %p49 = scmp.eq.s32.totalorder %s32, 1
      %p50 = por %p48, %p49
      %p51 = scmp.ne.s32.totalorder %s40, %s41
      %p52 = scmp.eq.s32.totalorder %s32, 0
      %p53 = por %p51, %p52
      %p54 = scmp.ne.s32.totalorder %s40, %s41
      %p55 = scmp.eq.s32.totalorder %s33, 1
      %p56 = por %p54, %p55
      %p58 = scmp.ne.s32.totalorder %s41, %s57
      %p59 = scmp.eq.s32.totalorder %s33, 0
      %p60 = por %p58, %p59
      %s62 = sadd.s32 %s61, 1
      %p65 = scmp.eq.s32.totalorder %s27, 1
      %p66 = scmp.ne.s32.totalorder %s61, %s63
      %p67 = scmp.eq.s32.totalorder %s27, 0
      %p68 = por %p66, %p67
      %p69 = scmp.ne.s32.totalorder %s61, %s63
      %p70 = scmp.eq.s32.totalorder %s32, 1
      %p71 = por %p69, %p70
      %p72 = scmp.ne.s32.totalorder %s63, %s64
      %p73 = scmp.eq.s32.totalorder %s32, 0
      %p74 = por %p72, %p73
      %p75 = scmp.ne.s32.totalorder %s63, %s64
      %p76 = scmp.eq.s32.totalorder %s33, 1
      %p77 = por %p75, %p76
      %p79 = scmp.ne.s32.totalorder %s64, %s78
      %p80 = scmp.eq.s32.totalorder %s33, 0
      %p81 = por %p79, %p80
      %s83 = sadd.s32 %s82, 1
      %p86 = scmp.eq.s32.totalorder %s27, 1
      %p87 = scmp.ne.s32.totalorder %s82, %s84
      %p88 = scmp.eq.s32.totalorder %s27, 0
      %p89 = por %p87, %p88
      %p90 = scmp.ne.s32.totalorder %s82, %s84
      %p91 = scmp.eq.s32.totalorder %s32, 1
      %p92 = por %p90, %p91
      %p93 = scmp.ne.s32.totalorder %s84, %s85
      %p94 = scmp.eq.s32.totalorder %s32, 0
      %p95 = por %p93, %p94
      %p96 = scmp.ne.s32.totalorder %s84, %s85
      %p97 = scmp.eq.s32.totalorder %s33, 1
      %p98 = por %p96, %p97
      %p100 = scmp.ne.s32.totalorder %s85, %s99
      %p101 = scmp.eq.s32.totalorder %s33, 0
      %p102 = por %p100, %p101
      %s104 = sadd.s32 %s103, 1
      %p107 = scmp.eq.s32.totalorder %s27, 1
      %p108 = scmp.ne.s32.totalorder %s103, %s105
      %p109 = scmp.eq.s32.totalorder %s27, 0
      %p110 = por %p108, %p109
      %p111 = scmp.ne.s32.totalorder %s103, %s105
      %p112 = scmp.eq.s32.totalorder %s32, 1
      %p113 = por %p111, %p112
      %p114 = scmp.ne.s32.totalorder %s105, %s106
      %p115 = scmp.eq.s32.totalorder %s32, 0
      %p116 = por %p114, %p115
      %p117 = scmp.ne.s32.totalorder %s105, %s106
      %p118 = scmp.eq.s32.totalorder %s33, 1
      %p119 = por %p117, %p118
      %p121 = scmp.ne.s32.totalorder %s106, %s120
      %p122 = scmp.eq.s32.totalorder %s33, 0
      %p123 = por %p121, %p122
      %s125 = sadd.s32 %s124, 1
      %p128 = scmp.eq.s32.totalorder %s27, 1
      %p129 = scmp.ne.s32.totalorder %s124, %s126
      %p130 = scmp.eq.s32.totalorder %s27, 0
      %p131 = por %p129, %p130
      %p132 = scmp.ne.s32.totalorder %s124, %s126
      %p133 = scmp.eq.s32.totalorder %s32, 1
      %p134 = por %p132, %p133
      %p135 = scmp.ne.s32.totalorder %s126, %s127
      %p136 = scmp.eq.s32.totalorder %s32, 0
      %p137 = por %p135, %p136
      %p138 = scmp.ne.s32.totalorder %s126, %s127
      %p139 = scmp.eq.s32.totalorder %s33, 1
      %p140 = por %p138, %p139
      %p142 = scmp.ne.s32.totalorder %s127, %s141
      %p143 = scmp.eq.s32.totalorder %s33, 0
      %p144 = por %p142, %p143
      %s146 = sadd.s32 %s145, 1
      %p149 = scmp.eq.s32.totalorder %s27, 1
      %p150 = scmp.ne.s32.totalorder %s145, %s147
      %p151 = scmp.eq.s32.totalorder %s27, 0
      %p152 = por %p150, %p151
      %p153 = scmp.ne.s32.totalorder %s145, %s147
      %p154 = scmp.eq.s32.totalorder %s32, 1
      %p155 = por %p153, %p154
      %p156 = scmp.ne.s32.totalorder %s147, %s148
      %p157 = scmp.eq.s32.totalorder %s32, 0
      %p158 = por %p156, %p157
      %p159 = scmp.ne.s32.totalorder %s147, %s148
      %p160 = scmp.eq.s32.totalorder %s33, 1
      %p161 = por %p159, %p160
      %p163 = scmp.ne.s32.totalorder %s148, %s162
      %p164 = scmp.eq.s32.totalorder %s33, 0
      %p165 = por %p163, %p164
      %s167 = sadd.s32 %s166, 1
      %p170 = scmp.eq.s32.totalorder %s27, 1
      %p171 = scmp.ne.s32.totalorder %s166, %s168
      %p172 = scmp.eq.s32.totalorder %s27, 0
      %p173 = por %p171, %p172
      %p174 = scmp.ne.s32.totalorder %s166, %s168
      %p175 = scmp.eq.s32.totalorder %s32, 1
      %p176 = por %p174, %p175
      %p177 = scmp.ne.s32.totalorder %s168, %s169
      %p178 = scmp.eq.s32.totalorder %s32, 0
      %p179 = por %p177, %p178
      %p180 = scmp.ne.s32.totalorder %s168, %s169
      %p181 = scmp.eq.s32.totalorder %s33, 1
      %p182 = por %p180, %p181
      %p184 = scmp.ne.s32.totalorder %s169, %s183
      %p185 = scmp.eq.s32.totalorder %s33, 0
      %p186 = por %p184, %p185
      %s188 = sadd.s32 %s187, 1
      %p191 = scmp.eq.s32.totalorder %s27, 1
      %p192 = scmp.ne.s32.totalorder %s187, %s189
      %p193 = scmp.eq.s32.totalorder %s27, 0
      %p194 = por %p192, %p193
      %p195 = scmp.ne.s32.totalorder %s187, %s189
      %p196 = scmp.eq.s32.totalorder %s32, 1
      %p197 = por %p195, %p196
      %p198 = scmp.ne.s32.totalorder %s189, %s190
      %p199 = scmp.eq.s32.totalorder %s32, 0
      %p200 = por %p198, %p199
      %p201 = scmp.ne.s32.totalorder %s189, %s190
      %p202 = scmp.eq.s32.totalorder %s33, 1
      %p203 = por %p201, %p202
      %p205 = scmp.ne.s32.totalorder %s190, %s204
      %p206 = scmp.eq.s32.totalorder %s33, 0
      %p207 = por %p205, %p206
      %s209 = sadd.s32 %s208, 1
      %p212 = scmp.eq.s32.totalorder %s27, 1
      %p213 = scmp.ne.s32.totalorder %s208, %s210
      %p214 = scmp.eq.s32.totalorder %s27, 0
      %p215 = por %p213, %p214
      %p216 = scmp.ne.s32.totalorder %s208, %s210
      %p217 = scmp.eq.s32.totalorder %s32, 1
      %p218 = por %p216, %p217
      %p219 = scmp.ne.s32.totalorder %s210, %s211
      %p220 = scmp.eq.s32.totalorder %s32, 0
      %p221 = por %p219, %p220
      %p222 = scmp.ne.s32.totalorder %s210, %s211
      %p223 = scmp.eq.s32.totalorder %s33, 1
      %p224 = por %p222, %p223
      %p226 = scmp.ne.s32.totalorder %s211, %s225
      %p227 = scmp.eq.s32.totalorder %s33, 0
      %p228 = por %p226, %p227
      %s230 = sadd.s32 %s229, 1
      %p233 = scmp.eq.s32.totalorder %s27, 1
      %p234 = scmp.ne.s32.totalorder %s229, %s231
      %p235 = scmp.eq.s32.totalorder %s27, 0
      %p236 = por %p234, %p235
      %p237 = scmp.ne.s32.totalorder %s229, %s231
      %p238 = scmp.eq.s32.totalorder %s32, 1
      %p239 = por %p237, %p238
      %p240 = scmp.ne.s32.totalorder %s231, %s232
      %p241 = scmp.eq.s32.totalorder %s32, 0
      %p242 = por %p240, %p241
      %p243 = scmp.ne.s32.totalorder %s231, %s232
      %p244 = scmp.eq.s32.totalorder %s33, 1
      %p245 = por %p243, %p244
      %p247 = scmp.ne.s32.totalorder %s232, %s246
      %p248 = scmp.eq.s32.totalorder %s33, 0
      %p249 = por %p247, %p248
      %s251 = sadd.s32 %s250, 1
      %p254 = scmp.eq.s32.totalorder %s27, 1
      %p255 = scmp.ne.s32.totalorder %s250, %s252
      %p256 = scmp.eq.s32.totalorder %s27, 0
      %p257 = por %p255, %p256
      %p258 = scmp.ne.s32.totalorder %s250, %s252
      %p259 = scmp.eq.s32.totalorder %s32, 1
      %p260 = por %p258, %p259
      %p261 = scmp.ne.s32.totalorder %s252, %s253
      %p262 = scmp.eq.s32.totalorder %s32, 0
      %p263 = por %p261, %p262
      %p264 = scmp.ne.s32.totalorder %s252, %s253
      %p265 = scmp.eq.s32.totalorder %s33, 1
      %p266 = por %p264, %p265
      %p268 = scmp.ne.s32.totalorder %s253, %s267
      %p269 = scmp.eq.s32.totalorder %s33, 0
      %p270 = por %p268, %p269
      %s272 = sadd.s32 %s271, 1
      %p275 = scmp.eq.s32.totalorder %s27, 1
      %p276 = scmp.ne.s32.totalorder %s271, %s273
      %p277 = scmp.eq.s32.totalorder %s27, 0
      %p278 = por %p276, %p277
      %p279 = scmp.ne.s32.totalorder %s271, %s273
      %p280 = scmp.eq.s32.totalorder %s32, 1
      %p281 = por %p279, %p280
      %p282 = scmp.ne.s32.totalorder %s273, %s274
      %p283 = scmp.eq.s32.totalorder %s32, 0
      %p284 = por %p282, %p283
      %p285 = scmp.ne.s32.totalorder %s273, %s274
      %p286 = scmp.eq.s32.totalorder %s33, 1
      %p287 = por %p285, %p286
      %p289 = scmp.ne.s32.totalorder %s274, %s288
      %p290 = scmp.eq.s32.totalorder %s33, 0
      %p291 = por %p289, %p290
      %s293 = sadd.s32 %s292, 1
      %p296 = scmp.eq.s32.totalorder %s27, 1
      %p297 = scmp.ne.s32.totalorder %s292, %s294
      %p298 = scmp.eq.s32.totalorder %s27, 0
      %p299 = por %p297, %p298
      %p300 = scmp.ne.s32.totalorder %s292, %s294
      %p301 = scmp.eq.s32.totalorder %s32, 1
      %p302 = por %p300, %p301
      %p303 = scmp.ne.s32.totalorder %s294, %s295
      %p304 = scmp.eq.s32.totalorder %s32, 0
      %p305 = por %p303, %p304
      %p306 = scmp.ne.s32.totalorder %s294, %s295
      %p307 = scmp.eq.s32.totalorder %s33, 1
      %p308 = por %p306, %p307
      %p310 = scmp.ne.s32.totalorder %s295, %s309
      %p311 = scmp.eq.s32.totalorder %s33, 0
      %p312 = por %p310, %p311
      %s314 = sadd.s32 %s313, 1
      %p317 = scmp.eq.s32.totalorder %s27, 1
      %p318 = scmp.ne.s32.totalorder %s313, %s315
      %p319 = scmp.eq.s32.totalorder %s27, 0
      %p320 = por %p318, %p319
      %p321 = scmp.ne.s32.totalorder %s313, %s315
      %p322 = scmp.eq.s32.totalorder %s32, 1
      %p323 = por %p321, %p322
      %p324 = scmp.ne.s32.totalorder %s315, %s316
      %p325 = scmp.eq.s32.totalorder %s32, 0
      %p326 = por %p324, %p325
      %p327 = scmp.ne.s32.totalorder %s315, %s316
      %p328 = scmp.eq.s32.totalorder %s33, 1
      %p329 = por %p327, %p328
      %p331 = scmp.ne.s32.totalorder %s316, %s330
      %p332 = scmp.eq.s32.totalorder %s33, 0
      %p333 = por %p331, %p332
      %s335 = sadd.s32 %s334, 1
      %p338 = scmp.eq.s32.totalorder %s27, 1
      %p339 = scmp.ne.s32.totalorder %s334, %s336
      %p340 = scmp.eq.s32.totalorder %s27, 0
      %p341 = por %p339, %p340
      %p342 = scmp.ne.s32.totalorder %s334, %s336
      %p343 = scmp.eq.s32.totalorder %s32, 1
      %p344 = por %p342, %p343
      %p345 = scmp.ne.s32.totalorder %s336, %s337
      %p346 = scmp.eq.s32.totalorder %s32, 0
      %p347 = por %p345, %p346
      %p348 = scmp.ne.s32.totalorder %s336, %s337
      %p349 = scmp.eq.s32.totalorder %s33, 1
      %p350 = por %p348, %p349
      %p352 = scmp.ne.s32.totalorder %s337, %s351
      %p353 = scmp.eq.s32.totalorder %s33, 0
      %p354 = por %p352, %p353
      %s355 = ssub.s32 %s27, %s34
      %p356 = scmp.eq.s32.totalorder %s355, 0
      %s358 = sadd.s32 %s357, 1
      %s359 = scalar_select %p356, %s357, %s358
      %p362 = pneg %p356
      %p363 = scmp.eq.s32.totalorder %s27, 1
      %p364 = por %p362, %p363
      %p365 = scmp.ne.s32.totalorder %s357, %s360
      %p366 = scmp.eq.s32.totalorder %s27, 0
      %p367 = por %p365, %p366
      %p368 = scmp.ne.s32.totalorder %s357, %s360
      %p369 = scmp.eq.s32.totalorder %s32, 1
      %p370 = por %p368, %p369
      %p371 = scmp.ne.s32.totalorder %s360, %s361
      %p372 = scmp.eq.s32.totalorder %s32, 0
      %p373 = por %p371, %p372
      %p374 = scmp.ne.s32.totalorder %s360, %s361
      %p375 = scmp.eq.s32.totalorder %s33, 1
      %p376 = por %p374, %p375
      %p378 = scmp.ne.s32.totalorder %s361, %s377
      %p379 = scmp.eq.s32.totalorder %s33, 0
      %p380 = por %p378, %p379
      %p381 = scmp.le.s32.totalorder 1, %s27
      %p382 = scmp.lt.s32.totalorder %s27, 3
      %p383 = pnand %p381, %p382
      %p384 = pneg %p383
      // Predicated region
      $region9: #{tpu_custom_call.1} parent=5 // pred_check
        _
      $region10: #{tpu_custom_call.1} parent=5 // pred_check_branch
        %386 = sbr.rel (%p383) target = $region12
      $region11: #{tpu_custom_call.1} parent=5 // pred_region
        %s387 = ssub.s32 %s27, 1
        // Predicated region
        $region13: #{tpu_custom_call.1} parent=11 // pred_check
          %p388 = pneg %p74
        $region14: #{tpu_custom_call.1} parent=11 // pred_check_branch
          %390 = sbr.rel (%p388) target = $region16
        $region15: #{tpu_custom_call.1} parent=11 // pred_region
          _
        $region16: #{tpu_custom_call.1} parent=11 // pred_fallthru
          _
        // Predicated region
        $region17: #{tpu_custom_call.1} parent=11 // pred_check
          %p391 = pneg %p95
        $region18: #{tpu_custom_call.1} parent=11 // pred_check_branch
          %393 = sbr.rel (%p391) target = $region20
        $region19: #{tpu_custom_call.1} parent=11 // pred_region
          %s395 = ssub.s32 4096, 4096
          %396 = vsyncadd [#allocation5], %s395
          %s397 = sshll.u32 [#allocation4], 4
          %s398 = int_to_ptr.vmem [resolvable:$true] %s397
          %403 = dma.hbm_to_vmem [thread:$0]  %s2, 4096, %s398, [#allocation5], 256, 256, 16
        $region20: #{tpu_custom_call.1} parent=11 // pred_fallthru
          _
        // Predicated region
        $region21: #{tpu_custom_call.1} parent=11 // pred_check
          %p404 = pneg %p116
        $region22: #{tpu_custom_call.1} parent=11 // pred_check_branch
          %406 = sbr.rel (%p404) target = $region24
        $region23: #{tpu_custom_call.1} parent=11 // pred_region
          _
        $region24: #{tpu_custom_call.1} parent=11 // pred_fallthru
          _
        // Predicated region
        $region25: #{tpu_custom_call.1} parent=11 // pred_check
          %p407 = pneg %p137
        $region26: #{tpu_custom_call.1} parent=11 // pred_check_branch
          %409 = sbr.rel (%p407) target = $region28
        $region27: #{tpu_custom_call.1} parent=11 // pred_region
          %s411 = ssub.s32 4096, 4096
          %412 = vsyncadd [#allocation7], %s411
          %s413 = sshll.u32 [#allocation6], 4
          %s414 = int_to_ptr.vmem [resolvable:$true] %s413
          %419 = dma.hbm_to_vmem [thread:$0]  %s4, 4096, %s414, [#allocation7], 256, 256, 16
        $region28: #{tpu_custom_call.1} parent=11 // pred_fallthru
          _
        // Predicated region
        $region29: #{tpu_custom_call.1} parent=11 // pred_check
          %p420 = pneg %p158
        $region30: #{tpu_custom_call.1} parent=11 // pred_check_branch
          %422 = sbr.rel (%p420) target = $region32
        $region31: #{tpu_custom_call.1} parent=11 // pred_region
          %s424 = ssub.s32 4096, 4096
          %425 = vsyncadd [#allocation7], %s424
          %s426 = sshll.u32 [#allocation8], 4
          %s427 = int_to_ptr.vmem [resolvable:$true] %s426
          %432 = dma.hbm_to_vmem [thread:$0]  %s5, 4096, %s427, [#allocation7], 256, 256, 16
        $region32: #{tpu_custom_call.1} parent=11 // pred_fallthru
          _
        // Predicated region
        $region33: #{tpu_custom_call.1} parent=11 // pred_check
          %p433 = pneg %p179
        $region34: #{tpu_custom_call.1} parent=11 // pred_check_branch
          %435 = sbr.rel (%p433) target = $region36
        $region35: #{tpu_custom_call.1} parent=11 // pred_region
          _
        $region36: #{tpu_custom_call.1} parent=11 // pred_fallthru
          _
        // Predicated region
        $region37: #{tpu_custom_call.1} parent=11 // pred_check
          %p436 = pneg %p200
        $region38: #{tpu_custom_call.1} parent=11 // pred_check_branch
          %438 = sbr.rel (%p436) target = $region40
        $region39: #{tpu_custom_call.1} parent=11 // pred_region
          %s440 = ssub.s32 4096, 4096
          %441 = vsyncadd [#allocation10], %s440
          %s442 = sshll.u32 [#allocation9], 4
          %s443 = int_to_ptr.vmem [resolvable:$true] %s442
          %448 = dma.hbm_to_vmem [thread:$0]  %s7, 4096, %s443, [#allocation10], 256, 256, 16
        $region40: #{tpu_custom_call.1} parent=11 // pred_fallthru
          _
        // Predicated region
        $region41: #{tpu_custom_call.1} parent=11 // pred_check
          %p449 = pneg %p221
        $region42: #{tpu_custom_call.1} parent=11 // pred_check_branch
          %451 = sbr.rel (%p449) target = $region44
        $region43: #{tpu_custom_call.1} parent=11 // pred_region
          %s453 = ssub.s32 4096, 4096
          %454 = vsyncadd [#allocation10], %s453
          %s455 = sshll.u32 [#allocation11], 4
          %s456 = int_to_ptr.vmem [resolvable:$true] %s455
          %461 = dma.hbm_to_vmem [thread:$0]  %s8, 4096, %s456, [#allocation10], 256, 256, 16
        $region44: #{tpu_custom_call.1} parent=11 // pred_fallthru
          _
        // Predicated region
        $region45: #{tpu_custom_call.1} parent=11 // pred_check
          %p462 = pneg %p242
        $region46: #{tpu_custom_call.1} parent=11 // pred_check_branch
          %464 = sbr.rel (%p462) target = $region48
        $region47: #{tpu_custom_call.1} parent=11 // pred_region
          _
        $region48: #{tpu_custom_call.1} parent=11 // pred_fallthru
          _
        // Predicated region
        $region49: #{tpu_custom_call.1} parent=11 // pred_check
          %p465 = pneg %p263
        $region50: #{tpu_custom_call.1} parent=11 // pred_check_branch
          %467 = sbr.rel (%p465) target = $region52
        $region51: #{tpu_custom_call.1} parent=11 // pred_region
          %s469 = ssub.s32 4096, 4096
          %470 = vsyncadd [#allocation13], %s469
          %s471 = sshll.u32 [#allocation12], 4
          %s472 = int_to_ptr.vmem [resolvable:$true] %s471
          %477 = dma.hbm_to_vmem [thread:$0]  %s10, 4096, %s472, [#allocation13], 256, 256, 16
        $region52: #{tpu_custom_call.1} parent=11 // pred_fallthru
          _
        // Predicated region
        $region53: #{tpu_custom_call.1} parent=11 // pred_check
          %p478 = pneg %p284
        $region54: #{tpu_custom_call.1} parent=11 // pred_check_branch
          %480 = sbr.rel (%p478) target = $region56
        $region55: #{tpu_custom_call.1} parent=11 // pred_region
          %s482 = ssub.s32 4096, 4096
          %483 = vsyncadd [#allocation13], %s482
          %s484 = sshll.u32 [#allocation14], 4
          %s485 = int_to_ptr.vmem [resolvable:$true] %s484
          %490 = dma.hbm_to_vmem [thread:$0]  %s11, 4096, %s485, [#allocation13], 256, 256, 16
        $region56: #{tpu_custom_call.1} parent=11 // pred_fallthru
          _
        // Predicated region
        $region57: #{tpu_custom_call.1} parent=11 // pred_check
          %p491 = pneg %p305
        $region58: #{tpu_custom_call.1} parent=11 // pred_check_branch
          %493 = sbr.rel (%p491) target = $region60
        $region59: #{tpu_custom_call.1} parent=11 // pred_region
          _
        $region60: #{tpu_custom_call.1} parent=11 // pred_fallthru
          _
        // Predicated region
        $region61: #{tpu_custom_call.1} parent=11 // pred_check
          %p494 = pneg %p326
        $region62: #{tpu_custom_call.1} parent=11 // pred_check_branch
          %496 = sbr.rel (%p494) target = $region64
        $region63: #{tpu_custom_call.1} parent=11 // pred_region
          _
        $region64: #{tpu_custom_call.1} parent=11 // pred_fallthru
          _
        // Predicated region
        $region65: #{tpu_custom_call.1} parent=11 // pred_check
          %p497 = pneg %p347
        $region66: #{tpu_custom_call.1} parent=11 // pred_check_branch
          %499 = sbr.rel (%p497) target = $region68
        $region67: #{tpu_custom_call.1} parent=11 // pred_region
          _
        $region68: #{tpu_custom_call.1} parent=11 // pred_fallthru
          _
      $region12: #{tpu_custom_call.1} parent=5 // pred_fallthru
        _
      %p500 = scmp.lt.s32.totalorder %s27, 2
      // Predicated region
      $region69: #{tpu_custom_call.1} parent=5 // pred_check
        %p501 = pneg %p500
      $region70: #{tpu_custom_call.1} parent=5 // pred_check_branch
        %503 = sbr.rel (%p501) target = $region72
      $region71: #{tpu_custom_call.1} parent=5 // pred_region
        // Predicated region
        $region73: #{tpu_custom_call.1} parent=71 // pred_check
          %p504 = pneg %p47
        $region74: #{tpu_custom_call.1} parent=71 // pred_check_branch
          %506 = sbr.rel (%p504) target = $region76
        $region75: #{tpu_custom_call.1} parent=71 // pred_region
          %s507 = sand.u32 %s37, 1
          %s508 = sand.u32 %s37, 1
          %s509 = smul.addr %s508, 64
          %s510 = scalar_lea.vmem [#allocation3], %s509
          %s511 = smul.addr %s27, 8
          %s512 = scalar_lea.vmem %s0, %s511
          // Predicated region
          $region77: #{tpu_custom_call.1} parent=75 // pred_check
            _
          $region78: #{tpu_custom_call.1} parent=75 // pred_check_branch
            %514 = sbr.rel (0) target = $region80
          $region79: #{tpu_custom_call.1} parent=75 // pred_region
            // Predicated region
            $region81: #{tpu_custom_call.1} parent=79 // pred_check
              _
            $region82: #{tpu_custom_call.1} parent=79 // pred_check_branch
              %516 = sbr.rel (0) target = $region84
            $region83: #{tpu_custom_call.1} parent=79 // pred_region
              // Predicated region
              $region96: #{tpu_custom_call.1} parent=83 // pred_check
                _
              $region97: #{tpu_custom_call.1} parent=83 // pred_check_branch
                %545 = sbr.rel (0) target = $region99
              $region98: #{tpu_custom_call.1} parent=83 // pred_region
                loop: start=0, step=1, limit=1
                $region100: #{tpu_custom_call.1} parent=98 // loop_pre_header
                  _
                $region101: #{tpu_custom_call.1} parent=98 // loop_header
                  %s547 = sphi 0, %s551
                  %p548 = scmp.ge.s32.totalorder %s547, 1
                  %s552 = sphi %s512, %s512
                  %s553 = sphi %s510, %s510
                $region102: #{tpu_custom_call.1} parent=98 // loop_header_branch
                  %550 = sbr.rel (%p548) target = $region106
                $region103: #{tpu_custom_call.1} parent=98 // loop_body
                  %v554 = vld [vmem:[%s552] sm:$0xff]
                  %555 = vst [vmem:[%s553] sm:$0xff] %v554
                  %v556 = vld [vmem:[%s552 + $0x10] sm:$0xff]
                  %557 = vst [vmem:[%s553 + $0x8] sm:$0xff] %v556
                  %v558 = vld [vmem:[%s552 + $0x20] sm:$0xff]
                  %559 = vst [vmem:[%s553 + $0x10] sm:$0xff] %v558
                  %v560 = vld [vmem:[%s552 + $0x30] sm:$0xff]
                  %561 = vst [vmem:[%s553 + $0x18] sm:$0xff] %v560
                  %v562 = vld [vmem:[%s552 + $0x40] sm:$0xff]
                  %563 = vst [vmem:[%s553 + $0x20] sm:$0xff] %v562
                  %v564 = vld [vmem:[%s552 + $0x50] sm:$0xff]
                  %565 = vst [vmem:[%s553 + $0x28] sm:$0xff] %v564
                  %v566 = vld [vmem:[%s552 + $0x60] sm:$0xff]
                  %567 = vst [vmem:[%s553 + $0x30] sm:$0xff] %v566
                  %v568 = vld [vmem:[%s552 + $0x70] sm:$0xff]
                  %569 = vst [vmem:[%s553 + $0x38] sm:$0xff] %v568
                $region104: #{tpu_custom_call.1} parent=98 // loop_footer
                  %s551 = sadd.s32 1, %s547
                $region105: #{tpu_custom_call.1} parent=98 // loop_footer_branch
                  %546 = sbr.rel target = $region101
                $region106: #{tpu_custom_call.1} parent=98 // loop_exit
                  _
              $region99: #{tpu_custom_call.1} parent=83 // pred_fallthru
                _
              // Predicated region
              $region107: #{tpu_custom_call.1} parent=83 // pred_check
                _
              $region108: #{tpu_custom_call.1} parent=83 // pred_check_branch
                %571 = sbr.rel target = $region110
              $region109: #{tpu_custom_call.1} parent=83 // pred_region
                _
              $region110: #{tpu_custom_call.1} parent=83 // pred_fallthru
                _
            $region84: #{tpu_custom_call.1} parent=79 // pred_fallthru
              _
            // Predicated region
            $region85: #{tpu_custom_call.1} parent=79 // pred_check
              _
            $region86: #{tpu_custom_call.1} parent=79 // pred_check_branch
              %518 = sbr.rel target = $region88
            $region87: #{tpu_custom_call.1} parent=79 // pred_region
              loop: start=0, step=1, limit=1
              $region89: #{tpu_custom_call.1} parent=87 // loop_pre_header
                _
              $region90: #{tpu_custom_call.1} parent=87 // loop_header
                %s521 = sphi 0, %s525
                %p522 = scmp.ge.s32.totalorder %s521, 1
                %s526 = sphi %s512, %s512
                %s527 = sphi %s510, %s510
              $region91: #{tpu_custom_call.1} parent=87 // loop_header_branch
                %524 = sbr.rel (%p522) target = $region95
              $region92: #{tpu_custom_call.1} parent=87 // loop_body
                %v528 = vld [vmem:[%s526] sm:$0xff]
                %529 = vst [vmem:[%s527] sm:$0xff] %v528
                %v530 = vld [vmem:[%s526 + $0x10] sm:$0xff]
                %531 = vst [vmem:[%s527 + $0x8] sm:$0xff] %v530
                %v532 = vld [vmem:[%s526 + $0x20] sm:$0xff]
                %533 = vst [vmem:[%s527 + $0x10] sm:$0xff] %v532
                %v534 = vld [vmem:[%s526 + $0x30] sm:$0xff]
                %535 = vst [vmem:[%s527 + $0x18] sm:$0xff] %v534
                %v536 = vld [vmem:[%s526 + $0x40] sm:$0xff]
                %537 = vst [vmem:[%s527 + $0x20] sm:$0xff] %v536
                %v538 = vld [vmem:[%s526 + $0x50] sm:$0xff]
                %539 = vst [vmem:[%s527 + $0x28] sm:$0xff] %v538
                %v540 = vld [vmem:[%s526 + $0x60] sm:$0xff]
                %541 = vst [vmem:[%s527 + $0x30] sm:$0xff] %v540
                %v542 = vld [vmem:[%s526 + $0x70] sm:$0xff]
                %543 = vst [vmem:[%s527 + $0x38] sm:$0xff] %v542
              $region93: #{tpu_custom_call.1} parent=87 // loop_footer
                %s525 = sadd.s32 1, %s521
              $region94: #{tpu_custom_call.1} parent=87 // loop_footer_branch
                %520 = sbr.rel target = $region90
              $region95: #{tpu_custom_call.1} parent=87 // loop_exit
                _
            $region88: #{tpu_custom_call.1} parent=79 // pred_fallthru
              _
          $region80: #{tpu_custom_call.1} parent=75 // pred_fallthru
            _
          %572 = vnop
        $region76: #{tpu_custom_call.1} parent=71 // pred_fallthru
          _
      $region72: #{tpu_custom_call.1} parent=5 // pred_fallthru
        _
      %p573 = scmp.le.s32.totalorder 1, %s27
      %p574 = scmp.lt.s32.totalorder %s27, 3
      %p575 = pnand %p573, %p574
      %p576 = pneg %p575
      // Predicated region
      $region111: #{tpu_custom_call.1} parent=5 // pred_check
        _
      $region112: #{tpu_custom_call.1} parent=5 // pred_check_branch
        %578 = sbr.rel (%p575) target = $region114
      $region113: #{tpu_custom_call.1} parent=5 // pred_region
        %s579 = ssub.s32 %s27, 1
        %s580 = sand.u32 %s40, 1
        %s581 = sand.u32 %s40, 1
        %s582 = smul.addr %s581, 64
        %s583 = scalar_lea.vmem [#allocation3], %s582
        // Predicated region
        $region115: #{tpu_custom_call.1} parent=113 // pred_check
          %p584 = pneg %p53
        $region116: #{tpu_custom_call.1} parent=113 // pred_check_branch
          %586 = sbr.rel (%p584) target = $region118
        $region117: #{tpu_custom_call.1} parent=113 // pred_region
          _
        $region118: #{tpu_custom_call.1} parent=113 // pred_fallthru
          _
        // Predicated region
        $region119: #{tpu_custom_call.1} parent=113 // pred_check
          %p587 = pneg %p95
        $region120: #{tpu_custom_call.1} parent=113 // pred_check_branch
          %589 = sbr.rel (%p587) target = $region122
        $region121: #{tpu_custom_call.1} parent=113 // pred_region
          %590 = dma.done [#allocation5], 4096
        $region122: #{tpu_custom_call.1} parent=113 // pred_fallthru
          _
        // Predicated region
        $region123: #{tpu_custom_call.1} parent=113 // pred_check
          %p591 = pneg %p137
        $region124: #{tpu_custom_call.1} parent=113 // pred_check_branch
          %593 = sbr.rel (%p591) target = $region126
        $region125: #{tpu_custom_call.1} parent=113 // pred_region
          %594 = dma.done [#allocation7], 4096
        $region126: #{tpu_custom_call.1} parent=113 // pred_fallthru
          _
        // Predicated region
        $region127: #{tpu_custom_call.1} parent=113 // pred_check
          %p595 = pneg %p158
        $region128: #{tpu_custom_call.1} parent=113 // pred_check_branch
          %597 = sbr.rel (%p595) target = $region130
        $region129: #{tpu_custom_call.1} parent=113 // pred_region
          %598 = dma.done [#allocation7], 4096
        $region130: #{tpu_custom_call.1} parent=113 // pred_fallthru
          _
        // Predicated region
        $region131: #{tpu_custom_call.1} parent=113 // pred_check
          %p599 = pneg %p200
        $region132: #{tpu_custom_call.1} parent=113 // pred_check_branch
          %601 = sbr.rel (%p599) target = $region134
        $region133: #{tpu_custom_call.1} parent=113 // pred_region
          %602 = dma.done [#allocation10], 4096
        $region134: #{tpu_custom_call.1} parent=113 // pred_fallthru
          _
        // Predicated region
        $region135: #{tpu_custom_call.1} parent=113 // pred_check
          %p603 = pneg %p221
        $region136: #{tpu_custom_call.1} parent=113 // pred_check_branch
          %605 = sbr.rel (%p603) target = $region138
        $region137: #{tpu_custom_call.1} parent=113 // pred_region
          %606 = dma.done [#allocation10], 4096
        $region138: #{tpu_custom_call.1} parent=113 // pred_fallthru
          _
        // Predicated region
        $region139: #{tpu_custom_call.1} parent=113 // pred_check
          %p607 = pneg %p263
        $region140: #{tpu_custom_call.1} parent=113 // pred_check_branch
          %609 = sbr.rel (%p607) target = $region142
        $region141: #{tpu_custom_call.1} parent=113 // pred_region
          %610 = dma.done [#allocation13], 4096
        $region142: #{tpu_custom_call.1} parent=113 // pred_fallthru
          _
        // Predicated region
        $region143: #{tpu_custom_call.1} parent=113 // pred_check
          %p611 = pneg %p284
        $region144: #{tpu_custom_call.1} parent=113 // pred_check_branch
          %613 = sbr.rel (%p611) target = $region146
        $region145: #{tpu_custom_call.1} parent=113 // pred_region
          %614 = dma.done [#allocation13], 4096
        $region146: #{tpu_custom_call.1} parent=113 // pred_fallthru
          _
        %s615 = sand.u32 %s40, 1
        %s616 = sand.u32 %s40, 1
        %s617 = smul.addr %s616, 64
        %s618 = scalar_lea.vmem [#allocation3], %s617
        %p619 = pneg %p53
        %p620 = pneg %p50
        %p621 = pneg %p74
        %p622 = pneg %p71
        %p623 = pneg %p95
        %p624 = pneg %p92
        %p625 = pneg %p116
        %p626 = pneg %p113
        %p627 = pneg %p137
        %p628 = pneg %p134
        %p629 = pneg %p158
        %p630 = pneg %p155
        %p631 = pneg %p179
        %p632 = pneg %p176
        %p633 = pneg %p200
        %p634 = pneg %p197
        %p635 = pneg %p221
        %p636 = pneg %p218
        %p637 = pneg %p242
        %p638 = pneg %p239
        %p639 = pneg %p263
        %p640 = pneg %p260
        %p641 = pneg %p284
        %p642 = pneg %p281
        %p643 = pneg %p305
        %p644 = pneg %p302
        %p645 = pneg %p326
        %p646 = pneg %p323
        %p647 = pneg %p347
        %p648 = pneg %p344
        %p649 = pneg %p373
        %p650 = pneg %p370
        %s651 = sand.u32 %s360, 1
        %s652 = sand.u32 %s360, 1
        %s653 = smul.addr %s652, 64
        %s654 = scalar_lea.vmem [#allocation15], %s653
        %v656 = vld [vmem:[%s583] sm:$0xff]
        %v657 = vld [vmem:[%s1] sm:$0xf]
        %659 = vset.pattern.permute.xlu0 0
        %660 = vperm.xlu0 %659, %v656
        %v661 = vpop.permute.xlu0 %660
        %v664 = vlaneseq
        %v665 = vshrl.u32 %v664, 7
        %v666 = vsub.s32 0, %v665
        %v667 = vrot.slane %v657, %v666
        %v668 = vlaneseq
        %v669 = vshrl.u32 %v668, 7
        %v670 = vsub.s32 1, %v669
        %v671 = vrot.slane %v657, %v670
        %v672 = vlaneseq
        %v673 = vshrl.u32 %v672, 7
        %v674 = vsub.s32 2, %v673
        %v675 = vrot.slane %v657, %v674
        %v676 = vlaneseq
        %v677 = vshrl.u32 %v676, 7
        %v678 = vsub.s32 3, %v677
        %v679 = vrot.slane %v657, %v678
        %v684 = vmul.f32 %v661, %v667
        %v685 = vmul.f32 %v661, %v671
        %v686 = vmul.f32 %v661, %v675
        %v687 = vmul.f32 %v661, %v679
        %v688 = vld [vmem:[%s3] sm:$0xf]
        %v690 = vlaneseq
        %v691 = vshrl.u32 %v690, 7
        %v692 = vsub.s32 0, %v691
        %v693 = vrot.slane %v688, %v692
        %v694 = vlaneseq
        %v695 = vshrl.u32 %v694, 7
        %v696 = vsub.s32 1, %v695
        %v697 = vrot.slane %v688, %v696
        %v698 = vlaneseq
        %v699 = vshrl.u32 %v698, 7
        %v700 = vsub.s32 2, %v699
        %v701 = vrot.slane %v688, %v700
        %v702 = vlaneseq
        %v703 = vshrl.u32 %v702, 7
        %v704 = vsub.s32 3, %v703
        %v705 = vrot.slane %v688, %v704
        %v710 = vadd.f32 %v684, %v693
        %v711 = vadd.f32 %v685, %v697
        %v712 = vadd.f32 %v686, %v701
        %v713 = vadd.f32 %v687, %v705
        %s714 = scalar_lea.vmem %s583, 8 [#allocation3]
        %v715 = vld [vmem:[%s714] sm:$0xff]
        %717 = vset.pattern.permute.xlu0 0
        %718 = vperm.xlu0 %717, %v715
        %v719 = vpop.permute.xlu0 %718
        %v721 = vmul.f32 %v719, %v667
        %v722 = vmul.f32 %v719, %v671
        %v723 = vmul.f32 %v719, %v675
        %v724 = vmul.f32 %v719, %v679
        %v725 = vadd.f32 %v721, %v693
        %v726 = vadd.f32 %v722, %v697
        %v727 = vadd.f32 %v723, %v701
        %v728 = vadd.f32 %v724, %v705
        %s729 = scalar_lea.vmem %s583, 16 [#allocation3]
        %v730 = vld [vmem:[%s729] sm:$0xff]
        %732 = vset.pattern.permute.xlu0 0
        %733 = vperm.xlu0 %732, %v730
        %v734 = vpop.permute.xlu0 %733
        %v736 = vmul.f32 %v734, %v667
        %v737 = vmul.f32 %v734, %v671
        %v738 = vmul.f32 %v734, %v675
        %v739 = vmul.f32 %v734, %v679
        %v740 = vadd.f32 %v736, %v693
        %v741 = vadd.f32 %v737, %v697
        %v742 = vadd.f32 %v738, %v701
        %v743 = vadd.f32 %v739, %v705
        %s744 = scalar_lea.vmem %s583, 24 [#allocation3]
        %v745 = vld [vmem:[%s744] sm:$0xff]
        %747 = vset.pattern.permute.xlu0 0
        %748 = vperm.xlu0 %747, %v745
        %v749 = vpop.permute.xlu0 %748
        %v751 = vmul.f32 %v749, %v667
        %v752 = vmul.f32 %v749, %v671
        %v753 = vmul.f32 %v749, %v675
        %v754 = vmul.f32 %v749, %v679
        %v755 = vadd.f32 %v751, %v693
        %v756 = vadd.f32 %v752, %v697
        %v757 = vadd.f32 %v753, %v701
        %v758 = vadd.f32 %v754, %v705
        %s759 = scalar_lea.vmem %s583, 32 [#allocation3]
        %v760 = vld [vmem:[%s759] sm:$0xff]
        %762 = vset.pattern.permute.xlu0 0
        %763 = vperm.xlu0 %762, %v760
        %v764 = vpop.permute.xlu0 %763
        %v766 = vmul.f32 %v764, %v667
        %v767 = vmul.f32 %v764, %v671
        %v768 = vmul.f32 %v764, %v675
        %v769 = vmul.f32 %v764, %v679
        %v770 = vadd.f32 %v766, %v693
        %v771 = vadd.f32 %v767, %v697
        %v772 = vadd.f32 %v768, %v701
        %v773 = vadd.f32 %v769, %v705
        %s774 = scalar_lea.vmem %s583, 40 [#allocation3]
        %v775 = vld [vmem:[%s774] sm:$0xff]
        %777 = vset.pattern.permute.xlu0 0
        %778 = vperm.xlu0 %777, %v775
        %v779 = vpop.permute.xlu0 %778
        %v781 = vmul.f32 %v779, %v667
        %v782 = vmul.f32 %v779, %v671
        %v783 = vmul.f32 %v779, %v675
        %v784 = vmul.f32 %v779, %v679
        %v785 = vadd.f32 %v781, %v693
        %v786 = vadd.f32 %v782, %v697
        %v787 = vadd.f32 %v783, %v701
        %v788 = vadd.f32 %v784, %v705
        %s789 = scalar_lea.vmem %s583, 48 [#allocation3]
        %v790 = vld [vmem:[%s789] sm:$0xff]
        %792 = vset.pattern.permute.xlu0 0
        %793 = vperm.xlu0 %792, %v790
        %v794 = vpop.permute.xlu0 %793
        %v796 = vmul.f32 %v794, %v667
        %v797 = vmul.f32 %v794, %v671
        %v798 = vmul.f32 %v794, %v675
        %v799 = vmul.f32 %v794, %v679
        %v800 = vadd.f32 %v796, %v693
        %v801 = vadd.f32 %v797, %v697
        %v802 = vadd.f32 %v798, %v701
        %v803 = vadd.f32 %v799, %v705
        %s804 = scalar_lea.vmem %s583, 56 [#allocation3]
        %v805 = vld [vmem:[%s804] sm:$0xff]
        %807 = vset.pattern.permute.xlu0 0
        %808 = vperm.xlu0 %807, %v805
        %v809 = vpop.permute.xlu0 %808
        %v811 = vmul.f32 %v809, %v667
        %v812 = vmul.f32 %v809, %v671
        %v813 = vmul.f32 %v809, %v675
        %v814 = vmul.f32 %v809, %v679
        %v815 = vadd.f32 %v811, %v693
        %v816 = vadd.f32 %v812, %v697
        %v817 = vadd.f32 %v813, %v701
        %v818 = vadd.f32 %v814, %v705
        %v819 = vld [vmem:[#allocation4] sm:$0xff]
        %v820 = vld [vmem:[#allocation4 + $0x8] sm:$0xff]
        %v821 = vld [vmem:[#allocation4 + $0x10] sm:$0xff]
        %v822 = vld [vmem:[#allocation4 + $0x18] sm:$0xff]
        %v823 = vld [vmem:[#allocation4 + $0x20] sm:$0xff]
        %v824 = vld [vmem:[#allocation4 + $0x28] sm:$0xff]
        %v825 = vld [vmem:[#allocation4 + $0x30] sm:$0xff]
        %v826 = vld [vmem:[#allocation4 + $0x38] sm:$0xff]
        %v827 = vld [vmem:[#allocation4 + $0x40] sm:$0xff]
        %v828 = vld [vmem:[#allocation4 + $0x48] sm:$0xff]
        %v829 = vld [vmem:[#allocation4 + $0x50] sm:$0xff]
        %v830 = vld [vmem:[#allocation4 + $0x58] sm:$0xff]
        %v831 = vld [vmem:[#allocation4 + $0x60] sm:$0xff]
        %v832 = vld [vmem:[#allocation4 + $0x68] sm:$0xff]
        %v833 = vld [vmem:[#allocation4 + $0x70] sm:$0xff]
        %v834 = vld [vmem:[#allocation4 + $0x78] sm:$0xff]
        %v835 = vld [vmem:[#allocation4 + $0x80] sm:$0xff]
        %v836 = vld [vmem:[#allocation4 + $0x88] sm:$0xff]
        %v837 = vld [vmem:[#allocation4 + $0x90] sm:$0xff]
        %v838 = vld [vmem:[#allocation4 + $0x98] sm:$0xff]
        %v839 = vld [vmem:[#allocation4 + $0xa0] sm:$0xff]
        %v840 = vld [vmem:[#allocation4 + $0xa8] sm:$0xff]
        %v841 = vld [vmem:[#allocation4 + $0xb0] sm:$0xff]
        %v842 = vld [vmem:[#allocation4 + $0xb8] sm:$0xff]
        %v843 = vld [vmem:[#allocation4 + $0xc0] sm:$0xff]
        %v844 = vld [vmem:[#allocation4 + $0xc8] sm:$0xff]
        %v845 = vld [vmem:[#allocation4 + $0xd0] sm:$0xff]
        %v846 = vld [vmem:[#allocation4 + $0xd8] sm:$0xff]
        %v847 = vld [vmem:[#allocation4 + $0xe0] sm:$0xff]
        %v848 = vld [vmem:[#allocation4 + $0xe8] sm:$0xff]
        %v849 = vld [vmem:[#allocation4 + $0xf0] sm:$0xff]
        %v850 = vld [vmem:[#allocation4 + $0xf8] sm:$0xff]
        %v883 = vunpack.c.l.b16 %v819
        %v884 = vunpack.c.h.b16 %v819
        %v885 = vunpack.c.l.b16 %v820
        %v886 = vunpack.c.h.b16 %v820
        %v887 = vunpack.c.l.b16 %v821
        %v888 = vunpack.c.h.b16 %v821
        %v889 = vunpack.c.l.b16 %v822
        %v890 = vunpack.c.h.b16 %v822
        %v891 = vunpack.c.l.b16 %v823
        %v892 = vunpack.c.h.b16 %v823
        %v893 = vunpack.c.l.b16 %v824
        %v894 = vunpack.c.h.b16 %v824
        %v895 = vunpack.c.l.b16 %v825
        %v896 = vunpack.c.h.b16 %v825
        %v897 = vunpack.c.l.b16 %v826
        %v898 = vunpack.c.h.b16 %v826
        %v899 = vunpack.c.l.b16 %v827
        %v900 = vunpack.c.h.b16 %v827
        %v901 = vunpack.c.l.b16 %v828
        %v902 = vunpack.c.h.b16 %v828
        %v903 = vunpack.c.l.b16 %v829
        %v904 = vunpack.c.h.b16 %v829
        %v905 = vunpack.c.l.b16 %v830
        %v906 = vunpack.c.h.b16 %v830
        %v907 = vunpack.c.l.b16 %v831
        %v908 = vunpack.c.h.b16 %v831
        %v909 = vunpack.c.l.b16 %v832
        %v910 = vunpack.c.h.b16 %v832
        %v911 = vunpack.c.l.b16 %v833
        %v912 = vunpack.c.h.b16 %v833
        %v913 = vunpack.c.l.b16 %v834
        %v914 = vunpack.c.h.b16 %v834
        %v915 = vunpack.c.l.b16 %v835
        %v916 = vunpack.c.h.b16 %v835
        %v917 = vunpack.c.l.b16 %v836
        %v918 = vunpack.c.h.b16 %v836
        %v919 = vunpack.c.l.b16 %v837
        %v920 = vunpack.c.h.b16 %v837
        %v921 = vunpack.c.l.b16 %v838
        %v922 = vunpack.c.h.b16 %v838
        %v923 = vunpack.c.l.b16 %v839
        %v924 = vunpack.c.h.b16 %v839
        %v925 = vunpack.c.l.b16 %v840
        %v926 = vunpack.c.h.b16 %v840
        %v927 = vunpack.c.l.b16 %v841
        %v928 = vunpack.c.h.b16 %v841
        %v929 = vunpack.c.l.b16 %v842
        %v930 = vunpack.c.h.b16 %v842
        %v931 = vunpack.c.l.b16 %v843
        %v932 = vunpack.c.h.b16 %v843
        %v933 = vunpack.c.l.b16 %v844
        %v934 = vunpack.c.h.b16 %v844
        %v935 = vunpack.c.l.b16 %v845
        %v936 = vunpack.c.h.b16 %v845
        %v937 = vunpack.c.l.b16 %v846
        %v938 = vunpack.c.h.b16 %v846
        %v939 = vunpack.c.l.b16 %v847
        %v940 = vunpack.c.h.b16 %v847
        %v941 = vunpack.c.l.b16 %v848
        %v942 = vunpack.c.h.b16 %v848
        %v943 = vunpack.c.l.b16 %v849
        %v944 = vunpack.c.h.b16 %v849
        %v945 = vunpack.c.l.b16 %v850
        %v946 = vunpack.c.h.b16 %v850
        %v947 = vpack.c.b16 %v887, %v883
        %v948 = vpack.c.b16 %v888, %v884
        %v949 = vpack.c.b16 %v889, %v885
        %v950 = vpack.c.b16 %v890, %v886
        %v951 = vpack.c.b16 %v895, %v891
        %v952 = vpack.c.b16 %v896, %v892
        %v953 = vpack.c.b16 %v897, %v893
        %v954 = vpack.c.b16 %v898, %v894
        %v955 = vpack.c.b16 %v903, %v899
        %v956 = vpack.c.b16 %v904, %v900
        %v957 = vpack.c.b16 %v905, %v901
        %v958 = vpack.c.b16 %v906, %v902
        %v959 = vpack.c.b16 %v911, %v907
        %v960 = vpack.c.b16 %v912, %v908
        %v961 = vpack.c.b16 %v913, %v909
        %v962 = vpack.c.b16 %v914, %v910
        %v963 = vpack.c.b16 %v919, %v915
        %v964 = vpack.c.b16 %v920, %v916
        %v965 = vpack.c.b16 %v921, %v917
        %v966 = vpack.c.b16 %v922, %v918
        %v967 = vpack.c.b16 %v927, %v923
        %v968 = vpack.c.b16 %v928, %v924
        %v969 = vpack.c.b16 %v929, %v925
        %v970 = vpack.c.b16 %v930, %v926
        %v971 = vpack.c.b16 %v935, %v931
        %v972 = vpack.c.b16 %v936, %v932
        %v973 = vpack.c.b16 %v937, %v933
        %v974 = vpack.c.b16 %v938, %v934
        %v975 = vpack.c.b16 %v943, %v939
        %v976 = vpack.c.b16 %v944, %v940
        %v977 = vpack.c.b16 %v945, %v941
        %v978 = vpack.c.b16 %v946, %v942
        %1011 = vmatprep.subr.bf16.mxu0 %v948
        %1012 = vmatpush1.bf16.msra.mxu0 %v947
        %1013 = vmatprep.subr.bf16.mxu0 %v952
        %1014 = vmatpush1.bf16.msra.mxu0 %v951
        %1015 = vmatprep.subr.bf16.mxu0 %v956
        %1016 = vmatpush1.bf16.msra.mxu0 %v955
        %1017 = vmatprep.subr.bf16.mxu0 %v960
        %1018 = vmatpush1.bf16.msra.mxu0 %v959
        %1019 = vmatprep.subr.bf16.mxu0 %v964
        %1020 = vmatpush1.bf16.msra.mxu0 %v963
        %1021 = vmatprep.subr.bf16.mxu0 %v968
        %1022 = vmatpush1.bf16.msra.mxu0 %v967
        %1023 = vmatprep.subr.bf16.mxu0 %v972
        %1024 = vmatpush1.bf16.msra.mxu0 %v971
        %1025 = vmatprep.subr.bf16.mxu0 %v976
        %1026 = vmatpush1.bf16.msra.mxu0 %v975
        %1027 = vmatprep.subr.bf16.mxu0 0
        %1028 = vmatpush1.bf16.msra.mxu0 0
        %1029 = vmatprep.subr.bf16.mxu0 0
        %1030 = vmatpush1.bf16.msra.mxu0 0
        %1031 = vmatprep.subr.bf16.mxu0 0
        %1032 = vmatpush1.bf16.msra.mxu0 0
        %1033 = vmatprep.subr.bf16.mxu0 0
        %1034 = vmatpush1.bf16.msra.mxu0 0
        %1035 = vmatprep.subr.bf16.mxu0 0
        %1036 = vmatpush1.bf16.msra.mxu0 0
        %1037 = vmatprep.subr.bf16.mxu0 0
        %1038 = vmatpush1.bf16.msra.mxu0 0
        %1039 = vmatprep.subr.bf16.mxu0 0
        %1040 = vmatpush1.bf16.msra.mxu0 0
        %1041 = vmatprep.subr.bf16.mxu0 0
        %1042 = vmatpush1.bf16.msra.mxu0 0
        %1043 = vmatprep.mubr.bf16.mxu0 0
        %1044 = vmatmul.mubr.bf16.gmra.mrb[0].mxu0 0
        %v1045 = vpop.f32.mrb[0].mxu0
        %v1046 = vadd.f32 0.0, %v1045
        %v1047 = vpop.f32.mrb[0].mxu0
        %v1048 = vadd.f32 0.0, %v1047
        %v1049 = vpop.f32.mrb[0].mxu0
        %v1050 = vpop.f32.mrb[0].mxu0
        %1051 = vdwg.mxu0
        %1052 = vmatprep.subr.bf16.mxu0 %v950
        %1053 = vmatpush1.bf16.msra.mxu0 %v949
        %1054 = vmatprep.subr.bf16.mxu0 %v954
        %1055 = vmatpush1.bf16.msra.mxu0 %v953
        %1056 = vmatprep.subr.bf16.mxu0 %v958
        %1057 = vmatpush1.bf16.msra.mxu0 %v957
        %1058 = vmatprep.subr.bf16.mxu0 %v962
        %1059 = vmatpush1.bf16.msra.mxu0 %v961
        %1060 = vmatprep.subr.bf16.mxu0 %v966
        %1061 = vmatpush1.bf16.msra.mxu0 %v965
        %1062 = vmatprep.subr.bf16.mxu0 %v970
        %1063 = vmatpush1.bf16.msra.mxu0 %v969
        %1064 = vmatprep.subr.bf16.mxu0 %v974
        %1065 = vmatpush1.bf16.msra.mxu0 %v973
        %1066 = vmatprep.subr.bf16.mxu0 %v978
        %1067 = vmatpush1.bf16.msra.mxu0 %v977
        %1068 = vmatprep.subr.bf16.mxu0 0
        %1069 = vmatpush1.bf16.msra.mxu0 0
        %1070 = vmatprep.subr.bf16.mxu0 0
        %1071 = vmatpush1.bf16.msra.mxu0 0
        %1072 = vmatprep.subr.bf16.mxu0 0
        %1073 = vmatpush1.bf16.msra.mxu0 0
        %1074 = vmatprep.subr.bf16.mxu0 0
        %1075 = vmatpush1.bf16.msra.mxu0 0
        %1076 = vmatprep.subr.bf16.mxu0 0
        %1077 = vmatpush1.bf16.msra.mxu0 0
        %1078 = vmatprep.subr.bf16.mxu0 0
        %1079 = vmatpush1.bf16.msra.mxu0 0
        %1080 = vmatprep.subr.bf16.mxu0 0
        %1081 = vmatpush1.bf16.msra.mxu0 0
        %1082 = vmatprep.subr.bf16.mxu0 0
        %1083 = vmatpush1.bf16.msra.mxu0 0
        %1084 = vmatprep.mubr.bf16.mxu0 0
        %1085 = vmatmul.mubr.bf16.gmra.mrb[0].mxu0 0
        %v1086 = vpop.f32.mrb[0].mxu0
        %v1087 = vadd.f32 0.0, %v1086
        %v1088 = vpop.f32.mrb[0].mxu0
        %v1089 = vadd.f32 0.0, %v1088
        %v1090 = vpop.f32.mrb[0].mxu0
        %v1091 = vpop.f32.mrb[0].mxu0
        %1092 = vdwg.mxu0
        %v1093 = vadd.f32 %v710, %v1046
        %v1094 = vadd.f32 %v711, %v1048
        %v1095 = vadd.f32 %v712, %v1087
        %v1096 = vadd.f32 %v713, %v1089
        %v1097 = vsub.f32 0.0, %v1093
        %v1098 = vsub.f32 0.0, %v1094
        %v1099 = vsub.f32 0.0, %v1095
        %v1100 = vmul.f32 %v1097, 1.442695
        %v1101 = vpow.pop %v1100
        %v1102 = vmul.f32 %v1098, 1.442695
        %v1103 = vpow.pop %v1102
        %v1104 = vmul.f32 %v1099, 1.442695
        %v1105 = vpow.pop %v1104
        %v1106 = vadd.f32 %v1101, 1.0
        %v1107 = vadd.f32 %v1103, 1.0
        %v1108 = vadd.f32 %v1105, 1.0
        %v1109 = vrcp.pop %v1106
        %v1110 = vrcp.pop %v1107
        %v1111 = vrcp.pop %v1108
        %v1112 = vtanh.pop %v1096
        %v1113 = vmul.f32 %v1110, 0.0
        %v1114 = vmul.f32 %v1109, %v1112
        %v1115 = vadd.f32 %v1113, %v1114
        %v1116 = vtanh.pop %v1115
        %v1117 = vmul.f32 %v1111, %v1116
        %v1118 = vpack.c.bf16 %v1117, %v1117
        %1119 = vmatprep.subr.bf16.mxu0 %v948
        %1120 = vmatpush1.bf16.msra.mxu0 %v947
        %1121 = vmatprep.subr.bf16.mxu0 %v952
        %1122 = vmatpush1.bf16.msra.mxu0 %v951
        %1123 = vmatprep.subr.bf16.mxu0 %v956
        %1124 = vmatpush1.bf16.msra.mxu0 %v955
        %1125 = vmatprep.subr.bf16.mxu0 %v960
        %1126 = vmatpush1.bf16.msra.mxu0 %v959
        %1127 = vmatprep.subr.bf16.mxu0 %v964
        %1128 = vmatpush1.bf16.msra.mxu0 %v963
        %1129 = vmatprep.subr.bf16.mxu0 %v968
        %1130 = vmatpush1.bf16.msra.mxu0 %v967
        %1131 = vmatprep.subr.bf16.mxu0 %v972
        %1132 = vmatpush1.bf16.msra.mxu0 %v971
        %1133 = vmatprep.subr.bf16.mxu0 %v976
        %1134 = vmatpush1.bf16.msra.mxu0 %v975
        %1135 = vmatprep.subr.bf16.mxu0 0
        %1136 = vmatpush1.bf16.msra.mxu0 0
        %1137 = vmatprep.subr.bf16.mxu0 0
        %1138 = vmatpush1.bf16.msra.mxu0 0
        %1139 = vmatprep.subr.bf16.mxu0 0
        %1140 = vmatpush1.bf16.msra.mxu0 0
        %1141 = vmatprep.subr.bf16.mxu0 0
        %1142 = vmatpush1.bf16.msra.mxu0 0
        %1143 = vmatprep.subr.bf16.mxu0 0
        %1144 = vmatpush1.bf16.msra.mxu0 0
        %1145 = vmatprep.subr.bf16.mxu0 0
        %1146 = vmatpush1.bf16.msra.mxu0 0
        %1147 = vmatprep.subr.bf16.mxu0 0
        %1148 = vmatpush1.bf16.msra.mxu0 0
        %1149 = vmatprep.subr.bf16.mxu0 0
        %1150 = vmatpush1.bf16.msra.mxu0 0
        %1151 = vmatprep.mubr.bf16.mxu0 0
        %1152 = vmatmul.mubr.bf16.gmra.mrb[0].mxu0 %v1118
        %v1153 = vpop.f32.mrb[0].mxu0
        %v1154 = vadd.f32 0.0, %v1153
        %v1155 = vpop.f32.mrb[0].mxu0
        %v1156 = vadd.f32 0.0, %v1155
        %v1157 = vpop.f32.mrb[0].mxu0
        %v1158 = vpop.f32.mrb[0].mxu0
        %1159 = vdwg.mxu0
        %1160 = vmatprep.subr.bf16.mxu0 %v950
        %1161 = vmatpush1.bf16.msra.mxu0 %v949
        %1162 = vmatprep.subr.bf16.mxu0 %v954
        %1163 = vmatpush1.bf16.msra.mxu0 %v953
        %1164 = vmatprep.subr.bf16.mxu0 %v958
        %1165 = vmatpush1.bf16.msra.mxu0 %v957
        %1166 = vmatprep.subr.bf16.mxu0 %v962
        %1167 = vmatpush1.bf16.msra.mxu0 %v961
        %1168 = vmatprep.subr.bf16.mxu0 %v966
        %1169 = vmatpush1.bf16.msra.mxu0 %v965
        %1170 = vmatprep.subr.bf16.mxu0 %v970
        %1171 = vmatpush1.bf16.msra.mxu0 %v969
        %1172 = vmatprep.subr.bf16.mxu0 %v974
        %1173 = vmatpush1.bf16.msra.mxu0 %v973
        %1174 = vmatprep.subr.bf16.mxu0 %v978
        %1175 = vmatpush1.bf16.msra.mxu0 %v977
        %1176 = vmatprep.subr.bf16.mxu0 0
        %1177 = vmatpush1.bf16.msra.mxu0 0
        %1178 = vmatprep.subr.bf16.mxu0 0
        %1179 = vmatpush1.bf16.msra.mxu0 0
        %1180 = vmatprep.subr.bf16.mxu0 0
        %1181 = vmatpush1.bf16.msra.mxu0 0
        %1182 = vmatprep.subr.bf16.mxu0 0
        %1183 = vmatpush1.bf16.msra.mxu0 0
        %1184 = vmatprep.subr.bf16.mxu0 0
        %1185 = vmatpush1.bf16.msra.mxu0 0
        %1186 = vmatprep.subr.bf16.mxu0 0
        %1187 = vmatpush1.bf16.msra.mxu0 0
        %1188 = vmatprep.subr.bf16.mxu0 0
        %1189 = vmatpush1.bf16.msra.mxu0 0
        %1190 = vmatprep.subr.bf16.mxu0 0
        %1191 = vmatpush1.bf16.msra.mxu0 0
        %1192 = vmatprep.mubr.bf16.mxu0 0
        %1193 = vmatmul.mubr.bf16.gmra.mrb[0].mxu0 %v1118
        %v1194 = vpop.f32.mrb[0].mxu0
        %v1195 = vadd.f32 0.0, %v1194
        %v1196 = vpop.f32.mrb[0].mxu0
        %v1197 = vadd.f32 0.0, %v1196
        %v1198 = vpop.f32.mrb[0].mxu0
        %v1199 = vpop.f32.mrb[0].mxu0
        %1200 = vdwg.mxu0
        %v1201 = vadd.f32 %v725, %v1154
        %v1202 = vadd.f32 %v726, %v1156
        %v1203 = vadd.f32 %v727, %v1195
        %v1204 = vadd.f32 %v728, %v1197
        %v1205 = vsub.f32 0.0, %v1201
        %v1206 = vsub.f32 0.0, %v1202
        %v1207 = vsub.f32 0.0, %v1203
        %v1208 = vmul.f32 %v1205, 1.442695
        %v1209 = vpow.pop %v1208
        %v1210 = vmul.f32 %v1206, 1.442695
        %v1211 = vpow.pop %v1210
        %v1212 = vmul.f32 %v1207, 1.442695
        %v1213 = vpow.pop %v1212
        %v1214 = vadd.f32 %v1209, 1.0
        %v1215 = vadd.f32 %v1211, 1.0
        %v1216 = vadd.f32 %v1213, 1.0
        %v1217 = vrcp.pop %v1214
        %v1218 = vrcp.pop %v1215
        %v1219 = vrcp.pop %v1216
        %v1220 = vtanh.pop %v1204
        %v1221 = vmul.f32 %v1218, %v1115
        %v1222 = vmul.f32 %v1217, %v1220
        %v1223 = vadd.f32 %v1221, %v1222
        %v1224 = vtanh.pop %v1223
        %v1225 = vmul.f32 %v1219, %v1224
        %v1226 = vpack.c.bf16 %v1225, %v1225
        %1227 = vmatprep.subr.bf16.mxu0 %v948
        %1228 = vmatpush1.bf16.msra.mxu0 %v947
        %1229 = vmatprep.subr.bf16.mxu0 %v952
        %1230 = vmatpush1.bf16.msra.mxu0 %v951
        %1231 = vmatprep.subr.bf16.mxu0 %v956
        %1232 = vmatpush1.bf16.msra.mxu0 %v955
        %1233 = vmatprep.subr.bf16.mxu0 %v960
        %1234 = vmatpush1.bf16.msra.mxu0 %v959
        %1235 = vmatprep.subr.bf16.mxu0 %v964
        %1236 = vmatpush1.bf16.msra.mxu0 %v963
        %1237 = vmatprep.subr.bf16.mxu0 %v968
        %1238 = vmatpush1.bf16.msra.mxu0 %v967
        %1239 = vmatprep.subr.bf16.mxu0 %v972
        %1240 = vmatpush1.bf16.msra.mxu0 %v971
        %1241 = vmatprep.subr.bf16.mxu0 %v976
        %1242 = vmatpush1.bf16.msra.mxu0 %v975
        %1243 = vmatprep.subr.bf16.mxu0 0
        %1244 = vmatpush1.bf16.msra.mxu0 0
        %1245 = vmatprep.subr.bf16.mxu0 0
        %1246 = vmatpush1.bf16.msra.mxu0 0
        %1247 = vmatprep.subr.bf16.mxu0 0
        %1248 = vmatpush1.bf16.msra.mxu0 0
        %1249 = vmatprep.subr.bf16.mxu0 0
        %1250 = vmatpush1.bf16.msra.mxu0 0
        %1251 = vmatprep.subr.bf16.mxu0 0
        %1252 = vmatpush1.bf16.msra.mxu0 0
        %1253 = vmatprep.subr.bf16.mxu0 0
        %1254 = vmatpush1.bf16.msra.mxu0 0
        %1255 = vmatprep.subr.bf16.mxu0 0
        %1256 = vmatpush1.bf16.msra.mxu0 0
        %1257 = vmatprep.subr.bf16.mxu0 0
        %1258 = vmatpush1.bf16.msra.mxu0 0
        %1259 = vmatprep.mubr.bf16.mxu0 0
        %1260 = vmatmul.mubr.bf16.gmra.mrb[0].mxu0 %v1226
        %v1261 = vpop.f32.mrb[0].mxu0
        %v1262 = vadd.f32 0.0, %v1261
        %v1263 = vpop.f32.mrb[0].mxu0
        %v1264 = vadd.f32 0.0, %v1263
        %v1265 = vpop.f32.mrb[0].mxu0
        %v1266 = vpop.f32.mrb[0].mxu0
        %1267 = vdwg.mxu0
        %1268 = vmatprep.subr.bf16.mxu0 %v950
        %1269 = vmatpush1.bf16.msra.mxu0 %v949
        %1270 = vmatprep.subr.bf16.mxu0 %v954
        %1271 = vmatpush1.bf16.msra.mxu0 %v953
        %1272 = vmatprep.subr.bf16.mxu0 %v958
        %1273 = vmatpush1.bf16.msra.mxu0 %v957
        %1274 = vmatprep.subr.bf16.mxu0 %v962
        %1275 = vmatpush1.bf16.msra.mxu0 %v961
        %1276 = vmatprep.subr.bf16.mxu0 %v966
        %1277 = vmatpush1.bf16.msra.mxu0 %v965
        %1278 = vmatprep.subr.bf16.mxu0 %v970
        %1279 = vmatpush1.bf16.msra.mxu0 %v969
        %1280 = vmatprep.subr.bf16.mxu0 %v974
        %1281 = vmatpush1.bf16.msra.mxu0 %v973
        %1282 = vmatprep.subr.bf16.mxu0 %v978
        %1283 = vmatpush1.bf16.msra.mxu0 %v977
        %1284 = vmatprep.subr.bf16.mxu0 0
        %1285 = vmatpush1.bf16.msra.mxu0 0
        %1286 = vmatprep.subr.bf16.mxu0 0
        %1287 = vmatpush1.bf16.msra.mxu0 0
        %1288 = vmatprep.subr.bf16.mxu0 0
        %1289 = vmatpush1.bf16.msra.mxu0 0
        %1290 = vmatprep.subr.bf16.mxu0 0
        %1291 = vmatpush1.bf16.msra.mxu0 0
        %1292 = vmatprep.subr.bf16.mxu0 0
        %1293 = vmatpush1.bf16.msra.mxu0 0
        %1294 = vmatprep.subr.bf16.mxu0 0
        %1295 = vmatpush1.bf16.msra.mxu0 0
        %1296 = vmatprep.subr.bf16.mxu0 0
        %1297 = vmatpush1.bf16.msra.mxu0 0
        %1298 = vmatprep.subr.bf16.mxu0 0
        %1299 = vmatpush1.bf16.msra.mxu0 0
        %1300 = vmatprep.mubr.bf16.mxu0 0
        %1301 = vmatmul.mubr.bf16.gmra.mrb[0].mxu0 %v1226
        %v1302 = vpop.f32.mrb[0].mxu0
        %v1303 = vadd.f32 0.0, %v1302
        %v1304 = vpop.f32.mrb[0].mxu0
        %v1305 = vadd.f32 0.0, %v1304
        %v1306 = vpop.f32.mrb[0].mxu0
        %v1307 = vpop.f32.mrb[0].mxu0
        %1308 = vdwg.mxu0
        %v1309 = vadd.f32 %v740, %v1262
        %v1310 = vadd.f32 %v741, %v1264
        %v1311 = vadd.f32 %v742, %v1303
        %v1312 = vadd.f32 %v743, %v1305
        %v1313 = vsub.f32 0.0, %v1309
        %v1314 = vsub.f32 0.0, %v1310
        %v1315 = vsub.f32 0.0, %v1311
        %v1316 = vmul.f32 %v1313, 1.442695
        %v1317 = vpow.pop %v1316
        %v1318 = vmul.f32 %v1314, 1.442695
        %v1319 = vpow.pop %v1318
        %v1320 = vmul.f32 %v1315, 1.442695
        %v1321 = vpow.pop %v1320
        %v1322 = vadd.f32 %v1317, 1.0
        %v1323 = vadd.f32 %v1319, 1.0
        %v1324 = vadd.f32 %v1321, 1.0
        %v1325 = vrcp.pop %v1322
        %v1326 = vrcp.pop %v1323
        %v1327 = vrcp.pop %v1324
        %v1328 = vtanh.pop %v1312
        %v1329 = vmul.f32 %v1326, %v1223
        %v1330 = vmul.f32 %v1325, %v1328
        %v1331 = vadd.f32 %v1329, %v1330
        %v1332 = vtanh.pop %v1331
        %v1333 = vmul.f32 %v1327, %v1332
        %v1334 = vpack.c.bf16 %v1333, %v1333
        %1335 = vmatprep.subr.bf16.mxu0 %v948
        %1336 = vmatpush1.bf16.msra.mxu0 %v947
        %1337 = vmatprep.subr.bf16.mxu0 %v952
        %1338 = vmatpush1.bf16.msra.mxu0 %v951
        %1339 = vmatprep.subr.bf16.mxu0 %v956
        %1340 = vmatpush1.bf16.msra.mxu0 %v955
        %1341 = vmatprep.subr.bf16.mxu0 %v960
        %1342 = vmatpush1.bf16.msra.mxu0 %v959
        %1343 = vmatprep.subr.bf16.mxu0 %v964
        %1344 = vmatpush1.bf16.msra.mxu0 %v963
        %1345 = vmatprep.subr.bf16.mxu0 %v968
        %1346 = vmatpush1.bf16.msra.mxu0 %v967
        %1347 = vmatprep.subr.bf16.mxu0 %v972
        %1348 = vmatpush1.bf16.msra.mxu0 %v971
        %1349 = vmatprep.subr.bf16.mxu0 %v976
        %1350 = vmatpush1.bf16.msra.mxu0 %v975
        %1351 = vmatprep.subr.bf16.mxu0 0
        %1352 = vmatpush1.bf16.msra.mxu0 0
        %1353 = vmatprep.subr.bf16.mxu0 0
        %1354 = vmatpush1.bf16.msra.mxu0 0
        %1355 = vmatprep.subr.bf16.mxu0 0
        %1356 = vmatpush1.bf16.msra.mxu0 0
        %1357 = vmatprep.subr.bf16.mxu0 0
        %1358 = vmatpush1.bf16.msra.mxu0 0
        %1359 = vmatprep.subr.bf16.mxu0 0
        %1360 = vmatpush1.bf16.msra.mxu0 0
        %1361 = vmatprep.subr.bf16.mxu0 0
        %1362 = vmatpush1.bf16.msra.mxu0 0
        %1363 = vmatprep.subr.bf16.mxu0 0
        %1364 = vmatpush1.bf16.msra.mxu0 0
        %1365 = vmatprep.subr.bf16.mxu0 0
        %1366 = vmatpush1.bf16.msra.mxu0 0
        %1367 = vmatprep.mubr.bf16.mxu0 0
        %1368 = vmatmul.mubr.bf16.gmra.mrb[0].mxu0 %v1334
        %v1369 = vpop.f32.mrb[0].mxu0
        %v1370 = vadd.f32 0.0, %v1369
        %v1371 = vpop.f32.mrb[0].mxu0
        %v1372 = vadd.f32 0.0, %v1371
        %v1373 = vpop.f32.mrb[0].mxu0
        %v1374 = vpop.f32.mrb[0].mxu0
        %1375 = vdwg.mxu0
        %1376 = vmatprep.subr.bf16.mxu0 %v950
        %1377 = vmatpush1.bf16.msra.mxu0 %v949
        %1378 = vmatprep.subr.bf16.mxu0 %v954
        %1379 = vmatpush1.bf16.msra.mxu0 %v953
        %1380 = vmatprep.subr.bf16.mxu0 %v958
        %1381 = vmatpush1.bf16.msra.mxu0 %v957
        %1382 = vmatprep.subr.bf16.mxu0 %v962
        %1383 = vmatpush1.bf16.msra.mxu0 %v961
        %1384 = vmatprep.subr.bf16.mxu0 %v966
        %1385 = vmatpush1.bf16.msra.mxu0 %v965
        %1386 = vmatprep.subr.bf16.mxu0 %v970
        %1387 = vmatpush1.bf16.msra.mxu0 %v969
        %1388 = vmatprep.subr.bf16.mxu0 %v974
        %1389 = vmatpush1.bf16.msra.mxu0 %v973
        %1390 = vmatprep.subr.bf16.mxu0 %v978
        %1391 = vmatpush1.bf16.msra.mxu0 %v977
        %1392 = vmatprep.subr.bf16.mxu0 0
        %1393 = vmatpush1.bf16.msra.mxu0 0
        %1394 = vmatprep.subr.bf16.mxu0 0
        %1395 = vmatpush1.bf16.msra.mxu0 0
        %1396 = vmatprep.subr.bf16.mxu0 0
        %1397 = vmatpush1.bf16.msra.mxu0 0
        %1398 = vmatprep.subr.bf16.mxu0 0
        %1399 = vmatpush1.bf16.msra.mxu0 0
        %1400 = vmatprep.subr.bf16.mxu0 0
        %1401 = vmatpush1.bf16.msra.mxu0 0
        %1402 = vmatprep.subr.bf16.mxu0 0
        %1403 = vmatpush1.bf16.msra.mxu0 0
        %1404 = vmatprep.subr.bf16.mxu0 0
        %1405 = vmatpush1.bf16.msra.mxu0 0
        %1406 = vmatprep.subr.bf16.mxu0 0
        %1407 = vmatpush1.bf16.msra.mxu0 0
        %1408 = vmatprep.mubr.bf16.mxu0 0
        %1409 = vmatmul.mubr.bf16.gmra.mrb[0].mxu0 %v1334
        %v1410 = vpop.f32.mrb[0].mxu0
        %v1411 = vadd.f32 0.0, %v1410
        %v1412 = vpop.f32.mrb[0].mxu0
        %v1413 = vadd.f32 0.0, %v1412
        %v1414 = vpop.f32.mrb[0].mxu0
        %v1415 = vpop.f32.mrb[0].mxu0
        %1416 = vdwg.mxu0
        %v1417 = vadd.f32 %v755, %v1370
        %v1418 = vadd.f32 %v756, %v1372
        %v1419 = vadd.f32 %v757, %v1411
        %v1420 = vadd.f32 %v758, %v1413
        %v1421 = vsub.f32 0.0, %v1417
        %v1422 = vsub.f32 0.0, %v1418
        %v1423 = vsub.f32 0.0, %v1419
        %v1424 = vmul.f32 %v1421, 1.442695
        %v1425 = vpow.pop %v1424
        %v1426 = vmul.f32 %v1422, 1.442695
        %v1427 = vpow.pop %v1426
        %v1428 = vmul.f32 %v1423, 1.442695
        %v1429 = vpow.pop %v1428
        %v1430 = vadd.f32 %v1425, 1.0
        %v1431 = vadd.f32 %v1427, 1.0
        %v1432 = vadd.f32 %v1429, 1.0
        %v1433 = vrcp.pop %v1430
        %v1434 = vrcp.pop %v1431
        %v1435 = vrcp.pop %v1432
        %v1436 = vtanh.pop %v1420
        %v1437 = vmul.f32 %v1434, %v1331
        %v1438 = vmul.f32 %v1433, %v1436
        %v1439 = vadd.f32 %v1437, %v1438
        %v1440 = vtanh.pop %v1439
        %v1441 = vmul.f32 %v1435, %v1440
        %v1442 = vpack.c.bf16 %v1441, %v1441
        %1443 = vmatprep.subr.bf16.mxu0 %v948
        %1444 = vmatpush1.bf16.msra.mxu0 %v947
        %1445 = vmatprep.subr.bf16.mxu0 %v952
        %1446 = vmatpush1.bf16.msra.mxu0 %v951
        %1447 = vmatprep.subr.bf16.mxu0 %v956
        %1448 = vmatpush1.bf16.msra.mxu0 %v955
        %1449 = vmatprep.subr.bf16.mxu0 %v960
        %1450 = vmatpush1.bf16.msra.mxu0 %v959
        %1451 = vmatprep.subr.bf16.mxu0 %v964
        %1452 = vmatpush1.bf16.msra.mxu0 %v963
        %1453 = vmatprep.subr.bf16.mxu0 %v968
        %1454 = vmatpush1.bf16.msra.mxu0 %v967
        %1455 = vmatprep.subr.bf16.mxu0 %v972
        %1456 = vmatpush1.bf16.msra.mxu0 %v971
        %1457 = vmatprep.subr.bf16.mxu0 %v976
        %1458 = vmatpush1.bf16.msra.mxu0 %v975
        %1459 = vmatprep.subr.bf16.mxu0 0
        %1460 = vmatpush1.bf16.msra.mxu0 0
        %1461 = vmatprep.subr.bf16.mxu0 0
        %1462 = vmatpush1.bf16.msra.mxu0 0
        %1463 = vmatprep.subr.bf16.mxu0 0
        %1464 = vmatpush1.bf16.msra.mxu0 0
        %1465 = vmatprep.subr.bf16.mxu0 0
        %1466 = vmatpush1.bf16.msra.mxu0 0
        %1467 = vmatprep.subr.bf16.mxu0 0
        %1468 = vmatpush1.bf16.msra.mxu0 0
        %1469 = vmatprep.subr.bf16.mxu0 0
        %1470 = vmatpush1.bf16.msra.mxu0 0
        %1471 = vmatprep.subr.bf16.mxu0 0
        %1472 = vmatpush1.bf16.msra.mxu0 0
        %1473 = vmatprep.subr.bf16.mxu0 0
        %1474 = vmatpush1.bf16.msra.mxu0 0
        %1475 = vmatprep.mubr.bf16.mxu0 0
        %1476 = vmatmul.mubr.bf16.gmra.mrb[0].mxu0 %v1442
        %v1477 = vpop.f32.mrb[0].mxu0
        %v1478 = vadd.f32 0.0, %v1477
        %v1479 = vpop.f32.mrb[0].mxu0
        %v1480 = vadd.f32 0.0, %v1479
        %v1481 = vpop.f32.mrb[0].mxu0
        %v1482 = vpop.f32.mrb[0].mxu0
        %1483 = vdwg.mxu0
        %1484 = vmatprep.subr.bf16.mxu0 %v950
        %1485 = vmatpush1.bf16.msra.mxu0 %v949
        %1486 = vmatprep.subr.bf16.mxu0 %v954
        %1487 = vmatpush1.bf16.msra.mxu0 %v953
        %1488 = vmatprep.subr.bf16.mxu0 %v958
        %1489 = vmatpush1.bf16.msra.mxu0 %v957
        %1490 = vmatprep.subr.bf16.mxu0 %v962
        %1491 = vmatpush1.bf16.msra.mxu0 %v961
        %1492 = vmatprep.subr.bf16.mxu0 %v966
        %1493 = vmatpush1.bf16.msra.mxu0 %v965
        %1494 = vmatprep.subr.bf16.mxu0 %v970
        %1495 = vmatpush1.bf16.msra.mxu0 %v969
        %1496 = vmatprep.subr.bf16.mxu0 %v974
        %1497 = vmatpush1.bf16.msra.mxu0 %v973
        %1498 = vmatprep.subr.bf16.mxu0 %v978
        %1499 = vmatpush1.bf16.msra.mxu0 %v977
        %1500 = vmatprep.subr.bf16.mxu0 0
        %1501 = vmatpush1.bf16.msra.mxu0 0
        %1502 = vmatprep.subr.bf16.mxu0 0
        %1503 = vmatpush1.bf16.msra.mxu0 0
        %1504 = vmatprep.subr.bf16.mxu0 0
        %1505 = vmatpush1.bf16.msra.mxu0 0
        %1506 = vmatprep.subr.bf16.mxu0 0
        %1507 = vmatpush1.bf16.msra.mxu0 0
        %1508 = vmatprep.subr.bf16.mxu0 0
        %1509 = vmatpush1.bf16.msra.mxu0 0
        %1510 = vmatprep.subr.bf16.mxu0 0
        %1511 = vmatpush1.bf16.msra.mxu0 0
        %1512 = vmatprep.subr.bf16.mxu0 0
        %1513 = vmatpush1.bf16.msra.mxu0 0
        %1514 = vmatprep.subr.bf16.mxu0 0
        %1515 = vmatpush1.bf16.msra.mxu0 0
        %1516 = vmatprep.mubr.bf16.mxu0 0
        %1517 = vmatmul.mubr.bf16.gmra.mrb[0].mxu0 %v1442
        %v1518 = vpop.f32.mrb[0].mxu0
        %v1519 = vadd.f32 0.0, %v1518
        %v1520 = vpop.f32.mrb[0].mxu0
        %v1521 = vadd.f32 0.0, %v1520
        %v1522 = vpop.f32.mrb[0].mxu0
        %v1523 = vpop.f32.mrb[0].mxu0
        %1524 = vdwg.mxu0
        %v1525 = vadd.f32 %v770, %v1478
        %v1526 = vadd.f32 %v771, %v1480
        %v1527 = vadd.f32 %v772, %v1519
        %v1528 = vadd.f32 %v773, %v1521
        %v1529 = vsub.f32 0.0, %v1525
        %v1530 = vsub.f32 0.0, %v1526
        %v1531 = vsub.f32 0.0, %v1527
        %v1532 = vmul.f32 %v1529, 1.442695
        %v1533 = vpow.pop %v1532
        %v1534 = vmul.f32 %v1530, 1.442695
        %v1535 = vpow.pop %v1534
        %v1536 = vmul.f32 %v1531, 1.442695
        %v1537 = vpow.pop %v1536
        %v1538 = vadd.f32 %v1533, 1.0
        %v1539 = vadd.f32 %v1535, 1.0
        %v1540 = vadd.f32 %v1537, 1.0
        %v1541 = vrcp.pop %v1538
        %v1542 = vrcp.pop %v1539
        %v1543 = vrcp.pop %v1540
        %v1544 = vtanh.pop %v1528
        %v1545 = vmul.f32 %v1542, %v1439
        %v1546 = vmul.f32 %v1541, %v1544
        %v1547 = vadd.f32 %v1545, %v1546
        %v1548 = vtanh.pop %v1547
        %v1549 = vmul.f32 %v1543, %v1548
        %v1550 = vpack.c.bf16 %v1549, %v1549
        %1551 = vmatprep.subr.bf16.mxu0 %v948
        %1552 = vmatpush1.bf16.msra.mxu0 %v947
        %1553 = vmatprep.subr.bf16.mxu0 %v952
        %1554 = vmatpush1.bf16.msra.mxu0 %v951
        %1555 = vmatprep.subr.bf16.mxu0 %v956
        %1556 = vmatpush1.bf16.msra.mxu0 %v955
        %1557 = vmatprep.subr.bf16.mxu0 %v960
        %1558 = vmatpush1.bf16.msra.mxu0 %v959
        %1559 = vmatprep.subr.bf16.mxu0 %v964
        %1560 = vmatpush1.bf16.msra.mxu0 %v963
        %1561 = vmatprep.subr.bf16.mxu0 %v968
        %1562 = vmatpush1.bf16.msra.mxu0 %v967
        %1563 = vmatprep.subr.bf16.mxu0 %v972
        %1564 = vmatpush1.bf16.msra.mxu0 %v971
        %1565 = vmatprep.subr.bf16.mxu0 %v976
        %1566 = vmatpush1.bf16.msra.mxu0 %v975
        %1567 = vmatprep.subr.bf16.mxu0 0
        %1568 = vmatpush1.bf16.msra.mxu0 0
        %1569 = vmatprep.subr.bf16.mxu0 0
        %1570 = vmatpush1.bf16.msra.mxu0 0
        %1571 = vmatprep.subr.bf16.mxu0 0
        %1572 = vmatpush1.bf16.msra.mxu0 0
        %1573 = vmatprep.subr.bf16.mxu0 0
        %1574 = vmatpush1.bf16.msra.mxu0 0
        %1575 = vmatprep.subr.bf16.mxu0 0
        %1576 = vmatpush1.bf16.msra.mxu0 0
        %1577 = vmatprep.subr.bf16.mxu0 0
        %1578 = vmatpush1.bf16.msra.mxu0 0
        %1579 = vmatprep.subr.bf16.mxu0 0
        %1580 = vmatpush1.bf16.msra.mxu0 0
        %1581 = vmatprep.subr.bf16.mxu0 0
        %1582 = vmatpush1.bf16.msra.mxu0 0
        %1583 = vmatprep.mubr.bf16.mxu0 0
        %1584 = vmatmul.mubr.bf16.gmra.mrb[0].mxu0 %v1550
        %v1585 = vpop.f32.mrb[0].mxu0
        %v1586 = vadd.f32 0.0, %v1585
        %v1587 = vpop.f32.mrb[0].mxu0
        %v1588 = vadd.f32 0.0, %v1587
        %v1589 = vpop.f32.mrb[0].mxu0
        %v1590 = vpop.f32.mrb[0].mxu0
        %1591 = vdwg.mxu0
        %1592 = vmatprep.subr.bf16.mxu0 %v950
        %1593 = vmatpush1.bf16.msra.mxu0 %v949
        %1594 = vmatprep.subr.bf16.mxu0 %v954
        %1595 = vmatpush1.bf16.msra.mxu0 %v953
        %1596 = vmatprep.subr.bf16.mxu0 %v958
        %1597 = vmatpush1.bf16.msra.mxu0 %v957
        %1598 = vmatprep.subr.bf16.mxu0 %v962
        %1599 = vmatpush1.bf16.msra.mxu0 %v961
        %1600 = vmatprep.subr.bf16.mxu0 %v966
        %1601 = vmatpush1.bf16.msra.mxu0 %v965
        %1602 = vmatprep.subr.bf16.mxu0 %v970
        %1603 = vmatpush1.bf16.msra.mxu0 %v969
        %1604 = vmatprep.subr.bf16.mxu0 %v974
        %1605 = vmatpush1.bf16.msra.mxu0 %v973
        %1606 = vmatprep.subr.bf16.mxu0 %v978
        %1607 = vmatpush1.bf16.msra.mxu0 %v977
        %1608 = vmatprep.subr.bf16.mxu0 0
        %1609 = vmatpush1.bf16.msra.mxu0 0
        %1610 = vmatprep.subr.bf16.mxu0 0
        %1611 = vmatpush1.bf16.msra.mxu0 0
        %1612 = vmatprep.subr.bf16.mxu0 0
        %1613 = vmatpush1.bf16.msra.mxu0 0
        %1614 = vmatprep.subr.bf16.mxu0 0
        %1615 = vmatpush1.bf16.msra.mxu0 0
        %1616 = vmatprep.subr.bf16.mxu0 0
        %1617 = vmatpush1.bf16.msra.mxu0 0
        %1618 = vmatprep.subr.bf16.mxu0 0
        %1619 = vmatpush1.bf16.msra.mxu0 0
        %1620 = vmatprep.subr.bf16.mxu0 0
        %1621 = vmatpush1.bf16.msra.mxu0 0
        %1622 = vmatprep.subr.bf16.mxu0 0
        %1623 = vmatpush1.bf16.msra.mxu0 0
        %1624 = vmatprep.mubr.bf16.mxu0 0
        %1625 = vmatmul.mubr.bf16.gmra.mrb[0].mxu0 %v1550
        %v1626 = vpop.f32.mrb[0].mxu0
        %v1627 = vadd.f32 0.0, %v1626
        %v1628 = vpop.f32.mrb[0].mxu0
        %v1629 = vadd.f32 0.0, %v1628
        %v1630 = vpop.f32.mrb[0].mxu0
        %v1631 = vpop.f32.mrb[0].mxu0
        %1632 = vdwg.mxu0
        %v1633 = vadd.f32 %v785, %v1586
        %v1634 = vadd.f32 %v786, %v1588
        %v1635 = vadd.f32 %v787, %v1627
        %v1636 = vadd.f32 %v788, %v1629
        %v1637 = vsub.f32 0.0, %v1633
        %v1638 = vsub.f32 0.0, %v1634
        %v1639 = vsub.f32 0.0, %v1635
        %v1640 = vmul.f32 %v1637, 1.442695
        %v1641 = vpow.pop %v1640
        %v1642 = vmul.f32 %v1638, 1.442695
        %v1643 = vpow.pop %v1642
        %v1644 = vmul.f32 %v1639, 1.442695
        %v1645 = vpow.pop %v1644
        %v1646 = vadd.f32 %v1641, 1.0
        %v1647 = vadd.f32 %v1643, 1.0
        %v1648 = vadd.f32 %v1645, 1.0
        %v1649 = vrcp.pop %v1646
        %v1650 = vrcp.pop %v1647
        %v1651 = vrcp.pop %v1648
        %v1652 = vtanh.pop %v1636
        %v1653 = vmul.f32 %v1650, %v1547
        %v1654 = vmul.f32 %v1649, %v1652
        %v1655 = vadd.f32 %v1653, %v1654
        %v1656 = vtanh.pop %v1655
        %v1657 = vmul.f32 %v1651, %v1656
        %v1658 = vpack.c.bf16 %v1657, %v1657
        %1659 = vmatprep.subr.bf16.mxu0 %v948
        %1660 = vmatpush1.bf16.msra.mxu0 %v947
        %1661 = vmatprep.subr.bf16.mxu0 %v952
        %1662 = vmatpush1.bf16.msra.mxu0 %v951
        %1663 = vmatprep.subr.bf16.mxu0 %v956
        %1664 = vmatpush1.bf16.msra.mxu0 %v955
        %1665 = vmatprep.subr.bf16.mxu0 %v960
        %1666 = vmatpush1.bf16.msra.mxu0 %v959
        %1667 = vmatprep.subr.bf16.mxu0 %v964
        %1668 = vmatpush1.bf16.msra.mxu0 %v963
        %1669 = vmatprep.subr.bf16.mxu0 %v968
        %1670 = vmatpush1.bf16.msra.mxu0 %v967
        %1671 = vmatprep.subr.bf16.mxu0 %v972
        %1672 = vmatpush1.bf16.msra.mxu0 %v971
        %1673 = vmatprep.subr.bf16.mxu0 %v976
        %1674 = vmatpush1.bf16.msra.mxu0 %v975
        %1675 = vmatprep.subr.bf16.mxu0 0
        %1676 = vmatpush1.bf16.msra.mxu0 0
        %1677 = vmatprep.subr.bf16.mxu0 0
        %1678 = vmatpush1.bf16.msra.mxu0 0
        %1679 = vmatprep.subr.bf16.mxu0 0
        %1680 = vmatpush1.bf16.msra.mxu0 0
        %1681 = vmatprep.subr.bf16.mxu0 0
        %1682 = vmatpush1.bf16.msra.mxu0 0
        %1683 = vmatprep.subr.bf16.mxu0 0
        %1684 = vmatpush1.bf16.msra.mxu0 0
        %1685 = vmatprep.subr.bf16.mxu0 0
        %1686 = vmatpush1.bf16.msra.mxu0 0
        %1687 = vmatprep.subr.bf16.mxu0 0
        %1688 = vmatpush1.bf16.msra.mxu0 0
        %1689 = vmatprep.subr.bf16.mxu0 0
        %1690 = vmatpush1.bf16.msra.mxu0 0
        %1691 = vmatprep.mubr.bf16.mxu0 0
        %1692 = vmatmul.mubr.bf16.gmra.mrb[0].mxu0 %v1658
        %v1693 = vpop.f32.mrb[0].mxu0
        %v1694 = vadd.f32 0.0, %v1693
        %v1695 = vpop.f32.mrb[0].mxu0
        %v1696 = vadd.f32 0.0, %v1695
        %v1697 = vpop.f32.mrb[0].mxu0
        %v1698 = vpop.f32.mrb[0].mxu0
        %1699 = vdwg.mxu0
        %1700 = vmatprep.subr.bf16.mxu0 %v950
        %1701 = vmatpush1.bf16.msra.mxu0 %v949
        %1702 = vmatprep.subr.bf16.mxu0 %v954
        %1703 = vmatpush1.bf16.msra.mxu0 %v953
        %1704 = vmatprep.subr.bf16.mxu0 %v958
        %1705 = vmatpush1.bf16.msra.mxu0 %v957
        %1706 = vmatprep.subr.bf16.mxu0 %v962
        %1707 = vmatpush1.bf16.msra.mxu0 %v961
        %1708 = vmatprep.subr.bf16.mxu0 %v966
        %1709 = vmatpush1.bf16.msra.mxu0 %v965
        %1710 = vmatprep.subr.bf16.mxu0 %v970
        %1711 = vmatpush1.bf16.msra.mxu0 %v969
        %1712 = vmatprep.subr.bf16.mxu0 %v974
        %1713 = vmatpush1.bf16.msra.mxu0 %v973
        %1714 = vmatprep.subr.bf16.mxu0 %v978
        %1715 = vmatpush1.bf16.msra.mxu0 %v977
        %1716 = vmatprep.subr.bf16.mxu0 0
        %1717 = vmatpush1.bf16.msra.mxu0 0
        %1718 = vmatprep.subr.bf16.mxu0 0
        %1719 = vmatpush1.bf16.msra.mxu0 0
        %1720 = vmatprep.subr.bf16.mxu0 0
        %1721 = vmatpush1.bf16.msra.mxu0 0
        %1722 = vmatprep.subr.bf16.mxu0 0
        %1723 = vmatpush1.bf16.msra.mxu0 0
        %1724 = vmatprep.subr.bf16.mxu0 0
        %1725 = vmatpush1.bf16.msra.mxu0 0
        %1726 = vmatprep.subr.bf16.mxu0 0
        %1727 = vmatpush1.bf16.msra.mxu0 0
        %1728 = vmatprep.subr.bf16.mxu0 0
        %1729 = vmatpush1.bf16.msra.mxu0 0
        %1730 = vmatprep.subr.bf16.mxu0 0
        %1731 = vmatpush1.bf16.msra.mxu0 0
        %1732 = vmatprep.mubr.bf16.mxu0 0
        %1733 = vmatmul.mubr.bf16.gmra.mrb[0].mxu0 %v1658
        %v1734 = vpop.f32.mrb[0].mxu0
        %v1735 = vadd.f32 0.0, %v1734
        %v1736 = vpop.f32.mrb[0].mxu0
        %v1737 = vadd.f32 0.0, %v1736
        %v1738 = vpop.f32.mrb[0].mxu0
        %v1739 = vpop.f32.mrb[0].mxu0
        %1740 = vdwg.mxu0
        %v1741 = vadd.f32 %v800, %v1694
        %v1742 = vadd.f32 %v801, %v1696
        %v1743 = vadd.f32 %v802, %v1735
        %v1744 = vadd.f32 %v803, %v1737
        %v1745 = vsub.f32 0.0, %v1741
        %v1746 = vsub.f32 0.0, %v1742
        %v1747 = vsub.f32 0.0, %v1743
        %v1748 = vmul.f32 %v1745, 1.442695
        %v1749 = vpow.pop %v1748
        %v1750 = vmul.f32 %v1746, 1.442695
        %v1751 = vpow.pop %v1750
        %v1752 = vmul.f32 %v1747, 1.442695
        %v1753 = vpow.pop %v1752
        %v1754 = vadd.f32 %v1749, 1.0
        %v1755 = vadd.f32 %v1751, 1.0
        %v1756 = vadd.f32 %v1753, 1.0
        %v1757 = vrcp.pop %v1754
        %v1758 = vrcp.pop %v1755
        %v1759 = vrcp.pop %v1756
        %v1760 = vtanh.pop %v1744
        %v1761 = vmul.f32 %v1758, %v1655
        %v1762 = vmul.f32 %v1757, %v1760
        %v1763 = vadd.f32 %v1761, %v1762
        %v1764 = vtanh.pop %v1763
        %v1765 = vmul.f32 %v1759, %v1764
        %v1766 = vpack.c.bf16 %v1765, %v1765
        %1767 = vmatprep.subr.bf16.mxu0 %v948
        %1768 = vmatpush1.bf16.msra.mxu0 %v947
        %1769 = vmatprep.subr.bf16.mxu0 %v952
        %1770 = vmatpush1.bf16.msra.mxu0 %v951
        %1771 = vmatprep.subr.bf16.mxu0 %v956
        %1772 = vmatpush1.bf16.msra.mxu0 %v955
        %1773 = vmatprep.subr.bf16.mxu0 %v960
        %1774 = vmatpush1.bf16.msra.mxu0 %v959
        %1775 = vmatprep.subr.bf16.mxu0 %v964
        %1776 = vmatpush1.bf16.msra.mxu0 %v963
        %1777 = vmatprep.subr.bf16.mxu0 %v968
        %1778 = vmatpush1.bf16.msra.mxu0 %v967
        %1779 = vmatprep.subr.bf16.mxu0 %v972
        %1780 = vmatpush1.bf16.msra.mxu0 %v971
        %1781 = vmatprep.subr.bf16.mxu0 %v976
        %1782 = vmatpush1.bf16.msra.mxu0 %v975
        %1783 = vmatprep.subr.bf16.mxu0 0
        %1784 = vmatpush1.bf16.msra.mxu0 0
        %1785 = vmatprep.subr.bf16.mxu0 0
        %1786 = vmatpush1.bf16.msra.mxu0 0
        %1787 = vmatprep.subr.bf16.mxu0 0
        %1788 = vmatpush1.bf16.msra.mxu0 0
        %1789 = vmatprep.subr.bf16.mxu0 0
        %1790 = vmatpush1.bf16.msra.mxu0 0
        %1791 = vmatprep.subr.bf16.mxu0 0
        %1792 = vmatpush1.bf16.msra.mxu0 0
        %1793 = vmatprep.subr.bf16.mxu0 0
        %1794 = vmatpush1.bf16.msra.mxu0 0
        %1795 = vmatprep.subr.bf16.mxu0 0
        %1796 = vmatpush1.bf16.msra.mxu0 0
        %1797 = vmatprep.subr.bf16.mxu0 0
        %1798 = vmatpush1.bf16.msra.mxu0 0
        %1799 = vmatprep.mubr.bf16.mxu0 0
        %1800 = vmatmul.mubr.bf16.gmra.mrb[0].mxu0 %v1766
        %v1801 = vpop.f32.mrb[0].mxu0
        %v1802 = vadd.f32 0.0, %v1801
        %v1803 = vpop.f32.mrb[0].mxu0
        %v1804 = vadd.f32 0.0, %v1803
        %v1805 = vpop.f32.mrb[0].mxu0
        %v1806 = vpop.f32.mrb[0].mxu0
        %1807 = vdwg.mxu0
        %1808 = vmatprep.subr.bf16.mxu0 %v950
        %1809 = vmatpush1.bf16.msra.mxu0 %v949
        %1810 = vmatprep.subr.bf16.mxu0 %v954
        %1811 = vmatpush1.bf16.msra.mxu0 %v953
        %1812 = vmatprep.subr.bf16.mxu0 %v958
        %1813 = vmatpush1.bf16.msra.mxu0 %v957
        %1814 = vmatprep.subr.bf16.mxu0 %v962
        %1815 = vmatpush1.bf16.msra.mxu0 %v961
        %1816 = vmatprep.subr.bf16.mxu0 %v966
        %1817 = vmatpush1.bf16.msra.mxu0 %v965
        %1818 = vmatprep.subr.bf16.mxu0 %v970
        %1819 = vmatpush1.bf16.msra.mxu0 %v969
        %1820 = vmatprep.subr.bf16.mxu0 %v974
        %1821 = vmatpush1.bf16.msra.mxu0 %v973
        %1822 = vmatprep.subr.bf16.mxu0 %v978
        %1823 = vmatpush1.bf16.msra.mxu0 %v977
        %1824 = vmatprep.subr.bf16.mxu0 0
        %1825 = vmatpush1.bf16.msra.mxu0 0
        %1826 = vmatprep.subr.bf16.mxu0 0
        %1827 = vmatpush1.bf16.msra.mxu0 0
        %1828 = vmatprep.subr.bf16.mxu0 0
        %1829 = vmatpush1.bf16.msra.mxu0 0
        %1830 = vmatprep.subr.bf16.mxu0 0
        %1831 = vmatpush1.bf16.msra.mxu0 0
        %1832 = vmatprep.subr.bf16.mxu0 0
        %1833 = vmatpush1.bf16.msra.mxu0 0
        %1834 = vmatprep.subr.bf16.mxu0 0
        %1835 = vmatpush1.bf16.msra.mxu0 0
        %1836 = vmatprep.subr.bf16.mxu0 0
        %1837 = vmatpush1.bf16.msra.mxu0 0
        %1838 = vmatprep.subr.bf16.mxu0 0
        %1839 = vmatpush1.bf16.msra.mxu0 0
        %1840 = vmatprep.mubr.bf16.mxu0 0
        %1841 = vmatmul.mubr.bf16.gmra.mrb[0].mxu0 %v1766
        %v1842 = vpop.f32.mrb[0].mxu0
        %v1843 = vadd.f32 0.0, %v1842
        %v1844 = vpop.f32.mrb[0].mxu0
        %v1845 = vadd.f32 0.0, %v1844
        %v1846 = vpop.f32.mrb[0].mxu0
        %v1847 = vpop.f32.mrb[0].mxu0
        %1848 = vdwg.mxu0
        %v1849 = vadd.f32 %v815, %v1802
        %v1850 = vadd.f32 %v816, %v1804
        %v1851 = vadd.f32 %v817, %v1843
        %v1852 = vadd.f32 %v818, %v1845
        %v1853 = vsub.f32 0.0, %v1849
        %v1854 = vsub.f32 0.0, %v1850
        %v1855 = vsub.f32 0.0, %v1851
        %v1856 = vmul.f32 %v1853, 1.442695
        %v1857 = vpow.pop %v1856
        %v1858 = vmul.f32 %v1854, 1.442695
        %v1859 = vpow.pop %v1858
        %v1860 = vmul.f32 %v1855, 1.442695
        %v1861 = vpow.pop %v1860
        %v1862 = vadd.f32 %v1857, 1.0
        %v1863 = vadd.f32 %v1859, 1.0
        %v1864 = vadd.f32 %v1861, 1.0
        %v1865 = vrcp.pop %v1862
        %v1866 = vrcp.pop %v1863
        %v1867 = vrcp.pop %v1864
        %v1868 = vtanh.pop %v1852
        %v1869 = vmul.f32 %v1866, %v1763
        %v1870 = vmul.f32 %v1865, %v1868
        %v1871 = vadd.f32 %v1869, %v1870
        %v1872 = vtanh.pop %v1871
        %v1873 = vmul.f32 %v1867, %v1872
        %v1874 = vpack.c.bf16 %v1225, %v1117
        %v1875 = vpack.c.bf16 %v1441, %v1333
        %v1876 = vpack.c.bf16 %v1657, %v1549
        %v1877 = vpack.c.bf16 %v1873, %v1765
        %v1878 = vld [vmem:[#allocation6] sm:$0xff]
        %v1879 = vld [vmem:[#allocation6 + $0x8] sm:$0xff]
        %v1880 = vld [vmem:[#allocation6 + $0x10] sm:$0xff]
        %v1881 = vld [vmem:[#allocation6 + $0x18] sm:$0xff]
        %v1882 = vld [vmem:[#allocation6 + $0x20] sm:$0xff]
        %v1883 = vld [vmem:[#allocation6 + $0x28] sm:$0xff]
        %v1884 = vld [vmem:[#allocation6 + $0x30] sm:$0xff]
        %v1885 = vld [vmem:[#allocation6 + $0x38] sm:$0xff]
        %v1886 = vld [vmem:[#allocation6 + $0x40] sm:$0xff]
        %v1887 = vld [vmem:[#allocation6 + $0x48] sm:$0xff]
        %v1888 = vld [vmem:[#allocation6 + $0x50] sm:$0xff]
        %v1889 = vld [vmem:[#allocation6 + $0x58] sm:$0xff]
        %v1890 = vld [vmem:[#allocation6 + $0x60] sm:$0xff]
        %v1891 = vld [vmem:[#allocation6 + $0x68] sm:$0xff]
        %v1892 = vld [vmem:[#allocation6 + $0x70] sm:$0xff]
        %v1893 = vld [vmem:[#allocation6 + $0x78] sm:$0xff]
        %v1894 = vld [vmem:[#allocation6 + $0x80] sm:$0xff]
        %v1895 = vld [vmem:[#allocation6 + $0x88] sm:$0xff]
        %v1896 = vld [vmem:[#allocation6 + $0x90] sm:$0xff]
        %v1897 = vld [vmem:[#allocation6 + $0x98] sm:$0xff]
        %v1898 = vld [vmem:[#allocation6 + $0xa0] sm:$0xff]
        %v1899 = vld [vmem:[#allocation6 + $0xa8] sm:$0xff]
        %v1900 = vld [vmem:[#allocation6 + $0xb0] sm:$0xff]
        %v1901 = vld [vmem:[#allocation6 + $0xb8] sm:$0xff]
        %v1902 = vld [vmem:[#allocation6 + $0xc0] sm:$0xff]
        %v1903 = vld [vmem:[#allocation6 + $0xc8] sm:$0xff]
        %v1904 = vld [vmem:[#allocation6 + $0xd0] sm:$0xff]
        %v1905 = vld [vmem:[#allocation6 + $0xd8] sm:$0xff]
        %v1906 = vld [vmem:[#allocation6 + $0xe0] sm:$0xff]
        %v1907 = vld [vmem:[#allocation6 + $0xe8] sm:$0xff]
        %v1908 = vld [vmem:[#allocation6 + $0xf0] sm:$0xff]
        %v1909 = vld [vmem:[#allocation6 + $0xf8] sm:$0xff]
        %v1910 = vld [vmem:[%s6] sm:$0xf]
        %v1912 = vlaneseq
        %v1913 = vshrl.u32 %v1912, 7
        %v1914 = vsub.s32 0, %v1913
        %v1915 = vrot.slane %v1910, %v1914
        %v1916 = vlaneseq
        %v1917 = vshrl.u32 %v1916, 7
        %v1918 = vsub.s32 1, %v1917
        %v1919 = vrot.slane %v1910, %v1918
        %v1920 = vlaneseq
        %v1921 = vshrl.u32 %v1920, 7
        %v1922 = vsub.s32 2, %v1921
        %v1923 = vrot.slane %v1910, %v1922
        %v1924 = vlaneseq
        %v1925 = vshrl.u32 %v1924, 7
        %v1926 = vsub.s32 3, %v1925
        %v1927 = vrot.slane %v1910, %v1926
        %v1964 = vunpack.c.l.b16 %v1878
        %v1965 = vunpack.c.h.b16 %v1878
        %v1966 = vunpack.c.l.b16 %v1879
        %v1967 = vunpack.c.h.b16 %v1879
        %v1968 = vunpack.c.l.b16 %v1880
        %v1969 = vunpack.c.h.b16 %v1880
        %v1970 = vunpack.c.l.b16 %v1881
        %v1971 = vunpack.c.h.b16 %v1881
        %v1972 = vunpack.c.l.b16 %v1882
        %v1973 = vunpack.c.h.b16 %v1882
        %v1974 = vunpack.c.l.b16 %v1883
        %v1975 = vunpack.c.h.b16 %v1883
        %v1976 = vunpack.c.l.b16 %v1884
        %v1977 = vunpack.c.h.b16 %v1884
        %v1978 = vunpack.c.l.b16 %v1885
        %v1979 = vunpack.c.h.b16 %v1885
        %v1980 = vunpack.c.l.b16 %v1886
        %v1981 = vunpack.c.h.b16 %v1886
        %v1982 = vunpack.c.l.b16 %v1887
        %v1983 = vunpack.c.h.b16 %v1887
        %v1984 = vunpack.c.l.b16 %v1888
        %v1985 = vunpack.c.h.b16 %v1888
        %v1986 = vunpack.c.l.b16 %v1889
        %v1987 = vunpack.c.h.b16 %v1889
        %v1988 = vunpack.c.l.b16 %v1890
        %v1989 = vunpack.c.h.b16 %v1890
        %v1990 = vunpack.c.l.b16 %v1891
        %v1991 = vunpack.c.h.b16 %v1891
        %v1992 = vunpack.c.l.b16 %v1892
        %v1993 = vunpack.c.h.b16 %v1892
        %v1994 = vunpack.c.l.b16 %v1893
        %v1995 = vunpack.c.h.b16 %v1893
        %v1996 = vunpack.c.l.b16 %v1894
        %v1997 = vunpack.c.h.b16 %v1894
        %v1998 = vunpack.c.l.b16 %v1895
        %v1999 = vunpack.c.h.b16 %v1895
        %v2000 = vunpack.c.l.b16 %v1896
        %v2001 = vunpack.c.h.b16 %v1896
        %v2002 = vunpack.c.l.b16 %v1897
        %v2003 = vunpack.c.h.b16 %v1897
        %v2004 = vunpack.c.l.b16 %v1898
        %v2005 = vunpack.c.h.b16 %v1898
        %v2006 = vunpack.c.l.b16 %v1899
        %v2007 = vunpack.c.h.b16 %v1899
        %v2008 = vunpack.c.l.b16 %v1900
        %v2009 = vunpack.c.h.b16 %v1900
        %v2010 = vunpack.c.l.b16 %v1901
        %v2011 = vunpack.c.h.b16 %v1901
        %v2012 = vunpack.c.l.b16 %v1902
        %v2013 = vunpack.c.h.b16 %v1902
        %v2014 = vunpack.c.l.b16 %v1903
        %v2015 = vunpack.c.h.b16 %v1903
        %v2016 = vunpack.c.l.b16 %v1904
        %v2017 = vunpack.c.h.b16 %v1904
        %v2018 = vunpack.c.l.b16 %v1905
        %v2019 = vunpack.c.h.b16 %v1905
        %v2020 = vunpack.c.l.b16 %v1906
        %v2021 = vunpack.c.h.b16 %v1906
        %v2022 = vunpack.c.l.b16 %v1907
        %v2023 = vunpack.c.h.b16 %v1907
        %v2024 = vunpack.c.l.b16 %v1908
        %v2025 = vunpack.c.h.b16 %v1908
        %v2026 = vunpack.c.l.b16 %v1909
        %v2027 = vunpack.c.h.b16 %v1909
        %v2028 = vpack.c.b16 %v1968, %v1964
        %v2029 = vpack.c.b16 %v1969, %v1965
        %v2030 = vpack.c.b16 %v1970, %v1966
        %v2031 = vpack.c.b16 %v1971, %v1967
        %v2032 = vpack.c.b16 %v1976, %v1972
        %v2033 = vpack.c.b16 %v1977, %v1973
        %v2034 = vpack.c.b16 %v1978, %v1974
        %v2035 = vpack.c.b16 %v1979, %v1975
        %v2036 = vpack.c.b16 %v1984, %v1980
        %v2037 = vpack.c.b16 %v1985, %v1981
        %v2038 = vpack.c.b16 %v1986, %v1982
        %v2039 = vpack.c.b16 %v1987, %v1983
        %v2040 = vpack.c.b16 %v1992, %v1988
        %v2041 = vpack.c.b16 %v1993, %v1989
        %v2042 = vpack.c.b16 %v1994, %v1990
        %v2043 = vpack.c.b16 %v1995, %v1991
        %v2044 = vpack.c.b16 %v2000, %v1996
        %v2045 = vpack.c.b16 %v2001, %v1997
        %v2046 = vpack.c.b16 %v2002, %v1998
        %v2047 = vpack.c.b16 %v2003, %v1999
        %v2048 = vpack.c.b16 %v2008, %v2004
        %v2049 = vpack.c.b16 %v2009, %v2005
        %v2050 = vpack.c.b16 %v2010, %v2006
        %v2051 = vpack.c.b16 %v2011, %v2007
        %v2052 = vpack.c.b16 %v2016, %v2012
        %v2053 = vpack.c.b16 %v2017, %v2013
        %v2054 = vpack.c.b16 %v2018, %v2014
        %v2055 = vpack.c.b16 %v2019, %v2015
        %v2056 = vpack.c.b16 %v2024, %v2020
        %v2057 = vpack.c.b16 %v2025, %v2021
        %v2058 = vpack.c.b16 %v2026, %v2022
        %v2059 = vpack.c.b16 %v2027, %v2023
        %2092 = vmatprep.subr.bf16.mxu0 %v2029
        %2093 = vmatpush1.bf16.msra.mxu0 %v2028
        %2094 = vmatprep.subr.bf16.mxu0 %v2033
        %2095 = vmatpush1.bf16.msra.mxu0 %v2032
        %2096 = vmatprep.subr.bf16.mxu0 %v2037
        %2097 = vmatpush1.bf16.msra.mxu0 %v2036
        %2098 = vmatprep.subr.bf16.mxu0 %v2041
        %2099 = vmatpush1.bf16.msra.mxu0 %v2040
        %2100 = vmatprep.subr.bf16.mxu0 %v2045
        %2101 = vmatpush1.bf16.msra.mxu0 %v2044
        %2102 = vmatprep.subr.bf16.mxu0 %v2049
        %2103 = vmatpush1.bf16.msra.mxu0 %v2048
        %2104 = vmatprep.subr.bf16.mxu0 %v2053
        %2105 = vmatpush1.bf16.msra.mxu0 %v2052
        %2106 = vmatprep.subr.bf16.mxu0 %v2057
        %2107 = vmatpush1.bf16.msra.mxu0 %v2056
        %2108 = vmatprep.subr.bf16.mxu0 0
        %2109 = vmatpush1.bf16.msra.mxu0 0
        %2110 = vmatprep.subr.bf16.mxu0 0
        %2111 = vmatpush1.bf16.msra.mxu0 0
        %2112 = vmatprep.subr.bf16.mxu0 0
        %2113 = vmatpush1.bf16.msra.mxu0 0
        %2114 = vmatprep.subr.bf16.mxu0 0
        %2115 = vmatpush1.bf16.msra.mxu0 0
        %2116 = vmatprep.subr.bf16.mxu0 0
        %2117 = vmatpush1.bf16.msra.mxu0 0
        %2118 = vmatprep.subr.bf16.mxu0 0
        %2119 = vmatpush1.bf16.msra.mxu0 0
        %2120 = vmatprep.subr.bf16.mxu0 0
        %2121 = vmatpush1.bf16.msra.mxu0 0
        %2122 = vmatprep.subr.bf16.mxu0 0
        %2123 = vmatpush1.bf16.msra.mxu0 0
        %2124 = vmatprep.mubr.bf16.mxu0 0
        %2125 = vmatmul.mubr.bf16.gmra.mrb[0].mxu0 %v1874
        %v2126 = vpop.f32.mrb[0].mxu0
        %v2127 = vadd.f32 %v1915, %v2126
        %v2128 = vpop.f32.mrb[0].mxu0
        %v2129 = vadd.f32 %v1919, %v2128
        %v2130 = vpop.f32.mrb[0].mxu0
        %v2131 = vadd.f32 %v1915, %v2130
        %v2132 = vpop.f32.mrb[0].mxu0
        %v2133 = vadd.f32 %v1919, %v2132
        %2134 = vmatprep.mubr.bf16.mxu0 0
        %2135 = vmatmul.mubr.bf16.gmra.mrb[0].mxu0 %v1875
        %v2136 = vpop.f32.mrb[0].mxu0
        %v2137 = vadd.f32 %v1915, %v2136
        %v2138 = vpop.f32.mrb[0].mxu0
        %v2139 = vadd.f32 %v1919, %v2138
        %v2140 = vpop.f32.mrb[0].mxu0
        %v2141 = vadd.f32 %v1915, %v2140
        %v2142 = vpop.f32.mrb[0].mxu0
        %v2143 = vadd.f32 %v1919, %v2142
        %2144 = vmatprep.mubr.bf16.mxu0 0
        %2145 = vmatmul.mubr.bf16.gmra.mrb[0].mxu0 %v1876
        %v2146 = vpop.f32.mrb[0].mxu0
        %v2147 = vadd.f32 %v1915, %v2146
        %v2148 = vpop.f32.mrb[0].mxu0
        %v2149 = vadd.f32 %v1919, %v2148
        %v2150 = vpop.f32.mrb[0].mxu0
        %v2151 = vadd.f32 %v1915, %v2150
        %v2152 = vpop.f32.mrb[0].mxu0
        %v2153 = vadd.f32 %v1919, %v2152
        %2154 = vmatprep.mubr.bf16.mxu0 0
        %2155 = vmatmul.mubr.bf16.gmra.mrb[0].mxu0 %v1877
        %v2156 = vpop.f32.mrb[0].mxu0
        %v2157 = vadd.f32 %v1915, %v2156
        %v2158 = vpop.f32.mrb[0].mxu0
        %v2159 = vadd.f32 %v1919, %v2158
        %v2160 = vpop.f32.mrb[0].mxu0
        %v2161 = vadd.f32 %v1915, %v2160
        %v2162 = vpop.f32.mrb[0].mxu0
        %v2163 = vadd.f32 %v1919, %v2162
        %2164 = vdwg.mxu0
        %2165 = vmatprep.subr.bf16.mxu0 %v2031
        %2166 = vmatpush1.bf16.msra.mxu0 %v2030
        %2167 = vmatprep.subr.bf16.mxu0 %v2035
        %2168 = vmatpush1.bf16.msra.mxu0 %v2034
        %2169 = vmatprep.subr.bf16.mxu0 %v2039
        %2170 = vmatpush1.bf16.msra.mxu0 %v2038
        %2171 = vmatprep.subr.bf16.mxu0 %v2043
        %2172 = vmatpush1.bf16.msra.mxu0 %v2042
        %2173 = vmatprep.subr.bf16.mxu0 %v2047
        %2174 = vmatpush1.bf16.msra.mxu0 %v2046
        %2175 = vmatprep.subr.bf16.mxu0 %v2051
        %2176 = vmatpush1.bf16.msra.mxu0 %v2050
        %2177 = vmatprep.subr.bf16.mxu0 %v2055
        %2178 = vmatpush1.bf16.msra.mxu0 %v2054
        %2179 = vmatprep.subr.bf16.mxu0 %v2059
        %2180 = vmatpush1.bf16.msra.mxu0 %v2058
        %2181 = vmatprep.subr.bf16.mxu0 0
        %2182 = vmatpush1.bf16.msra.mxu0 0
        %2183 = vmatprep.subr.bf16.mxu0 0
        %2184 = vmatpush1.bf16.msra.mxu0 0
        %2185 = vmatprep.subr.bf16.mxu0 0
        %2186 = vmatpush1.bf16.msra.mxu0 0
        %2187 = vmatprep.subr.bf16.mxu0 0
        %2188 = vmatpush1.bf16.msra.mxu0 0
        %2189 = vmatprep.subr.bf16.mxu0 0
        %2190 = vmatpush1.bf16.msra.mxu0 0
        %2191 = vmatprep.subr.bf16.mxu0 0
        %2192 = vmatpush1.bf16.msra.mxu0 0
        %2193 = vmatprep.subr.bf16.mxu0 0
        %2194 = vmatpush1.bf16.msra.mxu0 0
        %2195 = vmatprep.subr.bf16.mxu0 0
        %2196 = vmatpush1.bf16.msra.mxu0 0
        %2197 = vmatprep.mubr.bf16.mxu0 0
        %2198 = vmatmul.mubr.bf16.gmra.mrb[0].mxu0 %v1874
        %v2199 = vpop.f32.mrb[0].mxu0
        %v2200 = vadd.f32 %v1923, %v2199
        %v2201 = vpop.f32.mrb[0].mxu0
        %v2202 = vadd.f32 %v1927, %v2201
        %v2203 = vpop.f32.mrb[0].mxu0
        %v2204 = vadd.f32 %v1923, %v2203
        %v2205 = vpop.f32.mrb[0].mxu0
        %v2206 = vadd.f32 %v1927, %v2205
        %2207 = vmatprep.mubr.bf16.mxu0 0
        %2208 = vmatmul.mubr.bf16.gmra.mrb[0].mxu0 %v1875
        %v2209 = vpop.f32.mrb[0].mxu0
        %v2210 = vadd.f32 %v1923, %v2209
        %v2211 = vpop.f32.mrb[0].mxu0
        %v2212 = vadd.f32 %v1927, %v2211
        %v2213 = vpop.f32.mrb[0].mxu0
        %v2214 = vadd.f32 %v1923, %v2213
        %v2215 = vpop.f32.mrb[0].mxu0
        %v2216 = vadd.f32 %v1927, %v2215
        %2217 = vmatprep.mubr.bf16.mxu0 0
        %2218 = vmatmul.mubr.bf16.gmra.mrb[0].mxu0 %v1876
        %v2219 = vpop.f32.mrb[0].mxu0
        %v2220 = vadd.f32 %v1923, %v2219
        %v2221 = vpop.f32.mrb[0].mxu0
        %v2222 = vadd.f32 %v1927, %v2221
        %v2223 = vpop.f32.mrb[0].mxu0
        %v2224 = vadd.f32 %v1923, %v2223
        %v2225 = vpop.f32.mrb[0].mxu0
        %v2226 = vadd.f32 %v1927, %v2225
        %2227 = vmatprep.mubr.bf16.mxu0 0
        %2228 = vmatmul.mubr.bf16.gmra.mrb[0].mxu0 %v1877
        %v2229 = vpop.f32.mrb[0].mxu0
        %v2230 = vadd.f32 %v1923, %v2229
        %v2231 = vpop.f32.mrb[0].mxu0
        %v2232 = vadd.f32 %v1927, %v2231
        %v2233 = vpop.f32.mrb[0].mxu0
        %v2234 = vadd.f32 %v1923, %v2233
        %v2235 = vpop.f32.mrb[0].mxu0
        %v2236 = vadd.f32 %v1927, %v2235
        %2237 = vdwg.mxu0
        %v2238 = vld [vmem:[#allocation8] sm:$0xff]
        %v2239 = vld [vmem:[#allocation8 + $0x8] sm:$0xff]
        %v2240 = vld [vmem:[#allocation8 + $0x10] sm:$0xff]
        %v2241 = vld [vmem:[#allocation8 + $0x18] sm:$0xff]
        %v2242 = vld [vmem:[#allocation8 + $0x20] sm:$0xff]
        %v2243 = vld [vmem:[#allocation8 + $0x28] sm:$0xff]
        %v2244 = vld [vmem:[#allocation8 + $0x30] sm:$0xff]
        %v2245 = vld [vmem:[#allocation8 + $0x38] sm:$0xff]
        %v2246 = vld [vmem:[#allocation8 + $0x40] sm:$0xff]
        %v2247 = vld [vmem:[#allocation8 + $0x48] sm:$0xff]
        %v2248 = vld [vmem:[#allocation8 + $0x50] sm:$0xff]
        %v2249 = vld [vmem:[#allocation8 + $0x58] sm:$0xff]
        %v2250 = vld [vmem:[#allocation8 + $0x60] sm:$0xff]
        %v2251 = vld [vmem:[#allocation8 + $0x68] sm:$0xff]
        %v2252 = vld [vmem:[#allocation8 + $0x70] sm:$0xff]
        %v2253 = vld [vmem:[#allocation8 + $0x78] sm:$0xff]
        %v2254 = vld [vmem:[#allocation8 + $0x80] sm:$0xff]
        %v2255 = vld [vmem:[#allocation8 + $0x88] sm:$0xff]
        %v2256 = vld [vmem:[#allocation8 + $0x90] sm:$0xff]
        %v2257 = vld [vmem:[#allocation8 + $0x98] sm:$0xff]
        %v2258 = vld [vmem:[#allocation8 + $0xa0] sm:$0xff]
        %v2259 = vld [vmem:[#allocation8 + $0xa8] sm:$0xff]
        %v2260 = vld [vmem:[#allocation8 + $0xb0] sm:$0xff]
        %v2261 = vld [vmem:[#allocation8 + $0xb8] sm:$0xff]
        %v2262 = vld [vmem:[#allocation8 + $0xc0] sm:$0xff]
        %v2263 = vld [vmem:[#allocation8 + $0xc8] sm:$0xff]
        %v2264 = vld [vmem:[#allocation8 + $0xd0] sm:$0xff]
        %v2265 = vld [vmem:[#allocation8 + $0xd8] sm:$0xff]
        %v2266 = vld [vmem:[#allocation8 + $0xe0] sm:$0xff]
        %v2267 = vld [vmem:[#allocation8 + $0xe8] sm:$0xff]
        %v2268 = vld [vmem:[#allocation8 + $0xf0] sm:$0xff]
        %v2269 = vld [vmem:[#allocation8 + $0xf8] sm:$0xff]
        %v2302 = vunpack.c.l.b16 %v2238
        %v2303 = vunpack.c.h.b16 %v2238
        %v2304 = vunpack.c.l.b16 %v2239
        %v2305 = vunpack.c.h.b16 %v2239
        %v2306 = vunpack.c.l.b16 %v2240
        %v2307 = vunpack.c.h.b16 %v2240
        %v2308 = vunpack.c.l.b16 %v2241
        %v2309 = vunpack.c.h.b16 %v2241
        %v2310 = vunpack.c.l.b16 %v2242
        %v2311 = vunpack.c.h.b16 %v2242
        %v2312 = vunpack.c.l.b16 %v2243
        %v2313 = vunpack.c.h.b16 %v2243
        %v2314 = vunpack.c.l.b16 %v2244
        %v2315 = vunpack.c.h.b16 %v2244
        %v2316 = vunpack.c.l.b16 %v2245
        %v2317 = vunpack.c.h.b16 %v2245
        %v2318 = vunpack.c.l.b16 %v2246
        %v2319 = vunpack.c.h.b16 %v2246
        %v2320 = vunpack.c.l.b16 %v2247
        %v2321 = vunpack.c.h.b16 %v2247
        %v2322 = vunpack.c.l.b16 %v2248
        %v2323 = vunpack.c.h.b16 %v2248
        %v2324 = vunpack.c.l.b16 %v2249
        %v2325 = vunpack.c.h.b16 %v2249
        %v2326 = vunpack.c.l.b16 %v2250
        %v2327 = vunpack.c.h.b16 %v2250
        %v2328 = vunpack.c.l.b16 %v2251
        %v2329 = vunpack.c.h.b16 %v2251
        %v2330 = vunpack.c.l.b16 %v2252
        %v2331 = vunpack.c.h.b16 %v2252
        %v2332 = vunpack.c.l.b16 %v2253
        %v2333 = vunpack.c.h.b16 %v2253
        %v2334 = vunpack.c.l.b16 %v2254
        %v2335 = vunpack.c.h.b16 %v2254
        %v2336 = vunpack.c.l.b16 %v2255
        %v2337 = vunpack.c.h.b16 %v2255
        %v2338 = vunpack.c.l.b16 %v2256
        %v2339 = vunpack.c.h.b16 %v2256
        %v2340 = vunpack.c.l.b16 %v2257
        %v2341 = vunpack.c.h.b16 %v2257
        %v2342 = vunpack.c.l.b16 %v2258
        %v2343 = vunpack.c.h.b16 %v2258
        %v2344 = vunpack.c.l.b16 %v2259
        %v2345 = vunpack.c.h.b16 %v2259
        %v2346 = vunpack.c.l.b16 %v2260
        %v2347 = vunpack.c.h.b16 %v2260
        %v2348 = vunpack.c.l.b16 %v2261
        %v2349 = vunpack.c.h.b16 %v2261
        %v2350 = vunpack.c.l.b16 %v2262
        %v2351 = vunpack.c.h.b16 %v2262
        %v2352 = vunpack.c.l.b16 %v2263
        %v2353 = vunpack.c.h.b16 %v2263
        %v2354 = vunpack.c.l.b16 %v2264
        %v2355 = vunpack.c.h.b16 %v2264
        %v2356 = vunpack.c.l.b16 %v2265
        %v2357 = vunpack.c.h.b16 %v2265
        %v2358 = vunpack.c.l.b16 %v2266
        %v2359 = vunpack.c.h.b16 %v2266
        %v2360 = vunpack.c.l.b16 %v2267
        %v2361 = vunpack.c.h.b16 %v2267
        %v2362 = vunpack.c.l.b16 %v2268
        %v2363 = vunpack.c.h.b16 %v2268
        %v2364 = vunpack.c.l.b16 %v2269
        %v2365 = vunpack.c.h.b16 %v2269
        %v2366 = vpack.c.b16 %v2306, %v2302
        %v2367 = vpack.c.b16 %v2307, %v2303
        %v2368 = vpack.c.b16 %v2308, %v2304
        %v2369 = vpack.c.b16 %v2309, %v2305
        %v2370 = vpack.c.b16 %v2314, %v2310
        %v2371 = vpack.c.b16 %v2315, %v2311
        %v2372 = vpack.c.b16 %v2316, %v2312
        %v2373 = vpack.c.b16 %v2317, %v2313
        %v2374 = vpack.c.b16 %v2322, %v2318
        %v2375 = vpack.c.b16 %v2323, %v2319
        %v2376 = vpack.c.b16 %v2324, %v2320
        %v2377 = vpack.c.b16 %v2325, %v2321
        %v2378 = vpack.c.b16 %v2330, %v2326
        %v2379 = vpack.c.b16 %v2331, %v2327
        %v2380 = vpack.c.b16 %v2332, %v2328
        %v2381 = vpack.c.b16 %v2333, %v2329
        %v2382 = vpack.c.b16 %v2338, %v2334
        %v2383 = vpack.c.b16 %v2339, %v2335
        %v2384 = vpack.c.b16 %v2340, %v2336
        %v2385 = vpack.c.b16 %v2341, %v2337
        %v2386 = vpack.c.b16 %v2346, %v2342
        %v2387 = vpack.c.b16 %v2347, %v2343
        %v2388 = vpack.c.b16 %v2348, %v2344
        %v2389 = vpack.c.b16 %v2349, %v2345
        %v2390 = vpack.c.b16 %v2354, %v2350
        %v2391 = vpack.c.b16 %v2355, %v2351
        %v2392 = vpack.c.b16 %v2356, %v2352
        %v2393 = vpack.c.b16 %v2357, %v2353
        %v2394 = vpack.c.b16 %v2362, %v2358
        %v2395 = vpack.c.b16 %v2363, %v2359
        %v2396 = vpack.c.b16 %v2364, %v2360
        %v2397 = vpack.c.b16 %v2365, %v2361
        %2430 = vmatprep.subr.bf16.mxu0 %v2367
        %2431 = vmatpush1.bf16.msra.mxu0 %v2366
        %2432 = vmatprep.subr.bf16.mxu0 %v2371
        %2433 = vmatpush1.bf16.msra.mxu0 %v2370
        %2434 = vmatprep.subr.bf16.mxu0 %v2375
        %2435 = vmatpush1.bf16.msra.mxu0 %v2374
        %2436 = vmatprep.subr.bf16.mxu0 %v2379
        %2437 = vmatpush1.bf16.msra.mxu0 %v2378
        %2438 = vmatprep.subr.bf16.mxu0 %v2383
        %2439 = vmatpush1.bf16.msra.mxu0 %v2382
        %2440 = vmatprep.subr.bf16.mxu0 %v2387
        %2441 = vmatpush1.bf16.msra.mxu0 %v2386
        %2442 = vmatprep.subr.bf16.mxu0 %v2391
        %2443 = vmatpush1.bf16.msra.mxu0 %v2390
        %2444 = vmatprep.subr.bf16.mxu0 %v2395
        %2445 = vmatpush1.bf16.msra.mxu0 %v2394
        %2446 = vmatprep.subr.bf16.mxu0 0
        %2447 = vmatpush1.bf16.msra.mxu0 0
        %2448 = vmatprep.subr.bf16.mxu0 0
        %2449 = vmatpush1.bf16.msra.mxu0 0
        %2450 = vmatprep.subr.bf16.mxu0 0
        %2451 = vmatpush1.bf16.msra.mxu0 0
        %2452 = vmatprep.subr.bf16.mxu0 0
        %2453 = vmatpush1.bf16.msra.mxu0 0
        %2454 = vmatprep.subr.bf16.mxu0 0
        %2455 = vmatpush1.bf16.msra.mxu0 0
        %2456 = vmatprep.subr.bf16.mxu0 0
        %2457 = vmatpush1.bf16.msra.mxu0 0
        %2458 = vmatprep.subr.bf16.mxu0 0
        %2459 = vmatpush1.bf16.msra.mxu0 0
        %2460 = vmatprep.subr.bf16.mxu0 0
        %2461 = vmatpush1.bf16.msra.mxu0 0
        %2462 = vmatprep.mubr.bf16.mxu0 0
        %2463 = vmatmul.mubr.bf16.gmra.mrb[0].mxu0 0
        %v2464 = vpop.f32.mrb[0].mxu0
        %v2465 = vadd.f32 0.0, %v2464
        %v2466 = vpop.f32.mrb[0].mxu0
        %v2467 = vadd.f32 0.0, %v2466
        %v2468 = vpop.f32.mrb[0].mxu0
        %v2469 = vpop.f32.mrb[0].mxu0
        %2470 = vdwg.mxu0
        %2471 = vmatprep.subr.bf16.mxu0 %v2369
        %2472 = vmatpush1.bf16.msra.mxu0 %v2368
        %2473 = vmatprep.subr.bf16.mxu0 %v2373
        %2474 = vmatpush1.bf16.msra.mxu0 %v2372
        %2475 = vmatprep.subr.bf16.mxu0 %v2377
        %2476 = vmatpush1.bf16.msra.mxu0 %v2376
        %2477 = vmatprep.subr.bf16.mxu0 %v2381
        %2478 = vmatpush1.bf16.msra.mxu0 %v2380
        %2479 = vmatprep.subr.bf16.mxu0 %v2385
        %2480 = vmatpush1.bf16.msra.mxu0 %v2384
        %2481 = vmatprep.subr.bf16.mxu0 %v2389
        %2482 = vmatpush1.bf16.msra.mxu0 %v2388
        %2483 = vmatprep.subr.bf16.mxu0 %v2393
        %2484 = vmatpush1.bf16.msra.mxu0 %v2392
        %2485 = vmatprep.subr.bf16.mxu0 %v2397
        %2486 = vmatpush1.bf16.msra.mxu0 %v2396
        %2487 = vmatprep.subr.bf16.mxu0 0
        %2488 = vmatpush1.bf16.msra.mxu0 0
        %2489 = vmatprep.subr.bf16.mxu0 0
        %2490 = vmatpush1.bf16.msra.mxu0 0
        %2491 = vmatprep.subr.bf16.mxu0 0
        %2492 = vmatpush1.bf16.msra.mxu0 0
        %2493 = vmatprep.subr.bf16.mxu0 0
        %2494 = vmatpush1.bf16.msra.mxu0 0
        %2495 = vmatprep.subr.bf16.mxu0 0
        %2496 = vmatpush1.bf16.msra.mxu0 0
        %2497 = vmatprep.subr.bf16.mxu0 0
        %2498 = vmatpush1.bf16.msra.mxu0 0
        %2499 = vmatprep.subr.bf16.mxu0 0
        %2500 = vmatpush1.bf16.msra.mxu0 0
        %2501 = vmatprep.subr.bf16.mxu0 0
        %2502 = vmatpush1.bf16.msra.mxu0 0
        %2503 = vmatprep.mubr.bf16.mxu0 0
        %2504 = vmatmul.mubr.bf16.gmra.mrb[0].mxu0 0
        %v2505 = vpop.f32.mrb[0].mxu0
        %v2506 = vadd.f32 0.0, %v2505
        %v2507 = vpop.f32.mrb[0].mxu0
        %v2508 = vadd.f32 0.0, %v2507
        %v2509 = vpop.f32.mrb[0].mxu0
        %v2510 = vpop.f32.mrb[0].mxu0
        %2511 = vdwg.mxu0
        %v2512 = vadd.f32 %v2127, %v2465
        %v2513 = vadd.f32 %v2129, %v2467
        %v2514 = vadd.f32 %v2200, %v2506
        %v2515 = vadd.f32 %v2202, %v2508
        %v2516 = vsub.f32 0.0, %v2512
        %v2517 = vsub.f32 0.0, %v2513
        %v2518 = vsub.f32 0.0, %v2514
        %v2519 = vmul.f32 %v2516, 1.442695
        %v2520 = vpow.pop %v2519
        %v2521 = vmul.f32 %v2517, 1.442695
        %v2522 = vpow.pop %v2521
        %v2523 = vmul.f32 %v2518, 1.442695
        %v2524 = vpow.pop %v2523
        %v2525 = vadd.f32 %v2520, 1.0
        %v2526 = vadd.f32 %v2522, 1.0
        %v2527 = vadd.f32 %v2524, 1.0
        %v2528 = vrcp.pop %v2525
        %v2529 = vrcp.pop %v2526
        %v2530 = vrcp.pop %v2527
        %v2531 = vtanh.pop %v2515
        %v2532 = vmul.f32 %v2529, 0.0
        %v2533 = vmul.f32 %v2528, %v2531
        %v2534 = vadd.f32 %v2532, %v2533
        %v2535 = vtanh.pop %v2534
        %v2536 = vmul.f32 %v2530, %v2535
        %v2537 = vpack.c.bf16 %v2536, %v2536
        %2538 = vmatprep.subr.bf16.mxu0 %v2367
        %2539 = vmatpush1.bf16.msra.mxu0 %v2366
        %2540 = vmatprep.subr.bf16.mxu0 %v2371
        %2541 = vmatpush1.bf16.msra.mxu0 %v2370
        %2542 = vmatprep.subr.bf16.mxu0 %v2375
        %2543 = vmatpush1.bf16.msra.mxu0 %v2374
        %2544 = vmatprep.subr.bf16.mxu0 %v2379
        %2545 = vmatpush1.bf16.msra.mxu0 %v2378
        %2546 = vmatprep.subr.bf16.mxu0 %v2383
        %2547 = vmatpush1.bf16.msra.mxu0 %v2382
        %2548 = vmatprep.subr.bf16.mxu0 %v2387
        %2549 = vmatpush1.bf16.msra.mxu0 %v2386
        %2550 = vmatprep.subr.bf16.mxu0 %v2391
        %2551 = vmatpush1.bf16.msra.mxu0 %v2390
        %2552 = vmatprep.subr.bf16.mxu0 %v2395
        %2553 = vmatpush1.bf16.msra.mxu0 %v2394
        %2554 = vmatprep.subr.bf16.mxu0 0
        %2555 = vmatpush1.bf16.msra.mxu0 0
        %2556 = vmatprep.subr.bf16.mxu0 0
        %2557 = vmatpush1.bf16.msra.mxu0 0
        %2558 = vmatprep.subr.bf16.mxu0 0
        %2559 = vmatpush1.bf16.msra.mxu0 0
        %2560 = vmatprep.subr.bf16.mxu0 0
        %2561 = vmatpush1.bf16.msra.mxu0 0
        %2562 = vmatprep.subr.bf16.mxu0 0
        %2563 = vmatpush1.bf16.msra.mxu0 0
        %2564 = vmatprep.subr.bf16.mxu0 0
        %2565 = vmatpush1.bf16.msra.mxu0 0
        %2566 = vmatprep.subr.bf16.mxu0 0
        %2567 = vmatpush1.bf16.msra.mxu0 0
        %2568 = vmatprep.subr.bf16.mxu0 0
        %2569 = vmatpush1.bf16.msra.mxu0 0
        %2570 = vmatprep.mubr.bf16.mxu0 0
        %2571 = vmatmul.mubr.bf16.gmra.mrb[0].mxu0 %v2537
        %v2572 = vpop.f32.mrb[0].mxu0
        %v2573 = vadd.f32 0.0, %v2572
        %v2574 = vpop.f32.mrb[0].mxu0
        %v2575 = vadd.f32 0.0, %v2574
        %v2576 = vpop.f32.mrb[0].mxu0
        %v2577 = vpop.f32.mrb[0].mxu0
        %2578 = vdwg.mxu0
        %2579 = vmatprep.subr.bf16.mxu0 %v2369
        %2580 = vmatpush1.bf16.msra.mxu0 %v2368
        %2581 = vmatprep.subr.bf16.mxu0 %v2373
        %2582 = vmatpush1.bf16.msra.mxu0 %v2372
        %2583 = vmatprep.subr.bf16.mxu0 %v2377
        %2584 = vmatpush1.bf16.msra.mxu0 %v2376
        %2585 = vmatprep.subr.bf16.mxu0 %v2381
        %2586 = vmatpush1.bf16.msra.mxu0 %v2380
        %2587 = vmatprep.subr.bf16.mxu0 %v2385
        %2588 = vmatpush1.bf16.msra.mxu0 %v2384
        %2589 = vmatprep.subr.bf16.mxu0 %v2389
        %2590 = vmatpush1.bf16.msra.mxu0 %v2388
        %2591 = vmatprep.subr.bf16.mxu0 %v2393
        %2592 = vmatpush1.bf16.msra.mxu0 %v2392
        %2593 = vmatprep.subr.bf16.mxu0 %v2397
        %2594 = vmatpush1.bf16.msra.mxu0 %v2396
        %2595 = vmatprep.subr.bf16.mxu0 0
        %2596 = vmatpush1.bf16.msra.mxu0 0
        %2597 = vmatprep.subr.bf16.mxu0 0
        %2598 = vmatpush1.bf16.msra.mxu0 0
        %2599 = vmatprep.subr.bf16.mxu0 0
        %2600 = vmatpush1.bf16.msra.mxu0 0
        %2601 = vmatprep.subr.bf16.mxu0 0
        %2602 = vmatpush1.bf16.msra.mxu0 0
        %2603 = vmatprep.subr.bf16.mxu0 0
        %2604 = vmatpush1.bf16.msra.mxu0 0
        %2605 = vmatprep.subr.bf16.mxu0 0
        %2606 = vmatpush1.bf16.msra.mxu0 0
        %2607 = vmatprep.subr.bf16.mxu0 0
        %2608 = vmatpush1.bf16.msra.mxu0 0
        %2609 = vmatprep.subr.bf16.mxu0 0
        %2610 = vmatpush1.bf16.msra.mxu0 0
        %2611 = vmatprep.mubr.bf16.mxu0 0
        %2612 = vmatmul.mubr.bf16.gmra.mrb[0].mxu0 %v2537
        %v2613 = vpop.f32.mrb[0].mxu0
        %v2614 = vadd.f32 0.0, %v2613
        %v2615 = vpop.f32.mrb[0].mxu0
        %v2616 = vadd.f32 0.0, %v2615
        %v2617 = vpop.f32.mrb[0].mxu0
        %v2618 = vpop.f32.mrb[0].mxu0
        %2619 = vdwg.mxu0
        %v2620 = vadd.f32 %v2131, %v2573
        %v2621 = vadd.f32 %v2133, %v2575
        %v2622 = vadd.f32 %v2204, %v2614
        %v2623 = vadd.f32 %v2206, %v2616
        %v2624 = vsub.f32 0.0, %v2620
        %v2625 = vsub.f32 0.0, %v2621
        %v2626 = vsub.f32 0.0, %v2622
        %v2627 = vmul.f32 %v2624, 1.442695
        %v2628 = vpow.pop %v2627
        %v2629 = vmul.f32 %v2625, 1.442695
        %v2630 = vpow.pop %v2629
        %v2631 = vmul.f32 %v2626, 1.442695
        %v2632 = vpow.pop %v2631
        %v2633 = vadd.f32 %v2628, 1.0
        %v2634 = vadd.f32 %v2630, 1.0
        %v2635 = vadd.f32 %v2632, 1.0
        %v2636 = vrcp.pop %v2633
        %v2637 = vrcp.pop %v2634
        %v2638 = vrcp.pop %v2635
        %v2639 = vtanh.pop %v2623
        %v2640 = vmul.f32 %v2637, %v2534
        %v2641 = vmul.f32 %v2636, %v2639
        %v2642 = vadd.f32 %v2640, %v2641
        %v2643 = vtanh.pop %v2642
        %v2644 = vmul.f32 %v2638, %v2643
        %v2645 = vpack.c.bf16 %v2644, %v2644
        %2646 = vmatprep.subr.bf16.mxu0 %v2367
        %2647 = vmatpush1.bf16.msra.mxu0 %v2366
        %2648 = vmatprep.subr.bf16.mxu0 %v2371
        %2649 = vmatpush1.bf16.msra.mxu0 %v2370
        %2650 = vmatprep.subr.bf16.mxu0 %v2375
        %2651 = vmatpush1.bf16.msra.mxu0 %v2374
        %2652 = vmatprep.subr.bf16.mxu0 %v2379
        %2653 = vmatpush1.bf16.msra.mxu0 %v2378
        %2654 = vmatprep.subr.bf16.mxu0 %v2383
        %2655 = vmatpush1.bf16.msra.mxu0 %v2382
        %2656 = vmatprep.subr.bf16.mxu0 %v2387
        %2657 = vmatpush1.bf16.msra.mxu0 %v2386
        %2658 = vmatprep.subr.bf16.mxu0 %v2391
        %2659 = vmatpush1.bf16.msra.mxu0 %v2390
        %2660 = vmatprep.subr.bf16.mxu0 %v2395
        %2661 = vmatpush1.bf16.msra.mxu0 %v2394
        %2662 = vmatprep.subr.bf16.mxu0 0
        %2663 = vmatpush1.bf16.msra.mxu0 0
        %2664 = vmatprep.subr.bf16.mxu0 0
        %2665 = vmatpush1.bf16.msra.mxu0 0
        %2666 = vmatprep.subr.bf16.mxu0 0
        %2667 = vmatpush1.bf16.msra.mxu0 0
        %2668 = vmatprep.subr.bf16.mxu0 0
        %2669 = vmatpush1.bf16.msra.mxu0 0
        %2670 = vmatprep.subr.bf16.mxu0 0
        %2671 = vmatpush1.bf16.msra.mxu0 0
        %2672 = vmatprep.subr.bf16.mxu0 0
        %2673 = vmatpush1.bf16.msra.mxu0 0
        %2674 = vmatprep.subr.bf16.mxu0 0
        %2675 = vmatpush1.bf16.msra.mxu0 0
        %2676 = vmatprep.subr.bf16.mxu0 0
        %2677 = vmatpush1.bf16.msra.mxu0 0
        %2678 = vmatprep.mubr.bf16.mxu0 0
        %2679 = vmatmul.mubr.bf16.gmra.mrb[0].mxu0 %v2645
        %v2680 = vpop.f32.mrb[0].mxu0
        %v2681 = vadd.f32 0.0, %v2680
        %v2682 = vpop.f32.mrb[0].mxu0
        %v2683 = vadd.f32 0.0, %v2682
        %v2684 = vpop.f32.mrb[0].mxu0
        %v2685 = vpop.f32.mrb[0].mxu0
        %2686 = vdwg.mxu0
        %2687 = vmatprep.subr.bf16.mxu0 %v2369
        %2688 = vmatpush1.bf16.msra.mxu0 %v2368
        %2689 = vmatprep.subr.bf16.mxu0 %v2373
        %2690 = vmatpush1.bf16.msra.mxu0 %v2372
        %2691 = vmatprep.subr.bf16.mxu0 %v2377
        %2692 = vmatpush1.bf16.msra.mxu0 %v2376
        %2693 = vmatprep.subr.bf16.mxu0 %v2381
        %2694 = vmatpush1.bf16.msra.mxu0 %v2380
        %2695 = vmatprep.subr.bf16.mxu0 %v2385
        %2696 = vmatpush1.bf16.msra.mxu0 %v2384
        %2697 = vmatprep.subr.bf16.mxu0 %v2389
        %2698 = vmatpush1.bf16.msra.mxu0 %v2388
        %2699 = vmatprep.subr.bf16.mxu0 %v2393
        %2700 = vmatpush1.bf16.msra.mxu0 %v2392
        %2701 = vmatprep.subr.bf16.mxu0 %v2397
        %2702 = vmatpush1.bf16.msra.mxu0 %v2396
        %2703 = vmatprep.subr.bf16.mxu0 0
        %2704 = vmatpush1.bf16.msra.mxu0 0
        %2705 = vmatprep.subr.bf16.mxu0 0
        %2706 = vmatpush1.bf16.msra.mxu0 0
        %2707 = vmatprep.subr.bf16.mxu0 0
        %2708 = vmatpush1.bf16.msra.mxu0 0
        %2709 = vmatprep.subr.bf16.mxu0 0
        %2710 = vmatpush1.bf16.msra.mxu0 0
        %2711 = vmatprep.subr.bf16.mxu0 0
        %2712 = vmatpush1.bf16.msra.mxu0 0
        %2713 = vmatprep.subr.bf16.mxu0 0
        %2714 = vmatpush1.bf16.msra.mxu0 0
        %2715 = vmatprep.subr.bf16.mxu0 0
        %2716 = vmatpush1.bf16.msra.mxu0 0
        %2717 = vmatprep.subr.bf16.mxu0 0
        %2718 = vmatpush1.bf16.msra.mxu0 0
        %2719 = vmatprep.mubr.bf16.mxu0 0
        %2720 = vmatmul.mubr.bf16.gmra.mrb[0].mxu0 %v2645
        %v2721 = vpop.f32.mrb[0].mxu0
        %v2722 = vadd.f32 0.0, %v2721
        %v2723 = vpop.f32.mrb[0].mxu0
        %v2724 = vadd.f32 0.0, %v2723
        %v2725 = vpop.f32.mrb[0].mxu0
        %v2726 = vpop.f32.mrb[0].mxu0
        %2727 = vdwg.mxu0
        %v2728 = vadd.f32 %v2137, %v2681
        %v2729 = vadd.f32 %v2139, %v2683
        %v2730 = vadd.f32 %v2210, %v2722
        %v2731 = vadd.f32 %v2212, %v2724
        %v2732 = vsub.f32 0.0, %v2728
        %v2733 = vsub.f32 0.0, %v2729
        %v2734 = vsub.f32 0.0, %v2730
        %v2735 = vmul.f32 %v2732, 1.442695
        %v2736 = vpow.pop %v2735
        %v2737 = vmul.f32 %v2733, 1.442695
        %v2738 = vpow.pop %v2737
        %v2739 = vmul.f32 %v2734, 1.442695
        %v2740 = vpow.pop %v2739
        %v2741 = vadd.f32 %v2736, 1.0
        %v2742 = vadd.f32 %v2738, 1.0
        %v2743 = vadd.f32 %v2740, 1.0
        %v2744 = vrcp.pop %v2741
        %v2745 = vrcp.pop %v2742
        %v2746 = vrcp.pop %v2743
        %v2747 = vtanh.pop %v2731
        %v2748 = vmul.f32 %v2745, %v2642
        %v2749 = vmul.f32 %v2744, %v2747
        %v2750 = vadd.f32 %v2748, %v2749
        %v2751 = vtanh.pop %v2750
        %v2752 = vmul.f32 %v2746, %v2751
        %v2753 = vpack.c.bf16 %v2752, %v2752
        %2754 = vmatprep.subr.bf16.mxu0 %v2367
        %2755 = vmatpush1.bf16.msra.mxu0 %v2366
        %2756 = vmatprep.subr.bf16.mxu0 %v2371
        %2757 = vmatpush1.bf16.msra.mxu0 %v2370
        %2758 = vmatprep.subr.bf16.mxu0 %v2375
        %2759 = vmatpush1.bf16.msra.mxu0 %v2374
        %2760 = vmatprep.subr.bf16.mxu0 %v2379
        %2761 = vmatpush1.bf16.msra.mxu0 %v2378
        %2762 = vmatprep.subr.bf16.mxu0 %v2383
        %2763 = vmatpush1.bf16.msra.mxu0 %v2382
        %2764 = vmatprep.subr.bf16.mxu0 %v2387
        %2765 = vmatpush1.bf16.msra.mxu0 %v2386
        %2766 = vmatprep.subr.bf16.mxu0 %v2391
        %2767 = vmatpush1.bf16.msra.mxu0 %v2390
        %2768 = vmatprep.subr.bf16.mxu0 %v2395
        %2769 = vmatpush1.bf16.msra.mxu0 %v2394
        %2770 = vmatprep.subr.bf16.mxu0 0
        %2771 = vmatpush1.bf16.msra.mxu0 0
        %2772 = vmatprep.subr.bf16.mxu0 0
        %2773 = vmatpush1.bf16.msra.mxu0 0
        %2774 = vmatprep.subr.bf16.mxu0 0
        %2775 = vmatpush1.bf16.msra.mxu0 0
        %2776 = vmatprep.subr.bf16.mxu0 0
        %2777 = vmatpush1.bf16.msra.mxu0 0
        %2778 = vmatprep.subr.bf16.mxu0 0
        %2779 = vmatpush1.bf16.msra.mxu0 0
        %2780 = vmatprep.subr.bf16.mxu0 0
        %2781 = vmatpush1.bf16.msra.mxu0 0
        %2782 = vmatprep.subr.bf16.mxu0 0
        %2783 = vmatpush1.bf16.msra.mxu0 0
        %2784 = vmatprep.subr.bf16.mxu0 0
        %2785 = vmatpush1.bf16.msra.mxu0 0
        %2786 = vmatprep.mubr.bf16.mxu0 0
        %2787 = vmatmul.mubr.bf16.gmra.mrb[0].mxu0 %v2753
        %v2788 = vpop.f32.mrb[0].mxu0
        %v2789 = vadd.f32 0.0, %v2788
        %v2790 = vpop.f32.mrb[0].mxu0
        %v2791 = vadd.f32 0.0, %v2790
        %v2792 = vpop.f32.mrb[0].mxu0
        %v2793 = vpop.f32.mrb[0].mxu0
        %2794 = vdwg.mxu0
        %2795 = vmatprep.subr.bf16.mxu0 %v2369
        %2796 = vmatpush1.bf16.msra.mxu0 %v2368
        %2797 = vmatprep.subr.bf16.mxu0 %v2373
        %2798 = vmatpush1.bf16.msra.mxu0 %v2372
        %2799 = vmatprep.subr.bf16.mxu0 %v2377
        %2800 = vmatpush1.bf16.msra.mxu0 %v2376
        %2801 = vmatprep.subr.bf16.mxu0 %v2381
        %2802 = vmatpush1.bf16.msra.mxu0 %v2380
        %2803 = vmatprep.subr.bf16.mxu0 %v2385
        %2804 = vmatpush1.bf16.msra.mxu0 %v2384
        %2805 = vmatprep.subr.bf16.mxu0 %v2389
        %2806 = vmatpush1.bf16.msra.mxu0 %v2388
        %2807 = vmatprep.subr.bf16.mxu0 %v2393
        %2808 = vmatpush1.bf16.msra.mxu0 %v2392
        %2809 = vmatprep.subr.bf16.mxu0 %v2397
        %2810 = vmatpush1.bf16.msra.mxu0 %v2396
        %2811 = vmatprep.subr.bf16.mxu0 0
        %2812 = vmatpush1.bf16.msra.mxu0 0
        %2813 = vmatprep.subr.bf16.mxu0 0
        %2814 = vmatpush1.bf16.msra.mxu0 0
        %2815 = vmatprep.subr.bf16.mxu0 0
        %2816 = vmatpush1.bf16.msra.mxu0 0
        %2817 = vmatprep.subr.bf16.mxu0 0
        %2818 = vmatpush1.bf16.msra.mxu0 0
        %2819 = vmatprep.subr.bf16.mxu0 0
        %2820 = vmatpush1.bf16.msra.mxu0 0
        %2821 = vmatprep.subr.bf16.mxu0 0
        %2822 = vmatpush1.bf16.msra.mxu0 0
        %2823 = vmatprep.subr.bf16.mxu0 0
        %2824 = vmatpush1.bf16.msra.mxu0 0
        %2825 = vmatprep.subr.bf16.mxu0 0
        %2826 = vmatpush1.bf16.msra.mxu0 0
        %2827 = vmatprep.mubr.bf16.mxu0 0
        %2828 = vmatmul.mubr.bf16.gmra.mrb[0].mxu0 %v2753
        %v2829 = vpop.f32.mrb[0].mxu0
        %v2830 = vadd.f32 0.0, %v2829
        %v2831 = vpop.f32.mrb[0].mxu0
        %v2832 = vadd.f32 0.0, %v2831
        %v2833 = vpop.f32.mrb[0].mxu0
        %v2834 = vpop.f32.mrb[0].mxu0
        %2835 = vdwg.mxu0
        %v2836 = vadd.f32 %v2141, %v2789
        %v2837 = vadd.f32 %v2143, %v2791
        %v2838 = vadd.f32 %v2214, %v2830
        %v2839 = vadd.f32 %v2216, %v2832
        %v2840 = vsub.f32 0.0, %v2836
        %v2841 = vsub.f32 0.0, %v2837
        %v2842 = vsub.f32 0.0, %v2838
        %v2843 = vmul.f32 %v2840, 1.442695
        %v2844 = vpow.pop %v2843
        %v2845 = vmul.f32 %v2841, 1.442695
        %v2846 = vpow.pop %v2845
        %v2847 = vmul.f32 %v2842, 1.442695
        %v2848 = vpow.pop %v2847
        %v2849 = vadd.f32 %v2844, 1.0
        %v2850 = vadd.f32 %v2846, 1.0
        %v2851 = vadd.f32 %v2848, 1.0
        %v2852 = vrcp.pop %v2849
        %v2853 = vrcp.pop %v2850
        %v2854 = vrcp.pop %v2851
        %v2855 = vtanh.pop %v2839
        %v2856 = vmul.f32 %v2853, %v2750
        %v2857 = vmul.f32 %v2852, %v2855
        %v2858 = vadd.f32 %v2856, %v2857
        %v2859 = vtanh.pop %v2858
        %v2860 = vmul.f32 %v2854, %v2859
        %v2861 = vpack.c.bf16 %v2860, %v2860
        %2862 = vmatprep.subr.bf16.mxu0 %v2367
        %2863 = vmatpush1.bf16.msra.mxu0 %v2366
        %2864 = vmatprep.subr.bf16.mxu0 %v2371
        %2865 = vmatpush1.bf16.msra.mxu0 %v2370
        %2866 = vmatprep.subr.bf16.mxu0 %v2375
        %2867 = vmatpush1.bf16.msra.mxu0 %v2374
        %2868 = vmatprep.subr.bf16.mxu0 %v2379
        %2869 = vmatpush1.bf16.msra.mxu0 %v2378
        %2870 = vmatprep.subr.bf16.mxu0 %v2383
        %2871 = vmatpush1.bf16.msra.mxu0 %v2382
        %2872 = vmatprep.subr.bf16.mxu0 %v2387
        %2873 = vmatpush1.bf16.msra.mxu0 %v2386
        %2874 = vmatprep.subr.bf16.mxu0 %v2391
        %2875 = vmatpush1.bf16.msra.mxu0 %v2390
        %2876 = vmatprep.subr.bf16.mxu0 %v2395
        %2877 = vmatpush1.bf16.msra.mxu0 %v2394
        %2878 = vmatprep.subr.bf16.mxu0 0
        %2879 = vmatpush1.bf16.msra.mxu0 0
        %2880 = vmatprep.subr.bf16.mxu0 0
        %2881 = vmatpush1.bf16.msra.mxu0 0
        %2882 = vmatprep.subr.bf16.mxu0 0
        %2883 = vmatpush1.bf16.msra.mxu0 0
        %2884 = vmatprep.subr.bf16.mxu0 0
        %2885 = vmatpush1.bf16.msra.mxu0 0
        %2886 = vmatprep.subr.bf16.mxu0 0
        %2887 = vmatpush1.bf16.msra.mxu0 0
        %2888 = vmatprep.subr.bf16.mxu0 0
        %2889 = vmatpush1.bf16.msra.mxu0 0
        %2890 = vmatprep.subr.bf16.mxu0 0
        %2891 = vmatpush1.bf16.msra.mxu0 0
        %2892 = vmatprep.subr.bf16.mxu0 0
        %2893 = vmatpush1.bf16.msra.mxu0 0
        %2894 = vmatprep.mubr.bf16.mxu0 0
        %2895 = vmatmul.mubr.bf16.gmra.mrb[0].mxu0 %v2861
        %v2896 = vpop.f32.mrb[0].mxu0
        %v2897 = vadd.f32 0.0, %v2896
        %v2898 = vpop.f32.mrb[0].mxu0
        %v2899 = vadd.f32 0.0, %v2898
        %v2900 = vpop.f32.mrb[0].mxu0
        %v2901 = vpop.f32.mrb[0].mxu0
        %2902 = vdwg.mxu0
        %2903 = vmatprep.subr.bf16.mxu0 %v2369
        %2904 = vmatpush1.bf16.msra.mxu0 %v2368
        %2905 = vmatprep.subr.bf16.mxu0 %v2373
        %2906 = vmatpush1.bf16.msra.mxu0 %v2372
        %2907 = vmatprep.subr.bf16.mxu0 %v2377
        %2908 = vmatpush1.bf16.msra.mxu0 %v2376
        %2909 = vmatprep.subr.bf16.mxu0 %v2381
        %2910 = vmatpush1.bf16.msra.mxu0 %v2380
        %2911 = vmatprep.subr.bf16.mxu0 %v2385
        %2912 = vmatpush1.bf16.msra.mxu0 %v2384
        %2913 = vmatprep.subr.bf16.mxu0 %v2389
        %2914 = vmatpush1.bf16.msra.mxu0 %v2388
        %2915 = vmatprep.subr.bf16.mxu0 %v2393
        %2916 = vmatpush1.bf16.msra.mxu0 %v2392
        %2917 = vmatprep.subr.bf16.mxu0 %v2397
        %2918 = vmatpush1.bf16.msra.mxu0 %v2396
        %2919 = vmatprep.subr.bf16.mxu0 0
        %2920 = vmatpush1.bf16.msra.mxu0 0
        %2921 = vmatprep.subr.bf16.mxu0 0
        %2922 = vmatpush1.bf16.msra.mxu0 0
        %2923 = vmatprep.subr.bf16.mxu0 0
        %2924 = vmatpush1.bf16.msra.mxu0 0
        %2925 = vmatprep.subr.bf16.mxu0 0
        %2926 = vmatpush1.bf16.msra.mxu0 0
        %2927 = vmatprep.subr.bf16.mxu0 0
        %2928 = vmatpush1.bf16.msra.mxu0 0
        %2929 = vmatprep.subr.bf16.mxu0 0
        %2930 = vmatpush1.bf16.msra.mxu0 0
        %2931 = vmatprep.subr.bf16.mxu0 0
        %2932 = vmatpush1.bf16.msra.mxu0 0
        %2933 = vmatprep.subr.bf16.mxu0 0
        %2934 = vmatpush1.bf16.msra.mxu0 0
        %2935 = vmatprep.mubr.bf16.mxu0 0
        %2936 = vmatmul.mubr.bf16.gmra.mrb[0].mxu0 %v2861
        %v2937 = vpop.f32.mrb[0].mxu0
        %v2938 = vadd.f32 0.0, %v2937
        %v2939 = vpop.f32.mrb[0].mxu0
        %v2940 = vadd.f32 0.0, %v2939
        %v2941 = vpop.f32.mrb[0].mxu0
        %v2942 = vpop.f32.mrb[0].mxu0
        %2943 = vdwg.mxu0
        %v2944 = vadd.f32 %v2147, %v2897
        %v2945 = vadd.f32 %v2149, %v2899
        %v2946 = vadd.f32 %v2220, %v2938
        %v2947 = vadd.f32 %v2222, %v2940
        %v2948 = vsub.f32 0.0, %v2944
        %v2949 = vsub.f32 0.0, %v2945
        %v2950 = vsub.f32 0.0, %v2946
        %v2951 = vmul.f32 %v2948, 1.442695
        %v2952 = vpow.pop %v2951
        %v2953 = vmul.f32 %v2949, 1.442695
        %v2954 = vpow.pop %v2953
        %v2955 = vmul.f32 %v2950, 1.442695
        %v2956 = vpow.pop %v2955
        %v2957 = vadd.f32 %v2952, 1.0
        %v2958 = vadd.f32 %v2954, 1.0
        %v2959 = vadd.f32 %v2956, 1.0
        %v2960 = vrcp.pop %v2957
        %v2961 = vrcp.pop %v2958
        %v2962 = vrcp.pop %v2959
        %v2963 = vtanh.pop %v2947
        %v2964 = vmul.f32 %v2961, %v2858
        %v2965 = vmul.f32 %v2960, %v2963
        %v2966 = vadd.f32 %v2964, %v2965
        %v2967 = vtanh.pop %v2966
        %v2968 = vmul.f32 %v2962, %v2967
        %v2969 = vpack.c.bf16 %v2968, %v2968
        %2970 = vmatprep.subr.bf16.mxu0 %v2367
        %2971 = vmatpush1.bf16.msra.mxu0 %v2366
        %2972 = vmatprep.subr.bf16.mxu0 %v2371
        %2973 = vmatpush1.bf16.msra.mxu0 %v2370
        %2974 = vmatprep.subr.bf16.mxu0 %v2375
        %2975 = vmatpush1.bf16.msra.mxu0 %v2374
        %2976 = vmatprep.subr.bf16.mxu0 %v2379
        %2977 = vmatpush1.bf16.msra.mxu0 %v2378
        %2978 = vmatprep.subr.bf16.mxu0 %v2383
        %2979 = vmatpush1.bf16.msra.mxu0 %v2382
        %2980 = vmatprep.subr.bf16.mxu0 %v2387
        %2981 = vmatpush1.bf16.msra.mxu0 %v2386
        %2982 = vmatprep.subr.bf16.mxu0 %v2391
        %2983 = vmatpush1.bf16.msra.mxu0 %v2390
        %2984 = vmatprep.subr.bf16.mxu0 %v2395
        %2985 = vmatpush1.bf16.msra.mxu0 %v2394
        %2986 = vmatprep.subr.bf16.mxu0 0
        %2987 = vmatpush1.bf16.msra.mxu0 0
        %2988 = vmatprep.subr.bf16.mxu0 0
        %2989 = vmatpush1.bf16.msra.mxu0 0
        %2990 = vmatprep.subr.bf16.mxu0 0
        %2991 = vmatpush1.bf16.msra.mxu0 0
        %2992 = vmatprep.subr.bf16.mxu0 0
        %2993 = vmatpush1.bf16.msra.mxu0 0
        %2994 = vmatprep.subr.bf16.mxu0 0
        %2995 = vmatpush1.bf16.msra.mxu0 0
        %2996 = vmatprep.subr.bf16.mxu0 0
        %2997 = vmatpush1.bf16.msra.mxu0 0
        %2998 = vmatprep.subr.bf16.mxu0 0
        %2999 = vmatpush1.bf16.msra.mxu0 0
        %3000 = vmatprep.subr.bf16.mxu0 0
        %3001 = vmatpush1.bf16.msra.mxu0 0
        %3002 = vmatprep.mubr.bf16.mxu0 0
        %3003 = vmatmul.mubr.bf16.gmra.mrb[0].mxu0 %v2969
        %v3004 = vpop.f32.mrb[0].mxu0
        %v3005 = vadd.f32 0.0, %v3004
        %v3006 = vpop.f32.mrb[0].mxu0
        %v3007 = vadd.f32 0.0, %v3006
        %v3008 = vpop.f32.mrb[0].mxu0
        %v3009 = vpop.f32.mrb[0].mxu0
        %3010 = vdwg.mxu0
        %3011 = vmatprep.subr.bf16.mxu0 %v2369
        %3012 = vmatpush1.bf16.msra.mxu0 %v2368
        %3013 = vmatprep.subr.bf16.mxu0 %v2373
        %3014 = vmatpush1.bf16.msra.mxu0 %v2372
        %3015 = vmatprep.subr.bf16.mxu0 %v2377
        %3016 = vmatpush1.bf16.msra.mxu0 %v2376
        %3017 = vmatprep.subr.bf16.mxu0 %v2381
        %3018 = vmatpush1.bf16.msra.mxu0 %v2380
        %3019 = vmatprep.subr.bf16.mxu0 %v2385
        %3020 = vmatpush1.bf16.msra.mxu0 %v2384
        %3021 = vmatprep.subr.bf16.mxu0 %v2389
        %3022 = vmatpush1.bf16.msra.mxu0 %v2388
        %3023 = vmatprep.subr.bf16.mxu0 %v2393
        %3024 = vmatpush1.bf16.msra.mxu0 %v2392
        %3025 = vmatprep.subr.bf16.mxu0 %v2397
        %3026 = vmatpush1.bf16.msra.mxu0 %v2396
        %3027 = vmatprep.subr.bf16.mxu0 0
        %3028 = vmatpush1.bf16.msra.mxu0 0
        %3029 = vmatprep.subr.bf16.mxu0 0
        %3030 = vmatpush1.bf16.msra.mxu0 0
        %3031 = vmatprep.subr.bf16.mxu0 0
        %3032 = vmatpush1.bf16.msra.mxu0 0
        %3033 = vmatprep.subr.bf16.mxu0 0
        %3034 = vmatpush1.bf16.msra.mxu0 0
        %3035 = vmatprep.subr.bf16.mxu0 0
        %3036 = vmatpush1.bf16.msra.mxu0 0
        %3037 = vmatprep.subr.bf16.mxu0 0
        %3038 = vmatpush1.bf16.msra.mxu0 0
        %3039 = vmatprep.subr.bf16.mxu0 0
        %3040 = vmatpush1.bf16.msra.mxu0 0
        %3041 = vmatprep.subr.bf16.mxu0 0
        %3042 = vmatpush1.bf16.msra.mxu0 0
        %3043 = vmatprep.mubr.bf16.mxu0 0
        %3044 = vmatmul.mubr.bf16.gmra.mrb[0].mxu0 %v2969
        %v3045 = vpop.f32.mrb[0].mxu0
        %v3046 = vadd.f32 0.0, %v3045
        %v3047 = vpop.f32.mrb[0].mxu0
        %v3048 = vadd.f32 0.0, %v3047
        %v3049 = vpop.f32.mrb[0].mxu0
        %v3050 = vpop.f32.mrb[0].mxu0
        %3051 = vdwg.mxu0
        %v3052 = vadd.f32 %v2151, %v3005
        %v3053 = vadd.f32 %v2153, %v3007
        %v3054 = vadd.f32 %v2224, %v3046
        %v3055 = vadd.f32 %v2226, %v3048
        %v3056 = vsub.f32 0.0, %v3052
        %v3057 = vsub.f32 0.0, %v3053
        %v3058 = vsub.f32 0.0, %v3054
        %v3059 = vmul.f32 %v3056, 1.442695
        %v3060 = vpow.pop %v3059
        %v3061 = vmul.f32 %v3057, 1.442695
        %v3062 = vpow.pop %v3061
        %v3063 = vmul.f32 %v3058, 1.442695
        %v3064 = vpow.pop %v3063
        %v3065 = vadd.f32 %v3060, 1.0
        %v3066 = vadd.f32 %v3062, 1.0
        %v3067 = vadd.f32 %v3064, 1.0
        %v3068 = vrcp.pop %v3065
        %v3069 = vrcp.pop %v3066
        %v3070 = vrcp.pop %v3067
        %v3071 = vtanh.pop %v3055
        %v3072 = vmul.f32 %v3069, %v2966
        %v3073 = vmul.f32 %v3068, %v3071
        %v3074 = vadd.f32 %v3072, %v3073
        %v3075 = vtanh.pop %v3074
        %v3076 = vmul.f32 %v3070, %v3075
        %v3077 = vpack.c.bf16 %v3076, %v3076
        %3078 = vmatprep.subr.bf16.mxu0 %v2367
        %3079 = vmatpush1.bf16.msra.mxu0 %v2366
        %3080 = vmatprep.subr.bf16.mxu0 %v2371
        %3081 = vmatpush1.bf16.msra.mxu0 %v2370
        %3082 = vmatprep.subr.bf16.mxu0 %v2375
        %3083 = vmatpush1.bf16.msra.mxu0 %v2374
        %3084 = vmatprep.subr.bf16.mxu0 %v2379
        %3085 = vmatpush1.bf16.msra.mxu0 %v2378
        %3086 = vmatprep.subr.bf16.mxu0 %v2383
        %3087 = vmatpush1.bf16.msra.mxu0 %v2382
        %3088 = vmatprep.subr.bf16.mxu0 %v2387
        %3089 = vmatpush1.bf16.msra.mxu0 %v2386
        %3090 = vmatprep.subr.bf16.mxu0 %v2391
        %3091 = vmatpush1.bf16.msra.mxu0 %v2390
        %3092 = vmatprep.subr.bf16.mxu0 %v2395
        %3093 = vmatpush1.bf16.msra.mxu0 %v2394
        %3094 = vmatprep.subr.bf16.mxu0 0
        %3095 = vmatpush1.bf16.msra.mxu0 0
        %3096 = vmatprep.subr.bf16.mxu0 0
        %3097 = vmatpush1.bf16.msra.mxu0 0
        %3098 = vmatprep.subr.bf16.mxu0 0
        %3099 = vmatpush1.bf16.msra.mxu0 0
        %3100 = vmatprep.subr.bf16.mxu0 0
        %3101 = vmatpush1.bf16.msra.mxu0 0
        %3102 = vmatprep.subr.bf16.mxu0 0
        %3103 = vmatpush1.bf16.msra.mxu0 0
        %3104 = vmatprep.subr.bf16.mxu0 0
        %3105 = vmatpush1.bf16.msra.mxu0 0
        %3106 = vmatprep.subr.bf16.mxu0 0
        %3107 = vmatpush1.bf16.msra.mxu0 0
        %3108 = vmatprep.subr.bf16.mxu0 0
        %3109 = vmatpush1.bf16.msra.mxu0 0
        %3110 = vmatprep.mubr.bf16.mxu0 0
        %3111 = vmatmul.mubr.bf16.gmra.mrb[0].mxu0 %v3077
        %v3112 = vpop.f32.mrb[0].mxu0
        %v3113 = vadd.f32 0.0, %v3112
        %v3114 = vpop.f32.mrb[0].mxu0
        %v3115 = vadd.f32 0.0, %v3114
        %v3116 = vpop.f32.mrb[0].mxu0
        %v3117 = vpop.f32.mrb[0].mxu0
        %3118 = vdwg.mxu0
        %3119 = vmatprep.subr.bf16.mxu0 %v2369
        %3120 = vmatpush1.bf16.msra.mxu0 %v2368
        %3121 = vmatprep.subr.bf16.mxu0 %v2373
        %3122 = vmatpush1.bf16.msra.mxu0 %v2372
        %3123 = vmatprep.subr.bf16.mxu0 %v2377
        %3124 = vmatpush1.bf16.msra.mxu0 %v2376
        %3125 = vmatprep.subr.bf16.mxu0 %v2381
        %3126 = vmatpush1.bf16.msra.mxu0 %v2380
        %3127 = vmatprep.subr.bf16.mxu0 %v2385
        %3128 = vmatpush1.bf16.msra.mxu0 %v2384
        %3129 = vmatprep.subr.bf16.mxu0 %v2389
        %3130 = vmatpush1.bf16.msra.mxu0 %v2388
        %3131 = vmatprep.subr.bf16.mxu0 %v2393
        %3132 = vmatpush1.bf16.msra.mxu0 %v2392
        %3133 = vmatprep.subr.bf16.mxu0 %v2397
        %3134 = vmatpush1.bf16.msra.mxu0 %v2396
        %3135 = vmatprep.subr.bf16.mxu0 0
        %3136 = vmatpush1.bf16.msra.mxu0 0
        %3137 = vmatprep.subr.bf16.mxu0 0
        %3138 = vmatpush1.bf16.msra.mxu0 0
        %3139 = vmatprep.subr.bf16.mxu0 0
        %3140 = vmatpush1.bf16.msra.mxu0 0
        %3141 = vmatprep.subr.bf16.mxu0 0
        %3142 = vmatpush1.bf16.msra.mxu0 0
        %3143 = vmatprep.subr.bf16.mxu0 0
        %3144 = vmatpush1.bf16.msra.mxu0 0
        %3145 = vmatprep.subr.bf16.mxu0 0
        %3146 = vmatpush1.bf16.msra.mxu0 0
        %3147 = vmatprep.subr.bf16.mxu0 0
        %3148 = vmatpush1.bf16.msra.mxu0 0
        %3149 = vmatprep.subr.bf16.mxu0 0
        %3150 = vmatpush1.bf16.msra.mxu0 0
        %3151 = vmatprep.mubr.bf16.mxu0 0
        %3152 = vmatmul.mubr.bf16.gmra.mrb[0].mxu0 %v3077
        %v3153 = vpop.f32.mrb[0].mxu0
        %v3154 = vadd.f32 0.0, %v3153
        %v3155 = vpop.f32.mrb[0].mxu0
        %v3156 = vadd.f32 0.0, %v3155
        %v3157 = vpop.f32.mrb[0].mxu0
        %v3158 = vpop.f32.mrb[0].mxu0
        %3159 = vdwg.mxu0
        %v3160 = vadd.f32 %v2157, %v3113
        %v3161 = vadd.f32 %v2159, %v3115
        %v3162 = vadd.f32 %v2230, %v3154
        %v3163 = vadd.f32 %v2232, %v3156
        %v3164 = vsub.f32 0.0, %v3160
        %v3165 = vsub.f32 0.0, %v3161
        %v3166 = vsub.f32 0.0, %v3162
        %v3167 = vmul.f32 %v3164, 1.442695
        %v3168 = vpow.pop %v3167
        %v3169 = vmul.f32 %v3165, 1.442695
        %v3170 = vpow.pop %v3169
        %v3171 = vmul.f32 %v3166, 1.442695
        %v3172 = vpow.pop %v3171
        %v3173 = vadd.f32 %v3168, 1.0
        %v3174 = vadd.f32 %v3170, 1.0
        %v3175 = vadd.f32 %v3172, 1.0
        %v3176 = vrcp.pop %v3173
        %v3177 = vrcp.pop %v3174
        %v3178 = vrcp.pop %v3175
        %v3179 = vtanh.pop %v3163
        %v3180 = vmul.f32 %v3177, %v3074
        %v3181 = vmul.f32 %v3176, %v3179
        %v3182 = vadd.f32 %v3180, %v3181
        %v3183 = vtanh.pop %v3182
        %v3184 = vmul.f32 %v3178, %v3183
        %v3185 = vpack.c.bf16 %v3184, %v3184
        %3186 = vmatprep.subr.bf16.mxu0 %v2367
        %3187 = vmatpush1.bf16.msra.mxu0 %v2366
        %3188 = vmatprep.subr.bf16.mxu0 %v2371
        %3189 = vmatpush1.bf16.msra.mxu0 %v2370
        %3190 = vmatprep.subr.bf16.mxu0 %v2375
        %3191 = vmatpush1.bf16.msra.mxu0 %v2374
        %3192 = vmatprep.subr.bf16.mxu0 %v2379
        %3193 = vmatpush1.bf16.msra.mxu0 %v2378
        %3194 = vmatprep.subr.bf16.mxu0 %v2383
        %3195 = vmatpush1.bf16.msra.mxu0 %v2382
        %3196 = vmatprep.subr.bf16.mxu0 %v2387
        %3197 = vmatpush1.bf16.msra.mxu0 %v2386
        %3198 = vmatprep.subr.bf16.mxu0 %v2391
        %3199 = vmatpush1.bf16.msra.mxu0 %v2390
        %3200 = vmatprep.subr.bf16.mxu0 %v2395
        %3201 = vmatpush1.bf16.msra.mxu0 %v2394
        %3202 = vmatprep.subr.bf16.mxu0 0
        %3203 = vmatpush1.bf16.msra.mxu0 0
        %3204 = vmatprep.subr.bf16.mxu0 0
        %3205 = vmatpush1.bf16.msra.mxu0 0
        %3206 = vmatprep.subr.bf16.mxu0 0
        %3207 = vmatpush1.bf16.msra.mxu0 0
        %3208 = vmatprep.subr.bf16.mxu0 0
        %3209 = vmatpush1.bf16.msra.mxu0 0
        %3210 = vmatprep.subr.bf16.mxu0 0
        %3211 = vmatpush1.bf16.msra.mxu0 0
        %3212 = vmatprep.subr.bf16.mxu0 0
        %3213 = vmatpush1.bf16.msra.mxu0 0
        %3214 = vmatprep.subr.bf16.mxu0 0
        %3215 = vmatpush1.bf16.msra.mxu0 0
        %3216 = vmatprep.subr.bf16.mxu0 0
        %3217 = vmatpush1.bf16.msra.mxu0 0
        %3218 = vmatprep.mubr.bf16.mxu0 0
        %3219 = vmatmul.mubr.bf16.gmra.mrb[0].mxu0 %v3185
        %v3220 = vpop.f32.mrb[0].mxu0
        %v3221 = vadd.f32 0.0, %v3220
        %v3222 = vpop.f32.mrb[0].mxu0
        %v3223 = vadd.f32 0.0, %v3222
        %v3224 = vpop.f32.mrb[0].mxu0
        %v3225 = vpop.f32.mrb[0].mxu0
        %3226 = vdwg.mxu0
        %3227 = vmatprep.subr.bf16.mxu0 %v2369
        %3228 = vmatpush1.bf16.msra.mxu0 %v2368
        %3229 = vmatprep.subr.bf16.mxu0 %v2373
        %3230 = vmatpush1.bf16.msra.mxu0 %v2372
        %3231 = vmatprep.subr.bf16.mxu0 %v2377
        %3232 = vmatpush1.bf16.msra.mxu0 %v2376
        %3233 = vmatprep.subr.bf16.mxu0 %v2381
        %3234 = vmatpush1.bf16.msra.mxu0 %v2380
        %3235 = vmatprep.subr.bf16.mxu0 %v2385
        %3236 = vmatpush1.bf16.msra.mxu0 %v2384
        %3237 = vmatprep.subr.bf16.mxu0 %v2389
        %3238 = vmatpush1.bf16.msra.mxu0 %v2388
        %3239 = vmatprep.subr.bf16.mxu0 %v2393
        %3240 = vmatpush1.bf16.msra.mxu0 %v2392
        %3241 = vmatprep.subr.bf16.mxu0 %v2397
        %3242 = vmatpush1.bf16.msra.mxu0 %v2396
        %3243 = vmatprep.subr.bf16.mxu0 0
        %3244 = vmatpush1.bf16.msra.mxu0 0
        %3245 = vmatprep.subr.bf16.mxu0 0
        %3246 = vmatpush1.bf16.msra.mxu0 0
        %3247 = vmatprep.subr.bf16.mxu0 0
        %3248 = vmatpush1.bf16.msra.mxu0 0
        %3249 = vmatprep.subr.bf16.mxu0 0
        %3250 = vmatpush1.bf16.msra.mxu0 0
        %3251 = vmatprep.subr.bf16.mxu0 0
        %3252 = vmatpush1.bf16.msra.mxu0 0
        %3253 = vmatprep.subr.bf16.mxu0 0
        %3254 = vmatpush1.bf16.msra.mxu0 0
        %3255 = vmatprep.subr.bf16.mxu0 0
        %3256 = vmatpush1.bf16.msra.mxu0 0
        %3257 = vmatprep.subr.bf16.mxu0 0
        %3258 = vmatpush1.bf16.msra.mxu0 0
        %3259 = vmatprep.mubr.bf16.mxu0 0
        %3260 = vmatmul.mubr.bf16.gmra.mrb[0].mxu0 %v3185
        %v3261 = vpop.f32.mrb[0].mxu0
        %v3262 = vadd.f32 0.0, %v3261
        %v3263 = vpop.f32.mrb[0].mxu0
        %v3264 = vadd.f32 0.0, %v3263
        %v3265 = vpop.f32.mrb[0].mxu0
        %v3266 = vpop.f32.mrb[0].mxu0
        %3267 = vdwg.mxu0
        %v3268 = vadd.f32 %v2161, %v3221
        %v3269 = vadd.f32 %v2163, %v3223
        %v3270 = vadd.f32 %v2234, %v3262
        %v3271 = vadd.f32 %v2236, %v3264
        %v3272 = vsub.f32 0.0, %v3268
        %v3273 = vsub.f32 0.0, %v3269
        %v3274 = vsub.f32 0.0, %v3270
        %v3275 = vmul.f32 %v3272, 1.442695
        %v3276 = vpow.pop %v3275
        %v3277 = vmul.f32 %v3273, 1.442695
        %v3278 = vpow.pop %v3277
        %v3279 = vmul.f32 %v3274, 1.442695
        %v3280 = vpow.pop %v3279
        %v3281 = vadd.f32 %v3276, 1.0
        %v3282 = vadd.f32 %v3278, 1.0
        %v3283 = vadd.f32 %v3280, 1.0
        %v3284 = vrcp.pop %v3281
        %v3285 = vrcp.pop %v3282
        %v3286 = vrcp.pop %v3283
        %v3287 = vtanh.pop %v3271
        %v3288 = vmul.f32 %v3285, %v3182
        %v3289 = vmul.f32 %v3284, %v3287
        %v3290 = vadd.f32 %v3288, %v3289
        %v3291 = vtanh.pop %v3290
        %v3292 = vmul.f32 %v3286, %v3291
        %v3293 = vpack.c.bf16 %v3292, %v3292
        %v3294 = vld [vmem:[#allocation9] sm:$0xff]
        %v3295 = vld [vmem:[#allocation9 + $0x8] sm:$0xff]
        %v3296 = vld [vmem:[#allocation9 + $0x10] sm:$0xff]
        %v3297 = vld [vmem:[#allocation9 + $0x18] sm:$0xff]
        %v3298 = vld [vmem:[#allocation9 + $0x20] sm:$0xff]
        %v3299 = vld [vmem:[#allocation9 + $0x28] sm:$0xff]
        %v3300 = vld [vmem:[#allocation9 + $0x30] sm:$0xff]
        %v3301 = vld [vmem:[#allocation9 + $0x38] sm:$0xff]
        %v3302 = vld [vmem:[#allocation9 + $0x40] sm:$0xff]
        %v3303 = vld [vmem:[#allocation9 + $0x48] sm:$0xff]
        %v3304 = vld [vmem:[#allocation9 + $0x50] sm:$0xff]
        %v3305 = vld [vmem:[#allocation9 + $0x58] sm:$0xff]
        %v3306 = vld [vmem:[#allocation9 + $0x60] sm:$0xff]
        %v3307 = vld [vmem:[#allocation9 + $0x68] sm:$0xff]
        %v3308 = vld [vmem:[#allocation9 + $0x70] sm:$0xff]
        %v3309 = vld [vmem:[#allocation9 + $0x78] sm:$0xff]
        %v3310 = vld [vmem:[#allocation9 + $0x80] sm:$0xff]
        %v3311 = vld [vmem:[#allocation9 + $0x88] sm:$0xff]
        %v3312 = vld [vmem:[#allocation9 + $0x90] sm:$0xff]
        %v3313 = vld [vmem:[#allocation9 + $0x98] sm:$0xff]
        %v3314 = vld [vmem:[#allocation9 + $0xa0] sm:$0xff]
        %v3315 = vld [vmem:[#allocation9 + $0xa8] sm:$0xff]
        %v3316 = vld [vmem:[#allocation9 + $0xb0] sm:$0xff]
        %v3317 = vld [vmem:[#allocation9 + $0xb8] sm:$0xff]
        %v3318 = vld [vmem:[#allocation9 + $0xc0] sm:$0xff]
        %v3319 = vld [vmem:[#allocation9 + $0xc8] sm:$0xff]
        %v3320 = vld [vmem:[#allocation9 + $0xd0] sm:$0xff]
        %v3321 = vld [vmem:[#allocation9 + $0xd8] sm:$0xff]
        %v3322 = vld [vmem:[#allocation9 + $0xe0] sm:$0xff]
        %v3323 = vld [vmem:[#allocation9 + $0xe8] sm:$0xff]
        %v3324 = vld [vmem:[#allocation9 + $0xf0] sm:$0xff]
        %v3325 = vld [vmem:[#allocation9 + $0xf8] sm:$0xff]
        %v3326 = vld [vmem:[%s9] sm:$0xf]
        %v3328 = vlaneseq
        %v3329 = vshrl.u32 %v3328, 7
        %v3330 = vsub.s32 0, %v3329
        %v3331 = vrot.slane %v3326, %v3330
        %v3332 = vlaneseq
        %v3333 = vshrl.u32 %v3332, 7
        %v3334 = vsub.s32 1, %v3333
        %v3335 = vrot.slane %v3326, %v3334
        %v3336 = vlaneseq
        %v3337 = vshrl.u32 %v3336, 7
        %v3338 = vsub.s32 2, %v3337
        %v3339 = vrot.slane %v3326, %v3338
        %v3340 = vlaneseq
        %v3341 = vshrl.u32 %v3340, 7
        %v3342 = vsub.s32 3, %v3341
        %v3343 = vrot.slane %v3326, %v3342
        %v3380 = vunpack.c.l.b16 %v3294
        %v3381 = vunpack.c.h.b16 %v3294
        %v3382 = vunpack.c.l.b16 %v3295
        %v3383 = vunpack.c.h.b16 %v3295
        %v3384 = vunpack.c.l.b16 %v3296
        %v3385 = vunpack.c.h.b16 %v3296
        %v3386 = vunpack.c.l.b16 %v3297
        %v3387 = vunpack.c.h.b16 %v3297
        %v3388 = vunpack.c.l.b16 %v3298
        %v3389 = vunpack.c.h.b16 %v3298
        %v3390 = vunpack.c.l.b16 %v3299
        %v3391 = vunpack.c.h.b16 %v3299
        %v3392 = vunpack.c.l.b16 %v3300
        %v3393 = vunpack.c.h.b16 %v3300
        %v3394 = vunpack.c.l.b16 %v3301
        %v3395 = vunpack.c.h.b16 %v3301
        %v3396 = vunpack.c.l.b16 %v3302
        %v3397 = vunpack.c.h.b16 %v3302
        %v3398 = vunpack.c.l.b16 %v3303
        %v3399 = vunpack.c.h.b16 %v3303
        %v3400 = vunpack.c.l.b16 %v3304
        %v3401 = vunpack.c.h.b16 %v3304
        %v3402 = vunpack.c.l.b16 %v3305
        %v3403 = vunpack.c.h.b16 %v3305
        %v3404 = vunpack.c.l.b16 %v3306
        %v3405 = vunpack.c.h.b16 %v3306
        %v3406 = vunpack.c.l.b16 %v3307
        %v3407 = vunpack.c.h.b16 %v3307
        %v3408 = vunpack.c.l.b16 %v3308
        %v3409 = vunpack.c.h.b16 %v3308
        %v3410 = vunpack.c.l.b16 %v3309
        %v3411 = vunpack.c.h.b16 %v3309
        %v3412 = vunpack.c.l.b16 %v3310
        %v3413 = vunpack.c.h.b16 %v3310
        %v3414 = vunpack.c.l.b16 %v3311
        %v3415 = vunpack.c.h.b16 %v3311
        %v3416 = vunpack.c.l.b16 %v3312
        %v3417 = vunpack.c.h.b16 %v3312
        %v3418 = vunpack.c.l.b16 %v3313
        %v3419 = vunpack.c.h.b16 %v3313
        %v3420 = vunpack.c.l.b16 %v3314
        %v3421 = vunpack.c.h.b16 %v3314
        %v3422 = vunpack.c.l.b16 %v3315
        %v3423 = vunpack.c.h.b16 %v3315
        %v3424 = vunpack.c.l.b16 %v3316
        %v3425 = vunpack.c.h.b16 %v3316
        %v3426 = vunpack.c.l.b16 %v3317
        %v3427 = vunpack.c.h.b16 %v3317
        %v3428 = vunpack.c.l.b16 %v3318
        %v3429 = vunpack.c.h.b16 %v3318
        %v3430 = vunpack.c.l.b16 %v3319
        %v3431 = vunpack.c.h.b16 %v3319
        %v3432 = vunpack.c.l.b16 %v3320
        %v3433 = vunpack.c.h.b16 %v3320
        %v3434 = vunpack.c.l.b16 %v3321
        %v3435 = vunpack.c.h.b16 %v3321
        %v3436 = vunpack.c.l.b16 %v3322
        %v3437 = vunpack.c.h.b16 %v3322
        %v3438 = vunpack.c.l.b16 %v3323
        %v3439 = vunpack.c.h.b16 %v3323
        %v3440 = vunpack.c.l.b16 %v3324
        %v3441 = vunpack.c.h.b16 %v3324
        %v3442 = vunpack.c.l.b16 %v3325
        %v3443 = vunpack.c.h.b16 %v3325
        %v3444 = vpack.c.b16 %v3384, %v3380
        %v3445 = vpack.c.b16 %v3385, %v3381
        %v3446 = vpack.c.b16 %v3386, %v3382
        %v3447 = vpack.c.b16 %v3387, %v3383
        %v3448 = vpack.c.b16 %v3392, %v3388
        %v3449 = vpack.c.b16 %v3393, %v3389
        %v3450 = vpack.c.b16 %v3394, %v3390
        %v3451 = vpack.c.b16 %v3395, %v3391
        %v3452 = vpack.c.b16 %v3400, %v3396
        %v3453 = vpack.c.b16 %v3401, %v3397
        %v3454 = vpack.c.b16 %v3402, %v3398
        %v3455 = vpack.c.b16 %v3403, %v3399
        %v3456 = vpack.c.b16 %v3408, %v3404
        %v3457 = vpack.c.b16 %v3409, %v3405
        %v3458 = vpack.c.b16 %v3410, %v3406
        %v3459 = vpack.c.b16 %v3411, %v3407
        %v3460 = vpack.c.b16 %v3416, %v3412
        %v3461 = vpack.c.b16 %v3417, %v3413
        %v3462 = vpack.c.b16 %v3418, %v3414
        %v3463 = vpack.c.b16 %v3419, %v3415
        %v3464 = vpack.c.b16 %v3424, %v3420
        %v3465 = vpack.c.b16 %v3425, %v3421
        %v3466 = vpack.c.b16 %v3426, %v3422
        %v3467 = vpack.c.b16 %v3427, %v3423
        %v3468 = vpack.c.b16 %v3432, %v3428
        %v3469 = vpack.c.b16 %v3433, %v3429
        %v3470 = vpack.c.b16 %v3434, %v3430
        %v3471 = vpack.c.b16 %v3435, %v3431
        %v3472 = vpack.c.b16 %v3440, %v3436
        %v3473 = vpack.c.b16 %v3441, %v3437
        %v3474 = vpack.c.b16 %v3442, %v3438
        %v3475 = vpack.c.b16 %v3443, %v3439
        %3508 = vmatprep.subr.bf16.mxu0 %v3445
        %3509 = vmatpush1.bf16.msra.mxu0 %v3444
        %3510 = vmatprep.subr.bf16.mxu0 %v3449
        %3511 = vmatpush1.bf16.msra.mxu0 %v3448
        %3512 = vmatprep.subr.bf16.mxu0 %v3453
        %3513 = vmatpush1.bf16.msra.mxu0 %v3452
        %3514 = vmatprep.subr.bf16.mxu0 %v3457
        %3515 = vmatpush1.bf16.msra.mxu0 %v3456
        %3516 = vmatprep.subr.bf16.mxu0 %v3461
        %3517 = vmatpush1.bf16.msra.mxu0 %v3460
        %3518 = vmatprep.subr.bf16.mxu0 %v3465
        %3519 = vmatpush1.bf16.msra.mxu0 %v3464
        %3520 = vmatprep.subr.bf16.mxu0 %v3469
        %3521 = vmatpush1.bf16.msra.mxu0 %v3468
        %3522 = vmatprep.subr.bf16.mxu0 %v3473
        %3523 = vmatpush1.bf16.msra.mxu0 %v3472
        %3524 = vmatprep.subr.bf16.mxu0 0
        %3525 = vmatpush1.bf16.msra.mxu0 0
        %3526 = vmatprep.subr.bf16.mxu0 0
        %3527 = vmatpush1.bf16.msra.mxu0 0
        %3528 = vmatprep.subr.bf16.mxu0 0
        %3529 = vmatpush1.bf16.msra.mxu0 0
        %3530 = vmatprep.subr.bf16.mxu0 0
        %3531 = vmatpush1.bf16.msra.mxu0 0
        %3532 = vmatprep.subr.bf16.mxu0 0
        %3533 = vmatpush1.bf16.msra.mxu0 0
        %3534 = vmatprep.subr.bf16.mxu0 0
        %3535 = vmatpush1.bf16.msra.mxu0 0
        %3536 = vmatprep.subr.bf16.mxu0 0
        %3537 = vmatpush1.bf16.msra.mxu0 0
        %3538 = vmatprep.subr.bf16.mxu0 0
        %3539 = vmatpush1.bf16.msra.mxu0 0
        %3540 = vmatprep.mubr.bf16.mxu0 0
        %3541 = vmatmul.mubr.bf16.gmra.mrb[0].mxu0 %v3293
        %v3542 = vpop.f32.mrb[0].mxu0
        %v3543 = vadd.f32 %v3331, %v3542
        %v3544 = vpop.f32.mrb[0].mxu0
        %v3545 = vadd.f32 %v3335, %v3544
        %v3546 = vpop.f32.mrb[0].mxu0
        %v3547 = vpop.f32.mrb[0].mxu0
        %3548 = vdwg.mxu0
        %3549 = vmatprep.subr.bf16.mxu0 %v3447
        %3550 = vmatpush1.bf16.msra.mxu0 %v3446
        %3551 = vmatprep.subr.bf16.mxu0 %v3451
        %3552 = vmatpush1.bf16.msra.mxu0 %v3450
        %3553 = vmatprep.subr.bf16.mxu0 %v3455
        %3554 = vmatpush1.bf16.msra.mxu0 %v3454
        %3555 = vmatprep.subr.bf16.mxu0 %v3459
        %3556 = vmatpush1.bf16.msra.mxu0 %v3458
        %3557 = vmatprep.subr.bf16.mxu0 %v3463
        %3558 = vmatpush1.bf16.msra.mxu0 %v3462
        %3559 = vmatprep.subr.bf16.mxu0 %v3467
        %3560 = vmatpush1.bf16.msra.mxu0 %v3466
        %3561 = vmatprep.subr.bf16.mxu0 %v3471
        %3562 = vmatpush1.bf16.msra.mxu0 %v3470
        %3563 = vmatprep.subr.bf16.mxu0 %v3475
        %3564 = vmatpush1.bf16.msra.mxu0 %v3474
        %3565 = vmatprep.subr.bf16.mxu0 0
        %3566 = vmatpush1.bf16.msra.mxu0 0
        %3567 = vmatprep.subr.bf16.mxu0 0
        %3568 = vmatpush1.bf16.msra.mxu0 0
        %3569 = vmatprep.subr.bf16.mxu0 0
        %3570 = vmatpush1.bf16.msra.mxu0 0
        %3571 = vmatprep.subr.bf16.mxu0 0
        %3572 = vmatpush1.bf16.msra.mxu0 0
        %3573 = vmatprep.subr.bf16.mxu0 0
        %3574 = vmatpush1.bf16.msra.mxu0 0
        %3575 = vmatprep.subr.bf16.mxu0 0
        %3576 = vmatpush1.bf16.msra.mxu0 0
        %3577 = vmatprep.subr.bf16.mxu0 0
        %3578 = vmatpush1.bf16.msra.mxu0 0
        %3579 = vmatprep.subr.bf16.mxu0 0
        %3580 = vmatpush1.bf16.msra.mxu0 0
        %3581 = vmatprep.mubr.bf16.mxu0 0
        %3582 = vmatmul.mubr.bf16.gmra.mrb[0].mxu0 %v3293
        %v3583 = vpop.f32.mrb[0].mxu0
        %v3584 = vadd.f32 %v3339, %v3583
        %v3585 = vpop.f32.mrb[0].mxu0
        %v3586 = vadd.f32 %v3343, %v3585
        %v3587 = vpop.f32.mrb[0].mxu0
        %v3588 = vpop.f32.mrb[0].mxu0
        %3589 = vdwg.mxu0
        %v3590 = vld [vmem:[#allocation11] sm:$0xff]
        %v3591 = vld [vmem:[#allocation11 + $0x8] sm:$0xff]
        %v3592 = vld [vmem:[#allocation11 + $0x10] sm:$0xff]
        %v3593 = vld [vmem:[#allocation11 + $0x18] sm:$0xff]
        %v3594 = vld [vmem:[#allocation11 + $0x20] sm:$0xff]
        %v3595 = vld [vmem:[#allocation11 + $0x28] sm:$0xff]
        %v3596 = vld [vmem:[#allocation11 + $0x30] sm:$0xff]
        %v3597 = vld [vmem:[#allocation11 + $0x38] sm:$0xff]
        %v3598 = vld [vmem:[#allocation11 + $0x40] sm:$0xff]
        %v3599 = vld [vmem:[#allocation11 + $0x48] sm:$0xff]
        %v3600 = vld [vmem:[#allocation11 + $0x50] sm:$0xff]
        %v3601 = vld [vmem:[#allocation11 + $0x58] sm:$0xff]
        %v3602 = vld [vmem:[#allocation11 + $0x60] sm:$0xff]
        %v3603 = vld [vmem:[#allocation11 + $0x68] sm:$0xff]
        %v3604 = vld [vmem:[#allocation11 + $0x70] sm:$0xff]
        %v3605 = vld [vmem:[#allocation11 + $0x78] sm:$0xff]
        %v3606 = vld [vmem:[#allocation11 + $0x80] sm:$0xff]
        %v3607 = vld [vmem:[#allocation11 + $0x88] sm:$0xff]
        %v3608 = vld [vmem:[#allocation11 + $0x90] sm:$0xff]
        %v3609 = vld [vmem:[#allocation11 + $0x98] sm:$0xff]
        %v3610 = vld [vmem:[#allocation11 + $0xa0] sm:$0xff]
        %v3611 = vld [vmem:[#allocation11 + $0xa8] sm:$0xff]
        %v3612 = vld [vmem:[#allocation11 + $0xb0] sm:$0xff]
        %v3613 = vld [vmem:[#allocation11 + $0xb8] sm:$0xff]
        %v3614 = vld [vmem:[#allocation11 + $0xc0] sm:$0xff]
        %v3615 = vld [vmem:[#allocation11 + $0xc8] sm:$0xff]
        %v3616 = vld [vmem:[#allocation11 + $0xd0] sm:$0xff]
        %v3617 = vld [vmem:[#allocation11 + $0xd8] sm:$0xff]
        %v3618 = vld [vmem:[#allocation11 + $0xe0] sm:$0xff]
        %v3619 = vld [vmem:[#allocation11 + $0xe8] sm:$0xff]
        %v3620 = vld [vmem:[#allocation11 + $0xf0] sm:$0xff]
        %v3621 = vld [vmem:[#allocation11 + $0xf8] sm:$0xff]
        %v3654 = vunpack.c.l.b16 %v3590
        %v3655 = vunpack.c.h.b16 %v3590
        %v3656 = vunpack.c.l.b16 %v3591
        %v3657 = vunpack.c.h.b16 %v3591
        %v3658 = vunpack.c.l.b16 %v3592
        %v3659 = vunpack.c.h.b16 %v3592
        %v3660 = vunpack.c.l.b16 %v3593
        %v3661 = vunpack.c.h.b16 %v3593
        %v3662 = vunpack.c.l.b16 %v3594
        %v3663 = vunpack.c.h.b16 %v3594
        %v3664 = vunpack.c.l.b16 %v3595
        %v3665 = vunpack.c.h.b16 %v3595
        %v3666 = vunpack.c.l.b16 %v3596
        %v3667 = vunpack.c.h.b16 %v3596
        %v3668 = vunpack.c.l.b16 %v3597
        %v3669 = vunpack.c.h.b16 %v3597
        %v3670 = vunpack.c.l.b16 %v3598
        %v3671 = vunpack.c.h.b16 %v3598
        %v3672 = vunpack.c.l.b16 %v3599
        %v3673 = vunpack.c.h.b16 %v3599
        %v3674 = vunpack.c.l.b16 %v3600
        %v3675 = vunpack.c.h.b16 %v3600
        %v3676 = vunpack.c.l.b16 %v3601
        %v3677 = vunpack.c.h.b16 %v3601
        %v3678 = vunpack.c.l.b16 %v3602
        %v3679 = vunpack.c.h.b16 %v3602
        %v3680 = vunpack.c.l.b16 %v3603
        %v3681 = vunpack.c.h.b16 %v3603
        %v3682 = vunpack.c.l.b16 %v3604
        %v3683 = vunpack.c.h.b16 %v3604
        %v3684 = vunpack.c.l.b16 %v3605
        %v3685 = vunpack.c.h.b16 %v3605
        %v3686 = vunpack.c.l.b16 %v3606
        %v3687 = vunpack.c.h.b16 %v3606
        %v3688 = vunpack.c.l.b16 %v3607
        %v3689 = vunpack.c.h.b16 %v3607
        %v3690 = vunpack.c.l.b16 %v3608
        %v3691 = vunpack.c.h.b16 %v3608
        %v3692 = vunpack.c.l.b16 %v3609
        %v3693 = vunpack.c.h.b16 %v3609
        %v3694 = vunpack.c.l.b16 %v3610
        %v3695 = vunpack.c.h.b16 %v3610
        %v3696 = vunpack.c.l.b16 %v3611
        %v3697 = vunpack.c.h.b16 %v3611
        %v3698 = vunpack.c.l.b16 %v3612
        %v3699 = vunpack.c.h.b16 %v3612
        %v3700 = vunpack.c.l.b16 %v3613
        %v3701 = vunpack.c.h.b16 %v3613
        %v3702 = vunpack.c.l.b16 %v3614
        %v3703 = vunpack.c.h.b16 %v3614
        %v3704 = vunpack.c.l.b16 %v3615
        %v3705 = vunpack.c.h.b16 %v3615
        %v3706 = vunpack.c.l.b16 %v3616
        %v3707 = vunpack.c.h.b16 %v3616
        %v3708 = vunpack.c.l.b16 %v3617
        %v3709 = vunpack.c.h.b16 %v3617
        %v3710 = vunpack.c.l.b16 %v3618
        %v3711 = vunpack.c.h.b16 %v3618
        %v3712 = vunpack.c.l.b16 %v3619
        %v3713 = vunpack.c.h.b16 %v3619
        %v3714 = vunpack.c.l.b16 %v3620
        %v3715 = vunpack.c.h.b16 %v3620
        %v3716 = vunpack.c.l.b16 %v3621
        %v3717 = vunpack.c.h.b16 %v3621
        %v3718 = vpack.c.b16 %v3658, %v3654
        %v3719 = vpack.c.b16 %v3659, %v3655
        %v3720 = vpack.c.b16 %v3660, %v3656
        %v3721 = vpack.c.b16 %v3661, %v3657
        %v3722 = vpack.c.b16 %v3666, %v3662
        %v3723 = vpack.c.b16 %v3667, %v3663
        %v3724 = vpack.c.b16 %v3668, %v3664
        %v3725 = vpack.c.b16 %v3669, %v3665
        %v3726 = vpack.c.b16 %v3674, %v3670
        %v3727 = vpack.c.b16 %v3675, %v3671
        %v3728 = vpack.c.b16 %v3676, %v3672
        %v3729 = vpack.c.b16 %v3677, %v3673
        %v3730 = vpack.c.b16 %v3682, %v3678
        %v3731 = vpack.c.b16 %v3683, %v3679
        %v3732 = vpack.c.b16 %v3684, %v3680
        %v3733 = vpack.c.b16 %v3685, %v3681
        %v3734 = vpack.c.b16 %v3690, %v3686
        %v3735 = vpack.c.b16 %v3691, %v3687
        %v3736 = vpack.c.b16 %v3692, %v3688
        %v3737 = vpack.c.b16 %v3693, %v3689
        %v3738 = vpack.c.b16 %v3698, %v3694
        %v3739 = vpack.c.b16 %v3699, %v3695
        %v3740 = vpack.c.b16 %v3700, %v3696
        %v3741 = vpack.c.b16 %v3701, %v3697
        %v3742 = vpack.c.b16 %v3706, %v3702
        %v3743 = vpack.c.b16 %v3707, %v3703
        %v3744 = vpack.c.b16 %v3708, %v3704
        %v3745 = vpack.c.b16 %v3709, %v3705
        %v3746 = vpack.c.b16 %v3714, %v3710
        %v3747 = vpack.c.b16 %v3715, %v3711
        %v3748 = vpack.c.b16 %v3716, %v3712
        %v3749 = vpack.c.b16 %v3717, %v3713
        %3782 = vmatprep.subr.bf16.mxu0 %v3719
        %3783 = vmatpush1.bf16.msra.mxu0 %v3718
        %3784 = vmatprep.subr.bf16.mxu0 %v3723
        %3785 = vmatpush1.bf16.msra.mxu0 %v3722
        %3786 = vmatprep.subr.bf16.mxu0 %v3727
        %3787 = vmatpush1.bf16.msra.mxu0 %v3726
        %3788 = vmatprep.subr.bf16.mxu0 %v3731
        %3789 = vmatpush1.bf16.msra.mxu0 %v3730
        %3790 = vmatprep.subr.bf16.mxu0 %v3735
        %3791 = vmatpush1.bf16.msra.mxu0 %v3734
        %3792 = vmatprep.subr.bf16.mxu0 %v3739
        %3793 = vmatpush1.bf16.msra.mxu0 %v3738
        %3794 = vmatprep.subr.bf16.mxu0 %v3743
        %3795 = vmatpush1.bf16.msra.mxu0 %v3742
        %3796 = vmatprep.subr.bf16.mxu0 %v3747
        %3797 = vmatpush1.bf16.msra.mxu0 %v3746
        %3798 = vmatprep.subr.bf16.mxu0 0
        %3799 = vmatpush1.bf16.msra.mxu0 0
        %3800 = vmatprep.subr.bf16.mxu0 0
        %3801 = vmatpush1.bf16.msra.mxu0 0
        %3802 = vmatprep.subr.bf16.mxu0 0
        %3803 = vmatpush1.bf16.msra.mxu0 0
        %3804 = vmatprep.subr.bf16.mxu0 0
        %3805 = vmatpush1.bf16.msra.mxu0 0
        %3806 = vmatprep.subr.bf16.mxu0 0
        %3807 = vmatpush1.bf16.msra.mxu0 0
        %3808 = vmatprep.subr.bf16.mxu0 0
        %3809 = vmatpush1.bf16.msra.mxu0 0
        %3810 = vmatprep.subr.bf16.mxu0 0
        %3811 = vmatpush1.bf16.msra.mxu0 0
        %3812 = vmatprep.subr.bf16.mxu0 0
        %3813 = vmatpush1.bf16.msra.mxu0 0
        %3814 = vmatprep.mubr.bf16.mxu0 0
        %3815 = vmatmul.mubr.bf16.gmra.mrb[0].mxu0 0
        %v3816 = vpop.f32.mrb[0].mxu0
        %v3817 = vadd.f32 0.0, %v3816
        %v3818 = vpop.f32.mrb[0].mxu0
        %v3819 = vadd.f32 0.0, %v3818
        %v3820 = vpop.f32.mrb[0].mxu0
        %v3821 = vpop.f32.mrb[0].mxu0
        %3822 = vdwg.mxu0
        %3823 = vmatprep.subr.bf16.mxu0 %v3721
        %3824 = vmatpush1.bf16.msra.mxu0 %v3720
        %3825 = vmatprep.subr.bf16.mxu0 %v3725
        %3826 = vmatpush1.bf16.msra.mxu0 %v3724
        %3827 = vmatprep.subr.bf16.mxu0 %v3729
        %3828 = vmatpush1.bf16.msra.mxu0 %v3728
        %3829 = vmatprep.subr.bf16.mxu0 %v3733
        %3830 = vmatpush1.bf16.msra.mxu0 %v3732
        %3831 = vmatprep.subr.bf16.mxu0 %v3737
        %3832 = vmatpush1.bf16.msra.mxu0 %v3736
        %3833 = vmatprep.subr.bf16.mxu0 %v3741
        %3834 = vmatpush1.bf16.msra.mxu0 %v3740
        %3835 = vmatprep.subr.bf16.mxu0 %v3745
        %3836 = vmatpush1.bf16.msra.mxu0 %v3744
        %3837 = vmatprep.subr.bf16.mxu0 %v3749
        %3838 = vmatpush1.bf16.msra.mxu0 %v3748
        %3839 = vmatprep.subr.bf16.mxu0 0
        %3840 = vmatpush1.bf16.msra.mxu0 0
        %3841 = vmatprep.subr.bf16.mxu0 0
        %3842 = vmatpush1.bf16.msra.mxu0 0
        %3843 = vmatprep.subr.bf16.mxu0 0
        %3844 = vmatpush1.bf16.msra.mxu0 0
        %3845 = vmatprep.subr.bf16.mxu0 0
        %3846 = vmatpush1.bf16.msra.mxu0 0
        %3847 = vmatprep.subr.bf16.mxu0 0
        %3848 = vmatpush1.bf16.msra.mxu0 0
        %3849 = vmatprep.subr.bf16.mxu0 0
        %3850 = vmatpush1.bf16.msra.mxu0 0
        %3851 = vmatprep.subr.bf16.mxu0 0
        %3852 = vmatpush1.bf16.msra.mxu0 0
        %3853 = vmatprep.subr.bf16.mxu0 0
        %3854 = vmatpush1.bf16.msra.mxu0 0
        %3855 = vmatprep.mubr.bf16.mxu0 0
        %3856 = vmatmul.mubr.bf16.gmra.mrb[0].mxu0 0
        %v3857 = vpop.f32.mrb[0].mxu0
        %v3858 = vadd.f32 0.0, %v3857
        %v3859 = vpop.f32.mrb[0].mxu0
        %v3860 = vadd.f32 0.0, %v3859
        %v3861 = vpop.f32.mrb[0].mxu0
        %v3862 = vpop.f32.mrb[0].mxu0
        %3863 = vdwg.mxu0
        %v3864 = vadd.f32 %v3543, %v3817
        %v3865 = vadd.f32 %v3545, %v3819
        %v3866 = vadd.f32 %v3584, %v3858
        %v3867 = vadd.f32 %v3586, %v3860
        %v3868 = vsub.f32 0.0, %v3864
        %v3869 = vsub.f32 0.0, %v3865
        %v3870 = vsub.f32 0.0, %v3866
        %v3871 = vmul.f32 %v3868, 1.442695
        %v3872 = vpow.pop %v3871
        %v3873 = vmul.f32 %v3869, 1.442695
        %v3874 = vpow.pop %v3873
        %v3875 = vmul.f32 %v3870, 1.442695
        %v3876 = vpow.pop %v3875
        %v3877 = vadd.f32 %v3872, 1.0
        %v3878 = vadd.f32 %v3874, 1.0
        %v3879 = vadd.f32 %v3876, 1.0
        %v3880 = vrcp.pop %v3877
        %v3881 = vrcp.pop %v3878
        %v3882 = vrcp.pop %v3879
        %v3883 = vtanh.pop %v3867
        %v3884 = vmul.f32 %v3881, 0.0
        %v3885 = vmul.f32 %v3880, %v3883
        %v3886 = vadd.f32 %v3884, %v3885
        %v3887 = vtanh.pop %v3886
        %v3888 = vmul.f32 %v3882, %v3887
        %v3889 = vpack.c.bf16 %v3888, %v3888
        %3890 = vmatprep.subr.bf16.mxu0 %v3719
        %3891 = vmatpush1.bf16.msra.mxu0 %v3718
        %3892 = vmatprep.subr.bf16.mxu0 %v3723
        %3893 = vmatpush1.bf16.msra.mxu0 %v3722
        %3894 = vmatprep.subr.bf16.mxu0 %v3727
        %3895 = vmatpush1.bf16.msra.mxu0 %v3726
        %3896 = vmatprep.subr.bf16.mxu0 %v3731
        %3897 = vmatpush1.bf16.msra.mxu0 %v3730
        %3898 = vmatprep.subr.bf16.mxu0 %v3735
        %3899 = vmatpush1.bf16.msra.mxu0 %v3734
        %3900 = vmatprep.subr.bf16.mxu0 %v3739
        %3901 = vmatpush1.bf16.msra.mxu0 %v3738
        %3902 = vmatprep.subr.bf16.mxu0 %v3743
        %3903 = vmatpush1.bf16.msra.mxu0 %v3742
        %3904 = vmatprep.subr.bf16.mxu0 %v3747
        %3905 = vmatpush1.bf16.msra.mxu0 %v3746
        %3906 = vmatprep.subr.bf16.mxu0 0
        %3907 = vmatpush1.bf16.msra.mxu0 0
        %3908 = vmatprep.subr.bf16.mxu0 0
        %3909 = vmatpush1.bf16.msra.mxu0 0
        %3910 = vmatprep.subr.bf16.mxu0 0
        %3911 = vmatpush1.bf16.msra.mxu0 0
        %3912 = vmatprep.subr.bf16.mxu0 0
        %3913 = vmatpush1.bf16.msra.mxu0 0
        %3914 = vmatprep.subr.bf16.mxu0 0
        %3915 = vmatpush1.bf16.msra.mxu0 0
        %3916 = vmatprep.subr.bf16.mxu0 0
        %3917 = vmatpush1.bf16.msra.mxu0 0
        %3918 = vmatprep.subr.bf16.mxu0 0
        %3919 = vmatpush1.bf16.msra.mxu0 0
        %3920 = vmatprep.subr.bf16.mxu0 0
        %3921 = vmatpush1.bf16.msra.mxu0 0
        %3922 = vmatprep.mubr.bf16.mxu0 0
        %3923 = vmatmul.mubr.bf16.gmra.mrb[0].mxu0 %v3889
        %v3924 = vpop.f32.mrb[0].mxu0
        %v3925 = vadd.f32 0.0, %v3924
        %v3926 = vpop.f32.mrb[0].mxu0
        %v3927 = vadd.f32 0.0, %v3926
        %v3928 = vpop.f32.mrb[0].mxu0
        %v3929 = vpop.f32.mrb[0].mxu0
        %3930 = vdwg.mxu0
        %3931 = vmatprep.subr.bf16.mxu0 %v3721
        %3932 = vmatpush1.bf16.msra.mxu0 %v3720
        %3933 = vmatprep.subr.bf16.mxu0 %v3725
        %3934 = vmatpush1.bf16.msra.mxu0 %v3724
        %3935 = vmatprep.subr.bf16.mxu0 %v3729
        %3936 = vmatpush1.bf16.msra.mxu0 %v3728
        %3937 = vmatprep.subr.bf16.mxu0 %v3733
        %3938 = vmatpush1.bf16.msra.mxu0 %v3732
        %3939 = vmatprep.subr.bf16.mxu0 %v3737
        %3940 = vmatpush1.bf16.msra.mxu0 %v3736
        %3941 = vmatprep.subr.bf16.mxu0 %v3741
        %3942 = vmatpush1.bf16.msra.mxu0 %v3740
        %3943 = vmatprep.subr.bf16.mxu0 %v3745
        %3944 = vmatpush1.bf16.msra.mxu0 %v3744
        %3945 = vmatprep.subr.bf16.mxu0 %v3749
        %3946 = vmatpush1.bf16.msra.mxu0 %v3748
        %3947 = vmatprep.subr.bf16.mxu0 0
        %3948 = vmatpush1.bf16.msra.mxu0 0
        %3949 = vmatprep.subr.bf16.mxu0 0
        %3950 = vmatpush1.bf16.msra.mxu0 0
        %3951 = vmatprep.subr.bf16.mxu0 0
        %3952 = vmatpush1.bf16.msra.mxu0 0
        %3953 = vmatprep.subr.bf16.mxu0 0
        %3954 = vmatpush1.bf16.msra.mxu0 0
        %3955 = vmatprep.subr.bf16.mxu0 0
        %3956 = vmatpush1.bf16.msra.mxu0 0
        %3957 = vmatprep.subr.bf16.mxu0 0
        %3958 = vmatpush1.bf16.msra.mxu0 0
        %3959 = vmatprep.subr.bf16.mxu0 0
        %3960 = vmatpush1.bf16.msra.mxu0 0
        %3961 = vmatprep.subr.bf16.mxu0 0
        %3962 = vmatpush1.bf16.msra.mxu0 0
        %3963 = vmatprep.mubr.bf16.mxu0 0
        %3964 = vmatmul.mubr.bf16.gmra.mrb[0].mxu0 %v3889
        %v3965 = vpop.f32.mrb[0].mxu0
        %v3966 = vadd.f32 0.0, %v3965
        %v3967 = vpop.f32.mrb[0].mxu0
        %v3968 = vadd.f32 0.0, %v3967
        %v3969 = vpop.f32.mrb[0].mxu0
        %v3970 = vpop.f32.mrb[0].mxu0
        %3971 = vdwg.mxu0
        %v3972 = vadd.f32 %v3543, %v3925
        %v3973 = vadd.f32 %v3545, %v3927
        %v3974 = vadd.f32 %v3584, %v3966
        %v3975 = vadd.f32 %v3586, %v3968
        %v3976 = vsub.f32 0.0, %v3972
        %v3977 = vsub.f32 0.0, %v3973
        %v3978 = vsub.f32 0.0, %v3974
        %v3979 = vmul.f32 %v3976, 1.442695
        %v3980 = vpow.pop %v3979
        %v3981 = vmul.f32 %v3977, 1.442695
        %v3982 = vpow.pop %v3981
        %v3983 = vmul.f32 %v3978, 1.442695
        %v3984 = vpow.pop %v3983
        %v3985 = vadd.f32 %v3980, 1.0
        %v3986 = vadd.f32 %v3982, 1.0
        %v3987 = vadd.f32 %v3984, 1.0
        %v3988 = vrcp.pop %v3985
        %v3989 = vrcp.pop %v3986
        %v3990 = vrcp.pop %v3987
        %v3991 = vtanh.pop %v3975
        %v3992 = vmul.f32 %v3989, %v3886
        %v3993 = vmul.f32 %v3988, %v3991
        %v3994 = vadd.f32 %v3992, %v3993
        %v3995 = vtanh.pop %v3994
        %v3996 = vmul.f32 %v3990, %v3995
        %v3997 = vpack.c.bf16 %v3996, %v3996
        %3998 = vmatprep.subr.bf16.mxu0 %v3719
        %3999 = vmatpush1.bf16.msra.mxu0 %v3718
        %4000 = vmatprep.subr.bf16.mxu0 %v3723
        %4001 = vmatpush1.bf16.msra.mxu0 %v3722
        %4002 = vmatprep.subr.bf16.mxu0 %v3727
        %4003 = vmatpush1.bf16.msra.mxu0 %v3726
        %4004 = vmatprep.subr.bf16.mxu0 %v3731
        %4005 = vmatpush1.bf16.msra.mxu0 %v3730
        %4006 = vmatprep.subr.bf16.mxu0 %v3735
        %4007 = vmatpush1.bf16.msra.mxu0 %v3734
        %4008 = vmatprep.subr.bf16.mxu0 %v3739
        %4009 = vmatpush1.bf16.msra.mxu0 %v3738
        %4010 = vmatprep.subr.bf16.mxu0 %v3743
        %4011 = vmatpush1.bf16.msra.mxu0 %v3742
        %4012 = vmatprep.subr.bf16.mxu0 %v3747
        %4013 = vmatpush1.bf16.msra.mxu0 %v3746
        %4014 = vmatprep.subr.bf16.mxu0 0
        %4015 = vmatpush1.bf16.msra.mxu0 0
        %4016 = vmatprep.subr.bf16.mxu0 0
        %4017 = vmatpush1.bf16.msra.mxu0 0
        %4018 = vmatprep.subr.bf16.mxu0 0
        %4019 = vmatpush1.bf16.msra.mxu0 0
        %4020 = vmatprep.subr.bf16.mxu0 0
        %4021 = vmatpush1.bf16.msra.mxu0 0
        %4022 = vmatprep.subr.bf16.mxu0 0
        %4023 = vmatpush1.bf16.msra.mxu0 0
        %4024 = vmatprep.subr.bf16.mxu0 0
        %4025 = vmatpush1.bf16.msra.mxu0 0
        %4026 = vmatprep.subr.bf16.mxu0 0
        %4027 = vmatpush1.bf16.msra.mxu0 0
        %4028 = vmatprep.subr.bf16.mxu0 0
        %4029 = vmatpush1.bf16.msra.mxu0 0
        %4030 = vmatprep.mubr.bf16.mxu0 0
        %4031 = vmatmul.mubr.bf16.gmra.mrb[0].mxu0 %v3997
        %v4032 = vpop.f32.mrb[0].mxu0
        %v4033 = vadd.f32 0.0, %v4032
        %v4034 = vpop.f32.mrb[0].mxu0
        %v4035 = vadd.f32 0.0, %v4034
        %v4036 = vpop.f32.mrb[0].mxu0
        %v4037 = vpop.f32.mrb[0].mxu0
        %4038 = vdwg.mxu0
        %4039 = vmatprep.subr.bf16.mxu0 %v3721
        %4040 = vmatpush1.bf16.msra.mxu0 %v3720
        %4041 = vmatprep.subr.bf16.mxu0 %v3725
        %4042 = vmatpush1.bf16.msra.mxu0 %v3724
        %4043 = vmatprep.subr.bf16.mxu0 %v3729
        %4044 = vmatpush1.bf16.msra.mxu0 %v3728
        %4045 = vmatprep.subr.bf16.mxu0 %v3733
        %4046 = vmatpush1.bf16.msra.mxu0 %v3732
        %4047 = vmatprep.subr.bf16.mxu0 %v3737
        %4048 = vmatpush1.bf16.msra.mxu0 %v3736
        %4049 = vmatprep.subr.bf16.mxu0 %v3741
        %4050 = vmatpush1.bf16.msra.mxu0 %v3740
        %4051 = vmatprep.subr.bf16.mxu0 %v3745
        %4052 = vmatpush1.bf16.msra.mxu0 %v3744
        %4053 = vmatprep.subr.bf16.mxu0 %v3749
        %4054 = vmatpush1.bf16.msra.mxu0 %v3748
        %4055 = vmatprep.subr.bf16.mxu0 0
        %4056 = vmatpush1.bf16.msra.mxu0 0
        %4057 = vmatprep.subr.bf16.mxu0 0
        %4058 = vmatpush1.bf16.msra.mxu0 0
        %4059 = vmatprep.subr.bf16.mxu0 0
        %4060 = vmatpush1.bf16.msra.mxu0 0
        %4061 = vmatprep.subr.bf16.mxu0 0
        %4062 = vmatpush1.bf16.msra.mxu0 0
        %4063 = vmatprep.subr.bf16.mxu0 0
        %4064 = vmatpush1.bf16.msra.mxu0 0
        %4065 = vmatprep.subr.bf16.mxu0 0
        %4066 = vmatpush1.bf16.msra.mxu0 0
        %4067 = vmatprep.subr.bf16.mxu0 0
        %4068 = vmatpush1.bf16.msra.mxu0 0
        %4069 = vmatprep.subr.bf16.mxu0 0
        %4070 = vmatpush1.bf16.msra.mxu0 0
        %4071 = vmatprep.mubr.bf16.mxu0 0
        %4072 = vmatmul.mubr.bf16.gmra.mrb[0].mxu0 %v3997
        %v4073 = vpop.f32.mrb[0].mxu0
        %v4074 = vadd.f32 0.0, %v4073
        %v4075 = vpop.f32.mrb[0].mxu0
        %v4076 = vadd.f32 0.0, %v4075
        %v4077 = vpop.f32.mrb[0].mxu0
        %v4078 = vpop.f32.mrb[0].mxu0
        %4079 = vdwg.mxu0
        %v4080 = vadd.f32 %v3543, %v4033
        %v4081 = vadd.f32 %v3545, %v4035
        %v4082 = vadd.f32 %v3584, %v4074
        %v4083 = vadd.f32 %v3586, %v4076
        %v4084 = vsub.f32 0.0, %v4080
        %v4085 = vsub.f32 0.0, %v4081
        %v4086 = vsub.f32 0.0, %v4082
        %v4087 = vmul.f32 %v4084, 1.442695
        %v4088 = vpow.pop %v4087
        %v4089 = vmul.f32 %v4085, 1.442695
        %v4090 = vpow.pop %v4089
        %v4091 = vmul.f32 %v4086, 1.442695
        %v4092 = vpow.pop %v4091
        %v4093 = vadd.f32 %v4088, 1.0
        %v4094 = vadd.f32 %v4090, 1.0
        %v4095 = vadd.f32 %v4092, 1.0
        %v4096 = vrcp.pop %v4093
        %v4097 = vrcp.pop %v4094
        %v4098 = vrcp.pop %v4095
        %v4099 = vtanh.pop %v4083
        %v4100 = vmul.f32 %v4097, %v3994
        %v4101 = vmul.f32 %v4096, %v4099
        %v4102 = vadd.f32 %v4100, %v4101
        %v4103 = vtanh.pop %v4102
        %v4104 = vmul.f32 %v4098, %v4103
        %v4105 = vpack.c.bf16 %v4104, %v4104
        %4106 = vmatprep.subr.bf16.mxu0 %v3719
        %4107 = vmatpush1.bf16.msra.mxu0 %v3718
        %4108 = vmatprep.subr.bf16.mxu0 %v3723
        %4109 = vmatpush1.bf16.msra.mxu0 %v3722
        %4110 = vmatprep.subr.bf16.mxu0 %v3727
        %4111 = vmatpush1.bf16.msra.mxu0 %v3726
        %4112 = vmatprep.subr.bf16.mxu0 %v3731
        %4113 = vmatpush1.bf16.msra.mxu0 %v3730
        %4114 = vmatprep.subr.bf16.mxu0 %v3735
        %4115 = vmatpush1.bf16.msra.mxu0 %v3734
        %4116 = vmatprep.subr.bf16.mxu0 %v3739
        %4117 = vmatpush1.bf16.msra.mxu0 %v3738
        %4118 = vmatprep.subr.bf16.mxu0 %v3743
        %4119 = vmatpush1.bf16.msra.mxu0 %v3742
        %4120 = vmatprep.subr.bf16.mxu0 %v3747
        %4121 = vmatpush1.bf16.msra.mxu0 %v3746
        %4122 = vmatprep.subr.bf16.mxu0 0
        %4123 = vmatpush1.bf16.msra.mxu0 0
        %4124 = vmatprep.subr.bf16.mxu0 0
        %4125 = vmatpush1.bf16.msra.mxu0 0
        %4126 = vmatprep.subr.bf16.mxu0 0
        %4127 = vmatpush1.bf16.msra.mxu0 0
        %4128 = vmatprep.subr.bf16.mxu0 0
        %4129 = vmatpush1.bf16.msra.mxu0 0
        %4130 = vmatprep.subr.bf16.mxu0 0
        %4131 = vmatpush1.bf16.msra.mxu0 0
        %4132 = vmatprep.subr.bf16.mxu0 0
        %4133 = vmatpush1.bf16.msra.mxu0 0
        %4134 = vmatprep.subr.bf16.mxu0 0
        %4135 = vmatpush1.bf16.msra.mxu0 0
        %4136 = vmatprep.subr.bf16.mxu0 0
        %4137 = vmatpush1.bf16.msra.mxu0 0
        %4138 = vmatprep.mubr.bf16.mxu0 0
        %4139 = vmatmul.mubr.bf16.gmra.mrb[0].mxu0 %v4105
        %v4140 = vpop.f32.mrb[0].mxu0
        %v4141 = vadd.f32 0.0, %v4140
        %v4142 = vpop.f32.mrb[0].mxu0
        %v4143 = vadd.f32 0.0, %v4142
        %v4144 = vpop.f32.mrb[0].mxu0
        %v4145 = vpop.f32.mrb[0].mxu0
        %4146 = vdwg.mxu0
        %4147 = vmatprep.subr.bf16.mxu0 %v3721
        %4148 = vmatpush1.bf16.msra.mxu0 %v3720
        %4149 = vmatprep.subr.bf16.mxu0 %v3725
        %4150 = vmatpush1.bf16.msra.mxu0 %v3724
        %4151 = vmatprep.subr.bf16.mxu0 %v3729
        %4152 = vmatpush1.bf16.msra.mxu0 %v3728
        %4153 = vmatprep.subr.bf16.mxu0 %v3733
        %4154 = vmatpush1.bf16.msra.mxu0 %v3732
        %4155 = vmatprep.subr.bf16.mxu0 %v3737
        %4156 = vmatpush1.bf16.msra.mxu0 %v3736
        %4157 = vmatprep.subr.bf16.mxu0 %v3741
        %4158 = vmatpush1.bf16.msra.mxu0 %v3740
        %4159 = vmatprep.subr.bf16.mxu0 %v3745
        %4160 = vmatpush1.bf16.msra.mxu0 %v3744
        %4161 = vmatprep.subr.bf16.mxu0 %v3749
        %4162 = vmatpush1.bf16.msra.mxu0 %v3748
        %4163 = vmatprep.subr.bf16.mxu0 0
        %4164 = vmatpush1.bf16.msra.mxu0 0
        %4165 = vmatprep.subr.bf16.mxu0 0
        %4166 = vmatpush1.bf16.msra.mxu0 0
        %4167 = vmatprep.subr.bf16.mxu0 0
        %4168 = vmatpush1.bf16.msra.mxu0 0
        %4169 = vmatprep.subr.bf16.mxu0 0
        %4170 = vmatpush1.bf16.msra.mxu0 0
        %4171 = vmatprep.subr.bf16.mxu0 0
        %4172 = vmatpush1.bf16.msra.mxu0 0
        %4173 = vmatprep.subr.bf16.mxu0 0
        %4174 = vmatpush1.bf16.msra.mxu0 0
        %4175 = vmatprep.subr.bf16.mxu0 0
        %4176 = vmatpush1.bf16.msra.mxu0 0
        %4177 = vmatprep.subr.bf16.mxu0 0
        %4178 = vmatpush1.bf16.msra.mxu0 0
        %4179 = vmatprep.mubr.bf16.mxu0 0
        %4180 = vmatmul.mubr.bf16.gmra.mrb[0].mxu0 %v4105
        %v4181 = vpop.f32.mrb[0].mxu0
        %v4182 = vadd.f32 0.0, %v4181
        %v4183 = vpop.f32.mrb[0].mxu0
        %v4184 = vadd.f32 0.0, %v4183
        %v4185 = vpop.f32.mrb[0].mxu0
        %v4186 = vpop.f32.mrb[0].mxu0
        %4187 = vdwg.mxu0
        %v4188 = vadd.f32 %v3543, %v4141
        %v4189 = vadd.f32 %v3545, %v4143
        %v4190 = vadd.f32 %v3584, %v4182
        %v4191 = vadd.f32 %v3586, %v4184
        %v4192 = vsub.f32 0.0, %v4188
        %v4193 = vsub.f32 0.0, %v4189
        %v4194 = vsub.f32 0.0, %v4190
        %v4195 = vmul.f32 %v4192, 1.442695
        %v4196 = vpow.pop %v4195
        %v4197 = vmul.f32 %v4193, 1.442695
        %v4198 = vpow.pop %v4197
        %v4199 = vmul.f32 %v4194, 1.442695
        %v4200 = vpow.pop %v4199
        %v4201 = vadd.f32 %v4196, 1.0
        %v4202 = vadd.f32 %v4198, 1.0
        %v4203 = vadd.f32 %v4200, 1.0
        %v4204 = vrcp.pop %v4201
        %v4205 = vrcp.pop %v4202
        %v4206 = vrcp.pop %v4203
        %v4207 = vtanh.pop %v4191
        %v4208 = vmul.f32 %v4205, %v4102
        %v4209 = vmul.f32 %v4204, %v4207
        %v4210 = vadd.f32 %v4208, %v4209
        %v4211 = vtanh.pop %v4210
        %v4212 = vmul.f32 %v4206, %v4211
        %v4213 = vpack.c.bf16 %v4212, %v4212
        %4214 = vmatprep.subr.bf16.mxu0 %v3719
        %4215 = vmatpush1.bf16.msra.mxu0 %v3718
        %4216 = vmatprep.subr.bf16.mxu0 %v3723
        %4217 = vmatpush1.bf16.msra.mxu0 %v3722
        %4218 = vmatprep.subr.bf16.mxu0 %v3727
        %4219 = vmatpush1.bf16.msra.mxu0 %v3726
        %4220 = vmatprep.subr.bf16.mxu0 %v3731
        %4221 = vmatpush1.bf16.msra.mxu0 %v3730
        %4222 = vmatprep.subr.bf16.mxu0 %v3735
        %4223 = vmatpush1.bf16.msra.mxu0 %v3734
        %4224 = vmatprep.subr.bf16.mxu0 %v3739
        %4225 = vmatpush1.bf16.msra.mxu0 %v3738
        %4226 = vmatprep.subr.bf16.mxu0 %v3743
        %4227 = vmatpush1.bf16.msra.mxu0 %v3742
        %4228 = vmatprep.subr.bf16.mxu0 %v3747
        %4229 = vmatpush1.bf16.msra.mxu0 %v3746
        %4230 = vmatprep.subr.bf16.mxu0 0
        %4231 = vmatpush1.bf16.msra.mxu0 0
        %4232 = vmatprep.subr.bf16.mxu0 0
        %4233 = vmatpush1.bf16.msra.mxu0 0
        %4234 = vmatprep.subr.bf16.mxu0 0
        %4235 = vmatpush1.bf16.msra.mxu0 0
        %4236 = vmatprep.subr.bf16.mxu0 0
        %4237 = vmatpush1.bf16.msra.mxu0 0
        %4238 = vmatprep.subr.bf16.mxu0 0
        %4239 = vmatpush1.bf16.msra.mxu0 0
        %4240 = vmatprep.subr.bf16.mxu0 0
        %4241 = vmatpush1.bf16.msra.mxu0 0
        %4242 = vmatprep.subr.bf16.mxu0 0
        %4243 = vmatpush1.bf16.msra.mxu0 0
        %4244 = vmatprep.subr.bf16.mxu0 0
        %4245 = vmatpush1.bf16.msra.mxu0 0
        %4246 = vmatprep.mubr.bf16.mxu0 0
        %4247 = vmatmul.mubr.bf16.gmra.mrb[0].mxu0 %v4213
        %v4248 = vpop.f32.mrb[0].mxu0
        %v4249 = vadd.f32 0.0, %v4248
        %v4250 = vpop.f32.mrb[0].mxu0
        %v4251 = vadd.f32 0.0, %v4250
        %v4252 = vpop.f32.mrb[0].mxu0
        %v4253 = vpop.f32.mrb[0].mxu0
        %4254 = vdwg.mxu0
        %4255 = vmatprep.subr.bf16.mxu0 %v3721
        %4256 = vmatpush1.bf16.msra.mxu0 %v3720
        %4257 = vmatprep.subr.bf16.mxu0 %v3725
        %4258 = vmatpush1.bf16.msra.mxu0 %v3724
        %4259 = vmatprep.subr.bf16.mxu0 %v3729
        %4260 = vmatpush1.bf16.msra.mxu0 %v3728
        %4261 = vmatprep.subr.bf16.mxu0 %v3733
        %4262 = vmatpush1.bf16.msra.mxu0 %v3732
        %4263 = vmatprep.subr.bf16.mxu0 %v3737
        %4264 = vmatpush1.bf16.msra.mxu0 %v3736
        %4265 = vmatprep.subr.bf16.mxu0 %v3741
        %4266 = vmatpush1.bf16.msra.mxu0 %v3740
        %4267 = vmatprep.subr.bf16.mxu0 %v3745
        %4268 = vmatpush1.bf16.msra.mxu0 %v3744
        %4269 = vmatprep.subr.bf16.mxu0 %v3749
        %4270 = vmatpush1.bf16.msra.mxu0 %v3748
        %4271 = vmatprep.subr.bf16.mxu0 0
        %4272 = vmatpush1.bf16.msra.mxu0 0
        %4273 = vmatprep.subr.bf16.mxu0 0
        %4274 = vmatpush1.bf16.msra.mxu0 0
        %4275 = vmatprep.subr.bf16.mxu0 0
        %4276 = vmatpush1.bf16.msra.mxu0 0
        %4277 = vmatprep.subr.bf16.mxu0 0
        %4278 = vmatpush1.bf16.msra.mxu0 0
        %4279 = vmatprep.subr.bf16.mxu0 0
        %4280 = vmatpush1.bf16.msra.mxu0 0
        %4281 = vmatprep.subr.bf16.mxu0 0
        %4282 = vmatpush1.bf16.msra.mxu0 0
        %4283 = vmatprep.subr.bf16.mxu0 0
        %4284 = vmatpush1.bf16.msra.mxu0 0
        %4285 = vmatprep.subr.bf16.mxu0 0
        %4286 = vmatpush1.bf16.msra.mxu0 0
        %4287 = vmatprep.mubr.bf16.mxu0 0
        %4288 = vmatmul.mubr.bf16.gmra.mrb[0].mxu0 %v4213
        %v4289 = vpop.f32.mrb[0].mxu0
        %v4290 = vadd.f32 0.0, %v4289
        %v4291 = vpop.f32.mrb[0].mxu0
        %v4292 = vadd.f32 0.0, %v4291
        %v4293 = vpop.f32.mrb[0].mxu0
        %v4294 = vpop.f32.mrb[0].mxu0
        %4295 = vdwg.mxu0
        %v4296 = vadd.f32 %v3543, %v4249
        %v4297 = vadd.f32 %v3545, %v4251
        %v4298 = vadd.f32 %v3584, %v4290
        %v4299 = vadd.f32 %v3586, %v4292
        %v4300 = vsub.f32 0.0, %v4296
        %v4301 = vsub.f32 0.0, %v4297
        %v4302 = vsub.f32 0.0, %v4298
        %v4303 = vmul.f32 %v4300, 1.442695
        %v4304 = vpow.pop %v4303
        %v4305 = vmul.f32 %v4301, 1.442695
        %v4306 = vpow.pop %v4305
        %v4307 = vmul.f32 %v4302, 1.442695
        %v4308 = vpow.pop %v4307
        %v4309 = vadd.f32 %v4304, 1.0
        %v4310 = vadd.f32 %v4306, 1.0
        %v4311 = vadd.f32 %v4308, 1.0
        %v4312 = vrcp.pop %v4309
        %v4313 = vrcp.pop %v4310
        %v4314 = vrcp.pop %v4311
        %v4315 = vtanh.pop %v4299
        %v4316 = vmul.f32 %v4313, %v4210
        %v4317 = vmul.f32 %v4312, %v4315
        %v4318 = vadd.f32 %v4316, %v4317
        %v4319 = vtanh.pop %v4318
        %v4320 = vmul.f32 %v4314, %v4319
        %v4321 = vpack.c.bf16 %v4320, %v4320
        %4322 = vmatprep.subr.bf16.mxu0 %v3719
        %4323 = vmatpush1.bf16.msra.mxu0 %v3718
        %4324 = vmatprep.subr.bf16.mxu0 %v3723
        %4325 = vmatpush1.bf16.msra.mxu0 %v3722
        %4326 = vmatprep.subr.bf16.mxu0 %v3727
        %4327 = vmatpush1.bf16.msra.mxu0 %v3726
        %4328 = vmatprep.subr.bf16.mxu0 %v3731
        %4329 = vmatpush1.bf16.msra.mxu0 %v3730
        %4330 = vmatprep.subr.bf16.mxu0 %v3735
        %4331 = vmatpush1.bf16.msra.mxu0 %v3734
        %4332 = vmatprep.subr.bf16.mxu0 %v3739
        %4333 = vmatpush1.bf16.msra.mxu0 %v3738
        %4334 = vmatprep.subr.bf16.mxu0 %v3743
        %4335 = vmatpush1.bf16.msra.mxu0 %v3742
        %4336 = vmatprep.subr.bf16.mxu0 %v3747
        %4337 = vmatpush1.bf16.msra.mxu0 %v3746
        %4338 = vmatprep.subr.bf16.mxu0 0
        %4339 = vmatpush1.bf16.msra.mxu0 0
        %4340 = vmatprep.subr.bf16.mxu0 0
        %4341 = vmatpush1.bf16.msra.mxu0 0
        %4342 = vmatprep.subr.bf16.mxu0 0
        %4343 = vmatpush1.bf16.msra.mxu0 0
        %4344 = vmatprep.subr.bf16.mxu0 0
        %4345 = vmatpush1.bf16.msra.mxu0 0
        %4346 = vmatprep.subr.bf16.mxu0 0
        %4347 = vmatpush1.bf16.msra.mxu0 0
        %4348 = vmatprep.subr.bf16.mxu0 0
        %4349 = vmatpush1.bf16.msra.mxu0 0
        %4350 = vmatprep.subr.bf16.mxu0 0
        %4351 = vmatpush1.bf16.msra.mxu0 0
        %4352 = vmatprep.subr.bf16.mxu0 0
        %4353 = vmatpush1.bf16.msra.mxu0 0
        %4354 = vmatprep.mubr.bf16.mxu0 0
        %4355 = vmatmul.mubr.bf16.gmra.mrb[0].mxu0 %v4321
        %v4356 = vpop.f32.mrb[0].mxu0
        %v4357 = vadd.f32 0.0, %v4356
        %v4358 = vpop.f32.mrb[0].mxu0
        %v4359 = vadd.f32 0.0, %v4358
        %v4360 = vpop.f32.mrb[0].mxu0
        %v4361 = vpop.f32.mrb[0].mxu0
        %4362 = vdwg.mxu0
        %4363 = vmatprep.subr.bf16.mxu0 %v3721
        %4364 = vmatpush1.bf16.msra.mxu0 %v3720
        %4365 = vmatprep.subr.bf16.mxu0 %v3725
        %4366 = vmatpush1.bf16.msra.mxu0 %v3724
        %4367 = vmatprep.subr.bf16.mxu0 %v3729
        %4368 = vmatpush1.bf16.msra.mxu0 %v3728
        %4369 = vmatprep.subr.bf16.mxu0 %v3733
        %4370 = vmatpush1.bf16.msra.mxu0 %v3732
        %4371 = vmatprep.subr.bf16.mxu0 %v3737
        %4372 = vmatpush1.bf16.msra.mxu0 %v3736
        %4373 = vmatprep.subr.bf16.mxu0 %v3741
        %4374 = vmatpush1.bf16.msra.mxu0 %v3740
        %4375 = vmatprep.subr.bf16.mxu0 %v3745
        %4376 = vmatpush1.bf16.msra.mxu0 %v3744
        %4377 = vmatprep.subr.bf16.mxu0 %v3749
        %4378 = vmatpush1.bf16.msra.mxu0 %v3748
        %4379 = vmatprep.subr.bf16.mxu0 0
        %4380 = vmatpush1.bf16.msra.mxu0 0
        %4381 = vmatprep.subr.bf16.mxu0 0
        %4382 = vmatpush1.bf16.msra.mxu0 0
        %4383 = vmatprep.subr.bf16.mxu0 0
        %4384 = vmatpush1.bf16.msra.mxu0 0
        %4385 = vmatprep.subr.bf16.mxu0 0
        %4386 = vmatpush1.bf16.msra.mxu0 0
        %4387 = vmatprep.subr.bf16.mxu0 0
        %4388 = vmatpush1.bf16.msra.mxu0 0
        %4389 = vmatprep.subr.bf16.mxu0 0
        %4390 = vmatpush1.bf16.msra.mxu0 0
        %4391 = vmatprep.subr.bf16.mxu0 0
        %4392 = vmatpush1.bf16.msra.mxu0 0
        %4393 = vmatprep.subr.bf16.mxu0 0
        %4394 = vmatpush1.bf16.msra.mxu0 0
        %4395 = vmatprep.mubr.bf16.mxu0 0
        %4396 = vmatmul.mubr.bf16.gmra.mrb[0].mxu0 %v4321
        %v4397 = vpop.f32.mrb[0].mxu0
        %v4398 = vadd.f32 0.0, %v4397
        %v4399 = vpop.f32.mrb[0].mxu0
        %v4400 = vadd.f32 0.0, %v4399
        %v4401 = vpop.f32.mrb[0].mxu0
        %v4402 = vpop.f32.mrb[0].mxu0
        %4403 = vdwg.mxu0
        %v4404 = vadd.f32 %v3543, %v4357
        %v4405 = vadd.f32 %v3545, %v4359
        %v4406 = vadd.f32 %v3584, %v4398
        %v4407 = vadd.f32 %v3586, %v4400
        %v4408 = vsub.f32 0.0, %v4404
        %v4409 = vsub.f32 0.0, %v4405
        %v4410 = vsub.f32 0.0, %v4406
        %v4411 = vmul.f32 %v4408, 1.442695
        %v4412 = vpow.pop %v4411
        %v4413 = vmul.f32 %v4409, 1.442695
        %v4414 = vpow.pop %v4413
        %v4415 = vmul.f32 %v4410, 1.442695
        %v4416 = vpow.pop %v4415
        %v4417 = vadd.f32 %v4412, 1.0
        %v4418 = vadd.f32 %v4414, 1.0
        %v4419 = vadd.f32 %v4416, 1.0
        %v4420 = vrcp.pop %v4417
        %v4421 = vrcp.pop %v4418
        %v4422 = vrcp.pop %v4419
        %v4423 = vtanh.pop %v4407
        %v4424 = vmul.f32 %v4421, %v4318
        %v4425 = vmul.f32 %v4420, %v4423
        %v4426 = vadd.f32 %v4424, %v4425
        %v4427 = vtanh.pop %v4426
        %v4428 = vmul.f32 %v4422, %v4427
        %v4429 = vpack.c.bf16 %v4428, %v4428
        %4430 = vmatprep.subr.bf16.mxu0 %v3719
        %4431 = vmatpush1.bf16.msra.mxu0 %v3718
        %4432 = vmatprep.subr.bf16.mxu0 %v3723
        %4433 = vmatpush1.bf16.msra.mxu0 %v3722
        %4434 = vmatprep.subr.bf16.mxu0 %v3727
        %4435 = vmatpush1.bf16.msra.mxu0 %v3726
        %4436 = vmatprep.subr.bf16.mxu0 %v3731
        %4437 = vmatpush1.bf16.msra.mxu0 %v3730
        %4438 = vmatprep.subr.bf16.mxu0 %v3735
        %4439 = vmatpush1.bf16.msra.mxu0 %v3734
        %4440 = vmatprep.subr.bf16.mxu0 %v3739
        %4441 = vmatpush1.bf16.msra.mxu0 %v3738
        %4442 = vmatprep.subr.bf16.mxu0 %v3743
        %4443 = vmatpush1.bf16.msra.mxu0 %v3742
        %4444 = vmatprep.subr.bf16.mxu0 %v3747
        %4445 = vmatpush1.bf16.msra.mxu0 %v3746
        %4446 = vmatprep.subr.bf16.mxu0 0
        %4447 = vmatpush1.bf16.msra.mxu0 0
        %4448 = vmatprep.subr.bf16.mxu0 0
        %4449 = vmatpush1.bf16.msra.mxu0 0
        %4450 = vmatprep.subr.bf16.mxu0 0
        %4451 = vmatpush1.bf16.msra.mxu0 0
        %4452 = vmatprep.subr.bf16.mxu0 0
        %4453 = vmatpush1.bf16.msra.mxu0 0
        %4454 = vmatprep.subr.bf16.mxu0 0
        %4455 = vmatpush1.bf16.msra.mxu0 0
        %4456 = vmatprep.subr.bf16.mxu0 0
        %4457 = vmatpush1.bf16.msra.mxu0 0
        %4458 = vmatprep.subr.bf16.mxu0 0
        %4459 = vmatpush1.bf16.msra.mxu0 0
        %4460 = vmatprep.subr.bf16.mxu0 0
        %4461 = vmatpush1.bf16.msra.mxu0 0
        %4462 = vmatprep.mubr.bf16.mxu0 0
        %4463 = vmatmul.mubr.bf16.gmra.mrb[0].mxu0 %v4429
        %v4464 = vpop.f32.mrb[0].mxu0
        %v4465 = vadd.f32 0.0, %v4464
        %v4466 = vpop.f32.mrb[0].mxu0
        %v4467 = vadd.f32 0.0, %v4466
        %v4468 = vpop.f32.mrb[0].mxu0
        %v4469 = vpop.f32.mrb[0].mxu0
        %4470 = vdwg.mxu0
        %4471 = vmatprep.subr.bf16.mxu0 %v3721
        %4472 = vmatpush1.bf16.msra.mxu0 %v3720
        %4473 = vmatprep.subr.bf16.mxu0 %v3725
        %4474 = vmatpush1.bf16.msra.mxu0 %v3724
        %4475 = vmatprep.subr.bf16.mxu0 %v3729
        %4476 = vmatpush1.bf16.msra.mxu0 %v3728
        %4477 = vmatprep.subr.bf16.mxu0 %v3733
        %4478 = vmatpush1.bf16.msra.mxu0 %v3732
        %4479 = vmatprep.subr.bf16.mxu0 %v3737
        %4480 = vmatpush1.bf16.msra.mxu0 %v3736
        %4481 = vmatprep.subr.bf16.mxu0 %v3741
        %4482 = vmatpush1.bf16.msra.mxu0 %v3740
        %4483 = vmatprep.subr.bf16.mxu0 %v3745
        %4484 = vmatpush1.bf16.msra.mxu0 %v3744
        %4485 = vmatprep.subr.bf16.mxu0 %v3749
        %4486 = vmatpush1.bf16.msra.mxu0 %v3748
        %4487 = vmatprep.subr.bf16.mxu0 0
        %4488 = vmatpush1.bf16.msra.mxu0 0
        %4489 = vmatprep.subr.bf16.mxu0 0
        %4490 = vmatpush1.bf16.msra.mxu0 0
        %4491 = vmatprep.subr.bf16.mxu0 0
        %4492 = vmatpush1.bf16.msra.mxu0 0
        %4493 = vmatprep.subr.bf16.mxu0 0
        %4494 = vmatpush1.bf16.msra.mxu0 0
        %4495 = vmatprep.subr.bf16.mxu0 0
        %4496 = vmatpush1.bf16.msra.mxu0 0
        %4497 = vmatprep.subr.bf16.mxu0 0
        %4498 = vmatpush1.bf16.msra.mxu0 0
        %4499 = vmatprep.subr.bf16.mxu0 0
        %4500 = vmatpush1.bf16.msra.mxu0 0
        %4501 = vmatprep.subr.bf16.mxu0 0
        %4502 = vmatpush1.bf16.msra.mxu0 0
        %4503 = vmatprep.mubr.bf16.mxu0 0
        %4504 = vmatmul.mubr.bf16.gmra.mrb[0].mxu0 %v4429
        %v4505 = vpop.f32.mrb[0].mxu0
        %v4506 = vadd.f32 0.0, %v4505
        %v4507 = vpop.f32.mrb[0].mxu0
        %v4508 = vadd.f32 0.0, %v4507
        %v4509 = vpop.f32.mrb[0].mxu0
        %v4510 = vpop.f32.mrb[0].mxu0
        %4511 = vdwg.mxu0
        %v4512 = vadd.f32 %v3543, %v4465
        %v4513 = vadd.f32 %v3545, %v4467
        %v4514 = vadd.f32 %v3584, %v4506
        %v4515 = vadd.f32 %v3586, %v4508
        %v4516 = vsub.f32 0.0, %v4512
        %v4517 = vsub.f32 0.0, %v4513
        %v4518 = vsub.f32 0.0, %v4514
        %v4519 = vmul.f32 %v4516, 1.442695
        %v4520 = vpow.pop %v4519
        %v4521 = vmul.f32 %v4517, 1.442695
        %v4522 = vpow.pop %v4521
        %v4523 = vmul.f32 %v4518, 1.442695
        %v4524 = vpow.pop %v4523
        %v4525 = vadd.f32 %v4520, 1.0
        %v4526 = vadd.f32 %v4522, 1.0
        %v4527 = vadd.f32 %v4524, 1.0
        %v4528 = vrcp.pop %v4525
        %v4529 = vrcp.pop %v4526
        %v4530 = vrcp.pop %v4527
        %v4531 = vtanh.pop %v4515
        %v4532 = vmul.f32 %v4529, %v4426
        %v4533 = vmul.f32 %v4528, %v4531
        %v4534 = vadd.f32 %v4532, %v4533
        %v4535 = vtanh.pop %v4534
        %v4536 = vmul.f32 %v4530, %v4535
        %v4537 = vpack.c.bf16 %v4536, %v4536
        %4538 = vmatprep.subr.bf16.mxu0 %v3719
        %4539 = vmatpush1.bf16.msra.mxu0 %v3718
        %4540 = vmatprep.subr.bf16.mxu0 %v3723
        %4541 = vmatpush1.bf16.msra.mxu0 %v3722
        %4542 = vmatprep.subr.bf16.mxu0 %v3727
        %4543 = vmatpush1.bf16.msra.mxu0 %v3726
        %4544 = vmatprep.subr.bf16.mxu0 %v3731
        %4545 = vmatpush1.bf16.msra.mxu0 %v3730
        %4546 = vmatprep.subr.bf16.mxu0 %v3735
        %4547 = vmatpush1.bf16.msra.mxu0 %v3734
        %4548 = vmatprep.subr.bf16.mxu0 %v3739
        %4549 = vmatpush1.bf16.msra.mxu0 %v3738
        %4550 = vmatprep.subr.bf16.mxu0 %v3743
        %4551 = vmatpush1.bf16.msra.mxu0 %v3742
        %4552 = vmatprep.subr.bf16.mxu0 %v3747
        %4553 = vmatpush1.bf16.msra.mxu0 %v3746
        %4554 = vmatprep.subr.bf16.mxu0 0
        %4555 = vmatpush1.bf16.msra.mxu0 0
        %4556 = vmatprep.subr.bf16.mxu0 0
        %4557 = vmatpush1.bf16.msra.mxu0 0
        %4558 = vmatprep.subr.bf16.mxu0 0
        %4559 = vmatpush1.bf16.msra.mxu0 0
        %4560 = vmatprep.subr.bf16.mxu0 0
        %4561 = vmatpush1.bf16.msra.mxu0 0
        %4562 = vmatprep.subr.bf16.mxu0 0
        %4563 = vmatpush1.bf16.msra.mxu0 0
        %4564 = vmatprep.subr.bf16.mxu0 0
        %4565 = vmatpush1.bf16.msra.mxu0 0
        %4566 = vmatprep.subr.bf16.mxu0 0
        %4567 = vmatpush1.bf16.msra.mxu0 0
        %4568 = vmatprep.subr.bf16.mxu0 0
        %4569 = vmatpush1.bf16.msra.mxu0 0
        %4570 = vmatprep.mubr.bf16.mxu0 0
        %4571 = vmatmul.mubr.bf16.gmra.mrb[0].mxu0 %v4537
        %v4572 = vpop.f32.mrb[0].mxu0
        %v4573 = vadd.f32 0.0, %v4572
        %v4574 = vpop.f32.mrb[0].mxu0
        %v4575 = vadd.f32 0.0, %v4574
        %v4576 = vpop.f32.mrb[0].mxu0
        %v4577 = vpop.f32.mrb[0].mxu0
        %4578 = vdwg.mxu0
        %4579 = vmatprep.subr.bf16.mxu0 %v3721
        %4580 = vmatpush1.bf16.msra.mxu0 %v3720
        %4581 = vmatprep.subr.bf16.mxu0 %v3725
        %4582 = vmatpush1.bf16.msra.mxu0 %v3724
        %4583 = vmatprep.subr.bf16.mxu0 %v3729
        %4584 = vmatpush1.bf16.msra.mxu0 %v3728
        %4585 = vmatprep.subr.bf16.mxu0 %v3733
        %4586 = vmatpush1.bf16.msra.mxu0 %v3732
        %4587 = vmatprep.subr.bf16.mxu0 %v3737
        %4588 = vmatpush1.bf16.msra.mxu0 %v3736
        %4589 = vmatprep.subr.bf16.mxu0 %v3741
        %4590 = vmatpush1.bf16.msra.mxu0 %v3740
        %4591 = vmatprep.subr.bf16.mxu0 %v3745
        %4592 = vmatpush1.bf16.msra.mxu0 %v3744
        %4593 = vmatprep.subr.bf16.mxu0 %v3749
        %4594 = vmatpush1.bf16.msra.mxu0 %v3748
        %4595 = vmatprep.subr.bf16.mxu0 0
        %4596 = vmatpush1.bf16.msra.mxu0 0
        %4597 = vmatprep.subr.bf16.mxu0 0
        %4598 = vmatpush1.bf16.msra.mxu0 0
        %4599 = vmatprep.subr.bf16.mxu0 0
        %4600 = vmatpush1.bf16.msra.mxu0 0
        %4601 = vmatprep.subr.bf16.mxu0 0
        %4602 = vmatpush1.bf16.msra.mxu0 0
        %4603 = vmatprep.subr.bf16.mxu0 0
        %4604 = vmatpush1.bf16.msra.mxu0 0
        %4605 = vmatprep.subr.bf16.mxu0 0
        %4606 = vmatpush1.bf16.msra.mxu0 0
        %4607 = vmatprep.subr.bf16.mxu0 0
        %4608 = vmatpush1.bf16.msra.mxu0 0
        %4609 = vmatprep.subr.bf16.mxu0 0
        %4610 = vmatpush1.bf16.msra.mxu0 0
        %4611 = vmatprep.mubr.bf16.mxu0 0
        %4612 = vmatmul.mubr.bf16.gmra.mrb[0].mxu0 %v4537
        %v4613 = vpop.f32.mrb[0].mxu0
        %v4614 = vadd.f32 0.0, %v4613
        %v4615 = vpop.f32.mrb[0].mxu0
        %v4616 = vadd.f32 0.0, %v4615
        %v4617 = vpop.f32.mrb[0].mxu0
        %v4618 = vpop.f32.mrb[0].mxu0
        %4619 = vdwg.mxu0
        %v4620 = vadd.f32 %v3543, %v4573
        %v4621 = vadd.f32 %v3545, %v4575
        %v4622 = vadd.f32 %v3584, %v4614
        %v4623 = vadd.f32 %v3586, %v4616
        %v4624 = vsub.f32 0.0, %v4620
        %v4625 = vsub.f32 0.0, %v4621
        %v4626 = vsub.f32 0.0, %v4622
        %v4627 = vmul.f32 %v4624, 1.442695
        %v4628 = vpow.pop %v4627
        %v4629 = vmul.f32 %v4625, 1.442695
        %v4630 = vpow.pop %v4629
        %v4631 = vmul.f32 %v4626, 1.442695
        %v4632 = vpow.pop %v4631
        %v4633 = vadd.f32 %v4628, 1.0
        %v4634 = vadd.f32 %v4630, 1.0
        %v4635 = vadd.f32 %v4632, 1.0
        %v4636 = vrcp.pop %v4633
        %v4637 = vrcp.pop %v4634
        %v4638 = vrcp.pop %v4635
        %v4639 = vtanh.pop %v4623
        %v4640 = vmul.f32 %v4637, %v4534
        %v4641 = vmul.f32 %v4636, %v4639
        %v4642 = vadd.f32 %v4640, %v4641
        %v4643 = vtanh.pop %v4642
        %v4644 = vmul.f32 %v4638, %v4643
        %v4645 = vpack.c.bf16 %v3996, %v3888
        %v4646 = vpack.c.bf16 %v4212, %v4104
        %v4647 = vpack.c.bf16 %v4428, %v4320
        %v4648 = vpack.c.bf16 %v4644, %v4536
        %v4649 = vld [vmem:[#allocation12] sm:$0xff]
        %v4650 = vld [vmem:[#allocation12 + $0x8] sm:$0xff]
        %v4651 = vld [vmem:[#allocation12 + $0x10] sm:$0xff]
        %v4652 = vld [vmem:[#allocation12 + $0x18] sm:$0xff]
        %v4653 = vld [vmem:[#allocation12 + $0x20] sm:$0xff]
        %v4654 = vld [vmem:[#allocation12 + $0x28] sm:$0xff]
        %v4655 = vld [vmem:[#allocation12 + $0x30] sm:$0xff]
        %v4656 = vld [vmem:[#allocation12 + $0x38] sm:$0xff]
        %v4657 = vld [vmem:[#allocation12 + $0x40] sm:$0xff]
        %v4658 = vld [vmem:[#allocation12 + $0x48] sm:$0xff]
        %v4659 = vld [vmem:[#allocation12 + $0x50] sm:$0xff]
        %v4660 = vld [vmem:[#allocation12 + $0x58] sm:$0xff]
        %v4661 = vld [vmem:[#allocation12 + $0x60] sm:$0xff]
        %v4662 = vld [vmem:[#allocation12 + $0x68] sm:$0xff]
        %v4663 = vld [vmem:[#allocation12 + $0x70] sm:$0xff]
        %v4664 = vld [vmem:[#allocation12 + $0x78] sm:$0xff]
        %v4665 = vld [vmem:[#allocation12 + $0x80] sm:$0xff]
        %v4666 = vld [vmem:[#allocation12 + $0x88] sm:$0xff]
        %v4667 = vld [vmem:[#allocation12 + $0x90] sm:$0xff]
        %v4668 = vld [vmem:[#allocation12 + $0x98] sm:$0xff]
        %v4669 = vld [vmem:[#allocation12 + $0xa0] sm:$0xff]
        %v4670 = vld [vmem:[#allocation12 + $0xa8] sm:$0xff]
        %v4671 = vld [vmem:[#allocation12 + $0xb0] sm:$0xff]
        %v4672 = vld [vmem:[#allocation12 + $0xb8] sm:$0xff]
        %v4673 = vld [vmem:[#allocation12 + $0xc0] sm:$0xff]
        %v4674 = vld [vmem:[#allocation12 + $0xc8] sm:$0xff]
        %v4675 = vld [vmem:[#allocation12 + $0xd0] sm:$0xff]
        %v4676 = vld [vmem:[#allocation12 + $0xd8] sm:$0xff]
        %v4677 = vld [vmem:[#allocation12 + $0xe0] sm:$0xff]
        %v4678 = vld [vmem:[#allocation12 + $0xe8] sm:$0xff]
        %v4679 = vld [vmem:[#allocation12 + $0xf0] sm:$0xff]
        %v4680 = vld [vmem:[#allocation12 + $0xf8] sm:$0xff]
        %v4681 = vld [vmem:[%s12] sm:$0xf]
        %v4683 = vlaneseq
        %v4684 = vshrl.u32 %v4683, 7
        %v4685 = vsub.s32 0, %v4684
        %v4686 = vrot.slane %v4681, %v4685
        %v4687 = vlaneseq
        %v4688 = vshrl.u32 %v4687, 7
        %v4689 = vsub.s32 1, %v4688
        %v4690 = vrot.slane %v4681, %v4689
        %v4691 = vlaneseq
        %v4692 = vshrl.u32 %v4691, 7
        %v4693 = vsub.s32 2, %v4692
        %v4694 = vrot.slane %v4681, %v4693
        %v4695 = vlaneseq
        %v4696 = vshrl.u32 %v4695, 7
        %v4697 = vsub.s32 3, %v4696
        %v4698 = vrot.slane %v4681, %v4697
        %v4735 = vunpack.c.l.b16 %v4649
        %v4736 = vunpack.c.h.b16 %v4649
        %v4737 = vunpack.c.l.b16 %v4650
        %v4738 = vunpack.c.h.b16 %v4650
        %v4739 = vunpack.c.l.b16 %v4651
        %v4740 = vunpack.c.h.b16 %v4651
        %v4741 = vunpack.c.l.b16 %v4652
        %v4742 = vunpack.c.h.b16 %v4652
        %v4743 = vunpack.c.l.b16 %v4653
        %v4744 = vunpack.c.h.b16 %v4653
        %v4745 = vunpack.c.l.b16 %v4654
        %v4746 = vunpack.c.h.b16 %v4654
        %v4747 = vunpack.c.l.b16 %v4655
        %v4748 = vunpack.c.h.b16 %v4655
        %v4749 = vunpack.c.l.b16 %v4656
        %v4750 = vunpack.c.h.b16 %v4656
        %v4751 = vunpack.c.l.b16 %v4657
        %v4752 = vunpack.c.h.b16 %v4657
        %v4753 = vunpack.c.l.b16 %v4658
        %v4754 = vunpack.c.h.b16 %v4658
        %v4755 = vunpack.c.l.b16 %v4659
        %v4756 = vunpack.c.h.b16 %v4659
        %v4757 = vunpack.c.l.b16 %v4660
        %v4758 = vunpack.c.h.b16 %v4660
        %v4759 = vunpack.c.l.b16 %v4661
        %v4760 = vunpack.c.h.b16 %v4661
        %v4761 = vunpack.c.l.b16 %v4662
        %v4762 = vunpack.c.h.b16 %v4662
        %v4763 = vunpack.c.l.b16 %v4663
        %v4764 = vunpack.c.h.b16 %v4663
        %v4765 = vunpack.c.l.b16 %v4664
        %v4766 = vunpack.c.h.b16 %v4664
        %v4767 = vunpack.c.l.b16 %v4665
        %v4768 = vunpack.c.h.b16 %v4665
        %v4769 = vunpack.c.l.b16 %v4666
        %v4770 = vunpack.c.h.b16 %v4666
        %v4771 = vunpack.c.l.b16 %v4667
        %v4772 = vunpack.c.h.b16 %v4667
        %v4773 = vunpack.c.l.b16 %v4668
        %v4774 = vunpack.c.h.b16 %v4668
        %v4775 = vunpack.c.l.b16 %v4669
        %v4776 = vunpack.c.h.b16 %v4669
        %v4777 = vunpack.c.l.b16 %v4670
        %v4778 = vunpack.c.h.b16 %v4670
        %v4779 = vunpack.c.l.b16 %v4671
        %v4780 = vunpack.c.h.b16 %v4671
        %v4781 = vunpack.c.l.b16 %v4672
        %v4782 = vunpack.c.h.b16 %v4672
        %v4783 = vunpack.c.l.b16 %v4673
        %v4784 = vunpack.c.h.b16 %v4673
        %v4785 = vunpack.c.l.b16 %v4674
        %v4786 = vunpack.c.h.b16 %v4674
        %v4787 = vunpack.c.l.b16 %v4675
        %v4788 = vunpack.c.h.b16 %v4675
        %v4789 = vunpack.c.l.b16 %v4676
        %v4790 = vunpack.c.h.b16 %v4676
        %v4791 = vunpack.c.l.b16 %v4677
        %v4792 = vunpack.c.h.b16 %v4677
        %v4793 = vunpack.c.l.b16 %v4678
        %v4794 = vunpack.c.h.b16 %v4678
        %v4795 = vunpack.c.l.b16 %v4679
        %v4796 = vunpack.c.h.b16 %v4679
        %v4797 = vunpack.c.l.b16 %v4680
        %v4798 = vunpack.c.h.b16 %v4680
        %v4799 = vpack.c.b16 %v4739, %v4735
        %v4800 = vpack.c.b16 %v4740, %v4736
        %v4801 = vpack.c.b16 %v4741, %v4737
        %v4802 = vpack.c.b16 %v4742, %v4738
        %v4803 = vpack.c.b16 %v4747, %v4743
        %v4804 = vpack.c.b16 %v4748, %v4744
        %v4805 = vpack.c.b16 %v4749, %v4745
        %v4806 = vpack.c.b16 %v4750, %v4746
        %v4807 = vpack.c.b16 %v4755, %v4751
        %v4808 = vpack.c.b16 %v4756, %v4752
        %v4809 = vpack.c.b16 %v4757, %v4753
        %v4810 = vpack.c.b16 %v4758, %v4754
        %v4811 = vpack.c.b16 %v4763, %v4759
        %v4812 = vpack.c.b16 %v4764, %v4760
        %v4813 = vpack.c.b16 %v4765, %v4761
        %v4814 = vpack.c.b16 %v4766, %v4762
        %v4815 = vpack.c.b16 %v4771, %v4767
        %v4816 = vpack.c.b16 %v4772, %v4768
        %v4817 = vpack.c.b16 %v4773, %v4769
        %v4818 = vpack.c.b16 %v4774, %v4770
        %v4819 = vpack.c.b16 %v4779, %v4775
        %v4820 = vpack.c.b16 %v4780, %v4776
        %v4821 = vpack.c.b16 %v4781, %v4777
        %v4822 = vpack.c.b16 %v4782, %v4778
        %v4823 = vpack.c.b16 %v4787, %v4783
        %v4824 = vpack.c.b16 %v4788, %v4784
        %v4825 = vpack.c.b16 %v4789, %v4785
        %v4826 = vpack.c.b16 %v4790, %v4786
        %v4827 = vpack.c.b16 %v4795, %v4791
        %v4828 = vpack.c.b16 %v4796, %v4792
        %v4829 = vpack.c.b16 %v4797, %v4793
        %v4830 = vpack.c.b16 %v4798, %v4794
        %4863 = vmatprep.subr.bf16.mxu0 %v4800
        %4864 = vmatpush1.bf16.msra.mxu0 %v4799
        %4865 = vmatprep.subr.bf16.mxu0 %v4804
        %4866 = vmatpush1.bf16.msra.mxu0 %v4803
        %4867 = vmatprep.subr.bf16.mxu0 %v4808
        %4868 = vmatpush1.bf16.msra.mxu0 %v4807
        %4869 = vmatprep.subr.bf16.mxu0 %v4812
        %4870 = vmatpush1.bf16.msra.mxu0 %v4811
        %4871 = vmatprep.subr.bf16.mxu0 %v4816
        %4872 = vmatpush1.bf16.msra.mxu0 %v4815
        %4873 = vmatprep.subr.bf16.mxu0 %v4820
        %4874 = vmatpush1.bf16.msra.mxu0 %v4819
        %4875 = vmatprep.subr.bf16.mxu0 %v4824
        %4876 = vmatpush1.bf16.msra.mxu0 %v4823
        %4877 = vmatprep.subr.bf16.mxu0 %v4828
        %4878 = vmatpush1.bf16.msra.mxu0 %v4827
        %4879 = vmatprep.subr.bf16.mxu0 0
        %4880 = vmatpush1.bf16.msra.mxu0 0
        %4881 = vmatprep.subr.bf16.mxu0 0
        %4882 = vmatpush1.bf16.msra.mxu0 0
        %4883 = vmatprep.subr.bf16.mxu0 0
        %4884 = vmatpush1.bf16.msra.mxu0 0
        %4885 = vmatprep.subr.bf16.mxu0 0
        %4886 = vmatpush1.bf16.msra.mxu0 0
        %4887 = vmatprep.subr.bf16.mxu0 0
        %4888 = vmatpush1.bf16.msra.mxu0 0
        %4889 = vmatprep.subr.bf16.mxu0 0
        %4890 = vmatpush1.bf16.msra.mxu0 0
        %4891 = vmatprep.subr.bf16.mxu0 0
        %4892 = vmatpush1.bf16.msra.mxu0 0
        %4893 = vmatprep.subr.bf16.mxu0 0
        %4894 = vmatpush1.bf16.msra.mxu0 0
        %4895 = vmatprep.mubr.bf16.mxu0 0
        %4896 = vmatmul.mubr.bf16.gmra.mrb[0].mxu0 %v4645
        %v4897 = vpop.f32.mrb[0].mxu0
        %v4898 = vadd.f32 %v4686, %v4897
        %v4899 = vpop.f32.mrb[0].mxu0
        %v4900 = vadd.f32 %v4690, %v4899
        %v4901 = vpop.f32.mrb[0].mxu0
        %v4902 = vadd.f32 %v4686, %v4901
        %v4903 = vpop.f32.mrb[0].mxu0
        %v4904 = vadd.f32 %v4690, %v4903
        %4905 = vmatprep.mubr.bf16.mxu0 0
        %4906 = vmatmul.mubr.bf16.gmra.mrb[0].mxu0 %v4646
        %v4907 = vpop.f32.mrb[0].mxu0
        %v4908 = vadd.f32 %v4686, %v4907
        %v4909 = vpop.f32.mrb[0].mxu0
        %v4910 = vadd.f32 %v4690, %v4909
        %v4911 = vpop.f32.mrb[0].mxu0
        %v4912 = vadd.f32 %v4686, %v4911
        %v4913 = vpop.f32.mrb[0].mxu0
        %v4914 = vadd.f32 %v4690, %v4913
        %4915 = vmatprep.mubr.bf16.mxu0 0
        %4916 = vmatmul.mubr.bf16.gmra.mrb[0].mxu0 %v4647
        %v4917 = vpop.f32.mrb[0].mxu0
        %v4918 = vadd.f32 %v4686, %v4917
        %v4919 = vpop.f32.mrb[0].mxu0
        %v4920 = vadd.f32 %v4690, %v4919
        %v4921 = vpop.f32.mrb[0].mxu0
        %v4922 = vadd.f32 %v4686, %v4921
        %v4923 = vpop.f32.mrb[0].mxu0
        %v4924 = vadd.f32 %v4690, %v4923
        %4925 = vmatprep.mubr.bf16.mxu0 0
        %4926 = vmatmul.mubr.bf16.gmra.mrb[0].mxu0 %v4648
        %v4927 = vpop.f32.mrb[0].mxu0
        %v4928 = vadd.f32 %v4686, %v4927
        %v4929 = vpop.f32.mrb[0].mxu0
        %v4930 = vadd.f32 %v4690, %v4929
        %v4931 = vpop.f32.mrb[0].mxu0
        %v4932 = vadd.f32 %v4686, %v4931
        %v4933 = vpop.f32.mrb[0].mxu0
        %v4934 = vadd.f32 %v4690, %v4933
        %4935 = vdwg.mxu0
        %4936 = vmatprep.subr.bf16.mxu0 %v4802
        %4937 = vmatpush1.bf16.msra.mxu0 %v4801
        %4938 = vmatprep.subr.bf16.mxu0 %v4806
        %4939 = vmatpush1.bf16.msra.mxu0 %v4805
        %4940 = vmatprep.subr.bf16.mxu0 %v4810
        %4941 = vmatpush1.bf16.msra.mxu0 %v4809
        %4942 = vmatprep.subr.bf16.mxu0 %v4814
        %4943 = vmatpush1.bf16.msra.mxu0 %v4813
        %4944 = vmatprep.subr.bf16.mxu0 %v4818
        %4945 = vmatpush1.bf16.msra.mxu0 %v4817
        %4946 = vmatprep.subr.bf16.mxu0 %v4822
        %4947 = vmatpush1.bf16.msra.mxu0 %v4821
        %4948 = vmatprep.subr.bf16.mxu0 %v4826
        %4949 = vmatpush1.bf16.msra.mxu0 %v4825
        %4950 = vmatprep.subr.bf16.mxu0 %v4830
        %4951 = vmatpush1.bf16.msra.mxu0 %v4829
        %4952 = vmatprep.subr.bf16.mxu0 0
        %4953 = vmatpush1.bf16.msra.mxu0 0
        %4954 = vmatprep.subr.bf16.mxu0 0
        %4955 = vmatpush1.bf16.msra.mxu0 0
        %4956 = vmatprep.subr.bf16.mxu0 0
        %4957 = vmatpush1.bf16.msra.mxu0 0
        %4958 = vmatprep.subr.bf16.mxu0 0
        %4959 = vmatpush1.bf16.msra.mxu0 0
        %4960 = vmatprep.subr.bf16.mxu0 0
        %4961 = vmatpush1.bf16.msra.mxu0 0
        %4962 = vmatprep.subr.bf16.mxu0 0
        %4963 = vmatpush1.bf16.msra.mxu0 0
        %4964 = vmatprep.subr.bf16.mxu0 0
        %4965 = vmatpush1.bf16.msra.mxu0 0
        %4966 = vmatprep.subr.bf16.mxu0 0
        %4967 = vmatpush1.bf16.msra.mxu0 0
        %4968 = vmatprep.mubr.bf16.mxu0 0
        %4969 = vmatmul.mubr.bf16.gmra.mrb[0].mxu0 %v4645
        %v4970 = vpop.f32.mrb[0].mxu0
        %v4971 = vadd.f32 %v4694, %v4970
        %v4972 = vpop.f32.mrb[0].mxu0
        %v4973 = vadd.f32 %v4698, %v4972
        %v4974 = vpop.f32.mrb[0].mxu0
        %v4975 = vadd.f32 %v4694, %v4974
        %v4976 = vpop.f32.mrb[0].mxu0
        %v4977 = vadd.f32 %v4698, %v4976
        %4978 = vmatprep.mubr.bf16.mxu0 0
        %4979 = vmatmul.mubr.bf16.gmra.mrb[0].mxu0 %v4646
        %v4980 = vpop.f32.mrb[0].mxu0
        %v4981 = vadd.f32 %v4694, %v4980
        %v4982 = vpop.f32.mrb[0].mxu0
        %v4983 = vadd.f32 %v4698, %v4982
        %v4984 = vpop.f32.mrb[0].mxu0
        %v4985 = vadd.f32 %v4694, %v4984
        %v4986 = vpop.f32.mrb[0].mxu0
        %v4987 = vadd.f32 %v4698, %v4986
        %4988 = vmatprep.mubr.bf16.mxu0 0
        %4989 = vmatmul.mubr.bf16.gmra.mrb[0].mxu0 %v4647
        %v4990 = vpop.f32.mrb[0].mxu0
        %v4991 = vadd.f32 %v4694, %v4990
        %v4992 = vpop.f32.mrb[0].mxu0
        %v4993 = vadd.f32 %v4698, %v4992
        %v4994 = vpop.f32.mrb[0].mxu0
        %v4995 = vadd.f32 %v4694, %v4994
        %v4996 = vpop.f32.mrb[0].mxu0
        %v4997 = vadd.f32 %v4698, %v4996
        %4998 = vmatprep.mubr.bf16.mxu0 0
        %4999 = vmatmul.mubr.bf16.gmra.mrb[0].mxu0 %v4648
        %v5000 = vpop.f32.mrb[0].mxu0
        %v5001 = vadd.f32 %v4694, %v5000
        %v5002 = vpop.f32.mrb[0].mxu0
        %v5003 = vadd.f32 %v4698, %v5002
        %v5004 = vpop.f32.mrb[0].mxu0
        %v5005 = vadd.f32 %v4694, %v5004
        %v5006 = vpop.f32.mrb[0].mxu0
        %v5007 = vadd.f32 %v4698, %v5006
        %5008 = vdwg.mxu0
        %v5009 = vld [vmem:[#allocation14] sm:$0xff]
        %v5010 = vld [vmem:[#allocation14 + $0x8] sm:$0xff]
        %v5011 = vld [vmem:[#allocation14 + $0x10] sm:$0xff]
        %v5012 = vld [vmem:[#allocation14 + $0x18] sm:$0xff]
        %v5013 = vld [vmem:[#allocation14 + $0x20] sm:$0xff]
        %v5014 = vld [vmem:[#allocation14 + $0x28] sm:$0xff]
        %v5015 = vld [vmem:[#allocation14 + $0x30] sm:$0xff]
        %v5016 = vld [vmem:[#allocation14 + $0x38] sm:$0xff]
        %v5017 = vld [vmem:[#allocation14 + $0x40] sm:$0xff]
        %v5018 = vld [vmem:[#allocation14 + $0x48] sm:$0xff]
        %v5019 = vld [vmem:[#allocation14 + $0x50] sm:$0xff]
        %v5020 = vld [vmem:[#allocation14 + $0x58] sm:$0xff]
        %v5021 = vld [vmem:[#allocation14 + $0x60] sm:$0xff]
        %v5022 = vld [vmem:[#allocation14 + $0x68] sm:$0xff]
        %v5023 = vld [vmem:[#allocation14 + $0x70] sm:$0xff]
        %v5024 = vld [vmem:[#allocation14 + $0x78] sm:$0xff]
        %v5025 = vld [vmem:[#allocation14 + $0x80] sm:$0xff]
        %v5026 = vld [vmem:[#allocation14 + $0x88] sm:$0xff]
        %v5027 = vld [vmem:[#allocation14 + $0x90] sm:$0xff]
        %v5028 = vld [vmem:[#allocation14 + $0x98] sm:$0xff]
        %v5029 = vld [vmem:[#allocation14 + $0xa0] sm:$0xff]
        %v5030 = vld [vmem:[#allocation14 + $0xa8] sm:$0xff]
        %v5031 = vld [vmem:[#allocation14 + $0xb0] sm:$0xff]
        %v5032 = vld [vmem:[#allocation14 + $0xb8] sm:$0xff]
        %v5033 = vld [vmem:[#allocation14 + $0xc0] sm:$0xff]
        %v5034 = vld [vmem:[#allocation14 + $0xc8] sm:$0xff]
        %v5035 = vld [vmem:[#allocation14 + $0xd0] sm:$0xff]
        %v5036 = vld [vmem:[#allocation14 + $0xd8] sm:$0xff]
        %v5037 = vld [vmem:[#allocation14 + $0xe0] sm:$0xff]
        %v5038 = vld [vmem:[#allocation14 + $0xe8] sm:$0xff]
        %v5039 = vld [vmem:[#allocation14 + $0xf0] sm:$0xff]
        %v5040 = vld [vmem:[#allocation14 + $0xf8] sm:$0xff]
        %v5073 = vunpack.c.l.b16 %v5009
        %v5074 = vunpack.c.h.b16 %v5009
        %v5075 = vunpack.c.l.b16 %v5010
        %v5076 = vunpack.c.h.b16 %v5010
        %v5077 = vunpack.c.l.b16 %v5011
        %v5078 = vunpack.c.h.b16 %v5011
        %v5079 = vunpack.c.l.b16 %v5012
        %v5080 = vunpack.c.h.b16 %v5012
        %v5081 = vunpack.c.l.b16 %v5013
        %v5082 = vunpack.c.h.b16 %v5013
        %v5083 = vunpack.c.l.b16 %v5014
        %v5084 = vunpack.c.h.b16 %v5014
        %v5085 = vunpack.c.l.b16 %v5015
        %v5086 = vunpack.c.h.b16 %v5015
        %v5087 = vunpack.c.l.b16 %v5016
        %v5088 = vunpack.c.h.b16 %v5016
        %v5089 = vunpack.c.l.b16 %v5017
        %v5090 = vunpack.c.h.b16 %v5017
        %v5091 = vunpack.c.l.b16 %v5018
        %v5092 = vunpack.c.h.b16 %v5018
        %v5093 = vunpack.c.l.b16 %v5019
        %v5094 = vunpack.c.h.b16 %v5019
        %v5095 = vunpack.c.l.b16 %v5020
        %v5096 = vunpack.c.h.b16 %v5020
        %v5097 = vunpack.c.l.b16 %v5021
        %v5098 = vunpack.c.h.b16 %v5021
        %v5099 = vunpack.c.l.b16 %v5022
        %v5100 = vunpack.c.h.b16 %v5022
        %v5101 = vunpack.c.l.b16 %v5023
        %v5102 = vunpack.c.h.b16 %v5023
        %v5103 = vunpack.c.l.b16 %v5024
        %v5104 = vunpack.c.h.b16 %v5024
        %v5105 = vunpack.c.l.b16 %v5025
        %v5106 = vunpack.c.h.b16 %v5025
        %v5107 = vunpack.c.l.b16 %v5026
        %v5108 = vunpack.c.h.b16 %v5026
        %v5109 = vunpack.c.l.b16 %v5027
        %v5110 = vunpack.c.h.b16 %v5027
        %v5111 = vunpack.c.l.b16 %v5028
        %v5112 = vunpack.c.h.b16 %v5028
        %v5113 = vunpack.c.l.b16 %v5029
        %v5114 = vunpack.c.h.b16 %v5029
        %v5115 = vunpack.c.l.b16 %v5030
        %v5116 = vunpack.c.h.b16 %v5030
        %v5117 = vunpack.c.l.b16 %v5031
        %v5118 = vunpack.c.h.b16 %v5031
        %v5119 = vunpack.c.l.b16 %v5032
        %v5120 = vunpack.c.h.b16 %v5032
        %v5121 = vunpack.c.l.b16 %v5033
        %v5122 = vunpack.c.h.b16 %v5033
        %v5123 = vunpack.c.l.b16 %v5034
        %v5124 = vunpack.c.h.b16 %v5034
        %v5125 = vunpack.c.l.b16 %v5035
        %v5126 = vunpack.c.h.b16 %v5035
        %v5127 = vunpack.c.l.b16 %v5036
        %v5128 = vunpack.c.h.b16 %v5036
        %v5129 = vunpack.c.l.b16 %v5037
        %v5130 = vunpack.c.h.b16 %v5037
        %v5131 = vunpack.c.l.b16 %v5038
        %v5132 = vunpack.c.h.b16 %v5038
        %v5133 = vunpack.c.l.b16 %v5039
        %v5134 = vunpack.c.h.b16 %v5039
        %v5135 = vunpack.c.l.b16 %v5040
        %v5136 = vunpack.c.h.b16 %v5040
        %v5137 = vpack.c.b16 %v5077, %v5073
        %v5138 = vpack.c.b16 %v5078, %v5074
        %v5139 = vpack.c.b16 %v5079, %v5075
        %v5140 = vpack.c.b16 %v5080, %v5076
        %v5141 = vpack.c.b16 %v5085, %v5081
        %v5142 = vpack.c.b16 %v5086, %v5082
        %v5143 = vpack.c.b16 %v5087, %v5083
        %v5144 = vpack.c.b16 %v5088, %v5084
        %v5145 = vpack.c.b16 %v5093, %v5089
        %v5146 = vpack.c.b16 %v5094, %v5090
        %v5147 = vpack.c.b16 %v5095, %v5091
        %v5148 = vpack.c.b16 %v5096, %v5092
        %v5149 = vpack.c.b16 %v5101, %v5097
        %v5150 = vpack.c.b16 %v5102, %v5098
        %v5151 = vpack.c.b16 %v5103, %v5099
        %v5152 = vpack.c.b16 %v5104, %v5100
        %v5153 = vpack.c.b16 %v5109, %v5105
        %v5154 = vpack.c.b16 %v5110, %v5106
        %v5155 = vpack.c.b16 %v5111, %v5107
        %v5156 = vpack.c.b16 %v5112, %v5108
        %v5157 = vpack.c.b16 %v5117, %v5113
        %v5158 = vpack.c.b16 %v5118, %v5114
        %v5159 = vpack.c.b16 %v5119, %v5115
        %v5160 = vpack.c.b16 %v5120, %v5116
        %v5161 = vpack.c.b16 %v5125, %v5121
        %v5162 = vpack.c.b16 %v5126, %v5122
        %v5163 = vpack.c.b16 %v5127, %v5123
        %v5164 = vpack.c.b16 %v5128, %v5124
        %v5165 = vpack.c.b16 %v5133, %v5129
        %v5166 = vpack.c.b16 %v5134, %v5130
        %v5167 = vpack.c.b16 %v5135, %v5131
        %v5168 = vpack.c.b16 %v5136, %v5132
        %5201 = vmatprep.subr.bf16.mxu0 %v5138
        %5202 = vmatpush1.bf16.msra.mxu0 %v5137
        %5203 = vmatprep.subr.bf16.mxu0 %v5142
        %5204 = vmatpush1.bf16.msra.mxu0 %v5141
        %5205 = vmatprep.subr.bf16.mxu0 %v5146
        %5206 = vmatpush1.bf16.msra.mxu0 %v5145
        %5207 = vmatprep.subr.bf16.mxu0 %v5150
        %5208 = vmatpush1.bf16.msra.mxu0 %v5149
        %5209 = vmatprep.subr.bf16.mxu0 %v5154
        %5210 = vmatpush1.bf16.msra.mxu0 %v5153
        %5211 = vmatprep.subr.bf16.mxu0 %v5158
        %5212 = vmatpush1.bf16.msra.mxu0 %v5157
        %5213 = vmatprep.subr.bf16.mxu0 %v5162
        %5214 = vmatpush1.bf16.msra.mxu0 %v5161
        %5215 = vmatprep.subr.bf16.mxu0 %v5166
        %5216 = vmatpush1.bf16.msra.mxu0 %v5165
        %5217 = vmatprep.subr.bf16.mxu0 0
        %5218 = vmatpush1.bf16.msra.mxu0 0
        %5219 = vmatprep.subr.bf16.mxu0 0
        %5220 = vmatpush1.bf16.msra.mxu0 0
        %5221 = vmatprep.subr.bf16.mxu0 0
        %5222 = vmatpush1.bf16.msra.mxu0 0
        %5223 = vmatprep.subr.bf16.mxu0 0
        %5224 = vmatpush1.bf16.msra.mxu0 0
        %5225 = vmatprep.subr.bf16.mxu0 0
        %5226 = vmatpush1.bf16.msra.mxu0 0
        %5227 = vmatprep.subr.bf16.mxu0 0
        %5228 = vmatpush1.bf16.msra.mxu0 0
        %5229 = vmatprep.subr.bf16.mxu0 0
        %5230 = vmatpush1.bf16.msra.mxu0 0
        %5231 = vmatprep.subr.bf16.mxu0 0
        %5232 = vmatpush1.bf16.msra.mxu0 0
        %5233 = vmatprep.mubr.bf16.mxu0 0
        %5234 = vmatmul.mubr.bf16.gmra.mrb[0].mxu0 0
        %v5235 = vpop.f32.mrb[0].mxu0
        %v5236 = vadd.f32 0.0, %v5235
        %v5237 = vpop.f32.mrb[0].mxu0
        %v5238 = vadd.f32 0.0, %v5237
        %v5239 = vpop.f32.mrb[0].mxu0
        %v5240 = vpop.f32.mrb[0].mxu0
        %5241 = vdwg.mxu0
        %5242 = vmatprep.subr.bf16.mxu0 %v5140
        %5243 = vmatpush1.bf16.msra.mxu0 %v5139
        %5244 = vmatprep.subr.bf16.mxu0 %v5144
        %5245 = vmatpush1.bf16.msra.mxu0 %v5143
        %5246 = vmatprep.subr.bf16.mxu0 %v5148
        %5247 = vmatpush1.bf16.msra.mxu0 %v5147
        %5248 = vmatprep.subr.bf16.mxu0 %v5152
        %5249 = vmatpush1.bf16.msra.mxu0 %v5151
        %5250 = vmatprep.subr.bf16.mxu0 %v5156
        %5251 = vmatpush1.bf16.msra.mxu0 %v5155
        %5252 = vmatprep.subr.bf16.mxu0 %v5160
        %5253 = vmatpush1.bf16.msra.mxu0 %v5159
        %5254 = vmatprep.subr.bf16.mxu0 %v5164
        %5255 = vmatpush1.bf16.msra.mxu0 %v5163
        %5256 = vmatprep.subr.bf16.mxu0 %v5168
        %5257 = vmatpush1.bf16.msra.mxu0 %v5167
        %5258 = vmatprep.subr.bf16.mxu0 0
        %5259 = vmatpush1.bf16.msra.mxu0 0
        %5260 = vmatprep.subr.bf16.mxu0 0
        %5261 = vmatpush1.bf16.msra.mxu0 0
        %5262 = vmatprep.subr.bf16.mxu0 0
        %5263 = vmatpush1.bf16.msra.mxu0 0
        %5264 = vmatprep.subr.bf16.mxu0 0
        %5265 = vmatpush1.bf16.msra.mxu0 0
        %5266 = vmatprep.subr.bf16.mxu0 0
        %5267 = vmatpush1.bf16.msra.mxu0 0
        %5268 = vmatprep.subr.bf16.mxu0 0
        %5269 = vmatpush1.bf16.msra.mxu0 0
        %5270 = vmatprep.subr.bf16.mxu0 0
        %5271 = vmatpush1.bf16.msra.mxu0 0
        %5272 = vmatprep.subr.bf16.mxu0 0
        %5273 = vmatpush1.bf16.msra.mxu0 0
        %5274 = vmatprep.mubr.bf16.mxu0 0
        %5275 = vmatmul.mubr.bf16.gmra.mrb[0].mxu0 0
        %v5276 = vpop.f32.mrb[0].mxu0
        %v5277 = vadd.f32 0.0, %v5276
        %v5278 = vpop.f32.mrb[0].mxu0
        %v5279 = vadd.f32 0.0, %v5278
        %v5280 = vpop.f32.mrb[0].mxu0
        %v5281 = vpop.f32.mrb[0].mxu0
        %5282 = vdwg.mxu0
        %v5283 = vadd.f32 %v4898, %v5236
        %v5284 = vadd.f32 %v4900, %v5238
        %v5285 = vadd.f32 %v4971, %v5277
        %v5286 = vadd.f32 %v4973, %v5279
        %v5287 = vsub.f32 0.0, %v5283
        %v5288 = vsub.f32 0.0, %v5284
        %v5289 = vsub.f32 0.0, %v5285
        %v5290 = vmul.f32 %v5287, 1.442695
        %v5291 = vpow.pop %v5290
        %v5292 = vmul.f32 %v5288, 1.442695
        %v5293 = vpow.pop %v5292
        %v5294 = vmul.f32 %v5289, 1.442695
        %v5295 = vpow.pop %v5294
        %v5296 = vadd.f32 %v5291, 1.0
        %v5297 = vadd.f32 %v5293, 1.0
        %v5298 = vadd.f32 %v5295, 1.0
        %v5299 = vrcp.pop %v5296
        %v5300 = vrcp.pop %v5297
        %v5301 = vrcp.pop %v5298
        %v5302 = vtanh.pop %v5286
        %v5303 = vmul.f32 %v5300, 0.0
        %v5304 = vmul.f32 %v5299, %v5302
        %v5305 = vadd.f32 %v5303, %v5304
        %v5306 = vtanh.pop %v5305
        %v5307 = vmul.f32 %v5301, %v5306
        %v5308 = vpack.c.bf16 %v5307, %v5307
        %5309 = vmatprep.subr.bf16.mxu0 %v5138
        %5310 = vmatpush1.bf16.msra.mxu0 %v5137
        %5311 = vmatprep.subr.bf16.mxu0 %v5142
        %5312 = vmatpush1.bf16.msra.mxu0 %v5141
        %5313 = vmatprep.subr.bf16.mxu0 %v5146
        %5314 = vmatpush1.bf16.msra.mxu0 %v5145
        %5315 = vmatprep.subr.bf16.mxu0 %v5150
        %5316 = vmatpush1.bf16.msra.mxu0 %v5149
        %5317 = vmatprep.subr.bf16.mxu0 %v5154
        %5318 = vmatpush1.bf16.msra.mxu0 %v5153
        %5319 = vmatprep.subr.bf16.mxu0 %v5158
        %5320 = vmatpush1.bf16.msra.mxu0 %v5157
        %5321 = vmatprep.subr.bf16.mxu0 %v5162
        %5322 = vmatpush1.bf16.msra.mxu0 %v5161
        %5323 = vmatprep.subr.bf16.mxu0 %v5166
        %5324 = vmatpush1.bf16.msra.mxu0 %v5165
        %5325 = vmatprep.subr.bf16.mxu0 0
        %5326 = vmatpush1.bf16.msra.mxu0 0
        %5327 = vmatprep.subr.bf16.mxu0 0
        %5328 = vmatpush1.bf16.msra.mxu0 0
        %5329 = vmatprep.subr.bf16.mxu0 0
        %5330 = vmatpush1.bf16.msra.mxu0 0
        %5331 = vmatprep.subr.bf16.mxu0 0
        %5332 = vmatpush1.bf16.msra.mxu0 0
        %5333 = vmatprep.subr.bf16.mxu0 0
        %5334 = vmatpush1.bf16.msra.mxu0 0
        %5335 = vmatprep.subr.bf16.mxu0 0
        %5336 = vmatpush1.bf16.msra.mxu0 0
        %5337 = vmatprep.subr.bf16.mxu0 0
        %5338 = vmatpush1.bf16.msra.mxu0 0
        %5339 = vmatprep.subr.bf16.mxu0 0
        %5340 = vmatpush1.bf16.msra.mxu0 0
        %5341 = vmatprep.mubr.bf16.mxu0 0
        %5342 = vmatmul.mubr.bf16.gmra.mrb[0].mxu0 %v5308
        %v5343 = vpop.f32.mrb[0].mxu0
        %v5344 = vadd.f32 0.0, %v5343
        %v5345 = vpop.f32.mrb[0].mxu0
        %v5346 = vadd.f32 0.0, %v5345
        %v5347 = vpop.f32.mrb[0].mxu0
        %v5348 = vpop.f32.mrb[0].mxu0
        %5349 = vdwg.mxu0
        %5350 = vmatprep.subr.bf16.mxu0 %v5140
        %5351 = vmatpush1.bf16.msra.mxu0 %v5139
        %5352 = vmatprep.subr.bf16.mxu0 %v5144
        %5353 = vmatpush1.bf16.msra.mxu0 %v5143
        %5354 = vmatprep.subr.bf16.mxu0 %v5148
        %5355 = vmatpush1.bf16.msra.mxu0 %v5147
        %5356 = vmatprep.subr.bf16.mxu0 %v5152
        %5357 = vmatpush1.bf16.msra.mxu0 %v5151
        %5358 = vmatprep.subr.bf16.mxu0 %v5156
        %5359 = vmatpush1.bf16.msra.mxu0 %v5155
        %5360 = vmatprep.subr.bf16.mxu0 %v5160
        %5361 = vmatpush1.bf16.msra.mxu0 %v5159
        %5362 = vmatprep.subr.bf16.mxu0 %v5164
        %5363 = vmatpush1.bf16.msra.mxu0 %v5163
        %5364 = vmatprep.subr.bf16.mxu0 %v5168
        %5365 = vmatpush1.bf16.msra.mxu0 %v5167
        %5366 = vmatprep.subr.bf16.mxu0 0
        %5367 = vmatpush1.bf16.msra.mxu0 0
        %5368 = vmatprep.subr.bf16.mxu0 0
        %5369 = vmatpush1.bf16.msra.mxu0 0
        %5370 = vmatprep.subr.bf16.mxu0 0
        %5371 = vmatpush1.bf16.msra.mxu0 0
        %5372 = vmatprep.subr.bf16.mxu0 0
        %5373 = vmatpush1.bf16.msra.mxu0 0
        %5374 = vmatprep.subr.bf16.mxu0 0
        %5375 = vmatpush1.bf16.msra.mxu0 0
        %5376 = vmatprep.subr.bf16.mxu0 0
        %5377 = vmatpush1.bf16.msra.mxu0 0
        %5378 = vmatprep.subr.bf16.mxu0 0
        %5379 = vmatpush1.bf16.msra.mxu0 0
        %5380 = vmatprep.subr.bf16.mxu0 0
        %5381 = vmatpush1.bf16.msra.mxu0 0
        %5382 = vmatprep.mubr.bf16.mxu0 0
        %5383 = vmatmul.mubr.bf16.gmra.mrb[0].mxu0 %v5308
        %v5384 = vpop.f32.mrb[0].mxu0
        %v5385 = vadd.f32 0.0, %v5384
        %v5386 = vpop.f32.mrb[0].mxu0
        %v5387 = vadd.f32 0.0, %v5386
        %v5388 = vpop.f32.mrb[0].mxu0
        %v5389 = vpop.f32.mrb[0].mxu0
        %5390 = vdwg.mxu0
        %v5391 = vadd.f32 %v4902, %v5344
        %v5392 = vadd.f32 %v4904, %v5346
        %v5393 = vadd.f32 %v4975, %v5385
        %v5394 = vadd.f32 %v4977, %v5387
        %v5395 = vsub.f32 0.0, %v5391
        %v5396 = vsub.f32 0.0, %v5392
        %v5397 = vsub.f32 0.0, %v5393
        %v5398 = vmul.f32 %v5395, 1.442695
        %v5399 = vpow.pop %v5398
        %v5400 = vmul.f32 %v5396, 1.442695
        %v5401 = vpow.pop %v5400
        %v5402 = vmul.f32 %v5397, 1.442695
        %v5403 = vpow.pop %v5402
        %v5404 = vadd.f32 %v5399, 1.0
        %v5405 = vadd.f32 %v5401, 1.0
        %v5406 = vadd.f32 %v5403, 1.0
        %v5407 = vrcp.pop %v5404
        %v5408 = vrcp.pop %v5405
        %v5409 = vrcp.pop %v5406
        %v5410 = vtanh.pop %v5394
        %v5411 = vmul.f32 %v5408, %v5305
        %v5412 = vmul.f32 %v5407, %v5410
        %v5413 = vadd.f32 %v5411, %v5412
        %v5414 = vtanh.pop %v5413
        %v5415 = vmul.f32 %v5409, %v5414
        %v5416 = vpack.c.bf16 %v5415, %v5415
        %5417 = vmatprep.subr.bf16.mxu0 %v5138
        %5418 = vmatpush1.bf16.msra.mxu0 %v5137
        %5419 = vmatprep.subr.bf16.mxu0 %v5142
        %5420 = vmatpush1.bf16.msra.mxu0 %v5141
        %5421 = vmatprep.subr.bf16.mxu0 %v5146
        %5422 = vmatpush1.bf16.msra.mxu0 %v5145
        %5423 = vmatprep.subr.bf16.mxu0 %v5150
        %5424 = vmatpush1.bf16.msra.mxu0 %v5149
        %5425 = vmatprep.subr.bf16.mxu0 %v5154
        %5426 = vmatpush1.bf16.msra.mxu0 %v5153
        %5427 = vmatprep.subr.bf16.mxu0 %v5158
        %5428 = vmatpush1.bf16.msra.mxu0 %v5157
        %5429 = vmatprep.subr.bf16.mxu0 %v5162
        %5430 = vmatpush1.bf16.msra.mxu0 %v5161
        %5431 = vmatprep.subr.bf16.mxu0 %v5166
        %5432 = vmatpush1.bf16.msra.mxu0 %v5165
        %5433 = vmatprep.subr.bf16.mxu0 0
        %5434 = vmatpush1.bf16.msra.mxu0 0
        %5435 = vmatprep.subr.bf16.mxu0 0
        %5436 = vmatpush1.bf16.msra.mxu0 0
        %5437 = vmatprep.subr.bf16.mxu0 0
        %5438 = vmatpush1.bf16.msra.mxu0 0
        %5439 = vmatprep.subr.bf16.mxu0 0
        %5440 = vmatpush1.bf16.msra.mxu0 0
        %5441 = vmatprep.subr.bf16.mxu0 0
        %5442 = vmatpush1.bf16.msra.mxu0 0
        %5443 = vmatprep.subr.bf16.mxu0 0
        %5444 = vmatpush1.bf16.msra.mxu0 0
        %5445 = vmatprep.subr.bf16.mxu0 0
        %5446 = vmatpush1.bf16.msra.mxu0 0
        %5447 = vmatprep.subr.bf16.mxu0 0
        %5448 = vmatpush1.bf16.msra.mxu0 0
        %5449 = vmatprep.mubr.bf16.mxu0 0
        %5450 = vmatmul.mubr.bf16.gmra.mrb[0].mxu0 %v5416
        %v5451 = vpop.f32.mrb[0].mxu0
        %v5452 = vadd.f32 0.0, %v5451
        %v5453 = vpop.f32.mrb[0].mxu0
        %v5454 = vadd.f32 0.0, %v5453
        %v5455 = vpop.f32.mrb[0].mxu0
        %v5456 = vpop.f32.mrb[0].mxu0
        %5457 = vdwg.mxu0
        %5458 = vmatprep.subr.bf16.mxu0 %v5140
        %5459 = vmatpush1.bf16.msra.mxu0 %v5139
        %5460 = vmatprep.subr.bf16.mxu0 %v5144
        %5461 = vmatpush1.bf16.msra.mxu0 %v5143
        %5462 = vmatprep.subr.bf16.mxu0 %v5148
        %5463 = vmatpush1.bf16.msra.mxu0 %v5147
        %5464 = vmatprep.subr.bf16.mxu0 %v5152
        %5465 = vmatpush1.bf16.msra.mxu0 %v5151
        %5466 = vmatprep.subr.bf16.mxu0 %v5156
        %5467 = vmatpush1.bf16.msra.mxu0 %v5155
        %5468 = vmatprep.subr.bf16.mxu0 %v5160
        %5469 = vmatpush1.bf16.msra.mxu0 %v5159
        %5470 = vmatprep.subr.bf16.mxu0 %v5164
        %5471 = vmatpush1.bf16.msra.mxu0 %v5163
        %5472 = vmatprep.subr.bf16.mxu0 %v5168
        %5473 = vmatpush1.bf16.msra.mxu0 %v5167
        %5474 = vmatprep.subr.bf16.mxu0 0
        %5475 = vmatpush1.bf16.msra.mxu0 0
        %5476 = vmatprep.subr.bf16.mxu0 0
        %5477 = vmatpush1.bf16.msra.mxu0 0
        %5478 = vmatprep.subr.bf16.mxu0 0
        %5479 = vmatpush1.bf16.msra.mxu0 0
        %5480 = vmatprep.subr.bf16.mxu0 0
        %5481 = vmatpush1.bf16.msra.mxu0 0
        %5482 = vmatprep.subr.bf16.mxu0 0
        %5483 = vmatpush1.bf16.msra.mxu0 0
        %5484 = vmatprep.subr.bf16.mxu0 0
        %5485 = vmatpush1.bf16.msra.mxu0 0
        %5486 = vmatprep.subr.bf16.mxu0 0
        %5487 = vmatpush1.bf16.msra.mxu0 0
        %5488 = vmatprep.subr.bf16.mxu0 0
        %5489 = vmatpush1.bf16.msra.mxu0 0
        %5490 = vmatprep.mubr.bf16.mxu0 0
        %5491 = vmatmul.mubr.bf16.gmra.mrb[0].mxu0 %v5416
        %v5492 = vpop.f32.mrb[0].mxu0
        %v5493 = vadd.f32 0.0, %v5492
        %v5494 = vpop.f32.mrb[0].mxu0
        %v5495 = vadd.f32 0.0, %v5494
        %v5496 = vpop.f32.mrb[0].mxu0
        %v5497 = vpop.f32.mrb[0].mxu0
        %5498 = vdwg.mxu0
        %v5499 = vadd.f32 %v4908, %v5452
        %v5500 = vadd.f32 %v4910, %v5454
        %v5501 = vadd.f32 %v4981, %v5493
        %v5502 = vadd.f32 %v4983, %v5495
        %v5503 = vsub.f32 0.0, %v5499
        %v5504 = vsub.f32 0.0, %v5500
        %v5505 = vsub.f32 0.0, %v5501
        %v5506 = vmul.f32 %v5503, 1.442695
        %v5507 = vpow.pop %v5506
        %v5508 = vmul.f32 %v5504, 1.442695
        %v5509 = vpow.pop %v5508
        %v5510 = vmul.f32 %v5505, 1.442695
        %v5511 = vpow.pop %v5510
        %v5512 = vadd.f32 %v5507, 1.0
        %v5513 = vadd.f32 %v5509, 1.0
        %v5514 = vadd.f32 %v5511, 1.0
        %v5515 = vrcp.pop %v5512
        %v5516 = vrcp.pop %v5513
        %v5517 = vrcp.pop %v5514
        %v5518 = vtanh.pop %v5502
        %v5519 = vmul.f32 %v5516, %v5413
        %v5520 = vmul.f32 %v5515, %v5518
        %v5521 = vadd.f32 %v5519, %v5520
        %v5522 = vtanh.pop %v5521
        %v5523 = vmul.f32 %v5517, %v5522
        %v5524 = vpack.c.bf16 %v5523, %v5523
        %5525 = vmatprep.subr.bf16.mxu0 %v5138
        %5526 = vmatpush1.bf16.msra.mxu0 %v5137
        %5527 = vmatprep.subr.bf16.mxu0 %v5142
        %5528 = vmatpush1.bf16.msra.mxu0 %v5141
        %5529 = vmatprep.subr.bf16.mxu0 %v5146
        %5530 = vmatpush1.bf16.msra.mxu0 %v5145
        %5531 = vmatprep.subr.bf16.mxu0 %v5150
        %5532 = vmatpush1.bf16.msra.mxu0 %v5149
        %5533 = vmatprep.subr.bf16.mxu0 %v5154
        %5534 = vmatpush1.bf16.msra.mxu0 %v5153
        %5535 = vmatprep.subr.bf16.mxu0 %v5158
        %5536 = vmatpush1.bf16.msra.mxu0 %v5157
        %5537 = vmatprep.subr.bf16.mxu0 %v5162
        %5538 = vmatpush1.bf16.msra.mxu0 %v5161
        %5539 = vmatprep.subr.bf16.mxu0 %v5166
        %5540 = vmatpush1.bf16.msra.mxu0 %v5165
        %5541 = vmatprep.subr.bf16.mxu0 0
        %5542 = vmatpush1.bf16.msra.mxu0 0
        %5543 = vmatprep.subr.bf16.mxu0 0
        %5544 = vmatpush1.bf16.msra.mxu0 0
        %5545 = vmatprep.subr.bf16.mxu0 0
        %5546 = vmatpush1.bf16.msra.mxu0 0
        %5547 = vmatprep.subr.bf16.mxu0 0
        %5548 = vmatpush1.bf16.msra.mxu0 0
        %5549 = vmatprep.subr.bf16.mxu0 0
        %5550 = vmatpush1.bf16.msra.mxu0 0
        %5551 = vmatprep.subr.bf16.mxu0 0
        %5552 = vmatpush1.bf16.msra.mxu0 0
        %5553 = vmatprep.subr.bf16.mxu0 0
        %5554 = vmatpush1.bf16.msra.mxu0 0
        %5555 = vmatprep.subr.bf16.mxu0 0
        %5556 = vmatpush1.bf16.msra.mxu0 0
        %5557 = vmatprep.mubr.bf16.mxu0 0
        %5558 = vmatmul.mubr.bf16.gmra.mrb[0].mxu0 %v5524
        %v5559 = vpop.f32.mrb[0].mxu0
        %v5560 = vadd.f32 0.0, %v5559
        %v5561 = vpop.f32.mrb[0].mxu0
        %v5562 = vadd.f32 0.0, %v5561
        %v5563 = vpop.f32.mrb[0].mxu0
        %v5564 = vpop.f32.mrb[0].mxu0
        %5565 = vdwg.mxu0
        %5566 = vmatprep.subr.bf16.mxu0 %v5140
        %5567 = vmatpush1.bf16.msra.mxu0 %v5139
        %5568 = vmatprep.subr.bf16.mxu0 %v5144
        %5569 = vmatpush1.bf16.msra.mxu0 %v5143
        %5570 = vmatprep.subr.bf16.mxu0 %v5148
        %5571 = vmatpush1.bf16.msra.mxu0 %v5147
        %5572 = vmatprep.subr.bf16.mxu0 %v5152
        %5573 = vmatpush1.bf16.msra.mxu0 %v5151
        %5574 = vmatprep.subr.bf16.mxu0 %v5156
        %5575 = vmatpush1.bf16.msra.mxu0 %v5155
        %5576 = vmatprep.subr.bf16.mxu0 %v5160
        %5577 = vmatpush1.bf16.msra.mxu0 %v5159
        %5578 = vmatprep.subr.bf16.mxu0 %v5164
        %5579 = vmatpush1.bf16.msra.mxu0 %v5163
        %5580 = vmatprep.subr.bf16.mxu0 %v5168
        %5581 = vmatpush1.bf16.msra.mxu0 %v5167
        %5582 = vmatprep.subr.bf16.mxu0 0
        %5583 = vmatpush1.bf16.msra.mxu0 0
        %5584 = vmatprep.subr.bf16.mxu0 0
        %5585 = vmatpush1.bf16.msra.mxu0 0
        %5586 = vmatprep.subr.bf16.mxu0 0
        %5587 = vmatpush1.bf16.msra.mxu0 0
        %5588 = vmatprep.subr.bf16.mxu0 0
        %5589 = vmatpush1.bf16.msra.mxu0 0
        %5590 = vmatprep.subr.bf16.mxu0 0
        %5591 = vmatpush1.bf16.msra.mxu0 0
        %5592 = vmatprep.subr.bf16.mxu0 0
        %5593 = vmatpush1.bf16.msra.mxu0 0
        %5594 = vmatprep.subr.bf16.mxu0 0
        %5595 = vmatpush1.bf16.msra.mxu0 0
        %5596 = vmatprep.subr.bf16.mxu0 0
        %5597 = vmatpush1.bf16.msra.mxu0 0
        %5598 = vmatprep.mubr.bf16.mxu0 0
        %5599 = vmatmul.mubr.bf16.gmra.mrb[0].mxu0 %v5524
        %v5600 = vpop.f32.mrb[0].mxu0
        %v5601 = vadd.f32 0.0, %v5600
        %v5602 = vpop.f32.mrb[0].mxu0
        %v5603 = vadd.f32 0.0, %v5602
        %v5604 = vpop.f32.mrb[0].mxu0
        %v5605 = vpop.f32.mrb[0].mxu0
        %5606 = vdwg.mxu0
        %v5607 = vadd.f32 %v4912, %v5560
        %v5608 = vadd.f32 %v4914, %v5562
        %v5609 = vadd.f32 %v4985, %v5601
        %v5610 = vadd.f32 %v4987, %v5603
        %v5611 = vsub.f32 0.0, %v5607
        %v5612 = vsub.f32 0.0, %v5608
        %v5613 = vsub.f32 0.0, %v5609
        %v5614 = vmul.f32 %v5611, 1.442695
        %v5615 = vpow.pop %v5614
        %v5616 = vmul.f32 %v5612, 1.442695
        %v5617 = vpow.pop %v5616
        %v5618 = vmul.f32 %v5613, 1.442695
        %v5619 = vpow.pop %v5618
        %v5620 = vadd.f32 %v5615, 1.0
        %v5621 = vadd.f32 %v5617, 1.0
        %v5622 = vadd.f32 %v5619, 1.0
        %v5623 = vrcp.pop %v5620
        %v5624 = vrcp.pop %v5621
        %v5625 = vrcp.pop %v5622
        %v5626 = vtanh.pop %v5610
        %v5627 = vmul.f32 %v5624, %v5521
        %v5628 = vmul.f32 %v5623, %v5626
        %v5629 = vadd.f32 %v5627, %v5628
        %v5630 = vtanh.pop %v5629
        %v5631 = vmul.f32 %v5625, %v5630
        %v5632 = vpack.c.bf16 %v5631, %v5631
        %5633 = vmatprep.subr.bf16.mxu0 %v5138
        %5634 = vmatpush1.bf16.msra.mxu0 %v5137
        %5635 = vmatprep.subr.bf16.mxu0 %v5142
        %5636 = vmatpush1.bf16.msra.mxu0 %v5141
        %5637 = vmatprep.subr.bf16.mxu0 %v5146
        %5638 = vmatpush1.bf16.msra.mxu0 %v5145
        %5639 = vmatprep.subr.bf16.mxu0 %v5150
        %5640 = vmatpush1.bf16.msra.mxu0 %v5149
        %5641 = vmatprep.subr.bf16.mxu0 %v5154
        %5642 = vmatpush1.bf16.msra.mxu0 %v5153
        %5643 = vmatprep.subr.bf16.mxu0 %v5158
        %5644 = vmatpush1.bf16.msra.mxu0 %v5157
        %5645 = vmatprep.subr.bf16.mxu0 %v5162
        %5646 = vmatpush1.bf16.msra.mxu0 %v5161
        %5647 = vmatprep.subr.bf16.mxu0 %v5166
        %5648 = vmatpush1.bf16.msra.mxu0 %v5165
        %5649 = vmatprep.subr.bf16.mxu0 0
        %5650 = vmatpush1.bf16.msra.mxu0 0
        %5651 = vmatprep.subr.bf16.mxu0 0
        %5652 = vmatpush1.bf16.msra.mxu0 0
        %5653 = vmatprep.subr.bf16.mxu0 0
        %5654 = vmatpush1.bf16.msra.mxu0 0
        %5655 = vmatprep.subr.bf16.mxu0 0
        %5656 = vmatpush1.bf16.msra.mxu0 0
        %5657 = vmatprep.subr.bf16.mxu0 0
        %5658 = vmatpush1.bf16.msra.mxu0 0
        %5659 = vmatprep.subr.bf16.mxu0 0
        %5660 = vmatpush1.bf16.msra.mxu0 0
        %5661 = vmatprep.subr.bf16.mxu0 0
        %5662 = vmatpush1.bf16.msra.mxu0 0
        %5663 = vmatprep.subr.bf16.mxu0 0
        %5664 = vmatpush1.bf16.msra.mxu0 0
        %5665 = vmatprep.mubr.bf16.mxu0 0
        %5666 = vmatmul.mubr.bf16.gmra.mrb[0].mxu0 %v5632
        %v5667 = vpop.f32.mrb[0].mxu0
        %v5668 = vadd.f32 0.0, %v5667
        %v5669 = vpop.f32.mrb[0].mxu0
        %v5670 = vadd.f32 0.0, %v5669
        %v5671 = vpop.f32.mrb[0].mxu0
        %v5672 = vpop.f32.mrb[0].mxu0
        %5673 = vdwg.mxu0
        %5674 = vmatprep.subr.bf16.mxu0 %v5140
        %5675 = vmatpush1.bf16.msra.mxu0 %v5139
        %5676 = vmatprep.subr.bf16.mxu0 %v5144
        %5677 = vmatpush1.bf16.msra.mxu0 %v5143
        %5678 = vmatprep.subr.bf16.mxu0 %v5148
        %5679 = vmatpush1.bf16.msra.mxu0 %v5147
        %5680 = vmatprep.subr.bf16.mxu0 %v5152
        %5681 = vmatpush1.bf16.msra.mxu0 %v5151
        %5682 = vmatprep.subr.bf16.mxu0 %v5156
        %5683 = vmatpush1.bf16.msra.mxu0 %v5155
        %5684 = vmatprep.subr.bf16.mxu0 %v5160
        %5685 = vmatpush1.bf16.msra.mxu0 %v5159
        %5686 = vmatprep.subr.bf16.mxu0 %v5164
        %5687 = vmatpush1.bf16.msra.mxu0 %v5163
        %5688 = vmatprep.subr.bf16.mxu0 %v5168
        %5689 = vmatpush1.bf16.msra.mxu0 %v5167
        %5690 = vmatprep.subr.bf16.mxu0 0
        %5691 = vmatpush1.bf16.msra.mxu0 0
        %5692 = vmatprep.subr.bf16.mxu0 0
        %5693 = vmatpush1.bf16.msra.mxu0 0
        %5694 = vmatprep.subr.bf16.mxu0 0
        %5695 = vmatpush1.bf16.msra.mxu0 0
        %5696 = vmatprep.subr.bf16.mxu0 0
        %5697 = vmatpush1.bf16.msra.mxu0 0
        %5698 = vmatprep.subr.bf16.mxu0 0
        %5699 = vmatpush1.bf16.msra.mxu0 0
        %5700 = vmatprep.subr.bf16.mxu0 0
        %5701 = vmatpush1.bf16.msra.mxu0 0
        %5702 = vmatprep.subr.bf16.mxu0 0
        %5703 = vmatpush1.bf16.msra.mxu0 0
        %5704 = vmatprep.subr.bf16.mxu0 0
        %5705 = vmatpush1.bf16.msra.mxu0 0
        %5706 = vmatprep.mubr.bf16.mxu0 0
        %5707 = vmatmul.mubr.bf16.gmra.mrb[0].mxu0 %v5632
        %v5708 = vpop.f32.mrb[0].mxu0
        %v5709 = vadd.f32 0.0, %v5708
        %v5710 = vpop.f32.mrb[0].mxu0
        %v5711 = vadd.f32 0.0, %v5710
        %v5712 = vpop.f32.mrb[0].mxu0
        %v5713 = vpop.f32.mrb[0].mxu0
        %5714 = vdwg.mxu0
        %v5715 = vadd.f32 %v4918, %v5668
        %v5716 = vadd.f32 %v4920, %v5670
        %v5717 = vadd.f32 %v4991, %v5709
        %v5718 = vadd.f32 %v4993, %v5711
        %v5719 = vsub.f32 0.0, %v5715
        %v5720 = vsub.f32 0.0, %v5716
        %v5721 = vsub.f32 0.0, %v5717
        %v5722 = vmul.f32 %v5719, 1.442695
        %v5723 = vpow.pop %v5722
        %v5724 = vmul.f32 %v5720, 1.442695
        %v5725 = vpow.pop %v5724
        %v5726 = vmul.f32 %v5721, 1.442695
        %v5727 = vpow.pop %v5726
        %v5728 = vadd.f32 %v5723, 1.0
        %v5729 = vadd.f32 %v5725, 1.0
        %v5730 = vadd.f32 %v5727, 1.0
        %v5731 = vrcp.pop %v5728
        %v5732 = vrcp.pop %v5729
        %v5733 = vrcp.pop %v5730
        %v5734 = vtanh.pop %v5718
        %v5735 = vmul.f32 %v5732, %v5629
        %v5736 = vmul.f32 %v5731, %v5734
        %v5737 = vadd.f32 %v5735, %v5736
        %v5738 = vtanh.pop %v5737
        %v5739 = vmul.f32 %v5733, %v5738
        %v5740 = vpack.c.bf16 %v5739, %v5739
        %5741 = vmatprep.subr.bf16.mxu0 %v5138
        %5742 = vmatpush1.bf16.msra.mxu0 %v5137
        %5743 = vmatprep.subr.bf16.mxu0 %v5142
        %5744 = vmatpush1.bf16.msra.mxu0 %v5141
        %5745 = vmatprep.subr.bf16.mxu0 %v5146
        %5746 = vmatpush1.bf16.msra.mxu0 %v5145
        %5747 = vmatprep.subr.bf16.mxu0 %v5150
        %5748 = vmatpush1.bf16.msra.mxu0 %v5149
        %5749 = vmatprep.subr.bf16.mxu0 %v5154
        %5750 = vmatpush1.bf16.msra.mxu0 %v5153
        %5751 = vmatprep.subr.bf16.mxu0 %v5158
        %5752 = vmatpush1.bf16.msra.mxu0 %v5157
        %5753 = vmatprep.subr.bf16.mxu0 %v5162
        %5754 = vmatpush1.bf16.msra.mxu0 %v5161
        %5755 = vmatprep.subr.bf16.mxu0 %v5166
        %5756 = vmatpush1.bf16.msra.mxu0 %v5165
        %5757 = vmatprep.subr.bf16.mxu0 0
        %5758 = vmatpush1.bf16.msra.mxu0 0
        %5759 = vmatprep.subr.bf16.mxu0 0
        %5760 = vmatpush1.bf16.msra.mxu0 0
        %5761 = vmatprep.subr.bf16.mxu0 0
        %5762 = vmatpush1.bf16.msra.mxu0 0
        %5763 = vmatprep.subr.bf16.mxu0 0
        %5764 = vmatpush1.bf16.msra.mxu0 0
        %5765 = vmatprep.subr.bf16.mxu0 0
        %5766 = vmatpush1.bf16.msra.mxu0 0
        %5767 = vmatprep.subr.bf16.mxu0 0
        %5768 = vmatpush1.bf16.msra.mxu0 0
        %5769 = vmatprep.subr.bf16.mxu0 0
        %5770 = vmatpush1.bf16.msra.mxu0 0
        %5771 = vmatprep.subr.bf16.mxu0 0
        %5772 = vmatpush1.bf16.msra.mxu0 0
        %5773 = vmatprep.mubr.bf16.mxu0 0
        %5774 = vmatmul.mubr.bf16.gmra.mrb[0].mxu0 %v5740
        %v5775 = vpop.f32.mrb[0].mxu0
        %v5776 = vadd.f32 0.0, %v5775
        %v5777 = vpop.f32.mrb[0].mxu0
        %v5778 = vadd.f32 0.0, %v5777
        %v5779 = vpop.f32.mrb[0].mxu0
        %v5780 = vpop.f32.mrb[0].mxu0
        %5781 = vdwg.mxu0
        %5782 = vmatprep.subr.bf16.mxu0 %v5140
        %5783 = vmatpush1.bf16.msra.mxu0 %v5139
        %5784 = vmatprep.subr.bf16.mxu0 %v5144
        %5785 = vmatpush1.bf16.msra.mxu0 %v5143
        %5786 = vmatprep.subr.bf16.mxu0 %v5148
        %5787 = vmatpush1.bf16.msra.mxu0 %v5147
        %5788 = vmatprep.subr.bf16.mxu0 %v5152
        %5789 = vmatpush1.bf16.msra.mxu0 %v5151
        %5790 = vmatprep.subr.bf16.mxu0 %v5156
        %5791 = vmatpush1.bf16.msra.mxu0 %v5155
        %5792 = vmatprep.subr.bf16.mxu0 %v5160
        %5793 = vmatpush1.bf16.msra.mxu0 %v5159
        %5794 = vmatprep.subr.bf16.mxu0 %v5164
        %5795 = vmatpush1.bf16.msra.mxu0 %v5163
        %5796 = vmatprep.subr.bf16.mxu0 %v5168
        %5797 = vmatpush1.bf16.msra.mxu0 %v5167
        %5798 = vmatprep.subr.bf16.mxu0 0
        %5799 = vmatpush1.bf16.msra.mxu0 0
        %5800 = vmatprep.subr.bf16.mxu0 0
        %5801 = vmatpush1.bf16.msra.mxu0 0
        %5802 = vmatprep.subr.bf16.mxu0 0
        %5803 = vmatpush1.bf16.msra.mxu0 0
        %5804 = vmatprep.subr.bf16.mxu0 0
        %5805 = vmatpush1.bf16.msra.mxu0 0
        %5806 = vmatprep.subr.bf16.mxu0 0
        %5807 = vmatpush1.bf16.msra.mxu0 0
        %5808 = vmatprep.subr.bf16.mxu0 0
        %5809 = vmatpush1.bf16.msra.mxu0 0
        %5810 = vmatprep.subr.bf16.mxu0 0
        %5811 = vmatpush1.bf16.msra.mxu0 0
        %5812 = vmatprep.subr.bf16.mxu0 0
        %5813 = vmatpush1.bf16.msra.mxu0 0
        %5814 = vmatprep.mubr.bf16.mxu0 0
        %5815 = vmatmul.mubr.bf16.gmra.mrb[0].mxu0 %v5740
        %v5816 = vpop.f32.mrb[0].mxu0
        %v5817 = vadd.f32 0.0, %v5816
        %v5818 = vpop.f32.mrb[0].mxu0
        %v5819 = vadd.f32 0.0, %v5818
        %v5820 = vpop.f32.mrb[0].mxu0
        %v5821 = vpop.f32.mrb[0].mxu0
        %5822 = vdwg.mxu0
        %v5823 = vadd.f32 %v4922, %v5776
        %v5824 = vadd.f32 %v4924, %v5778
        %v5825 = vadd.f32 %v4995, %v5817
        %v5826 = vadd.f32 %v4997, %v5819
        %v5827 = vsub.f32 0.0, %v5823
        %v5828 = vsub.f32 0.0, %v5824
        %v5829 = vsub.f32 0.0, %v5825
        %v5830 = vmul.f32 %v5827, 1.442695
        %v5831 = vpow.pop %v5830
        %v5832 = vmul.f32 %v5828, 1.442695
        %v5833 = vpow.pop %v5832
        %v5834 = vmul.f32 %v5829, 1.442695
        %v5835 = vpow.pop %v5834
        %v5836 = vadd.f32 %v5831, 1.0
        %v5837 = vadd.f32 %v5833, 1.0
        %v5838 = vadd.f32 %v5835, 1.0
        %v5839 = vrcp.pop %v5836
        %v5840 = vrcp.pop %v5837
        %v5841 = vrcp.pop %v5838
        %v5842 = vtanh.pop %v5826
        %v5843 = vmul.f32 %v5840, %v5737
        %v5844 = vmul.f32 %v5839, %v5842
        %v5845 = vadd.f32 %v5843, %v5844
        %v5846 = vtanh.pop %v5845
        %v5847 = vmul.f32 %v5841, %v5846
        %v5848 = vpack.c.bf16 %v5847, %v5847
        %5849 = vmatprep.subr.bf16.mxu0 %v5138
        %5850 = vmatpush1.bf16.msra.mxu0 %v5137
        %5851 = vmatprep.subr.bf16.mxu0 %v5142
        %5852 = vmatpush1.bf16.msra.mxu0 %v5141
        %5853 = vmatprep.subr.bf16.mxu0 %v5146
        %5854 = vmatpush1.bf16.msra.mxu0 %v5145
        %5855 = vmatprep.subr.bf16.mxu0 %v5150
        %5856 = vmatpush1.bf16.msra.mxu0 %v5149
        %5857 = vmatprep.subr.bf16.mxu0 %v5154
        %5858 = vmatpush1.bf16.msra.mxu0 %v5153
        %5859 = vmatprep.subr.bf16.mxu0 %v5158
        %5860 = vmatpush1.bf16.msra.mxu0 %v5157
        %5861 = vmatprep.subr.bf16.mxu0 %v5162
        %5862 = vmatpush1.bf16.msra.mxu0 %v5161
        %5863 = vmatprep.subr.bf16.mxu0 %v5166
        %5864 = vmatpush1.bf16.msra.mxu0 %v5165
        %5865 = vmatprep.subr.bf16.mxu0 0
        %5866 = vmatpush1.bf16.msra.mxu0 0
        %5867 = vmatprep.subr.bf16.mxu0 0
        %5868 = vmatpush1.bf16.msra.mxu0 0
        %5869 = vmatprep.subr.bf16.mxu0 0
        %5870 = vmatpush1.bf16.msra.mxu0 0
        %5871 = vmatprep.subr.bf16.mxu0 0
        %5872 = vmatpush1.bf16.msra.mxu0 0
        %5873 = vmatprep.subr.bf16.mxu0 0
        %5874 = vmatpush1.bf16.msra.mxu0 0
        %5875 = vmatprep.subr.bf16.mxu0 0
        %5876 = vmatpush1.bf16.msra.mxu0 0
        %5877 = vmatprep.subr.bf16.mxu0 0
        %5878 = vmatpush1.bf16.msra.mxu0 0
        %5879 = vmatprep.subr.bf16.mxu0 0
        %5880 = vmatpush1.bf16.msra.mxu0 0
        %5881 = vmatprep.mubr.bf16.mxu0 0
        %5882 = vmatmul.mubr.bf16.gmra.mrb[0].mxu0 %v5848
        %v5883 = vpop.f32.mrb[0].mxu0
        %v5884 = vadd.f32 0.0, %v5883
        %v5885 = vpop.f32.mrb[0].mxu0
        %v5886 = vadd.f32 0.0, %v5885
        %v5887 = vpop.f32.mrb[0].mxu0
        %v5888 = vpop.f32.mrb[0].mxu0
        %5889 = vdwg.mxu0
        %5890 = vmatprep.subr.bf16.mxu0 %v5140
        %5891 = vmatpush1.bf16.msra.mxu0 %v5139
        %5892 = vmatprep.subr.bf16.mxu0 %v5144
        %5893 = vmatpush1.bf16.msra.mxu0 %v5143
        %5894 = vmatprep.subr.bf16.mxu0 %v5148
        %5895 = vmatpush1.bf16.msra.mxu0 %v5147
        %5896 = vmatprep.subr.bf16.mxu0 %v5152
        %5897 = vmatpush1.bf16.msra.mxu0 %v5151
        %5898 = vmatprep.subr.bf16.mxu0 %v5156
        %5899 = vmatpush1.bf16.msra.mxu0 %v5155
        %5900 = vmatprep.subr.bf16.mxu0 %v5160
        %5901 = vmatpush1.bf16.msra.mxu0 %v5159
        %5902 = vmatprep.subr.bf16.mxu0 %v5164
        %5903 = vmatpush1.bf16.msra.mxu0 %v5163
        %5904 = vmatprep.subr.bf16.mxu0 %v5168
        %5905 = vmatpush1.bf16.msra.mxu0 %v5167
        %5906 = vmatprep.subr.bf16.mxu0 0
        %5907 = vmatpush1.bf16.msra.mxu0 0
        %5908 = vmatprep.subr.bf16.mxu0 0
        %5909 = vmatpush1.bf16.msra.mxu0 0
        %5910 = vmatprep.subr.bf16.mxu0 0
        %5911 = vmatpush1.bf16.msra.mxu0 0
        %5912 = vmatprep.subr.bf16.mxu0 0
        %5913 = vmatpush1.bf16.msra.mxu0 0
        %5914 = vmatprep.subr.bf16.mxu0 0
        %5915 = vmatpush1.bf16.msra.mxu0 0
        %5916 = vmatprep.subr.bf16.mxu0 0
        %5917 = vmatpush1.bf16.msra.mxu0 0
        %5918 = vmatprep.subr.bf16.mxu0 0
        %5919 = vmatpush1.bf16.msra.mxu0 0
        %5920 = vmatprep.subr.bf16.mxu0 0
        %5921 = vmatpush1.bf16.msra.mxu0 0
        %5922 = vmatprep.mubr.bf16.mxu0 0
        %5923 = vmatmul.mubr.bf16.gmra.mrb[0].mxu0 %v5848
        %v5924 = vpop.f32.mrb[0].mxu0
        %v5925 = vadd.f32 0.0, %v5924
        %v5926 = vpop.f32.mrb[0].mxu0
        %v5927 = vadd.f32 0.0, %v5926
        %v5928 = vpop.f32.mrb[0].mxu0
        %v5929 = vpop.f32.mrb[0].mxu0
        %5930 = vdwg.mxu0
        %v5931 = vadd.f32 %v4928, %v5884
        %v5932 = vadd.f32 %v4930, %v5886
        %v5933 = vadd.f32 %v5001, %v5925
        %v5934 = vadd.f32 %v5003, %v5927
        %v5935 = vsub.f32 0.0, %v5931
        %v5936 = vsub.f32 0.0, %v5932
        %v5937 = vsub.f32 0.0, %v5933
        %v5938 = vmul.f32 %v5935, 1.442695
        %v5939 = vpow.pop %v5938
        %v5940 = vmul.f32 %v5936, 1.442695
        %v5941 = vpow.pop %v5940
        %v5942 = vmul.f32 %v5937, 1.442695
        %v5943 = vpow.pop %v5942
        %v5944 = vadd.f32 %v5939, 1.0
        %v5945 = vadd.f32 %v5941, 1.0
        %v5946 = vadd.f32 %v5943, 1.0
        %v5947 = vrcp.pop %v5944
        %v5948 = vrcp.pop %v5945
        %v5949 = vrcp.pop %v5946
        %v5950 = vtanh.pop %v5934
        %v5951 = vmul.f32 %v5948, %v5845
        %v5952 = vmul.f32 %v5947, %v5950
        %v5953 = vadd.f32 %v5951, %v5952
        %v5954 = vtanh.pop %v5953
        %v5955 = vmul.f32 %v5949, %v5954
        %v5956 = vpack.c.bf16 %v5955, %v5955
        %5957 = vmatprep.subr.bf16.mxu0 %v5138
        %5958 = vmatpush1.bf16.msra.mxu0 %v5137
        %5959 = vmatprep.subr.bf16.mxu0 %v5142
        %5960 = vmatpush1.bf16.msra.mxu0 %v5141
        %5961 = vmatprep.subr.bf16.mxu0 %v5146
        %5962 = vmatpush1.bf16.msra.mxu0 %v5145
        %5963 = vmatprep.subr.bf16.mxu0 %v5150
        %5964 = vmatpush1.bf16.msra.mxu0 %v5149
        %5965 = vmatprep.subr.bf16.mxu0 %v5154
        %5966 = vmatpush1.bf16.msra.mxu0 %v5153
        %5967 = vmatprep.subr.bf16.mxu0 %v5158
        %5968 = vmatpush1.bf16.msra.mxu0 %v5157
        %5969 = vmatprep.subr.bf16.mxu0 %v5162
        %5970 = vmatpush1.bf16.msra.mxu0 %v5161
        %5971 = vmatprep.subr.bf16.mxu0 %v5166
        %5972 = vmatpush1.bf16.msra.mxu0 %v5165
        %5973 = vmatprep.subr.bf16.mxu0 0
        %5974 = vmatpush1.bf16.msra.mxu0 0
        %5975 = vmatprep.subr.bf16.mxu0 0
        %5976 = vmatpush1.bf16.msra.mxu0 0
        %5977 = vmatprep.subr.bf16.mxu0 0
        %5978 = vmatpush1.bf16.msra.mxu0 0
        %5979 = vmatprep.subr.bf16.mxu0 0
        %5980 = vmatpush1.bf16.msra.mxu0 0
        %5981 = vmatprep.subr.bf16.mxu0 0
        %5982 = vmatpush1.bf16.msra.mxu0 0
        %5983 = vmatprep.subr.bf16.mxu0 0
        %5984 = vmatpush1.bf16.msra.mxu0 0
        %5985 = vmatprep.subr.bf16.mxu0 0
        %5986 = vmatpush1.bf16.msra.mxu0 0
        %5987 = vmatprep.subr.bf16.mxu0 0
        %5988 = vmatpush1.bf16.msra.mxu0 0
        %5989 = vmatprep.mubr.bf16.mxu0 0
        %5990 = vmatmul.mubr.bf16.gmra.mrb[0].mxu0 %v5956
        %v5991 = vpop.f32.mrb[0].mxu0
        %v5992 = vadd.f32 0.0, %v5991
        %v5993 = vpop.f32.mrb[0].mxu0
        %v5994 = vadd.f32 0.0, %v5993
        %v5995 = vpop.f32.mrb[0].mxu0
        %v5996 = vpop.f32.mrb[0].mxu0
        %5997 = vdwg.mxu0
        %5998 = vmatprep.subr.bf16.mxu0 %v5140
        %5999 = vmatpush1.bf16.msra.mxu0 %v5139
        %6000 = vmatprep.subr.bf16.mxu0 %v5144
        %6001 = vmatpush1.bf16.msra.mxu0 %v5143
        %6002 = vmatprep.subr.bf16.mxu0 %v5148
        %6003 = vmatpush1.bf16.msra.mxu0 %v5147
        %6004 = vmatprep.subr.bf16.mxu0 %v5152
        %6005 = vmatpush1.bf16.msra.mxu0 %v5151
        %6006 = vmatprep.subr.bf16.mxu0 %v5156
        %6007 = vmatpush1.bf16.msra.mxu0 %v5155
        %6008 = vmatprep.subr.bf16.mxu0 %v5160
        %6009 = vmatpush1.bf16.msra.mxu0 %v5159
        %6010 = vmatprep.subr.bf16.mxu0 %v5164
        %6011 = vmatpush1.bf16.msra.mxu0 %v5163
        %6012 = vmatprep.subr.bf16.mxu0 %v5168
        %6013 = vmatpush1.bf16.msra.mxu0 %v5167
        %6014 = vmatprep.subr.bf16.mxu0 0
        %6015 = vmatpush1.bf16.msra.mxu0 0
        %6016 = vmatprep.subr.bf16.mxu0 0
        %6017 = vmatpush1.bf16.msra.mxu0 0
        %6018 = vmatprep.subr.bf16.mxu0 0
        %6019 = vmatpush1.bf16.msra.mxu0 0
        %6020 = vmatprep.subr.bf16.mxu0 0
        %6021 = vmatpush1.bf16.msra.mxu0 0
        %6022 = vmatprep.subr.bf16.mxu0 0
        %6023 = vmatpush1.bf16.msra.mxu0 0
        %6024 = vmatprep.subr.bf16.mxu0 0
        %6025 = vmatpush1.bf16.msra.mxu0 0
        %6026 = vmatprep.subr.bf16.mxu0 0
        %6027 = vmatpush1.bf16.msra.mxu0 0
        %6028 = vmatprep.subr.bf16.mxu0 0
        %6029 = vmatpush1.bf16.msra.mxu0 0
        %6030 = vmatprep.mubr.bf16.mxu0 0
        %6031 = vmatmul.mubr.bf16.gmra.mrb[0].mxu0 %v5956
        %v6032 = vpop.f32.mrb[0].mxu0
        %v6033 = vadd.f32 0.0, %v6032
        %v6034 = vpop.f32.mrb[0].mxu0
        %v6035 = vadd.f32 0.0, %v6034
        %v6036 = vpop.f32.mrb[0].mxu0
        %v6037 = vpop.f32.mrb[0].mxu0
        %6038 = vdwg.mxu0
        %v6039 = vadd.f32 %v4932, %v5992
        %v6040 = vadd.f32 %v4934, %v5994
        %v6041 = vadd.f32 %v5005, %v6033
        %v6042 = vadd.f32 %v5007, %v6035
        %v6043 = vsub.f32 0.0, %v6039
        %v6044 = vsub.f32 0.0, %v6040
        %v6045 = vsub.f32 0.0, %v6041
        %v6046 = vmul.f32 %v6043, 1.442695
        %v6047 = vpow.pop %v6046
        %v6048 = vmul.f32 %v6044, 1.442695
        %v6049 = vpow.pop %v6048
        %v6050 = vmul.f32 %v6045, 1.442695
        %v6051 = vpow.pop %v6050
        %v6052 = vadd.f32 %v6047, 1.0
        %v6053 = vadd.f32 %v6049, 1.0
        %v6054 = vadd.f32 %v6051, 1.0
        %v6055 = vrcp.pop %v6052
        %v6056 = vrcp.pop %v6053
        %v6057 = vrcp.pop %v6054
        %v6058 = vtanh.pop %v6042
        %v6059 = vmul.f32 %v6056, %v5953
        %v6060 = vmul.f32 %v6055, %v6058
        %v6061 = vadd.f32 %v6059, %v6060
        %v6062 = vtanh.pop %v6061
        %v6063 = vmul.f32 %v6057, %v6062
        %v6064 = vld [vmem:[%s13] sm:$0x1]
        %v6066 = vlaneseq
        %v6067 = vshrl.u32 %v6066, 7
        %v6068 = vsub.s32 0, %v6067
        %v6069 = vrot.slane %v6064, %v6068
        %v6071 = vmul.f32 %v5307, %v6069
        %v6072 = vmul.f32 %v5415, %v6069
        %v6073 = vmul.f32 %v5523, %v6069
        %v6074 = vmul.f32 %v5631, %v6069
        %v6075 = vmul.f32 %v5739, %v6069
        %v6076 = vmul.f32 %v5847, %v6069
        %v6077 = vmul.f32 %v5955, %v6069
        %v6078 = vmul.f32 %v6063, %v6069
        %6079 = vadd.xlane.f32.xlu0 %v6071
        %v6080 = vpop.xlane.xlu0 %6079
        %6081 = vadd.xlane.f32.xlu0 %v6072
        %v6082 = vpop.xlane.xlu0 %6081
        %6083 = vadd.xlane.f32.xlu0 %v6073
        %v6084 = vpop.xlane.xlu0 %6083
        %6085 = vadd.xlane.f32.xlu0 %v6074
        %v6086 = vpop.xlane.xlu0 %6085
        %6087 = vadd.xlane.f32.xlu0 %v6075
        %v6088 = vpop.xlane.xlu0 %6087
        %6089 = vadd.xlane.f32.xlu0 %v6076
        %v6090 = vpop.xlane.xlu0 %6089
        %6091 = vadd.xlane.f32.xlu0 %v6077
        %v6092 = vpop.xlane.xlu0 %6091
        %6093 = vadd.xlane.f32.xlu0 %v6078
        %v6094 = vpop.xlane.xlu0 %6093
        %v6095 = vld [vmem:[#allocation2] sm:$0x1]
        %v6097 = vlaneseq
        %v6098 = vshrl.u32 %v6097, 7
        %v6099 = vsub.s32 0, %v6098
        %v6100 = vrot.slane %v6095, %v6099
        %v6102 = vadd.f32 %v6080, %v6100
        %v6103 = vadd.f32 %v6082, %v6100
        %v6104 = vadd.f32 %v6084, %v6100
        %v6105 = vadd.f32 %v6086, %v6100
        %v6106 = vadd.f32 %v6088, %v6100
        %v6107 = vadd.f32 %v6090, %v6100
        %v6108 = vadd.f32 %v6092, %v6100
        %v6109 = vadd.f32 %v6094, %v6100
        %vm6110 = vcmask 7168
        %6111 = vst.msk [vmem:[%s654] sm:$0xff] %vm6110, %v6102
        %6112 = vst.msk [vmem:[%s654 + $0x8] sm:$0xff] %vm6110, %v6103
        %6113 = vst.msk [vmem:[%s654 + $0x10] sm:$0xff] %vm6110, %v6104
        %6114 = vst.msk [vmem:[%s654 + $0x18] sm:$0xff] %vm6110, %v6105
        %6115 = vst.msk [vmem:[%s654 + $0x20] sm:$0xff] %vm6110, %v6106
        %6116 = vst.msk [vmem:[%s654 + $0x28] sm:$0xff] %vm6110, %v6107
        %6117 = vst.msk [vmem:[%s654 + $0x30] sm:$0xff] %vm6110, %v6108
        %6118 = vst.msk [vmem:[%s654 + $0x38] sm:$0xff] %vm6110, %v6109
        %s6119 = sand.u32 %s360, 1
        %s6120 = sand.u32 %s360, 1
        %s6121 = smul.addr %s6120, 64
        %s6122 = scalar_lea.vmem [#allocation15], %s6121
        // Predicated region
        $region147: #{tpu_custom_call.1} parent=113 // pred_check
          %p6123 = pneg %p370
        $region148: #{tpu_custom_call.1} parent=113 // pred_check_branch
          %6125 = sbr.rel (%p6123) target = $region150
        $region149: #{tpu_custom_call.1} parent=113 // pred_region
          %s6126 = smul.addr %s32, 8
          %s6127 = scalar_lea.vmem %s15, %s6126
          // Predicated region
          $region151: #{tpu_custom_call.1} parent=149 // pred_check
            _
          $region152: #{tpu_custom_call.1} parent=149 // pred_check_branch
            %6129 = sbr.rel (0) target = $region154
          $region153: #{tpu_custom_call.1} parent=149 // pred_region
            // Predicated region
            $region155: #{tpu_custom_call.1} parent=153 // pred_check
              _
            $region156: #{tpu_custom_call.1} parent=153 // pred_check_branch
              %6131 = sbr.rel (0) target = $region158
            $region157: #{tpu_custom_call.1} parent=153 // pred_region
              // Predicated region
              $region170: #{tpu_custom_call.1} parent=157 // pred_check
                _
              $region171: #{tpu_custom_call.1} parent=157 // pred_check_branch
                %6160 = sbr.rel (0) target = $region173
              $region172: #{tpu_custom_call.1} parent=157 // pred_region
                loop: start=0, step=1, limit=1
                $region174: #{tpu_custom_call.1} parent=172 // loop_pre_header
                  _
                $region175: #{tpu_custom_call.1} parent=172 // loop_header
                  %s6162 = sphi 0, %s6166
                  %p6163 = scmp.ge.s32.totalorder %s6162, 1
                  %s6167 = sphi %s6122, %s6122
                  %s6168 = sphi %s6127, %s6127
                $region176: #{tpu_custom_call.1} parent=172 // loop_header_branch
                  %6165 = sbr.rel (%p6163) target = $region180
                $region177: #{tpu_custom_call.1} parent=172 // loop_body
                  %v6169 = vld [vmem:[%s6167] sm:$0xff]
                  %6170 = vst [vmem:[%s6168] sm:$0xff] %v6169
                  %v6171 = vld [vmem:[%s6167 + $0x8] sm:$0xff]
                  %6172 = vst [vmem:[%s6168 + $0x10] sm:$0xff] %v6171
                  %v6173 = vld [vmem:[%s6167 + $0x10] sm:$0xff]
                  %6174 = vst [vmem:[%s6168 + $0x20] sm:$0xff] %v6173
                  %v6175 = vld [vmem:[%s6167 + $0x18] sm:$0xff]
                  %6176 = vst [vmem:[%s6168 + $0x30] sm:$0xff] %v6175
                  %v6177 = vld [vmem:[%s6167 + $0x20] sm:$0xff]
                  %6178 = vst [vmem:[%s6168 + $0x40] sm:$0xff] %v6177
                  %v6179 = vld [vmem:[%s6167 + $0x28] sm:$0xff]
                  %6180 = vst [vmem:[%s6168 + $0x50] sm:$0xff] %v6179
                  %v6181 = vld [vmem:[%s6167 + $0x30] sm:$0xff]
                  %6182 = vst [vmem:[%s6168 + $0x60] sm:$0xff] %v6181
                  %v6183 = vld [vmem:[%s6167 + $0x38] sm:$0xff]
                  %6184 = vst [vmem:[%s6168 + $0x70] sm:$0xff] %v6183
                $region178: #{tpu_custom_call.1} parent=172 // loop_footer
                  %s6166 = sadd.s32 1, %s6162
                $region179: #{tpu_custom_call.1} parent=172 // loop_footer_branch
                  %6161 = sbr.rel target = $region175
                $region180: #{tpu_custom_call.1} parent=172 // loop_exit
                  _
              $region173: #{tpu_custom_call.1} parent=157 // pred_fallthru
                _
              // Predicated region
              $region181: #{tpu_custom_call.1} parent=157 // pred_check
                _
              $region182: #{tpu_custom_call.1} parent=157 // pred_check_branch
                %6186 = sbr.rel target = $region184
              $region183: #{tpu_custom_call.1} parent=157 // pred_region
                _
              $region184: #{tpu_custom_call.1} parent=157 // pred_fallthru
                _
            $region158: #{tpu_custom_call.1} parent=153 // pred_fallthru
              _
            // Predicated region
            $region159: #{tpu_custom_call.1} parent=153 // pred_check
              _
            $region160: #{tpu_custom_call.1} parent=153 // pred_check_branch
              %6133 = sbr.rel target = $region162
            $region161: #{tpu_custom_call.1} parent=153 // pred_region
              loop: start=0, step=1, limit=1
              $region163: #{tpu_custom_call.1} parent=161 // loop_pre_header
                _
              $region164: #{tpu_custom_call.1} parent=161 // loop_header
                %s6136 = sphi 0, %s6140
                %p6137 = scmp.ge.s32.totalorder %s6136, 1
                %s6141 = sphi %s6122, %s6122
                %s6142 = sphi %s6127, %s6127
              $region165: #{tpu_custom_call.1} parent=161 // loop_header_branch
                %6139 = sbr.rel (%p6137) target = $region169
              $region166: #{tpu_custom_call.1} parent=161 // loop_body
                %v6143 = vld [vmem:[%s6141] sm:$0xff]
                %6144 = vst [vmem:[%s6142] sm:$0xff] %v6143
                %v6145 = vld [vmem:[%s6141 + $0x8] sm:$0xff]
                %6146 = vst [vmem:[%s6142 + $0x10] sm:$0xff] %v6145
                %v6147 = vld [vmem:[%s6141 + $0x10] sm:$0xff]
                %6148 = vst [vmem:[%s6142 + $0x20] sm:$0xff] %v6147
                %v6149 = vld [vmem:[%s6141 + $0x18] sm:$0xff]
                %6150 = vst [vmem:[%s6142 + $0x30] sm:$0xff] %v6149
                %v6151 = vld [vmem:[%s6141 + $0x20] sm:$0xff]
                %6152 = vst [vmem:[%s6142 + $0x40] sm:$0xff] %v6151
                %v6153 = vld [vmem:[%s6141 + $0x28] sm:$0xff]
                %6154 = vst [vmem:[%s6142 + $0x50] sm:$0xff] %v6153
                %v6155 = vld [vmem:[%s6141 + $0x30] sm:$0xff]
                %6156 = vst [vmem:[%s6142 + $0x60] sm:$0xff] %v6155
                %v6157 = vld [vmem:[%s6141 + $0x38] sm:$0xff]
                %6158 = vst [vmem:[%s6142 + $0x70] sm:$0xff] %v6157
              $region167: #{tpu_custom_call.1} parent=161 // loop_footer
                %s6140 = sadd.s32 1, %s6136
              $region168: #{tpu_custom_call.1} parent=161 // loop_footer_branch
                %6135 = sbr.rel target = $region164
              $region169: #{tpu_custom_call.1} parent=161 // loop_exit
                _
            $region162: #{tpu_custom_call.1} parent=153 // pred_fallthru
              _
          $region154: #{tpu_custom_call.1} parent=149 // pred_fallthru
            _
          %6187 = vnop
        $region150: #{tpu_custom_call.1} parent=113 // pred_fallthru
          _
      $region114: #{tpu_custom_call.1} parent=5 // pred_fallthru
        _
      %p6188 = scmp.le.s32.totalorder 2, %s27
      // Predicated region
      $region185: #{tpu_custom_call.1} parent=5 // pred_check
        %p6189 = pneg %p6188
      $region186: #{tpu_custom_call.1} parent=5 // pred_check_branch
        %6191 = sbr.rel (%p6189) target = $region188
      $region187: #{tpu_custom_call.1} parent=5 // pred_region
        %s6192 = ssub.s32 %s27, 2
        // Predicated region
        $region189: #{tpu_custom_call.1} parent=187 // pred_check
          %p6193 = pneg %p376
        $region190: #{tpu_custom_call.1} parent=187 // pred_check_branch
          %6195 = sbr.rel (%p6193) target = $region192
        $region191: #{tpu_custom_call.1} parent=187 // pred_region
          %s6196 = sand.u32 %s361, 1
          %s6197 = sand.u32 %s361, 1
          %s6198 = smul.addr %s6197, 64
          %s6199 = scalar_lea.vmem [#allocation15], %s6198
        $region192: #{tpu_custom_call.1} parent=187 // pred_fallthru
          _
      $region188: #{tpu_custom_call.1} parent=5 // pred_fallthru
        _
    $region6: #{tpu_custom_call.1} parent=1 // loop_footer
      %s31 = sadd.s32 1, %s27
    $region7: #{tpu_custom_call.1} parent=1 // loop_footer_branch
      %26 = sbr.rel target = $region3
    $region8: #{tpu_custom_call.1} parent=1 // loop_exit
      _
    %6200 = vsyncpa [#allocation5], 1
    %s6201 = scalar_lea.sflag [#allocation5], 1
    %6202 = vsyncpa %s6201, 1
    %6203 = vsyncpa [#allocation7], 1
    %6204 = vsyncpa [#allocation10], 1
    %6205 = vsyncpa [#allocation13], 1

</llo_original>
